<compile_context>
chip_gen: v6e
topology: v6e:2x2x1
jax: 0.10.0
libtpu: 0.0.40
codegen_flags: <defaults>
</compile_context>

<pallas_src>
import functools

import jax
import jax.numpy as jnp
from jax.experimental import pallas as pl
from jax.experimental.pallas import tpu as pltpu


def _round_up(a, b):
    return (a + b - 1) // b * b


def _basic_block_kernel(x_ref, w1_ref, b1_ref, w2_ref, b2_ref, out_ref,
                        y1pad_ref, *, H, W, Cpad):
    # x_ref    : (1, Mx, Cpad)   bf16  flattened zero-padded plane (+ slack rows)
    # w*_ref   : (9, Cpad, Cpad) bf16  conv weights, BN scale folded, tap-major
    # b*_ref   : (1, Cpad)       f32   folded BN bias
    # out_ref  : (1, Ms, Cpad)   f32   conv output in slab layout (H x (W+2))
    # y1pad_ref: (Mscr, Cpad)    bf16  flattened padded plane for conv2 (scratch)
    Wp = W + 2
    Ms = H * Wp                        # rows per shifted slab (valid + halo cols)
    pad_front = (-(Wp + 1)) % 8        # front pad -> 8-aligned y1 slab store
    store_off = pad_front + Wp + 1
    Mscr = y1pad_ref.shape[0]

    # Zero only the head/tail halo strips of the conv2 scratch; the interior
    # (Ms rows) is fully overwritten below with halo columns masked to zero.
    y1pad_ref[pl.ds(0, store_off), :] = jnp.zeros(
        (store_off, Cpad), y1pad_ref.dtype)
    tail = Mscr - (store_off + Ms)
    y1pad_ref[pl.ds(store_off + Ms, tail), :] = jnp.zeros(
        (tail, Cpad), y1pad_ref.dtype)

    def conv_taps(load_slab, w_ref):
        # 9 shifted-slab matmuls accumulated in f32 (MXU, bf16 inputs).
        acc = None
        for kh in range(3):
            for kw in range(3):
                slab = load_slab(kh * Wp + kw)               # (Ms, Cpad) bf16
                d = jnp.dot(slab, w_ref[kh * 3 + kw],
                            preferred_element_type=jnp.float32)
                acc = d if acc is None else acc + d
        return acc

    # ---- conv1 (BN1 scale folded into w1) + bias + ReLU ----
    acc1 = conv_taps(lambda t: x_ref[0, pl.ds(t, Ms), :], w1_ref)
    y1 = jnp.maximum(acc1 + b1_ref[...], 0.0)                # (Ms, Cpad) f32

    # Mask the halo columns (rows with j >= W land on halo positions of the
    # conv2 plane and must be zero), then stage into the padded scratch.
    col = jax.lax.broadcasted_iota(jnp.int32, (Ms, 1), 0) % Wp
    y1 = jnp.where(col < W, y1, 0.0)
    y1pad_ref[pl.ds(store_off, Ms), :] = y1.astype(y1pad_ref.dtype)

    # ---- conv2 (BN2 scale folded) + bias + residual + ReLU ----
    acc2 = conv_taps(lambda t: y1pad_ref[pl.ds(pad_front + t, Ms), :], w2_ref)
    # Residual = centre-tap slab of the padded input (same slab layout).
    residual = x_ref[0, pl.ds(Wp + 1, Ms), :].astype(jnp.float32)
    out_ref[0] = jnp.maximum(acc2 + b2_ref[...] + residual, 0.0)


def basic_block_pallas(x_nhwc, w1, bn1, w2, bn2, eps=1e-5):
    """x_nhwc: (N, H, W, C) f32. w1/w2: (3,3,Cin,Cout) HWIO.
    bn*: dict with gamma, beta, mean, var (shape (C,)). Inference-mode BN."""
    N, H, W, Cin = x_nhwc.shape
    Cout = w1.shape[-1]
    assert Cin == Cout, "BasicBlock with downsample=None requires Cin == Cout"
    C = Cin

    LANE = 128
    Cpad = _round_up(C, LANE)
    Wp, Hp = W + 2, H + 2
    Mpad = Hp * Wp                       # rows of the flattened padded plane
    Ms = H * Wp                          # rows of one shifted slab / the output
    Mx = _round_up(Mpad + 2, 8)          # +2 slack rows for the shifted reads
    pad_front = (-(Wp + 1)) % 8
    Mscr = _round_up(pad_front + Mpad + 2, 8)

    def fold(bn, w):
        scale = bn["gamma"] / jnp.sqrt(bn["var"] + eps)          # (C,)
        bias = bn["beta"] - bn["mean"] * scale                   # (C,)
        wf = w * scale[None, None, None, :]                      # fold into Cout
        return wf, bias

    w1f, b1 = fold(bn1, w1)
    w2f, b2 = fold(bn2, w2)

    def prep_w(wf):
        wp = jnp.zeros((3, 3, Cpad, Cpad), jnp.float32).at[:, :, :C, :C].set(wf)
        return wp.reshape(9, Cpad, Cpad).astype(jnp.bfloat16)

    w1p, w2p = prep_w(w1f), prep_w(w2f)
    b1p = jnp.zeros((1, Cpad), jnp.float32).at[0, :C].set(b1)
    b2p = jnp.zeros((1, Cpad), jnp.float32).at[0, :C].set(b2)

    # One combined pad pass: spatial halo + channel pad to lane width, flatten
    # the plane, add slack rows for the shifted slabs, cast to bf16.
    xp = jnp.pad(x_nhwc, ((0, 0), (1, 1), (1, 1), (0, Cpad - C)))
    xflat = xp.reshape(N, Mpad, Cpad)
    xflat = jnp.pad(xflat, ((0, 0), (0, Mx - Mpad), (0, 0))).astype(jnp.bfloat16)

    kernel = functools.partial(_basic_block_kernel, H=H, W=W, Cpad=Cpad)

    out = pl.pallas_call(
        kernel,
        out_shape=jax.ShapeDtypeStruct((N, Ms, Cpad), jnp.float32),
        grid_spec=pltpu.PrefetchScalarGridSpec(
            num_scalar_prefetch=0,
            grid=(N,),
            in_specs=[
                pl.BlockSpec((1, Mx, Cpad), lambda n: (n, 0, 0)),
                pl.BlockSpec((9, Cpad, Cpad), lambda n: (0, 0, 0)),
                pl.BlockSpec((1, Cpad), lambda n: (0, 0)),
                pl.BlockSpec((9, Cpad, Cpad), lambda n: (0, 0, 0)),
                pl.BlockSpec((1, Cpad), lambda n: (0, 0)),
            ],
            out_specs=pl.BlockSpec((1, Ms, Cpad), lambda n: (n, 0, 0)),
            scratch_shapes=[pltpu.VMEM((Mscr, Cpad), jnp.bfloat16)],
        ),
        compiler_params=pltpu.CompilerParams(
            dimension_semantics=("parallel",),
            vmem_limit_bytes=32 * 1024 * 1024),
    )(xflat, w1p, b1p, w2p, b2p)

    # Drop the halo columns and the channel padding (lane-dense until here).
    return out.reshape(N, H, Wp, Cpad)[:, :, :W, :C]


def basic_block_reference(x_nhwc, w1, bn1, w2, bn2, eps=1e-5):
    """Pure-JAX f32 reference (exact module semantics, inference BN)."""
    def conv(x, w):
        return jax.lax.conv_general_dilated(
            x, w, window_strides=(1, 1), padding="SAME",
            dimension_numbers=("NHWC", "HWIO", "NHWC"))

    def bn(x, p):
        scale = p["gamma"] / jnp.sqrt(p["var"] + eps)
        return x * scale + (p["beta"] - p["mean"] * scale)

    y = jnp.maximum(bn(conv(x_nhwc, w1), bn1), 0.0)
    y = bn(conv(y, w2), bn2)
    return jnp.maximum(y + x_nhwc, 0.0)


def basic_block_reference_bf16(x_nhwc, w1, bn1, w2, bn2, eps=1e-5):
    """Reference mirroring the kernel's bf16 quantization points (input, folded
    weights, staged activation) so layout/indexing bugs are caught with a tight
    tolerance independent of bf16 rounding."""
    def q(a):
        return a.astype(jnp.bfloat16).astype(jnp.float32)

    def conv(x, w):
        return jax.lax.conv_general_dilated(
            x, w, window_strides=(1, 1), padding="SAME",
            dimension_numbers=("NHWC", "HWIO", "NHWC"))

    def fold(bn, w):
        scale = bn["gamma"] / jnp.sqrt(bn["var"] + eps)
        return q(w * scale[None, None, None, :]), bn["beta"] - bn["mean"] * scale

    w1q, b1 = fold(bn1, w1)
    w2q, b2 = fold(bn2, w2)
    xq = q(x_nhwc)
    y = q(jnp.maximum(conv(xq, w1q) + b1, 0.0))
    y = conv(y, w2q) + b2
    return jnp.maximum(y + xq, 0.0)


if __name__ == "__main__":
    # Small shapes: batch=2, inplanes=planes=4, spatial=16x16 (stride=1).
    N, C, H, Wd = 2, 4, 16, 16
    key = jax.random.PRNGKey(0)
    kx, kw1, kw2, kg1, kb1, km1, kv1, kg2, kb2, km2, kv2 = jax.random.split(key, 11)

    # PyTorch-style input is NCHW; transpose to NHWC for the kernel.
    x_nchw = jax.random.normal(kx, (N, C, H, Wd), dtype=jnp.float32)
    x_nhwc = jnp.transpose(x_nchw, (0, 2, 3, 1))

    # Conv weights stored HWIO (= torch OIHW transposed (2,3,1,0)).
    w1 = jax.random.normal(kw1, (3, 3, C, C), dtype=jnp.float32) * 0.1
    w2 = jax.random.normal(kw2, (3, 3, C, C), dtype=jnp.float32) * 0.1
    bn1 = dict(gamma=1.0 + 0.1 * jax.random.normal(kg1, (C,)),
               beta=0.1 * jax.random.normal(kb1, (C,)),
               mean=0.1 * jax.random.normal(km1, (C,)),
               var=jnp.abs(jax.random.normal(kv1, (C,))) + 0.5)
    bn2 = dict(gamma=1.0 + 0.1 * jax.random.normal(kg2, (C,)),
               beta=0.1 * jax.random.normal(kb2, (C,)),
               mean=0.1 * jax.random.normal(km2, (C,)),
               var=jnp.abs(jax.random.normal(kv2, (C,))) + 0.5)

    out = jax.block_until_ready(basic_block_pallas(x_nhwc, w1, bn1, w2, bn2))
    assert out.shape == (N, H, Wd, C)

    # Tight structural check against the bf16-quantization-matched reference.
    ref_q = jax.block_until_ready(
        basic_block_reference_bf16(x_nhwc, w1, bn1, w2, bn2))
    err_q = float(jnp.max(jnp.abs(out - ref_q)))
    assert err_q < 2e-3, f"mismatch vs bf16-matched reference: {err_q}"

    # Loose semantic check against the full-f32 module reference
    # (tolerance widened because matmul inputs are bf16).
    ref = jax.block_until_ready(basic_block_reference(x_nhwc, w1, bn1, w2, bn2))
    err = float(jnp.max(jnp.abs(out - ref)))
    assert err < 6e-2, f"mismatch vs f32 reference: {err}"

    print("KERNEL_OK")
</pallas_src>

<mosaic_0001>
module attributes {stable_mosaic.version = 11 : i64} {
  func.func @_basic_block_kernel(%arg0: i32, %arg1: memref<1x328x128xbf16, #tpu.memory_space<vmem>>, %arg2: memref<9x128x128xbf16, #tpu.memory_space<vmem>>, %arg3: memref<1x128xf32, #tpu.memory_space<vmem>>, %arg4: memref<9x128x128xbf16, #tpu.memory_space<vmem>>, %arg5: memref<1x128xf32, #tpu.memory_space<vmem>>, %arg6: memref<1x288x128xf32, #tpu.memory_space<vmem>>, %arg7: memref<336x128xbf16, #tpu.memory_space<vmem>>) attributes {dimension_semantics = [#tpu.dimension_semantics<parallel>], iteration_bounds = array<i64: 2>, scalar_prefetch = 0 : i64, scratch_operands = 1 : i64, tpu.core_type = #tpu.core_type<tc>, window_params = [{transform_indices = @transform_0, window_bounds = array<i64: 1, 328, 128>}, {pipeline_mode = #tpu.pipeline_mode<synchronous>, transform_indices = @transform_1, window_bounds = array<i64: 9, 128, 128>}, {pipeline_mode = #tpu.pipeline_mode<synchronous>, transform_indices = @transform_2, window_bounds = array<i64: 1, 128>}, {pipeline_mode = #tpu.pipeline_mode<synchronous>, transform_indices = @transform_3, window_bounds = array<i64: 9, 128, 128>}, {pipeline_mode = #tpu.pipeline_mode<synchronous>, transform_indices = @transform_4, window_bounds = array<i64: 1, 128>}, {transform_indices = @transform_5, window_bounds = array<i64: 1, 288, 128>}]} {
    %cst = arith.constant 0.000000e+00 : bf16
    %0 = vector.broadcast %cst : bf16 to vector<24x128xbf16>
    %c0 = arith.constant 0 : index
    %c0_0 = arith.constant 0 : index
    %1 = vector.load %arg7[%c0, %c0_0] : memref<336x128xbf16, #tpu.memory_space<vmem>>, vector<24x128xbf16>
    tpu.vector_store %arg7[%c0, %c0_0], %0 {strides = array<i32>} : memref<336x128xbf16, #tpu.memory_space<vmem>>, vector<24x128xbf16>,
    %cst_1 = arith.constant 0.000000e+00 : bf16
    %2 = vector.broadcast %cst_1 : bf16 to vector<24x128xbf16>
    %c312 = arith.constant 312 : index
    %c0_2 = arith.constant 0 : index
    %3 = vector.load %arg7[%c312, %c0_2] : memref<336x128xbf16, #tpu.memory_space<vmem>>, vector<24x128xbf16>
    tpu.vector_store %arg7[%c312, %c0_2], %2 {strides = array<i32>} : memref<336x128xbf16, #tpu.memory_space<vmem>>, vector<24x128xbf16>,
    %c0_3 = arith.constant 0 : index
    %c0_4 = arith.constant 0 : index
    %c0_5 = arith.constant 0 : index
    %4 = vector.load %arg1[%c0_3, %c0_4, %c0_5] : memref<1x328x128xbf16, #tpu.memory_space<vmem>>, vector<1x288x128xbf16>
    %5 = vector.shape_cast %4 : vector<1x288x128xbf16> to vector<288x128xbf16>
    %c0_6 = arith.constant 0 : index
    %c0_7 = arith.constant 0 : index
    %c0_8 = arith.constant 0 : index
    %6 = vector.load %arg2[%c0_6, %c0_7, %c0_8] : memref<9x128x128xbf16, #tpu.memory_space<vmem>>, vector<1x128x128xbf16>
    %7 = vector.shape_cast %6 : vector<1x128x128xbf16> to vector<128x128xbf16>
    %cst_9 = arith.constant dense<0.000000e+00> : vector<288x128xf32>
    %8 = tpu.matmul %5, %7, %cst_9 {dimension_numbers = #tpu.dot_dimension_numbers<[1], [0], [0], [1], [0, 0, 1, 1], [], []>} : vector<288x128xbf16>, vector<128x128xbf16>, vector<288x128xf32> -> vector<288x128xf32>
    %c0_10 = arith.constant 0 : index
    %c1 = arith.constant 1 : index
    %c0_11 = arith.constant 0 : index
    %9 = vector.load %arg1[%c0_10, %c1, %c0_11] : memref<1x328x128xbf16, #tpu.memory_space<vmem>>, vector<1x288x128xbf16>
    %10 = vector.shape_cast %9 : vector<1x288x128xbf16> to vector<288x128xbf16>
    %c1_12 = arith.constant 1 : index
    %c0_13 = arith.constant 0 : index
    %c0_14 = arith.constant 0 : index
    %11 = vector.load %arg2[%c1_12, %c0_13, %c0_14] : memref<9x128x128xbf16, #tpu.memory_space<vmem>>, vector<1x128x128xbf16>
    %12 = vector.shape_cast %11 : vector<1x128x128xbf16> to vector<128x128xbf16>
    %cst_15 = arith.constant dense<0.000000e+00> : vector<288x128xf32>
    %13 = tpu.matmul %10, %12, %cst_15 {dimension_numbers = #tpu.dot_dimension_numbers<[1], [0], [0], [1], [0, 0, 1, 1], [], []>} : vector<288x128xbf16>, vector<128x128xbf16>, vector<288x128xf32> -> vector<288x128xf32>
    %14 = arith.addf %8, %13 : vector<288x128xf32>
    %c0_16 = arith.constant 0 : index
    %c2 = arith.constant 2 : index
    %c0_17 = arith.constant 0 : index
    %15 = vector.load %arg1[%c0_16, %c2, %c0_17] : memref<1x328x128xbf16, #tpu.memory_space<vmem>>, vector<1x288x128xbf16>
    %16 = vector.shape_cast %15 : vector<1x288x128xbf16> to vector<288x128xbf16>
    %c2_18 = arith.constant 2 : index
    %c0_19 = arith.constant 0 : index
    %c0_20 = arith.constant 0 : index
    %17 = vector.load %arg2[%c2_18, %c0_19, %c0_20] : memref<9x128x128xbf16, #tpu.memory_space<vmem>>, vector<1x128x128xbf16>
    %18 = vector.shape_cast %17 : vector<1x128x128xbf16> to vector<128x128xbf16>
    %cst_21 = arith.constant dense<0.000000e+00> : vector<288x128xf32>
    %19 = tpu.matmul %16, %18, %cst_21 {dimension_numbers = #tpu.dot_dimension_numbers<[1], [0], [0], [1], [0, 0, 1, 1], [], []>} : vector<288x128xbf16>, vector<128x128xbf16>, vector<288x128xf32> -> vector<288x128xf32>
    %20 = arith.addf %14, %19 : vector<288x128xf32>
    %c0_22 = arith.constant 0 : index
    %c18 = arith.constant 18 : index
    %c0_23 = arith.constant 0 : index
    %21 = vector.load %arg1[%c0_22, %c18, %c0_23] : memref<1x328x128xbf16, #tpu.memory_space<vmem>>, vector<1x288x128xbf16>
    %22 = vector.shape_cast %21 : vector<1x288x128xbf16> to vector<288x128xbf16>
    %c3 = arith.constant 3 : index
    %c0_24 = arith.constant 0 : index
    %c0_25 = arith.constant 0 : index
    %23 = vector.load %arg2[%c3, %c0_24, %c0_25] : memref<9x128x128xbf16, #tpu.memory_space<vmem>>, vector<1x128x128xbf16>
    %24 = vector.shape_cast %23 : vector<1x128x128xbf16> to vector<128x128xbf16>
    %cst_26 = arith.constant dense<0.000000e+00> : vector<288x128xf32>
    %25 = tpu.matmul %22, %24, %cst_26 {dimension_numbers = #tpu.dot_dimension_numbers<[1], [0], [0], [1], [0, 0, 1, 1], [], []>} : vector<288x128xbf16>, vector<128x128xbf16>, vector<288x128xf32> -> vector<288x128xf32>
    %26 = arith.addf %20, %25 : vector<288x128xf32>
    %c0_27 = arith.constant 0 : index
    %c19 = arith.constant 19 : index
    %c0_28 = arith.constant 0 : index
    %27 = vector.load %arg1[%c0_27, %c19, %c0_28] : memref<1x328x128xbf16, #tpu.memory_space<vmem>>, vector<1x288x128xbf16>
    %28 = vector.shape_cast %27 : vector<1x288x128xbf16> to vector<288x128xbf16>
    %c4 = arith.constant 4 : index
    %c0_29 = arith.constant 0 : index
    %c0_30 = arith.constant 0 : index
    %29 = vector.load %arg2[%c4, %c0_29, %c0_30] : memref<9x128x128xbf16, #tpu.memory_space<vmem>>, vector<1x128x128xbf16>
    %30 = vector.shape_cast %29 : vector<1x128x128xbf16> to vector<128x128xbf16>
    %cst_31 = arith.constant dense<0.000000e+00> : vector<288x128xf32>
    %31 = tpu.matmul %28, %30, %cst_31 {dimension_numbers = #tpu.dot_dimension_numbers<[1], [0], [0], [1], [0, 0, 1, 1], [], []>} : vector<288x128xbf16>, vector<128x128xbf16>, vector<288x128xf32> -> vector<288x128xf32>
    %32 = arith.addf %26, %31 : vector<288x128xf32>
    %c0_32 = arith.constant 0 : index
    %c20 = arith.constant 20 : index
    %c0_33 = arith.constant 0 : index
    %33 = vector.load %arg1[%c0_32, %c20, %c0_33] : memref<1x328x128xbf16, #tpu.memory_space<vmem>>, vector<1x288x128xbf16>
    %34 = vector.shape_cast %33 : vector<1x288x128xbf16> to vector<288x128xbf16>
    %c5 = arith.constant 5 : index
    %c0_34 = arith.constant 0 : index
    %c0_35 = arith.constant 0 : index
    %35 = vector.load %arg2[%c5, %c0_34, %c0_35] : memref<9x128x128xbf16, #tpu.memory_space<vmem>>, vector<1x128x128xbf16>
    %36 = vector.shape_cast %35 : vector<1x128x128xbf16> to vector<128x128xbf16>
    %cst_36 = arith.constant dense<0.000000e+00> : vector<288x128xf32>
    %37 = tpu.matmul %34, %36, %cst_36 {dimension_numbers = #tpu.dot_dimension_numbers<[1], [0], [0], [1], [0, 0, 1, 1], [], []>} : vector<288x128xbf16>, vector<128x128xbf16>, vector<288x128xf32> -> vector<288x128xf32>
    %38 = arith.addf %32, %37 : vector<288x128xf32>
    %c0_37 = arith.constant 0 : index
    %c36 = arith.constant 36 : index
    %c0_38 = arith.constant 0 : index
    %39 = vector.load %arg1[%c0_37, %c36, %c0_38] : memref<1x328x128xbf16, #tpu.memory_space<vmem>>, vector<1x288x128xbf16>
    %40 = vector.shape_cast %39 : vector<1x288x128xbf16> to vector<288x128xbf16>
    %c6 = arith.constant 6 : index
    %c0_39 = arith.constant 0 : index
    %c0_40 = arith.constant 0 : index
    %41 = vector.load %arg2[%c6, %c0_39, %c0_40] : memref<9x128x128xbf16, #tpu.memory_space<vmem>>, vector<1x128x128xbf16>
    %42 = vector.shape_cast %41 : vector<1x128x128xbf16> to vector<128x128xbf16>
    %cst_41 = arith.constant dense<0.000000e+00> : vector<288x128xf32>
    %43 = tpu.matmul %40, %42, %cst_41 {dimension_numbers = #tpu.dot_dimension_numbers<[1], [0], [0], [1], [0, 0, 1, 1], [], []>} : vector<288x128xbf16>, vector<128x128xbf16>, vector<288x128xf32> -> vector<288x128xf32>
    %44 = arith.addf %38, %43 : vector<288x128xf32>
    %c0_42 = arith.constant 0 : index
    %c37 = arith.constant 37 : index
    %c0_43 = arith.constant 0 : index
    %45 = vector.load %arg1[%c0_42, %c37, %c0_43] : memref<1x328x128xbf16, #tpu.memory_space<vmem>>, vector<1x288x128xbf16>
    %46 = vector.shape_cast %45 : vector<1x288x128xbf16> to vector<288x128xbf16>
    %c7 = arith.constant 7 : index
    %c0_44 = arith.constant 0 : index
    %c0_45 = arith.constant 0 : index
    %47 = vector.load %arg2[%c7, %c0_44, %c0_45] : memref<9x128x128xbf16, #tpu.memory_space<vmem>>, vector<1x128x128xbf16>
    %48 = vector.shape_cast %47 : vector<1x128x128xbf16> to vector<128x128xbf16>
    %cst_46 = arith.constant dense<0.000000e+00> : vector<288x128xf32>
    %49 = tpu.matmul %46, %48, %cst_46 {dimension_numbers = #tpu.dot_dimension_numbers<[1], [0], [0], [1], [0, 0, 1, 1], [], []>} : vector<288x128xbf16>, vector<128x128xbf16>, vector<288x128xf32> -> vector<288x128xf32>
    %50 = arith.addf %44, %49 : vector<288x128xf32>
    %c0_47 = arith.constant 0 : index
    %c38 = arith.constant 38 : index
    %c0_48 = arith.constant 0 : index
    %51 = vector.load %arg1[%c0_47, %c38, %c0_48] : memref<1x328x128xbf16, #tpu.memory_space<vmem>>, vector<1x288x128xbf16>
    %52 = vector.shape_cast %51 : vector<1x288x128xbf16> to vector<288x128xbf16>
    %c8 = arith.constant 8 : index
    %c0_49 = arith.constant 0 : index
    %c0_50 = arith.constant 0 : index
    %53 = vector.load %arg2[%c8, %c0_49, %c0_50] : memref<9x128x128xbf16, #tpu.memory_space<vmem>>, vector<1x128x128xbf16>
    %54 = vector.shape_cast %53 : vector<1x128x128xbf16> to vector<128x128xbf16>
    %cst_51 = arith.constant dense<0.000000e+00> : vector<288x128xf32>
    %55 = tpu.matmul %52, %54, %cst_51 {dimension_numbers = #tpu.dot_dimension_numbers<[1], [0], [0], [1], [0, 0, 1, 1], [], []>} : vector<288x128xbf16>, vector<128x128xbf16>, vector<288x128xf32> -> vector<288x128xf32>
    %56 = arith.addf %50, %55 : vector<288x128xf32>
    %c0_52 = arith.constant 0 : index
    %c0_53 = arith.constant 0 : index
    %57 = vector.load %arg3[%c0_52, %c0_53] : memref<1x128xf32, #tpu.memory_space<vmem>>, vector<1x128xf32>
    %58 = vector.broadcast %57 : vector<1x128xf32> to vector<288x128xf32>
    %59 = arith.addf %56, %58 : vector<288x128xf32>
    %cst_54 = arith.constant 0.000000e+00 : f32
    %60 = vector.broadcast %cst_54 : f32 to vector<288x128xf32>
    %61 = arith.maximumf %59, %60 : vector<288x128xf32>
    %62 = tpu.iota {dimensions = array<i32: 0>} : vector<288x1xi32>
    %c18_i32 = arith.constant 18 : i32
    %c0_i32 = arith.constant 0 : i32
    %63 = arith.cmpi eq, %c18_i32, %c0_i32 : i32
    %c1_i32 = arith.constant 1 : i32
    %64 = arith.select %63, %c1_i32, %c18_i32 : i32
    %65 = vector.broadcast %64 : i32 to vector<288x1xi32>
    %66 = arith.remsi %62, %65 : vector<288x1xi32>
    %c0_i32_55 = arith.constant 0 : i32
    %67 = vector.broadcast %c0_i32_55 : i32 to vector<288x1xi32>
    %68 = arith.cmpi ne, %66, %67 : vector<288x1xi32>
    %c0_i32_56 = arith.constant 0 : i32
    %69 = vector.broadcast %c0_i32_56 : i32 to vector<288x1xi32>
    %70 = arith.cmpi slt, %66, %69 : vector<288x1xi32>
    %c0_i32_57 = arith.constant 0 : i32
    %71 = arith.cmpi slt, %64, %c0_i32_57 : i32
    %72 = vector.broadcast %71 : i1 to vector<288x1xi1>
    %73 = vector.broadcast %72 : vector<288x1xi1> to vector<288x1xi1>
    %74 = arith.xori %70, %73 : vector<288x1xi1>
    %75 = arith.andi %74, %68 : vector<288x1xi1>
    %76 = vector.broadcast %64 : i32 to vector<288x1xi32>
    %77 = arith.addi %66, %76 : vector<288x1xi32>
    %78 = arith.select %75, %77, %66 : vector<288x1xi1>, vector<288x1xi32>
    %c16_i32 = arith.constant 16 : i32
    %79 = vector.broadcast %c16_i32 : i32 to vector<288x1xi32>
    %80 = arith.cmpi slt, %78, %79 : vector<288x1xi32>
    %cst_58 = arith.constant 0.000000e+00 : f32
    %81 = vector.shape_cast %80 : vector<288x1xi1> to vector<288x1xi1>
    %82 = vector.broadcast %81 : vector<288x1xi1> to vector<288x128xi1>
    %83 = vector.broadcast %cst_58 : f32 to vector<288x128xf32>
    %84 = arith.select %82, %61, %83 : vector<288x128xi1>, vector<288x128xf32>
    %85 = arith.truncf %84 : vector<288x128xf32> to vector<288x128xbf16>
    %c24 = arith.constant 24 : index
    %c0_59 = arith.constant 0 : index
    %86 = vector.load %arg7[%c24, %c0_59] : memref<336x128xbf16, #tpu.memory_space<vmem>>, vector<288x128xbf16>
    tpu.vector_store %arg7[%c24, %c0_59], %85 {strides = array<i32>} : memref<336x128xbf16, #tpu.memory_space<vmem>>, vector<288x128xbf16>,
    %c5_60 = arith.constant 5 : index
    %c0_61 = arith.constant 0 : index
    %87 = vector.load %arg7[%c5_60, %c0_61] : memref<336x128xbf16, #tpu.memory_space<vmem>>, vector<288x128xbf16>
    %c0_62 = arith.constant 0 : index
    %c0_63 = arith.constant 0 : index
    %c0_64 = arith.constant 0 : index
    %88 = vector.load %arg4[%c0_62, %c0_63, %c0_64] : memref<9x128x128xbf16, #tpu.memory_space<vmem>>, vector<1x128x128xbf16>
    %89 = vector.shape_cast %88 : vector<1x128x128xbf16> to vector<128x128xbf16>
    %cst_65 = arith.constant dense<0.000000e+00> : vector<288x128xf32>
    %90 = tpu.matmul %87, %89, %cst_65 {dimension_numbers = #tpu.dot_dimension_numbers<[1], [0], [0], [1], [0, 0, 1, 1], [], []>} : vector<288x128xbf16>, vector<128x128xbf16>, vector<288x128xf32> -> vector<288x128xf32>
    %c6_66 = arith.constant 6 : index
    %c0_67 = arith.constant 0 : index
    %91 = vector.load %arg7[%c6_66, %c0_67] : memref<336x128xbf16, #tpu.memory_space<vmem>>, vector<288x128xbf16>
    %c1_68 = arith.constant 1 : index
    %c0_69 = arith.constant 0 : index
    %c0_70 = arith.constant 0 : index
    %92 = vector.load %arg4[%c1_68, %c0_69, %c0_70] : memref<9x128x128xbf16, #tpu.memory_space<vmem>>, vector<1x128x128xbf16>
    %93 = vector.shape_cast %92 : vector<1x128x128xbf16> to vector<128x128xbf16>
    %cst_71 = arith.constant dense<0.000000e+00> : vector<288x128xf32>
    %94 = tpu.matmul %91, %93, %cst_71 {dimension_numbers = #tpu.dot_dimension_numbers<[1], [0], [0], [1], [0, 0, 1, 1], [], []>} : vector<288x128xbf16>, vector<128x128xbf16>, vector<288x128xf32> -> vector<288x128xf32>
    %95 = arith.addf %90, %94 : vector<288x128xf32>
    %c7_72 = arith.constant 7 : index
    %c0_73 = arith.constant 0 : index
    %96 = vector.load %arg7[%c7_72, %c0_73] : memref<336x128xbf16, #tpu.memory_space<vmem>>, vector<288x128xbf16>
    %c2_74 = arith.constant 2 : index
    %c0_75 = arith.constant 0 : index
    %c0_76 = arith.constant 0 : index
    %97 = vector.load %arg4[%c2_74, %c0_75, %c0_76] : memref<9x128x128xbf16, #tpu.memory_space<vmem>>, vector<1x128x128xbf16>
    %98 = vector.shape_cast %97 : vector<1x128x128xbf16> to vector<128x128xbf16>
    %cst_77 = arith.constant dense<0.000000e+00> : vector<288x128xf32>
    %99 = tpu.matmul %96, %98, %cst_77 {dimension_numbers = #tpu.dot_dimension_numbers<[1], [0], [0], [1], [0, 0, 1, 1], [], []>} : vector<288x128xbf16>, vector<128x128xbf16>, vector<288x128xf32> -> vector<288x128xf32>
    %100 = arith.addf %95, %99 : vector<288x128xf32>
    %c23 = arith.constant 23 : index
    %c0_78 = arith.constant 0 : index
    %101 = vector.load %arg7[%c23, %c0_78] : memref<336x128xbf16, #tpu.memory_space<vmem>>, vector<288x128xbf16>
    %c3_79 = arith.constant 3 : index
    %c0_80 = arith.constant 0 : index
    %c0_81 = arith.constant 0 : index
    %102 = vector.load %arg4[%c3_79, %c0_80, %c0_81] : memref<9x128x128xbf16, #tpu.memory_space<vmem>>, vector<1x128x128xbf16>
    %103 = vector.shape_cast %102 : vector<1x128x128xbf16> to vector<128x128xbf16>
    %cst_82 = arith.constant dense<0.000000e+00> : vector<288x128xf32>
    %104 = tpu.matmul %101, %103, %cst_82 {dimension_numbers = #tpu.dot_dimension_numbers<[1], [0], [0], [1], [0, 0, 1, 1], [], []>} : vector<288x128xbf16>, vector<128x128xbf16>, vector<288x128xf32> -> vector<288x128xf32>
    %105 = arith.addf %100, %104 : vector<288x128xf32>
    %c24_83 = arith.constant 24 : index
    %c0_84 = arith.constant 0 : index
    %106 = vector.load %arg7[%c24_83, %c0_84] : memref<336x128xbf16, #tpu.memory_space<vmem>>, vector<288x128xbf16>
    %c4_85 = arith.constant 4 : index
    %c0_86 = arith.constant 0 : index
    %c0_87 = arith.constant 0 : index
    %107 = vector.load %arg4[%c4_85, %c0_86, %c0_87] : memref<9x128x128xbf16, #tpu.memory_space<vmem>>, vector<1x128x128xbf16>
    %108 = vector.shape_cast %107 : vector<1x128x128xbf16> to vector<128x128xbf16>
    %cst_88 = arith.constant dense<0.000000e+00> : vector<288x128xf32>
    %109 = tpu.matmul %106, %108, %cst_88 {dimension_numbers = #tpu.dot_dimension_numbers<[1], [0], [0], [1], [0, 0, 1, 1], [], []>} : vector<288x128xbf16>, vector<128x128xbf16>, vector<288x128xf32> -> vector<288x128xf32>
    %110 = arith.addf %105, %109 : vector<288x128xf32>
    %c25 = arith.constant 25 : index
    %c0_89 = arith.constant 0 : index
    %111 = vector.load %arg7[%c25, %c0_89] : memref<336x128xbf16, #tpu.memory_space<vmem>>, vector<288x128xbf16>
    %c5_90 = arith.constant 5 : index
    %c0_91 = arith.constant 0 : index
    %c0_92 = arith.constant 0 : index
    %112 = vector.load %arg4[%c5_90, %c0_91, %c0_92] : memref<9x128x128xbf16, #tpu.memory_space<vmem>>, vector<1x128x128xbf16>
    %113 = vector.shape_cast %112 : vector<1x128x128xbf16> to vector<128x128xbf16>
    %cst_93 = arith.constant dense<0.000000e+00> : vector<288x128xf32>
    %114 = tpu.matmul %111, %113, %cst_93 {dimension_numbers = #tpu.dot_dimension_numbers<[1], [0], [0], [1], [0, 0, 1, 1], [], []>} : vector<288x128xbf16>, vector<128x128xbf16>, vector<288x128xf32> -> vector<288x128xf32>
    %115 = arith.addf %110, %114 : vector<288x128xf32>
    %c41 = arith.constant 41 : index
    %c0_94 = arith.constant 0 : index
    %116 = vector.load %arg7[%c41, %c0_94] : memref<336x128xbf16, #tpu.memory_space<vmem>>, vector<288x128xbf16>
    %c6_95 = arith.constant 6 : index
    %c0_96 = arith.constant 0 : index
    %c0_97 = arith.constant 0 : index
    %117 = vector.load %arg4[%c6_95, %c0_96, %c0_97] : memref<9x128x128xbf16, #tpu.memory_space<vmem>>, vector<1x128x128xbf16>
    %118 = vector.shape_cast %117 : vector<1x128x128xbf16> to vector<128x128xbf16>
    %cst_98 = arith.constant dense<0.000000e+00> : vector<288x128xf32>
    %119 = tpu.matmul %116, %118, %cst_98 {dimension_numbers = #tpu.dot_dimension_numbers<[1], [0], [0], [1], [0, 0, 1, 1], [], []>} : vector<288x128xbf16>, vector<128x128xbf16>, vector<288x128xf32> -> vector<288x128xf32>
    %120 = arith.addf %115, %119 : vector<288x128xf32>
    %c42 = arith.constant 42 : index
    %c0_99 = arith.constant 0 : index
    %121 = vector.load %arg7[%c42, %c0_99] : memref<336x128xbf16, #tpu.memory_space<vmem>>, vector<288x128xbf16>
    %c7_100 = arith.constant 7 : index
    %c0_101 = arith.constant 0 : index
    %c0_102 = arith.constant 0 : index
    %122 = vector.load %arg4[%c7_100, %c0_101, %c0_102] : memref<9x128x128xbf16, #tpu.memory_space<vmem>>, vector<1x128x128xbf16>
    %123 = vector.shape_cast %122 : vector<1x128x128xbf16> to vector<128x128xbf16>
    %cst_103 = arith.constant dense<0.000000e+00> : vector<288x128xf32>
    %124 = tpu.matmul %121, %123, %cst_103 {dimension_numbers = #tpu.dot_dimension_numbers<[1], [0], [0], [1], [0, 0, 1, 1], [], []>} : vector<288x128xbf16>, vector<128x128xbf16>, vector<288x128xf32> -> vector<288x128xf32>
    %125 = arith.addf %120, %124 : vector<288x128xf32>
    %c43 = arith.constant 43 : index
    %c0_104 = arith.constant 0 : index
    %126 = vector.load %arg7[%c43, %c0_104] : memref<336x128xbf16, #tpu.memory_space<vmem>>, vector<288x128xbf16>
    %c8_105 = arith.constant 8 : index
    %c0_106 = arith.constant 0 : index
    %c0_107 = arith.constant 0 : index
    %127 = vector.load %arg4[%c8_105, %c0_106, %c0_107] : memref<9x128x128xbf16, #tpu.memory_space<vmem>>, vector<1x128x128xbf16>
    %128 = vector.shape_cast %127 : vector<1x128x128xbf16> to vector<128x128xbf16>
    %cst_108 = arith.constant dense<0.000000e+00> : vector<288x128xf32>
    %129 = tpu.matmul %126, %128, %cst_108 {dimension_numbers = #tpu.dot_dimension_numbers<[1], [0], [0], [1], [0, 0, 1, 1], [], []>} : vector<288x128xbf16>, vector<128x128xbf16>, vector<288x128xf32> -> vector<288x128xf32>
    %130 = arith.addf %125, %129 : vector<288x128xf32>
    %c0_109 = arith.constant 0 : index
    %c19_110 = arith.constant 19 : index
    %c0_111 = arith.constant 0 : index
    %131 = vector.load %arg1[%c0_109, %c19_110, %c0_111] : memref<1x328x128xbf16, #tpu.memory_space<vmem>>, vector<1x288x128xbf16>
    %132 = vector.shape_cast %131 : vector<1x288x128xbf16> to vector<288x128xbf16>
    %133 = arith.extf %132 : vector<288x128xbf16> to vector<288x128xf32>
    %c0_112 = arith.constant 0 : index
    %c0_113 = arith.constant 0 : index
    %134 = vector.load %arg5[%c0_112, %c0_113] : memref<1x128xf32, #tpu.memory_space<vmem>>, vector<1x128xf32>
    %135 = vector.broadcast %134 : vector<1x128xf32> to vector<288x128xf32>
    %136 = arith.addf %130, %135 : vector<288x128xf32>
    %137 = arith.addf %136, %133 : vector<288x128xf32>
    %cst_114 = arith.constant 0.000000e+00 : f32
    %138 = vector.broadcast %cst_114 : f32 to vector<288x128xf32>
    %139 = arith.maximumf %137, %138 : vector<288x128xf32>
    %c0_115 = arith.constant 0 : index
    %c0_116 = arith.constant 0 : index
    %c0_117 = arith.constant 0 : index
    %140 = vector.load %arg6[%c0_115, %c0_116, %c0_117] : memref<1x288x128xf32, #tpu.memory_space<vmem>>, vector<1x288x128xf32>
    %141 = vector.shape_cast %140 : vector<1x288x128xf32> to vector<288x128xf32>
    %142 = vector.shape_cast %139 : vector<288x128xf32> to vector<1x288x128xf32>
    tpu.vector_store %arg6[%c0_115, %c0_116, %c0_117], %142 {strides = array<i32>} : memref<1x288x128xf32, #tpu.memory_space<vmem>>, vector<1x288x128xf32>,
    return
  }
  func.func @transform_0(%arg0: i32) -> (i32, i32, i32) {
    %c0_i32 = arith.constant 0 : i32
    %c0_i32_0 = arith.constant 0 : i32
    %c0_i32_1 = arith.constant 0 : i32
    return %arg0, %c0_i32, %c0_i32_0 : i32, i32, i32
  }
  func.func @transform_1(%arg0: i32) -> (i32, i32, i32) {
    %c0_i32 = arith.constant 0 : i32
    %c0_i32_0 = arith.constant 0 : i32
    %c0_i32_1 = arith.constant 0 : i32
    %c0_i32_2 = arith.constant 0 : i32
    return %c0_i32, %c0_i32_0, %c0_i32_1 : i32, i32, i32
  }
  func.func @transform_2(%arg0: i32) -> (i32, i32) {
    %c0_i32 = arith.constant 0 : i32
    %c0_i32_0 = arith.constant 0 : i32
    %c0_i32_1 = arith.constant 0 : i32
    return %c0_i32, %c0_i32_0 : i32, i32
  }
  func.func @transform_3(%arg0: i32) -> (i32, i32, i32) {
    %c0_i32 = arith.constant 0 : i32
    %c0_i32_0 = arith.constant 0 : i32
    %c0_i32_1 = arith.constant 0 : i32
    %c0_i32_2 = arith.constant 0 : i32
    return %c0_i32, %c0_i32_0, %c0_i32_1 : i32, i32, i32
  }
  func.func @transform_4(%arg0: i32) -> (i32, i32) {
    %c0_i32 = arith.constant 0 : i32
    %c0_i32_0 = arith.constant 0 : i32
    %c0_i32_1 = arith.constant 0 : i32
    return %c0_i32, %c0_i32_0 : i32, i32
  }
  func.func @transform_5(%arg0: i32) -> (i32, i32, i32) {
    %c0_i32 = arith.constant 0 : i32
    %c0_i32_0 = arith.constant 0 : i32
    %c0_i32_1 = arith.constant 0 : i32
    return %arg0, %c0_i32, %c0_i32_0 : i32, i32, i32
  }
}

</mosaic_0001>

<llo_original>
// kernel: tpu_custom_call.1
$region0: #{tpu_custom_call.1}
  #allocation0 [shape = 'u32[]', space=smem, size = 0x4, offset = 0x4, fixed_abs, tag = 'smem constant byte address 0x4 - core index']
  #allocation1 [shape = 'u32[144,128]{1,0:T(1,128)}', space=vmem, size = 0x12000, scoped, tag = 'internal scratch']
  #allocation2 [shape = 'bf16[336,128]{1,0:T(8,128)(2,1)}', space=vmem, size = 0x15000, scoped, tag = 'scratch operand']
  %s0 = inlined_call_operand.hbm [shape: bf16[2,328,128], index: 0, kind: input, shape index: {}]
  %s1 = inlined_call_operand.hbm [shape: bf16[9,128,128], index: 1, kind: input, shape index: {}]
  %s2 = inlined_call_operand.vmem [shape: f32[1,128], index: 2, kind: input, shape index: {}]
  %s3 = inlined_call_operand.hbm [shape: bf16[9,128,128], index: 3, kind: input, shape index: {}]
  %s4 = inlined_call_operand.vmem [shape: f32[1,128], index: 4, kind: input, shape index: {}]
  %s5 = inlined_call_operand.hbm [shape: f32[2,288,128], index: 5, kind: output, shape index: {}]
  %s6 = sld [smem:[#allocation0]]
  $region65: #{tpu_custom_call.1} parent=0
    _
  %s8 = ssub.s32 1, %s6
  %s9 = scalar_select 0, %s8, %s6
  $region1: #{tpu_custom_call.1} parent=0
    #allocation3 [shape = 'u8[167936]{0}', space=vmem, size = 0x29000, scoped, tag = 'input window, operand 0']
    #allocation4 [shape = 's32[2]{0}', space=sflag, size = 0x8, scoped, tag = 'scoped memory for tpu_custom_call.1']
    #allocation5 [shape = 's32[2]{0}', space=sflag, size = 0x8, scoped, tag = 'scoped memory for tpu_custom_call.1']
    #allocation6 [shape = 'u8[294912]{0}', space=vmem, size = 0x48000, scoped, tag = 'input window, operand 1, single buffered']
    #allocation7 [shape = 's32[1]{0}', space=sflag, size = 0x4, scoped, tag = 'scoped memory for tpu_custom_call.1']
    #allocation8 [shape = 'u8[294912]{0}', space=vmem, size = 0x48000, scoped, tag = 'input window, operand 3, single buffered']
    #allocation9 [shape = 'u8[294912]{0}', space=vmem, size = 0x48000, scoped, tag = 'output window, operand 0']
    %10 = vsyncpa [#allocation4], 0
    %s11 = scalar_lea.sflag [#allocation4], 1
    %12 = vsyncpa %s11, 0
    %13 = vsyncpa [#allocation7], 0
    %14 = vsyncpa [#allocation5], 0
    %s15 = scalar_lea.sflag [#allocation5], 1
    %16 = vsyncpa %s15, 0
    loop: start=0, step=1, limit=4
    $region2: #{tpu_custom_call.1} parent=1 // loop_pre_header
      _
    $region3: #{tpu_custom_call.1} parent=1 // loop_header
      %s18 = sphi 0, %s22
      %p19 = scmp.ge.s32.totalorder %s18, 4
      %s28 = sphi 0, %s30
      %s31 = sphi 0, %s28
      %s32 = sphi 0, %s31
      %s48 = sphi 0, %s32
      %s52 = sphi 0, %s52
      %s54 = sphi 0, %s52
      %s55 = sphi 0, %s54
      %s69 = sphi 0, %s55
      %s73 = sphi 0, %s73
      %s75 = sphi 0, %s73
      %s76 = sphi 0, %s75
      %s90 = sphi 0, %s76
      %s94 = sphi 0, %s94
      %s96 = sphi 0, %s94
      %s97 = sphi 0, %s96
      %s111 = sphi 0, %s97
      %s115 = sphi 0, %s115
      %s117 = sphi 0, %s115
      %s118 = sphi 0, %s117
      %s132 = sphi 0, %s118
      %s138 = sphi 0, %s140
      %s141 = sphi 0, %s138
      %s142 = sphi 0, %s141
      %s158 = sphi 0, %s142
    $region4: #{tpu_custom_call.1} parent=1 // loop_header_branch
      %21 = sbr.rel (%p19) target = $region8
    $region5: #{tpu_custom_call.1} parent=1 // loop_body
      %s23 = ssub.s32 %s18, 1
      %s24 = ssub.s32 %s18, 2
      %s25 = sadd.s32 %s18, 1
      %s26 = ssub.s32 %s18, %s25
      %p27 = scmp.eq.s32.totalorder %s26, 0
      %s29 = sadd.s32 %s28, 1
      %s30 = scalar_select %p27, %s28, %s29
      %p33 = pneg %p27
      %p34 = scmp.eq.s32.totalorder %s18, 1
      %p35 = por %p33, %p34
      %p36 = scmp.ne.s32.totalorder %s28, %s31
      %p37 = scmp.eq.s32.totalorder %s18, 0
      %p38 = por %p36, %p37
      %p39 = scmp.ne.s32.totalorder %s28, %s31
      %p40 = scmp.eq.s32.totalorder %s23, 1
      %p41 = por %p39, %p40
      %p42 = scmp.ne.s32.totalorder %s31, %s32
      %p43 = scmp.eq.s32.totalorder %s23, 0
      %p44 = por %p42, %p43
      %p45 = scmp.ne.s32.totalorder %s31, %s32
      %p46 = scmp.eq.s32.totalorder %s24, 1
      %p47 = por %p45, %p46
      %p49 = scmp.ne.s32.totalorder %s32, %s48
      %p50 = scmp.eq.s32.totalorder %s24, 0
      %p51 = por %p49, %p50
      %s53 = sadd.s32 %s52, 1
      %p56 = scmp.eq.s32.totalorder %s18, 1
      %p57 = scmp.ne.s32.totalorder %s52, %s54
      %p58 = scmp.eq.s32.totalorder %s18, 0
      %p59 = por %p57, %p58
      %p60 = scmp.ne.s32.totalorder %s52, %s54
      %p61 = scmp.eq.s32.totalorder %s23, 1
      %p62 = por %p60, %p61
      %p63 = scmp.ne.s32.totalorder %s54, %s55
      %p64 = scmp.eq.s32.totalorder %s23, 0
      %p65 = por %p63, %p64
      %p66 = scmp.ne.s32.totalorder %s54, %s55
      %p67 = scmp.eq.s32.totalorder %s24, 1
      %p68 = por %p66, %p67
      %p70 = scmp.ne.s32.totalorder %s55, %s69
      %p71 = scmp.eq.s32.totalorder %s24, 0
      %p72 = por %p70, %p71
      %s74 = sadd.s32 %s73, 1
      %p77 = scmp.eq.s32.totalorder %s18, 1
      %p78 = scmp.ne.s32.totalorder %s73, %s75
      %p79 = scmp.eq.s32.totalorder %s18, 0
      %p80 = por %p78, %p79
      %p81 = scmp.ne.s32.totalorder %s73, %s75
      %p82 = scmp.eq.s32.totalorder %s23, 1
      %p83 = por %p81, %p82
      %p84 = scmp.ne.s32.totalorder %s75, %s76
      %p85 = scmp.eq.s32.totalorder %s23, 0
      %p86 = por %p84, %p85
      %p87 = scmp.ne.s32.totalorder %s75, %s76
      %p88 = scmp.eq.s32.totalorder %s24, 1
      %p89 = por %p87, %p88
      %p91 = scmp.ne.s32.totalorder %s76, %s90
      %p92 = scmp.eq.s32.totalorder %s24, 0
      %p93 = por %p91, %p92
      %s95 = sadd.s32 %s94, 1
      %p98 = scmp.eq.s32.totalorder %s18, 1
      %p99 = scmp.ne.s32.totalorder %s94, %s96
      %p100 = scmp.eq.s32.totalorder %s18, 0
      %p101 = por %p99, %p100
      %p102 = scmp.ne.s32.totalorder %s94, %s96
      %p103 = scmp.eq.s32.totalorder %s23, 1
      %p104 = por %p102, %p103
      %p105 = scmp.ne.s32.totalorder %s96, %s97
      %p106 = scmp.eq.s32.totalorder %s23, 0
      %p107 = por %p105, %p106
      %p108 = scmp.ne.s32.totalorder %s96, %s97
      %p109 = scmp.eq.s32.totalorder %s24, 1
      %p110 = por %p108, %p109
      %p112 = scmp.ne.s32.totalorder %s97, %s111
      %p113 = scmp.eq.s32.totalorder %s24, 0
      %p114 = por %p112, %p113
      %s116 = sadd.s32 %s115, 1
      %p119 = scmp.eq.s32.totalorder %s18, 1
      %p120 = scmp.ne.s32.totalorder %s115, %s117
      %p121 = scmp.eq.s32.totalorder %s18, 0
      %p122 = por %p120, %p121
      %p123 = scmp.ne.s32.totalorder %s115, %s117
      %p124 = scmp.eq.s32.totalorder %s23, 1
      %p125 = por %p123, %p124
      %p126 = scmp.ne.s32.totalorder %s117, %s118
      %p127 = scmp.eq.s32.totalorder %s23, 0
      %p128 = por %p126, %p127
      %p129 = scmp.ne.s32.totalorder %s117, %s118
      %p130 = scmp.eq.s32.totalorder %s24, 1
      %p131 = por %p129, %p130
      %p133 = scmp.ne.s32.totalorder %s118, %s132
      %p134 = scmp.eq.s32.totalorder %s24, 0
      %p135 = por %p133, %p134
      %s136 = ssub.s32 %s18, %s25
      %p137 = scmp.eq.s32.totalorder %s136, 0
      %s139 = sadd.s32 %s138, 1
      %s140 = scalar_select %p137, %s138, %s139
      %p143 = pneg %p137
      %p144 = scmp.eq.s32.totalorder %s18, 1
      %p145 = por %p143, %p144
      %p146 = scmp.ne.s32.totalorder %s138, %s141
      %p147 = scmp.eq.s32.totalorder %s18, 0
      %p148 = por %p146, %p147
      %p149 = scmp.ne.s32.totalorder %s138, %s141
      %p150 = scmp.eq.s32.totalorder %s23, 1
      %p151 = por %p149, %p150
      %p152 = scmp.ne.s32.totalorder %s141, %s142
      %p153 = scmp.eq.s32.totalorder %s23, 0
      %p154 = por %p152, %p153
      %p155 = scmp.ne.s32.totalorder %s141, %s142
      %p156 = scmp.eq.s32.totalorder %s24, 1
      %p157 = por %p155, %p156
      %p159 = scmp.ne.s32.totalorder %s142, %s158
      %p160 = scmp.eq.s32.totalorder %s24, 0
      %p161 = por %p159, %p160
      %p162 = scmp.le.s32.totalorder 1, %s18
      %p163 = scmp.lt.s32.totalorder %s18, 3
      %p164 = pnand %p162, %p163
      %p165 = pneg %p164
      // Predicated region
      $region9: #{tpu_custom_call.1} parent=5 // pred_check
        _
      $region10: #{tpu_custom_call.1} parent=5 // pred_check_branch
        %167 = sbr.rel (%p164) target = $region12
      $region11: #{tpu_custom_call.1} parent=5 // pred_region
        %s168 = ssub.s32 %s18, 1
        // Predicated region
        $region13: #{tpu_custom_call.1} parent=11 // pred_check
          %p169 = pneg %p65
        $region14: #{tpu_custom_call.1} parent=11 // pred_check_branch
          %171 = sbr.rel (%p169) target = $region16
        $region15: #{tpu_custom_call.1} parent=11 // pred_region
          %s173 = ssub.s32 9216, 9216
          %174 = vsyncadd [#allocation7], %s173
          %s175 = sshll.u32 [#allocation6], 4
          %s176 = int_to_ptr.vmem [resolvable:$true] %s175
          %181 = dma.hbm_to_vmem [thread:$0]  %s1, 9216, %s176, [#allocation7], 64, 64, 4
        $region16: #{tpu_custom_call.1} parent=11 // pred_fallthru
          _
        // Predicated region
        $region17: #{tpu_custom_call.1} parent=11 // pred_check
          %p182 = pneg %p86
        $region18: #{tpu_custom_call.1} parent=11 // pred_check_branch
          %184 = sbr.rel (%p182) target = $region20
        $region19: #{tpu_custom_call.1} parent=11 // pred_region
          _
        $region20: #{tpu_custom_call.1} parent=11 // pred_fallthru
          _
        // Predicated region
        $region21: #{tpu_custom_call.1} parent=11 // pred_check
          %p185 = pneg %p107
        $region22: #{tpu_custom_call.1} parent=11 // pred_check_branch
          %187 = sbr.rel (%p185) target = $region24
        $region23: #{tpu_custom_call.1} parent=11 // pred_region
          %s189 = ssub.s32 9216, 9216
          %190 = vsyncadd [#allocation7], %s189
          %s191 = sshll.u32 [#allocation8], 4
          %s192 = int_to_ptr.vmem [resolvable:$true] %s191
          %197 = dma.hbm_to_vmem [thread:$0]  %s3, 9216, %s192, [#allocation7], 64, 64, 4
        $region24: #{tpu_custom_call.1} parent=11 // pred_fallthru
          _
        // Predicated region
        $region25: #{tpu_custom_call.1} parent=11 // pred_check
          %p198 = pneg %p128
        $region26: #{tpu_custom_call.1} parent=11 // pred_check_branch
          %200 = sbr.rel (%p198) target = $region28
        $region27: #{tpu_custom_call.1} parent=11 // pred_region
          _
        $region28: #{tpu_custom_call.1} parent=11 // pred_fallthru
          _
      $region12: #{tpu_custom_call.1} parent=5 // pred_fallthru
        _
      %p201 = scmp.lt.s32.totalorder %s18, 2
      // Predicated region
      $region29: #{tpu_custom_call.1} parent=5 // pred_check
        %p202 = pneg %p201
      $region30: #{tpu_custom_call.1} parent=5 // pred_check_branch
        %204 = sbr.rel (%p202) target = $region32
      $region31: #{tpu_custom_call.1} parent=5 // pred_region
        // Predicated region
        $region33: #{tpu_custom_call.1} parent=31 // pred_check
          %p205 = pneg %p38
        $region34: #{tpu_custom_call.1} parent=31 // pred_check_branch
          %207 = sbr.rel (%p205) target = $region36
        $region35: #{tpu_custom_call.1} parent=31 // pred_region
          %s208 = sand.u32 %s28, 1
          %s209 = scalar_lea.sflag [#allocation4], %s208
          %s210 = sand.u32 %s28, 1
          %s211 = smul.addr %s210, 164
          %s212 = scalar_lea.vmem [#allocation3], %s211
          %s214 = ssub.s32 2624, 2624
          %215 = vsyncadd %s209, %s214
          %s216 = smul.addr %s18, 41
          %s217 = smul.addr %s216, 64
          %s218 = scalar_lea.hbm %s0, %s217
          %s219 = sshll.u32 %s212, 4
          %s220 = int_to_ptr.vmem [resolvable:$true] %s219
          %225 = dma.hbm_to_vmem [thread:$0]  %s218, 2624, %s220, %s209, 64, 64, 4
        $region36: #{tpu_custom_call.1} parent=31 // pred_fallthru
          _
      $region32: #{tpu_custom_call.1} parent=5 // pred_fallthru
        _
      %p226 = scmp.le.s32.totalorder 1, %s18
      %p227 = scmp.lt.s32.totalorder %s18, 3
      %p228 = pnand %p226, %p227
      %p229 = pneg %p228
      // Predicated region
      $region37: #{tpu_custom_call.1} parent=5 // pred_check
        _
      $region38: #{tpu_custom_call.1} parent=5 // pred_check_branch
        %231 = sbr.rel (%p228) target = $region40
      $region39: #{tpu_custom_call.1} parent=5 // pred_region
        %s232 = ssub.s32 %s18, 1
        %s233 = sand.u32 %s31, 1
        %s234 = scalar_lea.sflag [#allocation4], %s233
        %s235 = sand.u32 %s31, 1
        %s236 = smul.addr %s235, 164
        %s237 = scalar_lea.vmem [#allocation3], %s236
        // Predicated region
        $region41: #{tpu_custom_call.1} parent=39 // pred_check
          %p238 = pneg %p44
        $region42: #{tpu_custom_call.1} parent=39 // pred_check_branch
          %240 = sbr.rel (%p238) target = $region44
        $region43: #{tpu_custom_call.1} parent=39 // pred_region
          %241 = dma.done %s234, 2624
        $region44: #{tpu_custom_call.1} parent=39 // pred_fallthru
          _
        // Predicated region
        $region45: #{tpu_custom_call.1} parent=39 // pred_check
          %p242 = pneg %p65
        $region46: #{tpu_custom_call.1} parent=39 // pred_check_branch
          %244 = sbr.rel (%p242) target = $region48
        $region47: #{tpu_custom_call.1} parent=39 // pred_region
          %245 = dma.done [#allocation7], 9216
        $region48: #{tpu_custom_call.1} parent=39 // pred_fallthru
          _
        // Predicated region
        $region49: #{tpu_custom_call.1} parent=39 // pred_check
          %p246 = pneg %p107
        $region50: #{tpu_custom_call.1} parent=39 // pred_check_branch
          %248 = sbr.rel (%p246) target = $region52
        $region51: #{tpu_custom_call.1} parent=39 // pred_region
          %249 = dma.done [#allocation7], 9216
        $region52: #{tpu_custom_call.1} parent=39 // pred_fallthru
          _
        %s250 = sand.u32 %s31, 1
        %s251 = scalar_lea.sflag [#allocation4], %s250
        %s252 = sand.u32 %s31, 1
        %s253 = smul.addr %s252, 164
        %s254 = scalar_lea.vmem [#allocation3], %s253
        %p255 = pneg %p44
        %p256 = pneg %p41
        %p257 = pneg %p65
        %p258 = pneg %p62
        %p259 = pneg %p86
        %p260 = pneg %p83
        %p261 = pneg %p107
        %p262 = pneg %p104
        %p263 = pneg %p128
        %p264 = pneg %p125
        %p265 = pneg %p154
        %p266 = pneg %p151
        %s267 = sand.u32 %s141, 1
        %s268 = scalar_lea.sflag [#allocation5], %s267
        %s269 = sand.u32 %s141, 1
        %s270 = smul.addr %s269, 288
        %s271 = scalar_lea.vmem [#allocation9], %s270
        %273 = vst [vmem:[#allocation2] sm:$0xf] 0
        %274 = vst [vmem:[#allocation2 + $0x4] sm:$0xf] 0
        %275 = vst [vmem:[#allocation2 + $0x8] sm:$0xf] 0
        %276 = vst [vmem:[#allocation2 + $0x9c] sm:$0xf] 0
        %277 = vst [vmem:[#allocation2 + $0xa0] sm:$0xf] 0
        %278 = vst [vmem:[#allocation2 + $0xa4] sm:$0xf] 0
        %v279 = vld [vmem:[%s237] sm:$0xf]
        %v280 = vld [vmem:[%s237 + $0x4] sm:$0xf]
        %v281 = vld [vmem:[%s237 + $0x8] sm:$0xf]
        %v282 = vld [vmem:[%s237 + $0xc] sm:$0xf]
        %v283 = vld [vmem:[%s237 + $0x10] sm:$0xf]
        %v284 = vld [vmem:[%s237 + $0x14] sm:$0xf]
        %v285 = vld [vmem:[%s237 + $0x18] sm:$0xf]
        %v286 = vld [vmem:[%s237 + $0x1c] sm:$0xf]
        %v287 = vld [vmem:[%s237 + $0x20] sm:$0xf]
        %v288 = vld [vmem:[%s237 + $0x24] sm:$0xf]
        %v289 = vld [vmem:[%s237 + $0x28] sm:$0xf]
        %v290 = vld [vmem:[%s237 + $0x2c] sm:$0xf]
        %v291 = vld [vmem:[%s237 + $0x30] sm:$0xf]
        %v292 = vld [vmem:[%s237 + $0x34] sm:$0xf]
        %v293 = vld [vmem:[%s237 + $0x38] sm:$0xf]
        %v294 = vld [vmem:[%s237 + $0x3c] sm:$0xf]
        %v295 = vld [vmem:[%s237 + $0x40] sm:$0xf]
        %v296 = vld [vmem:[%s237 + $0x44] sm:$0xf]
        %v297 = vld [vmem:[%s237 + $0x48] sm:$0xf]
        %v298 = vld [vmem:[%s237 + $0x4c] sm:$0xf]
        %v299 = vld [vmem:[%s237 + $0x50] sm:$0xf]
        %v300 = vld [vmem:[%s237 + $0x54] sm:$0xf]
        %v301 = vld [vmem:[%s237 + $0x58] sm:$0xf]
        %v302 = vld [vmem:[%s237 + $0x5c] sm:$0xf]
        %v303 = vld [vmem:[%s237 + $0x60] sm:$0xf]
        %v304 = vld [vmem:[%s237 + $0x64] sm:$0xf]
        %v305 = vld [vmem:[%s237 + $0x68] sm:$0xf]
        %v306 = vld [vmem:[%s237 + $0x6c] sm:$0xf]
        %v307 = vld [vmem:[%s237 + $0x70] sm:$0xf]
        %v308 = vld [vmem:[%s237 + $0x74] sm:$0xf]
        %v309 = vld [vmem:[%s237 + $0x78] sm:$0xf]
        %v310 = vld [vmem:[%s237 + $0x7c] sm:$0xf]
        %v311 = vld [vmem:[%s237 + $0x80] sm:$0xf]
        %v312 = vld [vmem:[%s237 + $0x84] sm:$0xf]
        %v313 = vld [vmem:[%s237 + $0x88] sm:$0xf]
        %v314 = vld [vmem:[%s237 + $0x8c] sm:$0xf]
        %v315 = vld [vmem:[#allocation6] sm:$0xf]
        %v316 = vld [vmem:[#allocation6 + $0x4] sm:$0xf]
        %v317 = vld [vmem:[#allocation6 + $0x8] sm:$0xf]
        %v318 = vld [vmem:[#allocation6 + $0xc] sm:$0xf]
        %v319 = vld [vmem:[#allocation6 + $0x10] sm:$0xf]
        %v320 = vld [vmem:[#allocation6 + $0x14] sm:$0xf]
        %v321 = vld [vmem:[#allocation6 + $0x18] sm:$0xf]
        %v322 = vld [vmem:[#allocation6 + $0x1c] sm:$0xf]
        %v323 = vld [vmem:[#allocation6 + $0x20] sm:$0xf]
        %v324 = vld [vmem:[#allocation6 + $0x24] sm:$0xf]
        %v325 = vld [vmem:[#allocation6 + $0x28] sm:$0xf]
        %v326 = vld [vmem:[#allocation6 + $0x2c] sm:$0xf]
        %v327 = vld [vmem:[#allocation6 + $0x30] sm:$0xf]
        %v328 = vld [vmem:[#allocation6 + $0x34] sm:$0xf]
        %v329 = vld [vmem:[#allocation6 + $0x38] sm:$0xf]
        %v330 = vld [vmem:[#allocation6 + $0x3c] sm:$0xf]
        %v331 = vld [vmem:[%s237 + $0x90] sm:$0x1]
        %s332 = scalar_lea.vmem [#allocation6], 64
        %v333 = vld [vmem:[%s332] sm:$0xf]
        %v334 = vld [vmem:[%s332 + $0x4] sm:$0xf]
        %v335 = vld [vmem:[%s332 + $0x8] sm:$0xf]
        %v336 = vld [vmem:[%s332 + $0xc] sm:$0xf]
        %v337 = vld [vmem:[%s332 + $0x10] sm:$0xf]
        %v338 = vld [vmem:[%s332 + $0x14] sm:$0xf]
        %v339 = vld [vmem:[%s332 + $0x18] sm:$0xf]
        %v340 = vld [vmem:[%s332 + $0x1c] sm:$0xf]
        %v341 = vld [vmem:[%s332 + $0x20] sm:$0xf]
        %v342 = vld [vmem:[%s332 + $0x24] sm:$0xf]
        %v343 = vld [vmem:[%s332 + $0x28] sm:$0xf]
        %v344 = vld [vmem:[%s332 + $0x2c] sm:$0xf]
        %v345 = vld [vmem:[%s332 + $0x30] sm:$0xf]
        %v346 = vld [vmem:[%s332 + $0x34] sm:$0xf]
        %v347 = vld [vmem:[%s332 + $0x38] sm:$0xf]
        %v348 = vld [vmem:[%s332 + $0x3c] sm:$0xf]
        %v386 = vunpack.c.l.b16 %v279
        %v387 = vunpack.c.l.b16 %v280
        %v388 = vunpack.c.l.b16 %v281
        %v389 = vunpack.c.l.b16 %v282
        %v390 = vunpack.c.l.b16 %v283
        %v391 = vunpack.c.l.b16 %v284
        %v392 = vunpack.c.l.b16 %v285
        %v393 = vunpack.c.l.b16 %v286
        %v394 = vunpack.c.l.b16 %v287
        %v395 = vunpack.c.l.b16 %v288
        %v396 = vunpack.c.l.b16 %v289
        %v397 = vunpack.c.l.b16 %v290
        %v398 = vunpack.c.l.b16 %v291
        %v399 = vunpack.c.l.b16 %v292
        %v400 = vunpack.c.l.b16 %v293
        %v401 = vunpack.c.l.b16 %v294
        %v402 = vunpack.c.l.b16 %v295
        %v403 = vunpack.c.l.b16 %v296
        %v404 = vunpack.c.l.b16 %v297
        %v405 = vunpack.c.l.b16 %v298
        %v406 = vunpack.c.l.b16 %v299
        %v407 = vunpack.c.l.b16 %v300
        %v408 = vunpack.c.l.b16 %v301
        %v409 = vunpack.c.l.b16 %v302
        %v410 = vunpack.c.l.b16 %v303
        %v411 = vunpack.c.l.b16 %v304
        %v412 = vunpack.c.l.b16 %v305
        %v413 = vunpack.c.l.b16 %v306
        %v414 = vunpack.c.l.b16 %v307
        %v415 = vunpack.c.l.b16 %v308
        %v416 = vunpack.c.l.b16 %v309
        %v417 = vunpack.c.l.b16 %v310
        %v418 = vunpack.c.l.b16 %v311
        %v419 = vunpack.c.l.b16 %v312
        %v420 = vunpack.c.l.b16 %v313
        %v421 = vunpack.c.l.b16 %v314
        %v422 = vunpack.c.l.b16 %v331
        %v423 = vpack.c.b16 %v387, %v386
        %v424 = vpack.c.b16 %v389, %v388
        %v425 = vpack.c.b16 %v391, %v390
        %v426 = vpack.c.b16 %v393, %v392
        %v427 = vpack.c.b16 %v395, %v394
        %v428 = vpack.c.b16 %v397, %v396
        %v429 = vpack.c.b16 %v399, %v398
        %v430 = vpack.c.b16 %v401, %v400
        %v431 = vpack.c.b16 %v403, %v402
        %v432 = vpack.c.b16 %v405, %v404
        %v433 = vpack.c.b16 %v407, %v406
        %v434 = vpack.c.b16 %v409, %v408
        %v435 = vpack.c.b16 %v411, %v410
        %v436 = vpack.c.b16 %v413, %v412
        %v437 = vpack.c.b16 %v415, %v414
        %v438 = vpack.c.b16 %v417, %v416
        %v439 = vpack.c.b16 %v419, %v418
        %v440 = vpack.c.b16 %v421, %v420
        %v441 = vpack.c.b16 %v422, %v422
        %vm442 = vsmask.f32 7424
        %v444 = vshrl.u32 %v423, 16
        %v446 = vshll.u32 %v423, 16
        %v448 = vrot.slane %v446, 1
        %v449 = vor.u32 %v444, %v448
        %v451 = vshll.u32 %v424, 16
        %v453 = vrot.slane %v451, 1
        %v454 = vsel %vm442, %v449, %v453
        %v455 = vshrl.u32 %v424, 16
        %v457 = vor.u32 %v455, %v453
        %v459 = vshll.u32 %v425, 16
        %v461 = vrot.slane %v459, 1
        %v462 = vsel %vm442, %v457, %v461
        %v463 = vshrl.u32 %v425, 16
        %v465 = vor.u32 %v463, %v461
        %v467 = vshll.u32 %v426, 16
        %v469 = vrot.slane %v467, 1
        %v470 = vsel %vm442, %v465, %v469
        %v471 = vshrl.u32 %v426, 16
        %v473 = vor.u32 %v471, %v469
        %v475 = vshll.u32 %v427, 16
        %v477 = vrot.slane %v475, 1
        %v478 = vsel %vm442, %v473, %v477
        %v479 = vshrl.u32 %v427, 16
        %v481 = vor.u32 %v479, %v477
        %v483 = vshll.u32 %v428, 16
        %v485 = vrot.slane %v483, 1
        %v486 = vsel %vm442, %v481, %v485
        %v487 = vshrl.u32 %v428, 16
        %v489 = vor.u32 %v487, %v485
        %v491 = vshll.u32 %v429, 16
        %v493 = vrot.slane %v491, 1
        %v494 = vsel %vm442, %v489, %v493
        %v495 = vshrl.u32 %v429, 16
        %v497 = vor.u32 %v495, %v493
        %v499 = vshll.u32 %v430, 16
        %v501 = vrot.slane %v499, 1
        %v502 = vsel %vm442, %v497, %v501
        %v503 = vshrl.u32 %v430, 16
        %v505 = vor.u32 %v503, %v501
        %v507 = vshll.u32 %v431, 16
        %v509 = vrot.slane %v507, 1
        %v510 = vsel %vm442, %v505, %v509
        %v511 = vshrl.u32 %v431, 16
        %v513 = vor.u32 %v511, %v509
        %v515 = vshll.u32 %v432, 16
        %v517 = vrot.slane %v515, 1
        %v518 = vsel %vm442, %v513, %v517
        %v519 = vshrl.u32 %v432, 16
        %v521 = vor.u32 %v519, %v517
        %v523 = vshll.u32 %v433, 16
        %v525 = vrot.slane %v523, 1
        %v526 = vsel %vm442, %v521, %v525
        %v527 = vshrl.u32 %v433, 16
        %v529 = vor.u32 %v527, %v525
        %v531 = vshll.u32 %v434, 16
        %v533 = vrot.slane %v531, 1
        %v534 = vsel %vm442, %v529, %v533
        %v535 = vshrl.u32 %v434, 16
        %v537 = vor.u32 %v535, %v533
        %v539 = vshll.u32 %v435, 16
        %v541 = vrot.slane %v539, 1
        %v542 = vsel %vm442, %v537, %v541
        %v543 = vshrl.u32 %v435, 16
        %v545 = vor.u32 %v543, %v541
        %v547 = vshll.u32 %v436, 16
        %v549 = vrot.slane %v547, 1
        %v550 = vsel %vm442, %v545, %v549
        %v551 = vshrl.u32 %v436, 16
        %v553 = vor.u32 %v551, %v549
        %v555 = vshll.u32 %v437, 16
        %v557 = vrot.slane %v555, 1
        %v558 = vsel %vm442, %v553, %v557
        %v559 = vshrl.u32 %v437, 16
        %v561 = vor.u32 %v559, %v557
        %v563 = vshll.u32 %v438, 16
        %v565 = vrot.slane %v563, 1
        %v566 = vsel %vm442, %v561, %v565
        %v567 = vshrl.u32 %v438, 16
        %v569 = vor.u32 %v567, %v565
        %v571 = vshll.u32 %v439, 16
        %v573 = vrot.slane %v571, 1
        %v574 = vsel %vm442, %v569, %v573
        %v575 = vshrl.u32 %v439, 16
        %v577 = vor.u32 %v575, %v573
        %v579 = vshll.u32 %v440, 16
        %v581 = vrot.slane %v579, 1
        %v582 = vsel %vm442, %v577, %v581
        %v583 = vshrl.u32 %v440, 16
        %v585 = vor.u32 %v583, %v581
        %v587 = vshll.u32 %v441, 16
        %v589 = vrot.slane %v587, 1
        %v590 = vsel %vm442, %v585, %v589
        %v625 = vunpack.c.l.b16 %v333
        %v626 = vunpack.c.l.b16 %v334
        %v627 = vunpack.c.l.b16 %v335
        %v628 = vunpack.c.l.b16 %v336
        %v629 = vunpack.c.l.b16 %v337
        %v630 = vunpack.c.l.b16 %v338
        %v631 = vunpack.c.l.b16 %v339
        %v632 = vunpack.c.l.b16 %v340
        %v633 = vunpack.c.l.b16 %v341
        %v634 = vunpack.c.l.b16 %v342
        %v635 = vunpack.c.l.b16 %v343
        %v636 = vunpack.c.l.b16 %v344
        %v637 = vunpack.c.l.b16 %v345
        %v638 = vunpack.c.l.b16 %v346
        %v639 = vunpack.c.l.b16 %v347
        %v640 = vunpack.c.l.b16 %v348
        %v641 = vpack.c.b16 %v626, %v625
        %v642 = vpack.c.b16 %v628, %v627
        %v643 = vpack.c.b16 %v630, %v629
        %v644 = vpack.c.b16 %v632, %v631
        %v645 = vpack.c.b16 %v634, %v633
        %v646 = vpack.c.b16 %v636, %v635
        %v647 = vpack.c.b16 %v638, %v637
        %v648 = vpack.c.b16 %v640, %v639
        %657 = vmatprep.subr.bf16.mxu0 0
        %658 = vmatpush1.bf16.msra.mxu0 %v648
        %659 = vmatprep.subr.bf16.mxu0 0
        %660 = vmatpush1.bf16.msra.mxu0 %v647
        %661 = vmatprep.subr.bf16.mxu0 0
        %662 = vmatpush1.bf16.msra.mxu0 %v646
        %663 = vmatprep.subr.bf16.mxu0 0
        %664 = vmatpush1.bf16.msra.mxu0 %v645
        %665 = vmatprep.subr.bf16.mxu0 0
        %666 = vmatpush1.bf16.msra.mxu0 %v644
        %667 = vmatprep.subr.bf16.mxu0 0
        %668 = vmatpush1.bf16.msra.mxu0 %v643
        %669 = vmatprep.subr.bf16.mxu0 0
        %670 = vmatpush1.bf16.msra.mxu0 %v642
        %671 = vmatprep.subr.bf16.mxu0 0
        %672 = vmatpush1.bf16.msra.mxu0 %v641
        %673 = vmatprep.subr.bf16.mxu0 0
        %674 = vmatpush2.bf16.msra.mxu0 0
        %675 = vmatprep.subr.bf16.mxu0 0
        %676 = vmatpush2.bf16.msra.mxu0 0
        %677 = vmatprep.subr.bf16.mxu0 0
        %678 = vmatpush2.bf16.msra.mxu0 0
        %679 = vmatprep.subr.bf16.mxu0 0
        %680 = vmatpush2.bf16.msra.mxu0 0
        %681 = vmatprep.subr.bf16.mxu0 0
        %682 = vmatpush2.bf16.msra.mxu0 0
        %683 = vmatprep.subr.bf16.mxu0 0
        %684 = vmatpush2.bf16.msra.mxu0 0
        %685 = vmatprep.subr.bf16.mxu0 0
        %686 = vmatpush2.bf16.msra.mxu0 0
        %687 = vmatprep.subr.bf16.mxu0 0
        %688 = vmatpush2.bf16.msra.mxu0 0
        %689 = vmatprep.mubr.bf16.mxu0 0
        %690 = vmatmul.mubr.bf16.gmra.mxu0 %v454
        %v691 = vpop.f32.mrf.mxu0
        %v692 = vadd.f32 0.0, %v691
        %v693 = vpop.f32.mrf.mxu0
        %v694 = vpop.f32.mrf.mxu0
        %v695 = vadd.f32 0.0, %v694
        %v696 = vpop.f32.mrf.mxu0
        %697 = vmatprep.mubr.bf16.mxu0 0
        %698 = vmatmul.mubr.bf16.gmra.mxu0 %v462
        %v699 = vpop.f32.mrf.mxu0
        %v700 = vadd.f32 0.0, %v699
        %v701 = vpop.f32.mrf.mxu0
        %v702 = vpop.f32.mrf.mxu0
        %v703 = vadd.f32 0.0, %v702
        %v704 = vpop.f32.mrf.mxu0
        %705 = vmatprep.mubr.bf16.mxu0 0
        %706 = vmatmul.mubr.bf16.gmra.mxu0 %v470
        %v707 = vpop.f32.mrf.mxu0
        %v708 = vadd.f32 0.0, %v707
        %v709 = vpop.f32.mrf.mxu0
        %v710 = vpop.f32.mrf.mxu0
        %v711 = vadd.f32 0.0, %v710
        %v712 = vpop.f32.mrf.mxu0
        %713 = vmatprep.mubr.bf16.mxu0 0
        %714 = vmatmul.mubr.bf16.gmra.mxu0 %v478
        %v715 = vpop.f32.mrf.mxu0
        %v716 = vadd.f32 0.0, %v715
        %v717 = vpop.f32.mrf.mxu0
        %v718 = vpop.f32.mrf.mxu0
        %v719 = vadd.f32 0.0, %v718
        %v720 = vpop.f32.mrf.mxu0
        %721 = vmatprep.mubr.bf16.mxu0 0
        %722 = vmatmul.mubr.bf16.gmra.mxu0 %v486
        %v723 = vpop.f32.mrf.mxu0
        %v724 = vadd.f32 0.0, %v723
        %v725 = vpop.f32.mrf.mxu0
        %v726 = vpop.f32.mrf.mxu0
        %v727 = vadd.f32 0.0, %v726
        %v728 = vpop.f32.mrf.mxu0
        %729 = vmatprep.mubr.bf16.mxu0 0
        %730 = vmatmul.mubr.bf16.gmra.mxu0 %v494
        %v731 = vpop.f32.mrf.mxu0
        %v732 = vadd.f32 0.0, %v731
        %v733 = vpop.f32.mrf.mxu0
        %v734 = vpop.f32.mrf.mxu0
        %v735 = vadd.f32 0.0, %v734
        %v736 = vpop.f32.mrf.mxu0
        %737 = vmatprep.mubr.bf16.mxu0 0
        %738 = vmatmul.mubr.bf16.gmra.mxu0 %v502
        %v739 = vpop.f32.mrf.mxu0
        %v740 = vadd.f32 0.0, %v739
        %v741 = vpop.f32.mrf.mxu0
        %v742 = vpop.f32.mrf.mxu0
        %v743 = vadd.f32 0.0, %v742
        %v744 = vpop.f32.mrf.mxu0
        %745 = vmatprep.mubr.bf16.mxu0 0
        %746 = vmatmul.mubr.bf16.gmra.mxu0 %v510
        %v747 = vpop.f32.mrf.mxu0
        %v748 = vadd.f32 0.0, %v747
        %v749 = vpop.f32.mrf.mxu0
        %v750 = vpop.f32.mrf.mxu0
        %v751 = vadd.f32 0.0, %v750
        %v752 = vpop.f32.mrf.mxu0
        %753 = vmatprep.mubr.bf16.mxu0 0
        %754 = vmatmul.mubr.bf16.gmra.mxu0 %v518
        %v755 = vpop.f32.mrf.mxu0
        %v756 = vadd.f32 0.0, %v755
        %v757 = vpop.f32.mrf.mxu0
        %v758 = vpop.f32.mrf.mxu0
        %v759 = vadd.f32 0.0, %v758
        %v760 = vpop.f32.mrf.mxu0
        %761 = vmatprep.mubr.bf16.mxu0 0
        %762 = vmatmul.mubr.bf16.gmra.mxu0 %v526
        %v763 = vpop.f32.mrf.mxu0
        %v764 = vadd.f32 0.0, %v763
        %v765 = vpop.f32.mrf.mxu0
        %v766 = vpop.f32.mrf.mxu0
        %v767 = vadd.f32 0.0, %v766
        %v768 = vpop.f32.mrf.mxu0
        %769 = vmatprep.mubr.bf16.mxu0 0
        %770 = vmatmul.mubr.bf16.gmra.mxu0 %v534
        %v771 = vpop.f32.mrf.mxu0
        %v772 = vadd.f32 0.0, %v771
        %v773 = vpop.f32.mrf.mxu0
        %v774 = vpop.f32.mrf.mxu0
        %v775 = vadd.f32 0.0, %v774
        %v776 = vpop.f32.mrf.mxu0
        %777 = vmatprep.mubr.bf16.mxu0 0
        %778 = vmatmul.mubr.bf16.gmra.mxu0 %v542
        %v779 = vpop.f32.mrf.mxu0
        %v780 = vadd.f32 0.0, %v779
        %v781 = vpop.f32.mrf.mxu0
        %v782 = vpop.f32.mrf.mxu0
        %v783 = vadd.f32 0.0, %v782
        %v784 = vpop.f32.mrf.mxu0
        %785 = vmatprep.mubr.bf16.mxu0 0
        %786 = vmatmul.mubr.bf16.gmra.mxu0 %v550
        %v787 = vpop.f32.mrf.mxu0
        %v788 = vadd.f32 0.0, %v787
        %v789 = vpop.f32.mrf.mxu0
        %v790 = vpop.f32.mrf.mxu0
        %v791 = vadd.f32 0.0, %v790
        %v792 = vpop.f32.mrf.mxu0
        %793 = vmatprep.mubr.bf16.mxu0 0
        %794 = vmatmul.mubr.bf16.gmra.mxu0 %v558
        %v795 = vpop.f32.mrf.mxu0
        %v796 = vadd.f32 0.0, %v795
        %v797 = vpop.f32.mrf.mxu0
        %v798 = vpop.f32.mrf.mxu0
        %v799 = vadd.f32 0.0, %v798
        %v800 = vpop.f32.mrf.mxu0
        %801 = vmatprep.mubr.bf16.mxu0 0
        %802 = vmatmul.mubr.bf16.gmra.mxu0 %v566
        %v803 = vpop.f32.mrf.mxu0
        %v804 = vadd.f32 0.0, %v803
        %v805 = vpop.f32.mrf.mxu0
        %v806 = vpop.f32.mrf.mxu0
        %v807 = vadd.f32 0.0, %v806
        %v808 = vpop.f32.mrf.mxu0
        %809 = vmatprep.mubr.bf16.mxu0 0
        %810 = vmatmul.mubr.bf16.gmra.mxu0 %v574
        %v811 = vpop.f32.mrf.mxu0
        %v812 = vadd.f32 0.0, %v811
        %v813 = vpop.f32.mrf.mxu0
        %v814 = vpop.f32.mrf.mxu0
        %v815 = vadd.f32 0.0, %v814
        %v816 = vpop.f32.mrf.mxu0
        %817 = vmatprep.mubr.bf16.mxu0 0
        %818 = vmatmul.mubr.bf16.gmra.mxu0 %v582
        %v819 = vpop.f32.mrf.mxu0
        %v820 = vadd.f32 0.0, %v819
        %v821 = vpop.f32.mrf.mxu0
        %v822 = vpop.f32.mrf.mxu0
        %v823 = vadd.f32 0.0, %v822
        %v824 = vpop.f32.mrf.mxu0
        %825 = vmatprep.mubr.bf16.mxu0 0
        %826 = vmatmul.mubr.bf16.gmra.mxu0 %v590
        %v827 = vpop.f32.mrf.mxu0
        %v828 = vadd.f32 0.0, %v827
        %v829 = vpop.f32.mrf.mxu0
        %v830 = vpop.f32.mrf.mxu0
        %v831 = vadd.f32 0.0, %v830
        %v832 = vpop.f32.mrf.mxu0
        %833 = vdwg.mxu0
        %v868 = vunpack.c.l.b16 %v315
        %v869 = vunpack.c.l.b16 %v316
        %v870 = vunpack.c.l.b16 %v317
        %v871 = vunpack.c.l.b16 %v318
        %v872 = vunpack.c.l.b16 %v319
        %v873 = vunpack.c.l.b16 %v320
        %v874 = vunpack.c.l.b16 %v321
        %v875 = vunpack.c.l.b16 %v322
        %v876 = vunpack.c.l.b16 %v323
        %v877 = vunpack.c.l.b16 %v324
        %v878 = vunpack.c.l.b16 %v325
        %v879 = vunpack.c.l.b16 %v326
        %v880 = vunpack.c.l.b16 %v327
        %v881 = vunpack.c.l.b16 %v328
        %v882 = vunpack.c.l.b16 %v329
        %v883 = vunpack.c.l.b16 %v330
        %v884 = vpack.c.b16 %v869, %v868
        %v885 = vpack.c.b16 %v871, %v870
        %v886 = vpack.c.b16 %v873, %v872
        %v887 = vpack.c.b16 %v875, %v874
        %v888 = vpack.c.b16 %v877, %v876
        %v889 = vpack.c.b16 %v879, %v878
        %v890 = vpack.c.b16 %v881, %v880
        %v891 = vpack.c.b16 %v883, %v882
        %900 = vmatprep.subr.bf16.mxu0 0
        %901 = vmatpush1.bf16.msra.mxu0 %v891
        %902 = vmatprep.subr.bf16.mxu0 0
        %903 = vmatpush1.bf16.msra.mxu0 %v890
        %904 = vmatprep.subr.bf16.mxu0 0
        %905 = vmatpush1.bf16.msra.mxu0 %v889
        %906 = vmatprep.subr.bf16.mxu0 0
        %907 = vmatpush1.bf16.msra.mxu0 %v888
        %908 = vmatprep.subr.bf16.mxu0 0
        %909 = vmatpush1.bf16.msra.mxu0 %v887
        %910 = vmatprep.subr.bf16.mxu0 0
        %911 = vmatpush1.bf16.msra.mxu0 %v886
        %912 = vmatprep.subr.bf16.mxu0 0
        %913 = vmatpush1.bf16.msra.mxu0 %v885
        %914 = vmatprep.subr.bf16.mxu0 0
        %915 = vmatpush1.bf16.msra.mxu0 %v884
        %916 = vmatprep.subr.bf16.mxu0 0
        %917 = vmatpush2.bf16.msra.mxu0 0
        %918 = vmatprep.subr.bf16.mxu0 0
        %919 = vmatpush2.bf16.msra.mxu0 0
        %920 = vmatprep.subr.bf16.mxu0 0
        %921 = vmatpush2.bf16.msra.mxu0 0
        %922 = vmatprep.subr.bf16.mxu0 0
        %923 = vmatpush2.bf16.msra.mxu0 0
        %924 = vmatprep.subr.bf16.mxu0 0
        %925 = vmatpush2.bf16.msra.mxu0 0
        %926 = vmatprep.subr.bf16.mxu0 0
        %927 = vmatpush2.bf16.msra.mxu0 0
        %928 = vmatprep.subr.bf16.mxu0 0
        %929 = vmatpush2.bf16.msra.mxu0 0
        %930 = vmatprep.subr.bf16.mxu0 0
        %931 = vmatpush2.bf16.msra.mxu0 0
        %932 = vmatprep.mubr.bf16.mxu0 0
        %933 = vmatmul.mubr.bf16.gmra.mxu0 %v423
        %v934 = vpop.f32.mrf.mxu0
        %v935 = vadd.f32 %v692, %v934
        %v936 = vpop.f32.mrf.mxu0
        %v937 = vpop.f32.mrf.mxu0
        %v938 = vadd.f32 %v695, %v937
        %v939 = vpop.f32.mrf.mxu0
        %940 = vmatprep.mubr.bf16.mxu0 0
        %941 = vmatmul.mubr.bf16.gmra.mxu0 %v424
        %v942 = vpop.f32.mrf.mxu0
        %v943 = vadd.f32 %v700, %v942
        %v944 = vpop.f32.mrf.mxu0
        %v945 = vpop.f32.mrf.mxu0
        %v946 = vadd.f32 %v703, %v945
        %v947 = vpop.f32.mrf.mxu0
        %948 = vmatprep.mubr.bf16.mxu0 0
        %949 = vmatmul.mubr.bf16.gmra.mxu0 %v425
        %v950 = vpop.f32.mrf.mxu0
        %v951 = vadd.f32 %v708, %v950
        %v952 = vpop.f32.mrf.mxu0
        %v953 = vpop.f32.mrf.mxu0
        %v954 = vadd.f32 %v711, %v953
        %v955 = vpop.f32.mrf.mxu0
        %956 = vmatprep.mubr.bf16.mxu0 0
        %957 = vmatmul.mubr.bf16.gmra.mxu0 %v426
        %v958 = vpop.f32.mrf.mxu0
        %v959 = vadd.f32 %v716, %v958
        %v960 = vpop.f32.mrf.mxu0
        %v961 = vpop.f32.mrf.mxu0
        %v962 = vadd.f32 %v719, %v961
        %v963 = vpop.f32.mrf.mxu0
        %964 = vmatprep.mubr.bf16.mxu0 0
        %965 = vmatmul.mubr.bf16.gmra.mxu0 %v427
        %v966 = vpop.f32.mrf.mxu0
        %v967 = vadd.f32 %v724, %v966
        %v968 = vpop.f32.mrf.mxu0
        %v969 = vpop.f32.mrf.mxu0
        %v970 = vadd.f32 %v727, %v969
        %v971 = vpop.f32.mrf.mxu0
        %972 = vmatprep.mubr.bf16.mxu0 0
        %973 = vmatmul.mubr.bf16.gmra.mxu0 %v428
        %v974 = vpop.f32.mrf.mxu0
        %v975 = vadd.f32 %v732, %v974
        %v976 = vpop.f32.mrf.mxu0
        %v977 = vpop.f32.mrf.mxu0
        %v978 = vadd.f32 %v735, %v977
        %v979 = vpop.f32.mrf.mxu0
        %980 = vmatprep.mubr.bf16.mxu0 0
        %981 = vmatmul.mubr.bf16.gmra.mxu0 %v429
        %v982 = vpop.f32.mrf.mxu0
        %v983 = vadd.f32 %v740, %v982
        %v984 = vpop.f32.mrf.mxu0
        %v985 = vpop.f32.mrf.mxu0
        %v986 = vadd.f32 %v743, %v985
        %v987 = vpop.f32.mrf.mxu0
        %988 = vmatprep.mubr.bf16.mxu0 0
        %989 = vmatmul.mubr.bf16.gmra.mxu0 %v430
        %v990 = vpop.f32.mrf.mxu0
        %v991 = vadd.f32 %v748, %v990
        %v992 = vpop.f32.mrf.mxu0
        %v993 = vpop.f32.mrf.mxu0
        %v994 = vadd.f32 %v751, %v993
        %v995 = vpop.f32.mrf.mxu0
        %996 = vmatprep.mubr.bf16.mxu0 0
        %997 = vmatmul.mubr.bf16.gmra.mxu0 %v431
        %v998 = vpop.f32.mrf.mxu0
        %v999 = vadd.f32 %v756, %v998
        %v1000 = vpop.f32.mrf.mxu0
        %v1001 = vpop.f32.mrf.mxu0
        %v1002 = vadd.f32 %v759, %v1001
        %v1003 = vpop.f32.mrf.mxu0
        %1004 = vmatprep.mubr.bf16.mxu0 0
        %1005 = vmatmul.mubr.bf16.gmra.mxu0 %v432
        %v1006 = vpop.f32.mrf.mxu0
        %v1007 = vadd.f32 %v764, %v1006
        %v1008 = vpop.f32.mrf.mxu0
        %v1009 = vpop.f32.mrf.mxu0
        %v1010 = vadd.f32 %v767, %v1009
        %v1011 = vpop.f32.mrf.mxu0
        %1012 = vmatprep.mubr.bf16.mxu0 0
        %1013 = vmatmul.mubr.bf16.gmra.mxu0 %v433
        %v1014 = vpop.f32.mrf.mxu0
        %v1015 = vadd.f32 %v772, %v1014
        %v1016 = vpop.f32.mrf.mxu0
        %v1017 = vpop.f32.mrf.mxu0
        %v1018 = vadd.f32 %v775, %v1017
        %v1019 = vpop.f32.mrf.mxu0
        %1020 = vmatprep.mubr.bf16.mxu0 0
        %1021 = vmatmul.mubr.bf16.gmra.mxu0 %v434
        %v1022 = vpop.f32.mrf.mxu0
        %v1023 = vadd.f32 %v780, %v1022
        %v1024 = vpop.f32.mrf.mxu0
        %v1025 = vpop.f32.mrf.mxu0
        %v1026 = vadd.f32 %v783, %v1025
        %v1027 = vpop.f32.mrf.mxu0
        %1028 = vmatprep.mubr.bf16.mxu0 0
        %1029 = vmatmul.mubr.bf16.gmra.mxu0 %v435
        %v1030 = vpop.f32.mrf.mxu0
        %v1031 = vadd.f32 %v788, %v1030
        %v1032 = vpop.f32.mrf.mxu0
        %v1033 = vpop.f32.mrf.mxu0
        %v1034 = vadd.f32 %v791, %v1033
        %v1035 = vpop.f32.mrf.mxu0
        %1036 = vmatprep.mubr.bf16.mxu0 0
        %1037 = vmatmul.mubr.bf16.gmra.mxu0 %v436
        %v1038 = vpop.f32.mrf.mxu0
        %v1039 = vadd.f32 %v796, %v1038
        %v1040 = vpop.f32.mrf.mxu0
        %v1041 = vpop.f32.mrf.mxu0
        %v1042 = vadd.f32 %v799, %v1041
        %v1043 = vpop.f32.mrf.mxu0
        %1044 = vmatprep.mubr.bf16.mxu0 0
        %1045 = vmatmul.mubr.bf16.gmra.mxu0 %v437
        %v1046 = vpop.f32.mrf.mxu0
        %v1047 = vadd.f32 %v804, %v1046
        %v1048 = vpop.f32.mrf.mxu0
        %v1049 = vpop.f32.mrf.mxu0
        %v1050 = vadd.f32 %v807, %v1049
        %v1051 = vpop.f32.mrf.mxu0
        %1052 = vmatprep.mubr.bf16.mxu0 0
        %1053 = vmatmul.mubr.bf16.gmra.mxu0 %v438
        %v1054 = vpop.f32.mrf.mxu0
        %v1055 = vadd.f32 %v812, %v1054
        %v1056 = vpop.f32.mrf.mxu0
        %v1057 = vpop.f32.mrf.mxu0
        %v1058 = vadd.f32 %v815, %v1057
        %v1059 = vpop.f32.mrf.mxu0
        %1060 = vmatprep.mubr.bf16.mxu0 0
        %1061 = vmatmul.mubr.bf16.gmra.mxu0 %v439
        %v1062 = vpop.f32.mrf.mxu0
        %v1063 = vadd.f32 %v820, %v1062
        %v1064 = vpop.f32.mrf.mxu0
        %v1065 = vpop.f32.mrf.mxu0
        %v1066 = vadd.f32 %v823, %v1065
        %v1067 = vpop.f32.mrf.mxu0
        %1068 = vmatprep.mubr.bf16.mxu0 0
        %1069 = vmatmul.mubr.bf16.gmra.mxu0 %v440
        %v1070 = vpop.f32.mrf.mxu0
        %v1071 = vadd.f32 %v828, %v1070
        %v1072 = vpop.f32.mrf.mxu0
        %v1073 = vpop.f32.mrf.mxu0
        %v1074 = vadd.f32 %v831, %v1073
        %v1075 = vpop.f32.mrf.mxu0
        %1076 = vdwg.mxu0
        %v1077 = vld [vmem:[%s237] sm:$0xe]
        %s1078 = scalar_lea.vmem [#allocation6], 128
        %v1079 = vld [vmem:[%s1078] sm:$0xf]
        %v1080 = vld [vmem:[%s1078 + $0x4] sm:$0xf]
        %v1081 = vld [vmem:[%s1078 + $0x8] sm:$0xf]
        %v1082 = vld [vmem:[%s1078 + $0xc] sm:$0xf]
        %v1083 = vld [vmem:[%s1078 + $0x10] sm:$0xf]
        %v1084 = vld [vmem:[%s1078 + $0x14] sm:$0xf]
        %v1085 = vld [vmem:[%s1078 + $0x18] sm:$0xf]
        %v1086 = vld [vmem:[%s1078 + $0x1c] sm:$0xf]
        %v1087 = vld [vmem:[%s1078 + $0x20] sm:$0xf]
        %v1088 = vld [vmem:[%s1078 + $0x24] sm:$0xf]
        %v1089 = vld [vmem:[%s1078 + $0x28] sm:$0xf]
        %v1090 = vld [vmem:[%s1078 + $0x2c] sm:$0xf]
        %v1091 = vld [vmem:[%s1078 + $0x30] sm:$0xf]
        %v1092 = vld [vmem:[%s1078 + $0x34] sm:$0xf]
        %v1093 = vld [vmem:[%s1078 + $0x38] sm:$0xf]
        %v1094 = vld [vmem:[%s1078 + $0x3c] sm:$0xf]
        %v1096 = vunpack.c.l.b16 %v1077
        %v1097 = vpack.c.b16 %v387, %v1096
        %vm1098 = vcmask 1046528
        %v1099 = vrot.slane %v1097, 1
        %v1100 = vrot.slane %v424, 1
        %v1101 = vsel %vm1098, %v1099, %v1100
        %v1102 = vrot.slane %v425, 1
        %v1103 = vsel %vm1098, %v1100, %v1102
        %v1104 = vrot.slane %v426, 1
        %v1105 = vsel %vm1098, %v1102, %v1104
        %v1106 = vrot.slane %v427, 1
        %v1107 = vsel %vm1098, %v1104, %v1106
        %v1108 = vrot.slane %v428, 1
        %v1109 = vsel %vm1098, %v1106, %v1108
        %v1110 = vrot.slane %v429, 1
        %v1111 = vsel %vm1098, %v1108, %v1110
        %v1112 = vrot.slane %v430, 1
        %v1113 = vsel %vm1098, %v1110, %v1112
        %v1114 = vrot.slane %v431, 1
        %v1115 = vsel %vm1098, %v1112, %v1114
        %v1116 = vrot.slane %v432, 1
        %v1117 = vsel %vm1098, %v1114, %v1116
        %v1118 = vrot.slane %v433, 1
        %v1119 = vsel %vm1098, %v1116, %v1118
        %v1120 = vrot.slane %v434, 1
        %v1121 = vsel %vm1098, %v1118, %v1120
        %v1122 = vrot.slane %v435, 1
        %v1123 = vsel %vm1098, %v1120, %v1122
        %v1124 = vrot.slane %v436, 1
        %v1125 = vsel %vm1098, %v1122, %v1124
        %v1126 = vrot.slane %v437, 1
        %v1127 = vsel %vm1098, %v1124, %v1126
        %v1128 = vrot.slane %v438, 1
        %v1129 = vsel %vm1098, %v1126, %v1128
        %v1130 = vrot.slane %v439, 1
        %v1131 = vsel %vm1098, %v1128, %v1130
        %v1132 = vrot.slane %v440, 1
        %v1133 = vsel %vm1098, %v1130, %v1132
        %v1134 = vrot.slane %v441, 1
        %v1135 = vsel %vm1098, %v1132, %v1134
        %v1170 = vunpack.c.l.b16 %v1079
        %v1171 = vunpack.c.l.b16 %v1080
        %v1172 = vunpack.c.l.b16 %v1081
        %v1173 = vunpack.c.l.b16 %v1082
        %v1174 = vunpack.c.l.b16 %v1083
        %v1175 = vunpack.c.l.b16 %v1084
        %v1176 = vunpack.c.l.b16 %v1085
        %v1177 = vunpack.c.l.b16 %v1086
        %v1178 = vunpack.c.l.b16 %v1087
        %v1179 = vunpack.c.l.b16 %v1088
        %v1180 = vunpack.c.l.b16 %v1089
        %v1181 = vunpack.c.l.b16 %v1090
        %v1182 = vunpack.c.l.b16 %v1091
        %v1183 = vunpack.c.l.b16 %v1092
        %v1184 = vunpack.c.l.b16 %v1093
        %v1185 = vunpack.c.l.b16 %v1094
        %v1186 = vpack.c.b16 %v1171, %v1170
        %v1187 = vpack.c.b16 %v1173, %v1172
        %v1188 = vpack.c.b16 %v1175, %v1174
        %v1189 = vpack.c.b16 %v1177, %v1176
        %v1190 = vpack.c.b16 %v1179, %v1178
        %v1191 = vpack.c.b16 %v1181, %v1180
        %v1192 = vpack.c.b16 %v1183, %v1182
        %v1193 = vpack.c.b16 %v1185, %v1184
        %1202 = vmatprep.subr.bf16.mxu0 0
        %1203 = vmatpush1.bf16.msra.mxu0 %v1193
        %1204 = vmatprep.subr.bf16.mxu0 0
        %1205 = vmatpush1.bf16.msra.mxu0 %v1192
        %1206 = vmatprep.subr.bf16.mxu0 0
        %1207 = vmatpush1.bf16.msra.mxu0 %v1191
        %1208 = vmatprep.subr.bf16.mxu0 0
        %1209 = vmatpush1.bf16.msra.mxu0 %v1190
        %1210 = vmatprep.subr.bf16.mxu0 0
        %1211 = vmatpush1.bf16.msra.mxu0 %v1189
        %1212 = vmatprep.subr.bf16.mxu0 0
        %1213 = vmatpush1.bf16.msra.mxu0 %v1188
        %1214 = vmatprep.subr.bf16.mxu0 0
        %1215 = vmatpush1.bf16.msra.mxu0 %v1187
        %1216 = vmatprep.subr.bf16.mxu0 0
        %1217 = vmatpush1.bf16.msra.mxu0 %v1186
        %1218 = vmatprep.subr.bf16.mxu0 0
        %1219 = vmatpush2.bf16.msra.mxu0 0
        %1220 = vmatprep.subr.bf16.mxu0 0
        %1221 = vmatpush2.bf16.msra.mxu0 0
        %1222 = vmatprep.subr.bf16.mxu0 0
        %1223 = vmatpush2.bf16.msra.mxu0 0
        %1224 = vmatprep.subr.bf16.mxu0 0
        %1225 = vmatpush2.bf16.msra.mxu0 0
        %1226 = vmatprep.subr.bf16.mxu0 0
        %1227 = vmatpush2.bf16.msra.mxu0 0
        %1228 = vmatprep.subr.bf16.mxu0 0
        %1229 = vmatpush2.bf16.msra.mxu0 0
        %1230 = vmatprep.subr.bf16.mxu0 0
        %1231 = vmatpush2.bf16.msra.mxu0 0
        %1232 = vmatprep.subr.bf16.mxu0 0
        %1233 = vmatpush2.bf16.msra.mxu0 0
        %1234 = vmatprep.mubr.bf16.mxu0 0
        %1235 = vmatmul.mubr.bf16.gmra.mxu0 %v1101
        %v1236 = vpop.f32.mrf.mxu0
        %v1237 = vadd.f32 0.0, %v1236
        %v1238 = vpop.f32.mrf.mxu0
        %v1239 = vpop.f32.mrf.mxu0
        %v1240 = vadd.f32 0.0, %v1239
        %v1241 = vpop.f32.mrf.mxu0
        %1242 = vmatprep.mubr.bf16.mxu0 0
        %1243 = vmatmul.mubr.bf16.gmra.mxu0 %v1103
        %v1244 = vpop.f32.mrf.mxu0
        %v1245 = vadd.f32 0.0, %v1244
        %v1246 = vpop.f32.mrf.mxu0
        %v1247 = vpop.f32.mrf.mxu0
        %v1248 = vadd.f32 0.0, %v1247
        %v1249 = vpop.f32.mrf.mxu0
        %1250 = vmatprep.mubr.bf16.mxu0 0
        %1251 = vmatmul.mubr.bf16.gmra.mxu0 %v1105
        %v1252 = vpop.f32.mrf.mxu0
        %v1253 = vadd.f32 0.0, %v1252
        %v1254 = vpop.f32.mrf.mxu0
        %v1255 = vpop.f32.mrf.mxu0
        %v1256 = vadd.f32 0.0, %v1255
        %v1257 = vpop.f32.mrf.mxu0
        %1258 = vmatprep.mubr.bf16.mxu0 0
        %1259 = vmatmul.mubr.bf16.gmra.mxu0 %v1107
        %v1260 = vpop.f32.mrf.mxu0
        %v1261 = vadd.f32 0.0, %v1260
        %v1262 = vpop.f32.mrf.mxu0
        %v1263 = vpop.f32.mrf.mxu0
        %v1264 = vadd.f32 0.0, %v1263
        %v1265 = vpop.f32.mrf.mxu0
        %1266 = vmatprep.mubr.bf16.mxu0 0
        %1267 = vmatmul.mubr.bf16.gmra.mxu0 %v1109
        %v1268 = vpop.f32.mrf.mxu0
        %v1269 = vadd.f32 0.0, %v1268
        %v1270 = vpop.f32.mrf.mxu0
        %v1271 = vpop.f32.mrf.mxu0
        %v1272 = vadd.f32 0.0, %v1271
        %v1273 = vpop.f32.mrf.mxu0
        %1274 = vmatprep.mubr.bf16.mxu0 0
        %1275 = vmatmul.mubr.bf16.gmra.mxu0 %v1111
        %v1276 = vpop.f32.mrf.mxu0
        %v1277 = vadd.f32 0.0, %v1276
        %v1278 = vpop.f32.mrf.mxu0
        %v1279 = vpop.f32.mrf.mxu0
        %v1280 = vadd.f32 0.0, %v1279
        %v1281 = vpop.f32.mrf.mxu0
        %1282 = vmatprep.mubr.bf16.mxu0 0
        %1283 = vmatmul.mubr.bf16.gmra.mxu0 %v1113
        %v1284 = vpop.f32.mrf.mxu0
        %v1285 = vadd.f32 0.0, %v1284
        %v1286 = vpop.f32.mrf.mxu0
        %v1287 = vpop.f32.mrf.mxu0
        %v1288 = vadd.f32 0.0, %v1287
        %v1289 = vpop.f32.mrf.mxu0
        %1290 = vmatprep.mubr.bf16.mxu0 0
        %1291 = vmatmul.mubr.bf16.gmra.mxu0 %v1115
        %v1292 = vpop.f32.mrf.mxu0
        %v1293 = vadd.f32 0.0, %v1292
        %v1294 = vpop.f32.mrf.mxu0
        %v1295 = vpop.f32.mrf.mxu0
        %v1296 = vadd.f32 0.0, %v1295
        %v1297 = vpop.f32.mrf.mxu0
        %1298 = vmatprep.mubr.bf16.mxu0 0
        %1299 = vmatmul.mubr.bf16.gmra.mxu0 %v1117
        %v1300 = vpop.f32.mrf.mxu0
        %v1301 = vadd.f32 0.0, %v1300
        %v1302 = vpop.f32.mrf.mxu0
        %v1303 = vpop.f32.mrf.mxu0
        %v1304 = vadd.f32 0.0, %v1303
        %v1305 = vpop.f32.mrf.mxu0
        %1306 = vmatprep.mubr.bf16.mxu0 0
        %1307 = vmatmul.mubr.bf16.gmra.mxu0 %v1119
        %v1308 = vpop.f32.mrf.mxu0
        %v1309 = vadd.f32 0.0, %v1308
        %v1310 = vpop.f32.mrf.mxu0
        %v1311 = vpop.f32.mrf.mxu0
        %v1312 = vadd.f32 0.0, %v1311
        %v1313 = vpop.f32.mrf.mxu0
        %1314 = vmatprep.mubr.bf16.mxu0 0
        %1315 = vmatmul.mubr.bf16.gmra.mxu0 %v1121
        %v1316 = vpop.f32.mrf.mxu0
        %v1317 = vadd.f32 0.0, %v1316
        %v1318 = vpop.f32.mrf.mxu0
        %v1319 = vpop.f32.mrf.mxu0
        %v1320 = vadd.f32 0.0, %v1319
        %v1321 = vpop.f32.mrf.mxu0
        %1322 = vmatprep.mubr.bf16.mxu0 0
        %1323 = vmatmul.mubr.bf16.gmra.mxu0 %v1123
        %v1324 = vpop.f32.mrf.mxu0
        %v1325 = vadd.f32 0.0, %v1324
        %v1326 = vpop.f32.mrf.mxu0
        %v1327 = vpop.f32.mrf.mxu0
        %v1328 = vadd.f32 0.0, %v1327
        %v1329 = vpop.f32.mrf.mxu0
        %1330 = vmatprep.mubr.bf16.mxu0 0
        %1331 = vmatmul.mubr.bf16.gmra.mxu0 %v1125
        %v1332 = vpop.f32.mrf.mxu0
        %v1333 = vadd.f32 0.0, %v1332
        %v1334 = vpop.f32.mrf.mxu0
        %v1335 = vpop.f32.mrf.mxu0
        %v1336 = vadd.f32 0.0, %v1335
        %v1337 = vpop.f32.mrf.mxu0
        %1338 = vmatprep.mubr.bf16.mxu0 0
        %1339 = vmatmul.mubr.bf16.gmra.mxu0 %v1127
        %v1340 = vpop.f32.mrf.mxu0
        %v1341 = vadd.f32 0.0, %v1340
        %v1342 = vpop.f32.mrf.mxu0
        %v1343 = vpop.f32.mrf.mxu0
        %v1344 = vadd.f32 0.0, %v1343
        %v1345 = vpop.f32.mrf.mxu0
        %1346 = vmatprep.mubr.bf16.mxu0 0
        %1347 = vmatmul.mubr.bf16.gmra.mxu0 %v1129
        %v1348 = vpop.f32.mrf.mxu0
        %v1349 = vadd.f32 0.0, %v1348
        %v1350 = vpop.f32.mrf.mxu0
        %v1351 = vpop.f32.mrf.mxu0
        %v1352 = vadd.f32 0.0, %v1351
        %v1353 = vpop.f32.mrf.mxu0
        %1354 = vmatprep.mubr.bf16.mxu0 0
        %1355 = vmatmul.mubr.bf16.gmra.mxu0 %v1131
        %v1356 = vpop.f32.mrf.mxu0
        %v1357 = vadd.f32 0.0, %v1356
        %v1358 = vpop.f32.mrf.mxu0
        %v1359 = vpop.f32.mrf.mxu0
        %v1360 = vadd.f32 0.0, %v1359
        %v1361 = vpop.f32.mrf.mxu0
        %1362 = vmatprep.mubr.bf16.mxu0 0
        %1363 = vmatmul.mubr.bf16.gmra.mxu0 %v1133
        %v1364 = vpop.f32.mrf.mxu0
        %v1365 = vadd.f32 0.0, %v1364
        %v1366 = vpop.f32.mrf.mxu0
        %v1367 = vpop.f32.mrf.mxu0
        %v1368 = vadd.f32 0.0, %v1367
        %v1369 = vpop.f32.mrf.mxu0
        %1370 = vmatprep.mubr.bf16.mxu0 0
        %1371 = vmatmul.mubr.bf16.gmra.mxu0 %v1135
        %v1372 = vpop.f32.mrf.mxu0
        %v1373 = vadd.f32 0.0, %v1372
        %v1374 = vpop.f32.mrf.mxu0
        %v1375 = vpop.f32.mrf.mxu0
        %v1376 = vadd.f32 0.0, %v1375
        %v1377 = vpop.f32.mrf.mxu0
        %1378 = vdwg.mxu0
        %v1379 = vadd.f32 %v935, %v1237
        %v1380 = vadd.f32 %v938, %v1240
        %v1381 = vadd.f32 %v943, %v1245
        %v1382 = vadd.f32 %v946, %v1248
        %v1383 = vadd.f32 %v951, %v1253
        %v1384 = vadd.f32 %v954, %v1256
        %v1385 = vadd.f32 %v959, %v1261
        %v1386 = vadd.f32 %v962, %v1264
        %v1387 = vadd.f32 %v967, %v1269
        %v1388 = vadd.f32 %v970, %v1272
        %v1389 = vadd.f32 %v975, %v1277
        %v1390 = vadd.f32 %v978, %v1280
        %v1391 = vadd.f32 %v983, %v1285
        %v1392 = vadd.f32 %v986, %v1288
        %v1393 = vadd.f32 %v991, %v1293
        %v1394 = vadd.f32 %v994, %v1296
        %v1395 = vadd.f32 %v999, %v1301
        %v1396 = vadd.f32 %v1002, %v1304
        %v1397 = vadd.f32 %v1007, %v1309
        %v1398 = vadd.f32 %v1010, %v1312
        %v1399 = vadd.f32 %v1015, %v1317
        %v1400 = vadd.f32 %v1018, %v1320
        %v1401 = vadd.f32 %v1023, %v1325
        %v1402 = vadd.f32 %v1026, %v1328
        %v1403 = vadd.f32 %v1031, %v1333
        %v1404 = vadd.f32 %v1034, %v1336
        %v1405 = vadd.f32 %v1039, %v1341
        %v1406 = vadd.f32 %v1042, %v1344
        %v1407 = vadd.f32 %v1047, %v1349
        %v1408 = vadd.f32 %v1050, %v1352
        %v1409 = vadd.f32 %v1055, %v1357
        %v1410 = vadd.f32 %v1058, %v1360
        %v1411 = vadd.f32 %v1063, %v1365
        %v1412 = vadd.f32 %v1066, %v1368
        %v1413 = vadd.f32 %v1071, %v1373
        %v1414 = vadd.f32 %v1074, %v1376
        %v1415 = vld [vmem:[%s237 + $0x8] sm:$0xe]
        %v1416 = vld [vmem:[%s237 + $0xc] sm:$0xf]
        %v1417 = vld [vmem:[%s237 + $0x10] sm:$0xf]
        %v1418 = vld [vmem:[%s237 + $0x14] sm:$0xf]
        %v1419 = vld [vmem:[%s237 + $0x18] sm:$0xf]
        %v1420 = vld [vmem:[%s237 + $0x1c] sm:$0xf]
        %v1421 = vld [vmem:[%s237 + $0x20] sm:$0xf]
        %v1422 = vld [vmem:[%s237 + $0x24] sm:$0xf]
        %v1423 = vld [vmem:[%s237 + $0x28] sm:$0xf]
        %v1424 = vld [vmem:[%s237 + $0x2c] sm:$0xf]
        %v1425 = vld [vmem:[%s237 + $0x30] sm:$0xf]
        %v1426 = vld [vmem:[%s237 + $0x34] sm:$0xf]
        %v1427 = vld [vmem:[%s237 + $0x38] sm:$0xf]
        %v1428 = vld [vmem:[%s237 + $0x3c] sm:$0xf]
        %v1429 = vld [vmem:[%s237 + $0x40] sm:$0xf]
        %v1430 = vld [vmem:[%s237 + $0x44] sm:$0xf]
        %v1431 = vld [vmem:[%s237 + $0x48] sm:$0xf]
        %v1432 = vld [vmem:[%s237 + $0x4c] sm:$0xf]
        %v1433 = vld [vmem:[%s237 + $0x50] sm:$0xf]
        %v1434 = vld [vmem:[%s237 + $0x54] sm:$0xf]
        %v1435 = vld [vmem:[%s237 + $0x58] sm:$0xf]
        %v1436 = vld [vmem:[%s237 + $0x5c] sm:$0xf]
        %v1437 = vld [vmem:[%s237 + $0x60] sm:$0xf]
        %v1438 = vld [vmem:[%s237 + $0x64] sm:$0xf]
        %v1439 = vld [vmem:[%s237 + $0x68] sm:$0xf]
        %v1440 = vld [vmem:[%s237 + $0x6c] sm:$0xf]
        %v1441 = vld [vmem:[%s237 + $0x70] sm:$0xf]
        %v1442 = vld [vmem:[%s237 + $0x74] sm:$0xf]
        %v1443 = vld [vmem:[%s237 + $0x78] sm:$0xf]
        %v1444 = vld [vmem:[%s237 + $0x7c] sm:$0xf]
        %v1445 = vld [vmem:[%s237 + $0x80] sm:$0xf]
        %v1446 = vld [vmem:[%s237 + $0x84] sm:$0xf]
        %v1447 = vld [vmem:[%s237 + $0x88] sm:$0xf]
        %v1448 = vld [vmem:[%s237 + $0x8c] sm:$0xf]
        %v1449 = vld [vmem:[%s237 + $0x90] sm:$0xf]
        %v1450 = vld [vmem:[%s237 + $0x94] sm:$0xf]
        %v1451 = vld [vmem:[%s237 + $0x98] sm:$0x1]
        %s1452 = scalar_lea.vmem [#allocation6], 192
        %v1453 = vld [vmem:[%s1452] sm:$0xf]
        %v1454 = vld [vmem:[%s1452 + $0x4] sm:$0xf]
        %v1455 = vld [vmem:[%s1452 + $0x8] sm:$0xf]
        %v1456 = vld [vmem:[%s1452 + $0xc] sm:$0xf]
        %v1457 = vld [vmem:[%s1452 + $0x10] sm:$0xf]
        %v1458 = vld [vmem:[%s1452 + $0x14] sm:$0xf]
        %v1459 = vld [vmem:[%s1452 + $0x18] sm:$0xf]
        %v1460 = vld [vmem:[%s1452 + $0x1c] sm:$0xf]
        %v1461 = vld [vmem:[%s1452 + $0x20] sm:$0xf]
        %v1462 = vld [vmem:[%s1452 + $0x24] sm:$0xf]
        %v1463 = vld [vmem:[%s1452 + $0x28] sm:$0xf]
        %v1464 = vld [vmem:[%s1452 + $0x2c] sm:$0xf]
        %v1465 = vld [vmem:[%s1452 + $0x30] sm:$0xf]
        %v1466 = vld [vmem:[%s1452 + $0x34] sm:$0xf]
        %v1467 = vld [vmem:[%s1452 + $0x38] sm:$0xf]
        %v1468 = vld [vmem:[%s1452 + $0x3c] sm:$0xf]
        %v1506 = vunpack.c.l.b16 %v1415
        %v1507 = vunpack.c.l.b16 %v1416
        %v1508 = vunpack.c.l.b16 %v1417
        %v1509 = vunpack.c.l.b16 %v1418
        %v1510 = vunpack.c.l.b16 %v1419
        %v1511 = vunpack.c.l.b16 %v1420
        %v1512 = vunpack.c.l.b16 %v1421
        %v1513 = vunpack.c.l.b16 %v1422
        %v1514 = vunpack.c.l.b16 %v1423
        %v1515 = vunpack.c.l.b16 %v1424
        %v1516 = vunpack.c.l.b16 %v1425
        %v1517 = vunpack.c.l.b16 %v1426
        %v1518 = vunpack.c.l.b16 %v1427
        %v1519 = vunpack.c.l.b16 %v1428
        %v1520 = vunpack.c.l.b16 %v1429
        %v1521 = vunpack.c.l.b16 %v1430
        %v1522 = vunpack.c.l.b16 %v1431
        %v1523 = vunpack.c.l.b16 %v1432
        %v1524 = vunpack.c.l.b16 %v1433
        %v1525 = vunpack.c.l.b16 %v1434
        %v1526 = vunpack.c.l.b16 %v1435
        %v1527 = vunpack.c.l.b16 %v1436
        %v1528 = vunpack.c.l.b16 %v1437
        %v1529 = vunpack.c.l.b16 %v1438
        %v1530 = vunpack.c.l.b16 %v1439
        %v1531 = vunpack.c.l.b16 %v1440
        %v1532 = vunpack.c.l.b16 %v1441
        %v1533 = vunpack.c.l.b16 %v1442
        %v1534 = vunpack.c.l.b16 %v1443
        %v1535 = vunpack.c.l.b16 %v1444
        %v1536 = vunpack.c.l.b16 %v1445
        %v1537 = vunpack.c.l.b16 %v1446
        %v1538 = vunpack.c.l.b16 %v1447
        %v1539 = vunpack.c.l.b16 %v1448
        %v1540 = vunpack.c.l.b16 %v1449
        %v1541 = vunpack.c.l.b16 %v1450
        %v1542 = vunpack.c.l.b16 %v1451
        %v1543 = vpack.c.b16 %v1507, %v1506
        %v1544 = vpack.c.b16 %v1509, %v1508
        %v1545 = vpack.c.b16 %v1511, %v1510
        %v1546 = vpack.c.b16 %v1513, %v1512
        %v1547 = vpack.c.b16 %v1515, %v1514
        %v1548 = vpack.c.b16 %v1517, %v1516
        %v1549 = vpack.c.b16 %v1519, %v1518
        %v1550 = vpack.c.b16 %v1521, %v1520
        %v1551 = vpack.c.b16 %v1523, %v1522
        %v1552 = vpack.c.b16 %v1525, %v1524
        %v1553 = vpack.c.b16 %v1527, %v1526
        %v1554 = vpack.c.b16 %v1529, %v1528
        %v1555 = vpack.c.b16 %v1531, %v1530
        %v1556 = vpack.c.b16 %v1533, %v1532
        %v1557 = vpack.c.b16 %v1535, %v1534
        %v1558 = vpack.c.b16 %v1537, %v1536
        %v1559 = vpack.c.b16 %v1539, %v1538
        %v1560 = vpack.c.b16 %v1541, %v1540
        %v1561 = vpack.c.b16 %v1542, %v1542
        %v1562 = vrot.slane %v1543, 1
        %v1563 = vrot.slane %v1544, 1
        %v1564 = vsel %vm1098, %v1562, %v1563
        %v1565 = vrot.slane %v1545, 1
        %v1566 = vsel %vm1098, %v1563, %v1565
        %v1567 = vrot.slane %v1546, 1
        %v1568 = vsel %vm1098, %v1565, %v1567
        %v1569 = vrot.slane %v1547, 1
        %v1570 = vsel %vm1098, %v1567, %v1569
        %v1571 = vrot.slane %v1548, 1
        %v1572 = vsel %vm1098, %v1569, %v1571
        %v1573 = vrot.slane %v1549, 1
        %v1574 = vsel %vm1098, %v1571, %v1573
        %v1575 = vrot.slane %v1550, 1
        %v1576 = vsel %vm1098, %v1573, %v1575
        %v1577 = vrot.slane %v1551, 1
        %v1578 = vsel %vm1098, %v1575, %v1577
        %v1579 = vrot.slane %v1552, 1
        %v1580 = vsel %vm1098, %v1577, %v1579
        %v1581 = vrot.slane %v1553, 1
        %v1582 = vsel %vm1098, %v1579, %v1581
        %v1583 = vrot.slane %v1554, 1
        %v1584 = vsel %vm1098, %v1581, %v1583
        %v1585 = vrot.slane %v1555, 1
        %v1586 = vsel %vm1098, %v1583, %v1585
        %v1587 = vrot.slane %v1556, 1
        %v1588 = vsel %vm1098, %v1585, %v1587
        %v1589 = vrot.slane %v1557, 1
        %v1590 = vsel %vm1098, %v1587, %v1589
        %v1591 = vrot.slane %v1558, 1
        %v1592 = vsel %vm1098, %v1589, %v1591
        %v1593 = vrot.slane %v1559, 1
        %v1594 = vsel %vm1098, %v1591, %v1593
        %v1595 = vrot.slane %v1560, 1
        %v1596 = vsel %vm1098, %v1593, %v1595
        %v1597 = vrot.slane %v1561, 1
        %v1598 = vsel %vm1098, %v1595, %v1597
        %v1633 = vunpack.c.l.b16 %v1453
        %v1634 = vunpack.c.l.b16 %v1454
        %v1635 = vunpack.c.l.b16 %v1455
        %v1636 = vunpack.c.l.b16 %v1456
        %v1637 = vunpack.c.l.b16 %v1457
        %v1638 = vunpack.c.l.b16 %v1458
        %v1639 = vunpack.c.l.b16 %v1459
        %v1640 = vunpack.c.l.b16 %v1460
        %v1641 = vunpack.c.l.b16 %v1461
        %v1642 = vunpack.c.l.b16 %v1462
        %v1643 = vunpack.c.l.b16 %v1463
        %v1644 = vunpack.c.l.b16 %v1464
        %v1645 = vunpack.c.l.b16 %v1465
        %v1646 = vunpack.c.l.b16 %v1466
        %v1647 = vunpack.c.l.b16 %v1467
        %v1648 = vunpack.c.l.b16 %v1468
        %v1649 = vpack.c.b16 %v1634, %v1633
        %v1650 = vpack.c.b16 %v1636, %v1635
        %v1651 = vpack.c.b16 %v1638, %v1637
        %v1652 = vpack.c.b16 %v1640, %v1639
        %v1653 = vpack.c.b16 %v1642, %v1641
        %v1654 = vpack.c.b16 %v1644, %v1643
        %v1655 = vpack.c.b16 %v1646, %v1645
        %v1656 = vpack.c.b16 %v1648, %v1647
        %1665 = vmatprep.subr.bf16.mxu0 0
        %1666 = vmatpush1.bf16.msra.mxu0 %v1656
        %1667 = vmatprep.subr.bf16.mxu0 0
        %1668 = vmatpush1.bf16.msra.mxu0 %v1655
        %1669 = vmatprep.subr.bf16.mxu0 0
        %1670 = vmatpush1.bf16.msra.mxu0 %v1654
        %1671 = vmatprep.subr.bf16.mxu0 0
        %1672 = vmatpush1.bf16.msra.mxu0 %v1653
        %1673 = vmatprep.subr.bf16.mxu0 0
        %1674 = vmatpush1.bf16.msra.mxu0 %v1652
        %1675 = vmatprep.subr.bf16.mxu0 0
        %1676 = vmatpush1.bf16.msra.mxu0 %v1651
        %1677 = vmatprep.subr.bf16.mxu0 0
        %1678 = vmatpush1.bf16.msra.mxu0 %v1650
        %1679 = vmatprep.subr.bf16.mxu0 0
        %1680 = vmatpush1.bf16.msra.mxu0 %v1649
        %1681 = vmatprep.subr.bf16.mxu0 0
        %1682 = vmatpush2.bf16.msra.mxu0 0
        %1683 = vmatprep.subr.bf16.mxu0 0
        %1684 = vmatpush2.bf16.msra.mxu0 0
        %1685 = vmatprep.subr.bf16.mxu0 0
        %1686 = vmatpush2.bf16.msra.mxu0 0
        %1687 = vmatprep.subr.bf16.mxu0 0
        %1688 = vmatpush2.bf16.msra.mxu0 0
        %1689 = vmatprep.subr.bf16.mxu0 0
        %1690 = vmatpush2.bf16.msra.mxu0 0
        %1691 = vmatprep.subr.bf16.mxu0 0
        %1692 = vmatpush2.bf16.msra.mxu0 0
        %1693 = vmatprep.subr.bf16.mxu0 0
        %1694 = vmatpush2.bf16.msra.mxu0 0
        %1695 = vmatprep.subr.bf16.mxu0 0
        %1696 = vmatpush2.bf16.msra.mxu0 0
        %1697 = vmatprep.mubr.bf16.mxu0 0
        %1698 = vmatmul.mubr.bf16.gmra.mxu0 %v1564
        %v1699 = vpop.f32.mrf.mxu0
        %v1700 = vadd.f32 0.0, %v1699
        %v1701 = vpop.f32.mrf.mxu0
        %v1702 = vpop.f32.mrf.mxu0
        %v1703 = vadd.f32 0.0, %v1702
        %v1704 = vpop.f32.mrf.mxu0
        %1705 = vmatprep.mubr.bf16.mxu0 0
        %1706 = vmatmul.mubr.bf16.gmra.mxu0 %v1566
        %v1707 = vpop.f32.mrf.mxu0
        %v1708 = vadd.f32 0.0, %v1707
        %v1709 = vpop.f32.mrf.mxu0
        %v1710 = vpop.f32.mrf.mxu0
        %v1711 = vadd.f32 0.0, %v1710
        %v1712 = vpop.f32.mrf.mxu0
        %1713 = vmatprep.mubr.bf16.mxu0 0
        %1714 = vmatmul.mubr.bf16.gmra.mxu0 %v1568
        %v1715 = vpop.f32.mrf.mxu0
        %v1716 = vadd.f32 0.0, %v1715
        %v1717 = vpop.f32.mrf.mxu0
        %v1718 = vpop.f32.mrf.mxu0
        %v1719 = vadd.f32 0.0, %v1718
        %v1720 = vpop.f32.mrf.mxu0
        %1721 = vmatprep.mubr.bf16.mxu0 0
        %1722 = vmatmul.mubr.bf16.gmra.mxu0 %v1570
        %v1723 = vpop.f32.mrf.mxu0
        %v1724 = vadd.f32 0.0, %v1723
        %v1725 = vpop.f32.mrf.mxu0
        %v1726 = vpop.f32.mrf.mxu0
        %v1727 = vadd.f32 0.0, %v1726
        %v1728 = vpop.f32.mrf.mxu0
        %1729 = vmatprep.mubr.bf16.mxu0 0
        %1730 = vmatmul.mubr.bf16.gmra.mxu0 %v1572
        %v1731 = vpop.f32.mrf.mxu0
        %v1732 = vadd.f32 0.0, %v1731
        %v1733 = vpop.f32.mrf.mxu0
        %v1734 = vpop.f32.mrf.mxu0
        %v1735 = vadd.f32 0.0, %v1734
        %v1736 = vpop.f32.mrf.mxu0
        %1737 = vmatprep.mubr.bf16.mxu0 0
        %1738 = vmatmul.mubr.bf16.gmra.mxu0 %v1574
        %v1739 = vpop.f32.mrf.mxu0
        %v1740 = vadd.f32 0.0, %v1739
        %v1741 = vpop.f32.mrf.mxu0
        %v1742 = vpop.f32.mrf.mxu0
        %v1743 = vadd.f32 0.0, %v1742
        %v1744 = vpop.f32.mrf.mxu0
        %1745 = vmatprep.mubr.bf16.mxu0 0
        %1746 = vmatmul.mubr.bf16.gmra.mxu0 %v1576
        %v1747 = vpop.f32.mrf.mxu0
        %v1748 = vadd.f32 0.0, %v1747
        %v1749 = vpop.f32.mrf.mxu0
        %v1750 = vpop.f32.mrf.mxu0
        %v1751 = vadd.f32 0.0, %v1750
        %v1752 = vpop.f32.mrf.mxu0
        %1753 = vmatprep.mubr.bf16.mxu0 0
        %1754 = vmatmul.mubr.bf16.gmra.mxu0 %v1578
        %v1755 = vpop.f32.mrf.mxu0
        %v1756 = vadd.f32 0.0, %v1755
        %v1757 = vpop.f32.mrf.mxu0
        %v1758 = vpop.f32.mrf.mxu0
        %v1759 = vadd.f32 0.0, %v1758
        %v1760 = vpop.f32.mrf.mxu0
        %1761 = vmatprep.mubr.bf16.mxu0 0
        %1762 = vmatmul.mubr.bf16.gmra.mxu0 %v1580
        %v1763 = vpop.f32.mrf.mxu0
        %v1764 = vadd.f32 0.0, %v1763
        %v1765 = vpop.f32.mrf.mxu0
        %v1766 = vpop.f32.mrf.mxu0
        %v1767 = vadd.f32 0.0, %v1766
        %v1768 = vpop.f32.mrf.mxu0
        %1769 = vmatprep.mubr.bf16.mxu0 0
        %1770 = vmatmul.mubr.bf16.gmra.mxu0 %v1582
        %v1771 = vpop.f32.mrf.mxu0
        %v1772 = vadd.f32 0.0, %v1771
        %v1773 = vpop.f32.mrf.mxu0
        %v1774 = vpop.f32.mrf.mxu0
        %v1775 = vadd.f32 0.0, %v1774
        %v1776 = vpop.f32.mrf.mxu0
        %1777 = vmatprep.mubr.bf16.mxu0 0
        %1778 = vmatmul.mubr.bf16.gmra.mxu0 %v1584
        %v1779 = vpop.f32.mrf.mxu0
        %v1780 = vadd.f32 0.0, %v1779
        %v1781 = vpop.f32.mrf.mxu0
        %v1782 = vpop.f32.mrf.mxu0
        %v1783 = vadd.f32 0.0, %v1782
        %v1784 = vpop.f32.mrf.mxu0
        %1785 = vmatprep.mubr.bf16.mxu0 0
        %1786 = vmatmul.mubr.bf16.gmra.mxu0 %v1586
        %v1787 = vpop.f32.mrf.mxu0
        %v1788 = vadd.f32 0.0, %v1787
        %v1789 = vpop.f32.mrf.mxu0
        %v1790 = vpop.f32.mrf.mxu0
        %v1791 = vadd.f32 0.0, %v1790
        %v1792 = vpop.f32.mrf.mxu0
        %1793 = vmatprep.mubr.bf16.mxu0 0
        %1794 = vmatmul.mubr.bf16.gmra.mxu0 %v1588
        %v1795 = vpop.f32.mrf.mxu0
        %v1796 = vadd.f32 0.0, %v1795
        %v1797 = vpop.f32.mrf.mxu0
        %v1798 = vpop.f32.mrf.mxu0
        %v1799 = vadd.f32 0.0, %v1798
        %v1800 = vpop.f32.mrf.mxu0
        %1801 = vmatprep.mubr.bf16.mxu0 0
        %1802 = vmatmul.mubr.bf16.gmra.mxu0 %v1590
        %v1803 = vpop.f32.mrf.mxu0
        %v1804 = vadd.f32 0.0, %v1803
        %v1805 = vpop.f32.mrf.mxu0
        %v1806 = vpop.f32.mrf.mxu0
        %v1807 = vadd.f32 0.0, %v1806
        %v1808 = vpop.f32.mrf.mxu0
        %1809 = vmatprep.mubr.bf16.mxu0 0
        %1810 = vmatmul.mubr.bf16.gmra.mxu0 %v1592
        %v1811 = vpop.f32.mrf.mxu0
        %v1812 = vadd.f32 0.0, %v1811
        %v1813 = vpop.f32.mrf.mxu0
        %v1814 = vpop.f32.mrf.mxu0
        %v1815 = vadd.f32 0.0, %v1814
        %v1816 = vpop.f32.mrf.mxu0
        %1817 = vmatprep.mubr.bf16.mxu0 0
        %1818 = vmatmul.mubr.bf16.gmra.mxu0 %v1594
        %v1819 = vpop.f32.mrf.mxu0
        %v1820 = vadd.f32 0.0, %v1819
        %v1821 = vpop.f32.mrf.mxu0
        %v1822 = vpop.f32.mrf.mxu0
        %v1823 = vadd.f32 0.0, %v1822
        %v1824 = vpop.f32.mrf.mxu0
        %1825 = vmatprep.mubr.bf16.mxu0 0
        %1826 = vmatmul.mubr.bf16.gmra.mxu0 %v1596
        %v1827 = vpop.f32.mrf.mxu0
        %v1828 = vadd.f32 0.0, %v1827
        %v1829 = vpop.f32.mrf.mxu0
        %v1830 = vpop.f32.mrf.mxu0
        %v1831 = vadd.f32 0.0, %v1830
        %v1832 = vpop.f32.mrf.mxu0
        %1833 = vmatprep.mubr.bf16.mxu0 0
        %1834 = vmatmul.mubr.bf16.gmra.mxu0 %v1598
        %v1835 = vpop.f32.mrf.mxu0
        %v1836 = vadd.f32 0.0, %v1835
        %v1837 = vpop.f32.mrf.mxu0
        %v1838 = vpop.f32.mrf.mxu0
        %v1839 = vadd.f32 0.0, %v1838
        %v1840 = vpop.f32.mrf.mxu0
        %1841 = vdwg.mxu0
        %v1842 = vadd.f32 %v1379, %v1700
        %v1843 = vadd.f32 %v1380, %v1703
        %v1844 = vadd.f32 %v1381, %v1708
        %v1845 = vadd.f32 %v1382, %v1711
        %v1846 = vadd.f32 %v1383, %v1716
        %v1847 = vadd.f32 %v1384, %v1719
        %v1848 = vadd.f32 %v1385, %v1724
        %v1849 = vadd.f32 %v1386, %v1727
        %v1850 = vadd.f32 %v1387, %v1732
        %v1851 = vadd.f32 %v1388, %v1735
        %v1852 = vadd.f32 %v1389, %v1740
        %v1853 = vadd.f32 %v1390, %v1743
        %v1854 = vadd.f32 %v1391, %v1748
        %v1855 = vadd.f32 %v1392, %v1751
        %v1856 = vadd.f32 %v1393, %v1756
        %v1857 = vadd.f32 %v1394, %v1759
        %v1858 = vadd.f32 %v1395, %v1764
        %v1859 = vadd.f32 %v1396, %v1767
        %v1860 = vadd.f32 %v1397, %v1772
        %v1861 = vadd.f32 %v1398, %v1775
        %v1862 = vadd.f32 %v1399, %v1780
        %v1863 = vadd.f32 %v1400, %v1783
        %v1864 = vadd.f32 %v1401, %v1788
        %v1865 = vadd.f32 %v1402, %v1791
        %v1866 = vadd.f32 %v1403, %v1796
        %v1867 = vadd.f32 %v1404, %v1799
        %v1868 = vadd.f32 %v1405, %v1804
        %v1869 = vadd.f32 %v1406, %v1807
        %v1870 = vadd.f32 %v1407, %v1812
        %v1871 = vadd.f32 %v1408, %v1815
        %v1872 = vadd.f32 %v1409, %v1820
        %v1873 = vadd.f32 %v1410, %v1823
        %v1874 = vadd.f32 %v1411, %v1828
        %v1875 = vadd.f32 %v1412, %v1831
        %v1876 = vadd.f32 %v1413, %v1836
        %v1877 = vadd.f32 %v1414, %v1839
        %v1878 = vld [vmem:[%s237 + $0x98] sm:$0x3]
        %s1879 = scalar_lea.vmem [#allocation6], 256
        %v1880 = vld [vmem:[%s1879] sm:$0xf]
        %v1881 = vld [vmem:[%s1879 + $0x4] sm:$0xf]
        %v1882 = vld [vmem:[%s1879 + $0x8] sm:$0xf]
        %v1883 = vld [vmem:[%s1879 + $0xc] sm:$0xf]
        %v1884 = vld [vmem:[%s1879 + $0x10] sm:$0xf]
        %v1885 = vld [vmem:[%s1879 + $0x14] sm:$0xf]
        %v1886 = vld [vmem:[%s1879 + $0x18] sm:$0xf]
        %v1887 = vld [vmem:[%s1879 + $0x1c] sm:$0xf]
        %v1888 = vld [vmem:[%s1879 + $0x20] sm:$0xf]
        %v1889 = vld [vmem:[%s1879 + $0x24] sm:$0xf]
        %v1890 = vld [vmem:[%s1879 + $0x28] sm:$0xf]
        %v1891 = vld [vmem:[%s1879 + $0x2c] sm:$0xf]
        %v1892 = vld [vmem:[%s1879 + $0x30] sm:$0xf]
        %v1893 = vld [vmem:[%s1879 + $0x34] sm:$0xf]
        %v1894 = vld [vmem:[%s1879 + $0x38] sm:$0xf]
        %v1895 = vld [vmem:[%s1879 + $0x3c] sm:$0xf]
        %v1897 = vunpack.c.l.b16 %v1878
        %v1898 = vpack.c.b16 %v1897, %v1897
        %vm1899 = vsmask.f32 6400
        %v1901 = vshrl.u32 %v1543, 16
        %v1903 = vrot.slane %v1901, 1
        %v1904 = vshll.u32 %v1543, 16
        %v1906 = vrot.slane %v1904, 2
        %v1907 = vor.u32 %v1903, %v1906
        %v1909 = vshrl.u32 %v1544, 16
        %v1911 = vrot.slane %v1909, 1
        %v1912 = vshll.u32 %v1544, 16
        %v1914 = vrot.slane %v1912, 2
        %v1915 = vor.u32 %v1911, %v1914
        %v1916 = vsel %vm1899, %v1907, %v1915
        %v1918 = vshrl.u32 %v1545, 16
        %v1920 = vrot.slane %v1918, 1
        %v1921 = vshll.u32 %v1545, 16
        %v1923 = vrot.slane %v1921, 2
        %v1924 = vor.u32 %v1920, %v1923
        %v1925 = vsel %vm1899, %v1915, %v1924
        %v1927 = vshrl.u32 %v1546, 16
        %v1929 = vrot.slane %v1927, 1
        %v1930 = vshll.u32 %v1546, 16
        %v1932 = vrot.slane %v1930, 2
        %v1933 = vor.u32 %v1929, %v1932
        %v1934 = vsel %vm1899, %v1924, %v1933
        %v1936 = vshrl.u32 %v1547, 16
        %v1938 = vrot.slane %v1936, 1
        %v1939 = vshll.u32 %v1547, 16
        %v1941 = vrot.slane %v1939, 2
        %v1942 = vor.u32 %v1938, %v1941
        %v1943 = vsel %vm1899, %v1933, %v1942
        %v1945 = vshrl.u32 %v1548, 16
        %v1947 = vrot.slane %v1945, 1
        %v1948 = vshll.u32 %v1548, 16
        %v1950 = vrot.slane %v1948, 2
        %v1951 = vor.u32 %v1947, %v1950
        %v1952 = vsel %vm1899, %v1942, %v1951
        %v1954 = vshrl.u32 %v1549, 16
        %v1956 = vrot.slane %v1954, 1
        %v1957 = vshll.u32 %v1549, 16
        %v1959 = vrot.slane %v1957, 2
        %v1960 = vor.u32 %v1956, %v1959
        %v1961 = vsel %vm1899, %v1951, %v1960
        %v1963 = vshrl.u32 %v1550, 16
        %v1965 = vrot.slane %v1963, 1
        %v1966 = vshll.u32 %v1550, 16
        %v1968 = vrot.slane %v1966, 2
        %v1969 = vor.u32 %v1965, %v1968
        %v1970 = vsel %vm1899, %v1960, %v1969
        %v1972 = vshrl.u32 %v1551, 16
        %v1974 = vrot.slane %v1972, 1
        %v1975 = vshll.u32 %v1551, 16
        %v1977 = vrot.slane %v1975, 2
        %v1978 = vor.u32 %v1974, %v1977
        %v1979 = vsel %vm1899, %v1969, %v1978
        %v1981 = vshrl.u32 %v1552, 16
        %v1983 = vrot.slane %v1981, 1
        %v1984 = vshll.u32 %v1552, 16
        %v1986 = vrot.slane %v1984, 2
        %v1987 = vor.u32 %v1983, %v1986
        %v1988 = vsel %vm1899, %v1978, %v1987
        %v1990 = vshrl.u32 %v1553, 16
        %v1992 = vrot.slane %v1990, 1
        %v1993 = vshll.u32 %v1553, 16
        %v1995 = vrot.slane %v1993, 2
        %v1996 = vor.u32 %v1992, %v1995
        %v1997 = vsel %vm1899, %v1987, %v1996
        %v1999 = vshrl.u32 %v1554, 16
        %v2001 = vrot.slane %v1999, 1
        %v2002 = vshll.u32 %v1554, 16
        %v2004 = vrot.slane %v2002, 2
        %v2005 = vor.u32 %v2001, %v2004
        %v2006 = vsel %vm1899, %v1996, %v2005
        %v2008 = vshrl.u32 %v1555, 16
        %v2010 = vrot.slane %v2008, 1
        %v2011 = vshll.u32 %v1555, 16
        %v2013 = vrot.slane %v2011, 2
        %v2014 = vor.u32 %v2010, %v2013
        %v2015 = vsel %vm1899, %v2005, %v2014
        %v2017 = vshrl.u32 %v1556, 16
        %v2019 = vrot.slane %v2017, 1
        %v2020 = vshll.u32 %v1556, 16
        %v2022 = vrot.slane %v2020, 2
        %v2023 = vor.u32 %v2019, %v2022
        %v2024 = vsel %vm1899, %v2014, %v2023
        %v2026 = vshrl.u32 %v1557, 16
        %v2028 = vrot.slane %v2026, 1
        %v2029 = vshll.u32 %v1557, 16
        %v2031 = vrot.slane %v2029, 2
        %v2032 = vor.u32 %v2028, %v2031
        %v2033 = vsel %vm1899, %v2023, %v2032
        %v2035 = vshrl.u32 %v1558, 16
        %v2037 = vrot.slane %v2035, 1
        %v2038 = vshll.u32 %v1558, 16
        %v2040 = vrot.slane %v2038, 2
        %v2041 = vor.u32 %v2037, %v2040
        %v2042 = vsel %vm1899, %v2032, %v2041
        %v2044 = vshrl.u32 %v1559, 16
        %v2046 = vrot.slane %v2044, 1
        %v2047 = vshll.u32 %v1559, 16
        %v2049 = vrot.slane %v2047, 2
        %v2050 = vor.u32 %v2046, %v2049
        %v2051 = vsel %vm1899, %v2041, %v2050
        %v2053 = vshrl.u32 %v1560, 16
        %v2055 = vrot.slane %v2053, 1
        %v2056 = vshll.u32 %v1560, 16
        %v2058 = vrot.slane %v2056, 2
        %v2059 = vor.u32 %v2055, %v2058
        %v2060 = vsel %vm1899, %v2050, %v2059
        %v2062 = vshrl.u32 %v1898, 16
        %v2064 = vrot.slane %v2062, 1
        %v2065 = vshll.u32 %v1898, 16
        %v2067 = vrot.slane %v2065, 2
        %v2068 = vor.u32 %v2064, %v2067
        %v2069 = vsel %vm1899, %v2059, %v2068
        %v2104 = vunpack.c.l.b16 %v1880
        %v2105 = vunpack.c.l.b16 %v1881
        %v2106 = vunpack.c.l.b16 %v1882
        %v2107 = vunpack.c.l.b16 %v1883
        %v2108 = vunpack.c.l.b16 %v1884
        %v2109 = vunpack.c.l.b16 %v1885
        %v2110 = vunpack.c.l.b16 %v1886
        %v2111 = vunpack.c.l.b16 %v1887
        %v2112 = vunpack.c.l.b16 %v1888
        %v2113 = vunpack.c.l.b16 %v1889
        %v2114 = vunpack.c.l.b16 %v1890
        %v2115 = vunpack.c.l.b16 %v1891
        %v2116 = vunpack.c.l.b16 %v1892
        %v2117 = vunpack.c.l.b16 %v1893
        %v2118 = vunpack.c.l.b16 %v1894
        %v2119 = vunpack.c.l.b16 %v1895
        %v2120 = vpack.c.b16 %v2105, %v2104
        %v2121 = vpack.c.b16 %v2107, %v2106
        %v2122 = vpack.c.b16 %v2109, %v2108
        %v2123 = vpack.c.b16 %v2111, %v2110
        %v2124 = vpack.c.b16 %v2113, %v2112
        %v2125 = vpack.c.b16 %v2115, %v2114
        %v2126 = vpack.c.b16 %v2117, %v2116
        %v2127 = vpack.c.b16 %v2119, %v2118
        %2136 = vmatprep.subr.bf16.mxu0 0
        %2137 = vmatpush1.bf16.msra.mxu0 %v2127
        %2138 = vmatprep.subr.bf16.mxu0 0
        %2139 = vmatpush1.bf16.msra.mxu0 %v2126
        %2140 = vmatprep.subr.bf16.mxu0 0
        %2141 = vmatpush1.bf16.msra.mxu0 %v2125
        %2142 = vmatprep.subr.bf16.mxu0 0
        %2143 = vmatpush1.bf16.msra.mxu0 %v2124
        %2144 = vmatprep.subr.bf16.mxu0 0
        %2145 = vmatpush1.bf16.msra.mxu0 %v2123
        %2146 = vmatprep.subr.bf16.mxu0 0
        %2147 = vmatpush1.bf16.msra.mxu0 %v2122
        %2148 = vmatprep.subr.bf16.mxu0 0
        %2149 = vmatpush1.bf16.msra.mxu0 %v2121
        %2150 = vmatprep.subr.bf16.mxu0 0
        %2151 = vmatpush1.bf16.msra.mxu0 %v2120
        %2152 = vmatprep.subr.bf16.mxu0 0
        %2153 = vmatpush2.bf16.msra.mxu0 0
        %2154 = vmatprep.subr.bf16.mxu0 0
        %2155 = vmatpush2.bf16.msra.mxu0 0
        %2156 = vmatprep.subr.bf16.mxu0 0
        %2157 = vmatpush2.bf16.msra.mxu0 0
        %2158 = vmatprep.subr.bf16.mxu0 0
        %2159 = vmatpush2.bf16.msra.mxu0 0
        %2160 = vmatprep.subr.bf16.mxu0 0
        %2161 = vmatpush2.bf16.msra.mxu0 0
        %2162 = vmatprep.subr.bf16.mxu0 0
        %2163 = vmatpush2.bf16.msra.mxu0 0
        %2164 = vmatprep.subr.bf16.mxu0 0
        %2165 = vmatpush2.bf16.msra.mxu0 0
        %2166 = vmatprep.subr.bf16.mxu0 0
        %2167 = vmatpush2.bf16.msra.mxu0 0
        %2168 = vmatprep.mubr.bf16.mxu0 0
        %2169 = vmatmul.mubr.bf16.gmra.mxu0 %v1916
        %v2170 = vpop.f32.mrf.mxu0
        %v2171 = vadd.f32 0.0, %v2170
        %v2172 = vpop.f32.mrf.mxu0
        %v2173 = vpop.f32.mrf.mxu0
        %v2174 = vadd.f32 0.0, %v2173
        %v2175 = vpop.f32.mrf.mxu0
        %2176 = vmatprep.mubr.bf16.mxu0 0
        %2177 = vmatmul.mubr.bf16.gmra.mxu0 %v1925
        %v2178 = vpop.f32.mrf.mxu0
        %v2179 = vadd.f32 0.0, %v2178
        %v2180 = vpop.f32.mrf.mxu0
        %v2181 = vpop.f32.mrf.mxu0
        %v2182 = vadd.f32 0.0, %v2181
        %v2183 = vpop.f32.mrf.mxu0
        %2184 = vmatprep.mubr.bf16.mxu0 0
        %2185 = vmatmul.mubr.bf16.gmra.mxu0 %v1934
        %v2186 = vpop.f32.mrf.mxu0
        %v2187 = vadd.f32 0.0, %v2186
        %v2188 = vpop.f32.mrf.mxu0
        %v2189 = vpop.f32.mrf.mxu0
        %v2190 = vadd.f32 0.0, %v2189
        %v2191 = vpop.f32.mrf.mxu0
        %2192 = vmatprep.mubr.bf16.mxu0 0
        %2193 = vmatmul.mubr.bf16.gmra.mxu0 %v1943
        %v2194 = vpop.f32.mrf.mxu0
        %v2195 = vadd.f32 0.0, %v2194
        %v2196 = vpop.f32.mrf.mxu0
        %v2197 = vpop.f32.mrf.mxu0
        %v2198 = vadd.f32 0.0, %v2197
        %v2199 = vpop.f32.mrf.mxu0
        %2200 = vmatprep.mubr.bf16.mxu0 0
        %2201 = vmatmul.mubr.bf16.gmra.mxu0 %v1952
        %v2202 = vpop.f32.mrf.mxu0
        %v2203 = vadd.f32 0.0, %v2202
        %v2204 = vpop.f32.mrf.mxu0
        %v2205 = vpop.f32.mrf.mxu0
        %v2206 = vadd.f32 0.0, %v2205
        %v2207 = vpop.f32.mrf.mxu0
        %2208 = vmatprep.mubr.bf16.mxu0 0
        %2209 = vmatmul.mubr.bf16.gmra.mxu0 %v1961
        %v2210 = vpop.f32.mrf.mxu0
        %v2211 = vadd.f32 0.0, %v2210
        %v2212 = vpop.f32.mrf.mxu0
        %v2213 = vpop.f32.mrf.mxu0
        %v2214 = vadd.f32 0.0, %v2213
        %v2215 = vpop.f32.mrf.mxu0
        %2216 = vmatprep.mubr.bf16.mxu0 0
        %2217 = vmatmul.mubr.bf16.gmra.mxu0 %v1970
        %v2218 = vpop.f32.mrf.mxu0
        %v2219 = vadd.f32 0.0, %v2218
        %v2220 = vpop.f32.mrf.mxu0
        %v2221 = vpop.f32.mrf.mxu0
        %v2222 = vadd.f32 0.0, %v2221
        %v2223 = vpop.f32.mrf.mxu0
        %2224 = vmatprep.mubr.bf16.mxu0 0
        %2225 = vmatmul.mubr.bf16.gmra.mxu0 %v1979
        %v2226 = vpop.f32.mrf.mxu0
        %v2227 = vadd.f32 0.0, %v2226
        %v2228 = vpop.f32.mrf.mxu0
        %v2229 = vpop.f32.mrf.mxu0
        %v2230 = vadd.f32 0.0, %v2229
        %v2231 = vpop.f32.mrf.mxu0
        %2232 = vmatprep.mubr.bf16.mxu0 0
        %2233 = vmatmul.mubr.bf16.gmra.mxu0 %v1988
        %v2234 = vpop.f32.mrf.mxu0
        %v2235 = vadd.f32 0.0, %v2234
        %v2236 = vpop.f32.mrf.mxu0
        %v2237 = vpop.f32.mrf.mxu0
        %v2238 = vadd.f32 0.0, %v2237
        %v2239 = vpop.f32.mrf.mxu0
        %2240 = vmatprep.mubr.bf16.mxu0 0
        %2241 = vmatmul.mubr.bf16.gmra.mxu0 %v1997
        %v2242 = vpop.f32.mrf.mxu0
        %v2243 = vadd.f32 0.0, %v2242
        %v2244 = vpop.f32.mrf.mxu0
        %v2245 = vpop.f32.mrf.mxu0
        %v2246 = vadd.f32 0.0, %v2245
        %v2247 = vpop.f32.mrf.mxu0
        %2248 = vmatprep.mubr.bf16.mxu0 0
        %2249 = vmatmul.mubr.bf16.gmra.mxu0 %v2006
        %v2250 = vpop.f32.mrf.mxu0
        %v2251 = vadd.f32 0.0, %v2250
        %v2252 = vpop.f32.mrf.mxu0
        %v2253 = vpop.f32.mrf.mxu0
        %v2254 = vadd.f32 0.0, %v2253
        %v2255 = vpop.f32.mrf.mxu0
        %2256 = vmatprep.mubr.bf16.mxu0 0
        %2257 = vmatmul.mubr.bf16.gmra.mxu0 %v2015
        %v2258 = vpop.f32.mrf.mxu0
        %v2259 = vadd.f32 0.0, %v2258
        %v2260 = vpop.f32.mrf.mxu0
        %v2261 = vpop.f32.mrf.mxu0
        %v2262 = vadd.f32 0.0, %v2261
        %v2263 = vpop.f32.mrf.mxu0
        %2264 = vmatprep.mubr.bf16.mxu0 0
        %2265 = vmatmul.mubr.bf16.gmra.mxu0 %v2024
        %v2266 = vpop.f32.mrf.mxu0
        %v2267 = vadd.f32 0.0, %v2266
        %v2268 = vpop.f32.mrf.mxu0
        %v2269 = vpop.f32.mrf.mxu0
        %v2270 = vadd.f32 0.0, %v2269
        %v2271 = vpop.f32.mrf.mxu0
        %2272 = vmatprep.mubr.bf16.mxu0 0
        %2273 = vmatmul.mubr.bf16.gmra.mxu0 %v2033
        %v2274 = vpop.f32.mrf.mxu0
        %v2275 = vadd.f32 0.0, %v2274
        %v2276 = vpop.f32.mrf.mxu0
        %v2277 = vpop.f32.mrf.mxu0
        %v2278 = vadd.f32 0.0, %v2277
        %v2279 = vpop.f32.mrf.mxu0
        %2280 = vmatprep.mubr.bf16.mxu0 0
        %2281 = vmatmul.mubr.bf16.gmra.mxu0 %v2042
        %v2282 = vpop.f32.mrf.mxu0
        %v2283 = vadd.f32 0.0, %v2282
        %v2284 = vpop.f32.mrf.mxu0
        %v2285 = vpop.f32.mrf.mxu0
        %v2286 = vadd.f32 0.0, %v2285
        %v2287 = vpop.f32.mrf.mxu0
        %2288 = vmatprep.mubr.bf16.mxu0 0
        %2289 = vmatmul.mubr.bf16.gmra.mxu0 %v2051
        %v2290 = vpop.f32.mrf.mxu0
        %v2291 = vadd.f32 0.0, %v2290
        %v2292 = vpop.f32.mrf.mxu0
        %v2293 = vpop.f32.mrf.mxu0
        %v2294 = vadd.f32 0.0, %v2293
        %v2295 = vpop.f32.mrf.mxu0
        %2296 = vmatprep.mubr.bf16.mxu0 0
        %2297 = vmatmul.mubr.bf16.gmra.mxu0 %v2060
        %v2298 = vpop.f32.mrf.mxu0
        %v2299 = vadd.f32 0.0, %v2298
        %v2300 = vpop.f32.mrf.mxu0
        %v2301 = vpop.f32.mrf.mxu0
        %v2302 = vadd.f32 0.0, %v2301
        %v2303 = vpop.f32.mrf.mxu0
        %2304 = vmatprep.mubr.bf16.mxu0 0
        %2305 = vmatmul.mubr.bf16.gmra.mxu0 %v2069
        %v2306 = vpop.f32.mrf.mxu0
        %v2307 = vadd.f32 0.0, %v2306
        %v2308 = vpop.f32.mrf.mxu0
        %v2309 = vpop.f32.mrf.mxu0
        %v2310 = vadd.f32 0.0, %v2309
        %v2311 = vpop.f32.mrf.mxu0
        %2312 = vdwg.mxu0
        %v2313 = vadd.f32 %v1842, %v2171
        %v2314 = vadd.f32 %v1843, %v2174
        %v2315 = vadd.f32 %v1844, %v2179
        %v2316 = vadd.f32 %v1845, %v2182
        %v2317 = vadd.f32 %v1846, %v2187
        %v2318 = vadd.f32 %v1847, %v2190
        %v2319 = vadd.f32 %v1848, %v2195
        %v2320 = vadd.f32 %v1849, %v2198
        %v2321 = vadd.f32 %v1850, %v2203
        %v2322 = vadd.f32 %v1851, %v2206
        %v2323 = vadd.f32 %v1852, %v2211
        %v2324 = vadd.f32 %v1853, %v2214
        %v2325 = vadd.f32 %v1854, %v2219
        %v2326 = vadd.f32 %v1855, %v2222
        %v2327 = vadd.f32 %v1856, %v2227
        %v2328 = vadd.f32 %v1857, %v2230
        %v2329 = vadd.f32 %v1858, %v2235
        %v2330 = vadd.f32 %v1859, %v2238
        %v2331 = vadd.f32 %v1860, %v2243
        %v2332 = vadd.f32 %v1861, %v2246
        %v2333 = vadd.f32 %v1862, %v2251
        %v2334 = vadd.f32 %v1863, %v2254
        %v2335 = vadd.f32 %v1864, %v2259
        %v2336 = vadd.f32 %v1865, %v2262
        %v2337 = vadd.f32 %v1866, %v2267
        %v2338 = vadd.f32 %v1867, %v2270
        %v2339 = vadd.f32 %v1868, %v2275
        %v2340 = vadd.f32 %v1869, %v2278
        %v2341 = vadd.f32 %v1870, %v2283
        %v2342 = vadd.f32 %v1871, %v2286
        %v2343 = vadd.f32 %v1872, %v2291
        %v2344 = vadd.f32 %v1873, %v2294
        %v2345 = vadd.f32 %v1874, %v2299
        %v2346 = vadd.f32 %v1875, %v2302
        %v2347 = vadd.f32 %v1876, %v2307
        %v2348 = vadd.f32 %v1877, %v2310
        %v2349 = vld [vmem:[%s237 + $0x8] sm:$0xc]
        %s2350 = scalar_lea.vmem [#allocation6], 320
        %v2351 = vld [vmem:[%s2350] sm:$0xf]
        %v2352 = vld [vmem:[%s2350 + $0x4] sm:$0xf]
        %v2353 = vld [vmem:[%s2350 + $0x8] sm:$0xf]
        %v2354 = vld [vmem:[%s2350 + $0xc] sm:$0xf]
        %v2355 = vld [vmem:[%s2350 + $0x10] sm:$0xf]
        %v2356 = vld [vmem:[%s2350 + $0x14] sm:$0xf]
        %v2357 = vld [vmem:[%s2350 + $0x18] sm:$0xf]
        %v2358 = vld [vmem:[%s2350 + $0x1c] sm:$0xf]
        %v2359 = vld [vmem:[%s2350 + $0x20] sm:$0xf]
        %v2360 = vld [vmem:[%s2350 + $0x24] sm:$0xf]
        %v2361 = vld [vmem:[%s2350 + $0x28] sm:$0xf]
        %v2362 = vld [vmem:[%s2350 + $0x2c] sm:$0xf]
        %v2363 = vld [vmem:[%s2350 + $0x30] sm:$0xf]
        %v2364 = vld [vmem:[%s2350 + $0x34] sm:$0xf]
        %v2365 = vld [vmem:[%s2350 + $0x38] sm:$0xf]
        %v2366 = vld [vmem:[%s2350 + $0x3c] sm:$0xf]
        %v2368 = vunpack.c.l.b16 %v2349
        %v2369 = vpack.c.b16 %v1507, %v2368
        %vm2370 = vcmask 1045504
        %v2371 = vrot.slane %v2369, 2
        %v2372 = vrot.slane %v1544, 2
        %v2373 = vsel %vm2370, %v2371, %v2372
        %v2374 = vrot.slane %v1545, 2
        %v2375 = vsel %vm2370, %v2372, %v2374
        %v2376 = vrot.slane %v1546, 2
        %v2377 = vsel %vm2370, %v2374, %v2376
        %v2378 = vrot.slane %v1547, 2
        %v2379 = vsel %vm2370, %v2376, %v2378
        %v2380 = vrot.slane %v1548, 2
        %v2381 = vsel %vm2370, %v2378, %v2380
        %v2382 = vrot.slane %v1549, 2
        %v2383 = vsel %vm2370, %v2380, %v2382
        %v2384 = vrot.slane %v1550, 2
        %v2385 = vsel %vm2370, %v2382, %v2384
        %v2386 = vrot.slane %v1551, 2
        %v2387 = vsel %vm2370, %v2384, %v2386
        %v2388 = vrot.slane %v1552, 2
        %v2389 = vsel %vm2370, %v2386, %v2388
        %v2390 = vrot.slane %v1553, 2
        %v2391 = vsel %vm2370, %v2388, %v2390
        %v2392 = vrot.slane %v1554, 2
        %v2393 = vsel %vm2370, %v2390, %v2392
        %v2394 = vrot.slane %v1555, 2
        %v2395 = vsel %vm2370, %v2392, %v2394
        %v2396 = vrot.slane %v1556, 2
        %v2397 = vsel %vm2370, %v2394, %v2396
        %v2398 = vrot.slane %v1557, 2
        %v2399 = vsel %vm2370, %v2396, %v2398
        %v2400 = vrot.slane %v1558, 2
        %v2401 = vsel %vm2370, %v2398, %v2400
        %v2402 = vrot.slane %v1559, 2
        %v2403 = vsel %vm2370, %v2400, %v2402
        %v2404 = vrot.slane %v1560, 2
        %v2405 = vsel %vm2370, %v2402, %v2404
        %v2406 = vrot.slane %v1898, 2
        %v2407 = vsel %vm2370, %v2404, %v2406
        %v2442 = vunpack.c.l.b16 %v2351
        %v2443 = vunpack.c.l.b16 %v2352
        %v2444 = vunpack.c.l.b16 %v2353
        %v2445 = vunpack.c.l.b16 %v2354
        %v2446 = vunpack.c.l.b16 %v2355
        %v2447 = vunpack.c.l.b16 %v2356
        %v2448 = vunpack.c.l.b16 %v2357
        %v2449 = vunpack.c.l.b16 %v2358
        %v2450 = vunpack.c.l.b16 %v2359
        %v2451 = vunpack.c.l.b16 %v2360
        %v2452 = vunpack.c.l.b16 %v2361
        %v2453 = vunpack.c.l.b16 %v2362
        %v2454 = vunpack.c.l.b16 %v2363
        %v2455 = vunpack.c.l.b16 %v2364
        %v2456 = vunpack.c.l.b16 %v2365
        %v2457 = vunpack.c.l.b16 %v2366
        %v2458 = vpack.c.b16 %v2443, %v2442
        %v2459 = vpack.c.b16 %v2445, %v2444
        %v2460 = vpack.c.b16 %v2447, %v2446
        %v2461 = vpack.c.b16 %v2449, %v2448
        %v2462 = vpack.c.b16 %v2451, %v2450
        %v2463 = vpack.c.b16 %v2453, %v2452
        %v2464 = vpack.c.b16 %v2455, %v2454
        %v2465 = vpack.c.b16 %v2457, %v2456
        %2474 = vmatprep.subr.bf16.mxu0 0
        %2475 = vmatpush1.bf16.msra.mxu0 %v2465
        %2476 = vmatprep.subr.bf16.mxu0 0
        %2477 = vmatpush1.bf16.msra.mxu0 %v2464
        %2478 = vmatprep.subr.bf16.mxu0 0
        %2479 = vmatpush1.bf16.msra.mxu0 %v2463
        %2480 = vmatprep.subr.bf16.mxu0 0
        %2481 = vmatpush1.bf16.msra.mxu0 %v2462
        %2482 = vmatprep.subr.bf16.mxu0 0
        %2483 = vmatpush1.bf16.msra.mxu0 %v2461
        %2484 = vmatprep.subr.bf16.mxu0 0
        %2485 = vmatpush1.bf16.msra.mxu0 %v2460
        %2486 = vmatprep.subr.bf16.mxu0 0
        %2487 = vmatpush1.bf16.msra.mxu0 %v2459
        %2488 = vmatprep.subr.bf16.mxu0 0
        %2489 = vmatpush1.bf16.msra.mxu0 %v2458
        %2490 = vmatprep.subr.bf16.mxu0 0
        %2491 = vmatpush2.bf16.msra.mxu0 0
        %2492 = vmatprep.subr.bf16.mxu0 0
        %2493 = vmatpush2.bf16.msra.mxu0 0
        %2494 = vmatprep.subr.bf16.mxu0 0
        %2495 = vmatpush2.bf16.msra.mxu0 0
        %2496 = vmatprep.subr.bf16.mxu0 0
        %2497 = vmatpush2.bf16.msra.mxu0 0
        %2498 = vmatprep.subr.bf16.mxu0 0
        %2499 = vmatpush2.bf16.msra.mxu0 0
        %2500 = vmatprep.subr.bf16.mxu0 0
        %2501 = vmatpush2.bf16.msra.mxu0 0
        %2502 = vmatprep.subr.bf16.mxu0 0
        %2503 = vmatpush2.bf16.msra.mxu0 0
        %2504 = vmatprep.subr.bf16.mxu0 0
        %2505 = vmatpush2.bf16.msra.mxu0 0
        %2506 = vmatprep.mubr.bf16.mxu0 0
        %2507 = vmatmul.mubr.bf16.gmra.mxu0 %v2373
        %v2508 = vpop.f32.mrf.mxu0
        %v2509 = vadd.f32 0.0, %v2508
        %v2510 = vpop.f32.mrf.mxu0
        %v2511 = vpop.f32.mrf.mxu0
        %v2512 = vadd.f32 0.0, %v2511
        %v2513 = vpop.f32.mrf.mxu0
        %2514 = vmatprep.mubr.bf16.mxu0 0
        %2515 = vmatmul.mubr.bf16.gmra.mxu0 %v2375
        %v2516 = vpop.f32.mrf.mxu0
        %v2517 = vadd.f32 0.0, %v2516
        %v2518 = vpop.f32.mrf.mxu0
        %v2519 = vpop.f32.mrf.mxu0
        %v2520 = vadd.f32 0.0, %v2519
        %v2521 = vpop.f32.mrf.mxu0
        %2522 = vmatprep.mubr.bf16.mxu0 0
        %2523 = vmatmul.mubr.bf16.gmra.mxu0 %v2377
        %v2524 = vpop.f32.mrf.mxu0
        %v2525 = vadd.f32 0.0, %v2524
        %v2526 = vpop.f32.mrf.mxu0
        %v2527 = vpop.f32.mrf.mxu0
        %v2528 = vadd.f32 0.0, %v2527
        %v2529 = vpop.f32.mrf.mxu0
        %2530 = vmatprep.mubr.bf16.mxu0 0
        %2531 = vmatmul.mubr.bf16.gmra.mxu0 %v2379
        %v2532 = vpop.f32.mrf.mxu0
        %v2533 = vadd.f32 0.0, %v2532
        %v2534 = vpop.f32.mrf.mxu0
        %v2535 = vpop.f32.mrf.mxu0
        %v2536 = vadd.f32 0.0, %v2535
        %v2537 = vpop.f32.mrf.mxu0
        %2538 = vmatprep.mubr.bf16.mxu0 0
        %2539 = vmatmul.mubr.bf16.gmra.mxu0 %v2381
        %v2540 = vpop.f32.mrf.mxu0
        %v2541 = vadd.f32 0.0, %v2540
        %v2542 = vpop.f32.mrf.mxu0
        %v2543 = vpop.f32.mrf.mxu0
        %v2544 = vadd.f32 0.0, %v2543
        %v2545 = vpop.f32.mrf.mxu0
        %2546 = vmatprep.mubr.bf16.mxu0 0
        %2547 = vmatmul.mubr.bf16.gmra.mxu0 %v2383
        %v2548 = vpop.f32.mrf.mxu0
        %v2549 = vadd.f32 0.0, %v2548
        %v2550 = vpop.f32.mrf.mxu0
        %v2551 = vpop.f32.mrf.mxu0
        %v2552 = vadd.f32 0.0, %v2551
        %v2553 = vpop.f32.mrf.mxu0
        %2554 = vmatprep.mubr.bf16.mxu0 0
        %2555 = vmatmul.mubr.bf16.gmra.mxu0 %v2385
        %v2556 = vpop.f32.mrf.mxu0
        %v2557 = vadd.f32 0.0, %v2556
        %v2558 = vpop.f32.mrf.mxu0
        %v2559 = vpop.f32.mrf.mxu0
        %v2560 = vadd.f32 0.0, %v2559
        %v2561 = vpop.f32.mrf.mxu0
        %2562 = vmatprep.mubr.bf16.mxu0 0
        %2563 = vmatmul.mubr.bf16.gmra.mxu0 %v2387
        %v2564 = vpop.f32.mrf.mxu0
        %v2565 = vadd.f32 0.0, %v2564
        %v2566 = vpop.f32.mrf.mxu0
        %v2567 = vpop.f32.mrf.mxu0
        %v2568 = vadd.f32 0.0, %v2567
        %v2569 = vpop.f32.mrf.mxu0
        %2570 = vmatprep.mubr.bf16.mxu0 0
        %2571 = vmatmul.mubr.bf16.gmra.mxu0 %v2389
        %v2572 = vpop.f32.mrf.mxu0
        %v2573 = vadd.f32 0.0, %v2572
        %v2574 = vpop.f32.mrf.mxu0
        %v2575 = vpop.f32.mrf.mxu0
        %v2576 = vadd.f32 0.0, %v2575
        %v2577 = vpop.f32.mrf.mxu0
        %2578 = vmatprep.mubr.bf16.mxu0 0
        %2579 = vmatmul.mubr.bf16.gmra.mxu0 %v2391
        %v2580 = vpop.f32.mrf.mxu0
        %v2581 = vadd.f32 0.0, %v2580
        %v2582 = vpop.f32.mrf.mxu0
        %v2583 = vpop.f32.mrf.mxu0
        %v2584 = vadd.f32 0.0, %v2583
        %v2585 = vpop.f32.mrf.mxu0
        %2586 = vmatprep.mubr.bf16.mxu0 0
        %2587 = vmatmul.mubr.bf16.gmra.mxu0 %v2393
        %v2588 = vpop.f32.mrf.mxu0
        %v2589 = vadd.f32 0.0, %v2588
        %v2590 = vpop.f32.mrf.mxu0
        %v2591 = vpop.f32.mrf.mxu0
        %v2592 = vadd.f32 0.0, %v2591
        %v2593 = vpop.f32.mrf.mxu0
        %2594 = vmatprep.mubr.bf16.mxu0 0
        %2595 = vmatmul.mubr.bf16.gmra.mxu0 %v2395
        %v2596 = vpop.f32.mrf.mxu0
        %v2597 = vadd.f32 0.0, %v2596
        %v2598 = vpop.f32.mrf.mxu0
        %v2599 = vpop.f32.mrf.mxu0
        %v2600 = vadd.f32 0.0, %v2599
        %v2601 = vpop.f32.mrf.mxu0
        %2602 = vmatprep.mubr.bf16.mxu0 0
        %2603 = vmatmul.mubr.bf16.gmra.mxu0 %v2397
        %v2604 = vpop.f32.mrf.mxu0
        %v2605 = vadd.f32 0.0, %v2604
        %v2606 = vpop.f32.mrf.mxu0
        %v2607 = vpop.f32.mrf.mxu0
        %v2608 = vadd.f32 0.0, %v2607
        %v2609 = vpop.f32.mrf.mxu0
        %2610 = vmatprep.mubr.bf16.mxu0 0
        %2611 = vmatmul.mubr.bf16.gmra.mxu0 %v2399
        %v2612 = vpop.f32.mrf.mxu0
        %v2613 = vadd.f32 0.0, %v2612
        %v2614 = vpop.f32.mrf.mxu0
        %v2615 = vpop.f32.mrf.mxu0
        %v2616 = vadd.f32 0.0, %v2615
        %v2617 = vpop.f32.mrf.mxu0
        %2618 = vmatprep.mubr.bf16.mxu0 0
        %2619 = vmatmul.mubr.bf16.gmra.mxu0 %v2401
        %v2620 = vpop.f32.mrf.mxu0
        %v2621 = vadd.f32 0.0, %v2620
        %v2622 = vpop.f32.mrf.mxu0
        %v2623 = vpop.f32.mrf.mxu0
        %v2624 = vadd.f32 0.0, %v2623
        %v2625 = vpop.f32.mrf.mxu0
        %2626 = vmatprep.mubr.bf16.mxu0 0
        %2627 = vmatmul.mubr.bf16.gmra.mxu0 %v2403
        %v2628 = vpop.f32.mrf.mxu0
        %v2629 = vadd.f32 0.0, %v2628
        %v2630 = vpop.f32.mrf.mxu0
        %v2631 = vpop.f32.mrf.mxu0
        %v2632 = vadd.f32 0.0, %v2631
        %v2633 = vpop.f32.mrf.mxu0
        %2634 = vmatprep.mubr.bf16.mxu0 0
        %2635 = vmatmul.mubr.bf16.gmra.mxu0 %v2405
        %v2636 = vpop.f32.mrf.mxu0
        %v2637 = vadd.f32 0.0, %v2636
        %v2638 = vpop.f32.mrf.mxu0
        %v2639 = vpop.f32.mrf.mxu0
        %v2640 = vadd.f32 0.0, %v2639
        %v2641 = vpop.f32.mrf.mxu0
        %2642 = vmatprep.mubr.bf16.mxu0 0
        %2643 = vmatmul.mubr.bf16.gmra.mxu0 %v2407
        %v2644 = vpop.f32.mrf.mxu0
        %v2645 = vadd.f32 0.0, %v2644
        %v2646 = vpop.f32.mrf.mxu0
        %v2647 = vpop.f32.mrf.mxu0
        %v2648 = vadd.f32 0.0, %v2647
        %v2649 = vpop.f32.mrf.mxu0
        %2650 = vdwg.mxu0
        %v2651 = vadd.f32 %v2313, %v2509
        %v2652 = vadd.f32 %v2314, %v2512
        %v2653 = vadd.f32 %v2315, %v2517
        %v2654 = vadd.f32 %v2316, %v2520
        %v2655 = vadd.f32 %v2317, %v2525
        %v2656 = vadd.f32 %v2318, %v2528
        %v2657 = vadd.f32 %v2319, %v2533
        %v2658 = vadd.f32 %v2320, %v2536
        %v2659 = vadd.f32 %v2321, %v2541
        %v2660 = vadd.f32 %v2322, %v2544
        %v2661 = vadd.f32 %v2323, %v2549
        %v2662 = vadd.f32 %v2324, %v2552
        %v2663 = vadd.f32 %v2325, %v2557
        %v2664 = vadd.f32 %v2326, %v2560
        %v2665 = vadd.f32 %v2327, %v2565
        %v2666 = vadd.f32 %v2328, %v2568
        %v2667 = vadd.f32 %v2329, %v2573
        %v2668 = vadd.f32 %v2330, %v2576
        %v2669 = vadd.f32 %v2331, %v2581
        %v2670 = vadd.f32 %v2332, %v2584
        %v2671 = vadd.f32 %v2333, %v2589
        %v2672 = vadd.f32 %v2334, %v2592
        %v2673 = vadd.f32 %v2335, %v2597
        %v2674 = vadd.f32 %v2336, %v2600
        %v2675 = vadd.f32 %v2337, %v2605
        %v2676 = vadd.f32 %v2338, %v2608
        %v2677 = vadd.f32 %v2339, %v2613
        %v2678 = vadd.f32 %v2340, %v2616
        %v2679 = vadd.f32 %v2341, %v2621
        %v2680 = vadd.f32 %v2342, %v2624
        %v2681 = vadd.f32 %v2343, %v2629
        %v2682 = vadd.f32 %v2344, %v2632
        %v2683 = vadd.f32 %v2345, %v2637
        %v2684 = vadd.f32 %v2346, %v2640
        %v2685 = vadd.f32 %v2347, %v2645
        %v2686 = vadd.f32 %v2348, %v2648
        %v2687 = vld [vmem:[%s237 + $0x10] sm:$0xc]
        %v2688 = vld [vmem:[%s237 + $0x14] sm:$0xf]
        %v2689 = vld [vmem:[%s237 + $0x18] sm:$0xf]
        %v2690 = vld [vmem:[%s237 + $0x1c] sm:$0xf]
        %v2691 = vld [vmem:[%s237 + $0x20] sm:$0xf]
        %v2692 = vld [vmem:[%s237 + $0x24] sm:$0xf]
        %v2693 = vld [vmem:[%s237 + $0x28] sm:$0xf]
        %v2694 = vld [vmem:[%s237 + $0x2c] sm:$0xf]
        %v2695 = vld [vmem:[%s237 + $0x30] sm:$0xf]
        %v2696 = vld [vmem:[%s237 + $0x34] sm:$0xf]
        %v2697 = vld [vmem:[%s237 + $0x38] sm:$0xf]
        %v2698 = vld [vmem:[%s237 + $0x3c] sm:$0xf]
        %v2699 = vld [vmem:[%s237 + $0x40] sm:$0xf]
        %v2700 = vld [vmem:[%s237 + $0x44] sm:$0xf]
        %v2701 = vld [vmem:[%s237 + $0x48] sm:$0xf]
        %v2702 = vld [vmem:[%s237 + $0x4c] sm:$0xf]
        %v2703 = vld [vmem:[%s237 + $0x50] sm:$0xf]
        %v2704 = vld [vmem:[%s237 + $0x54] sm:$0xf]
        %v2705 = vld [vmem:[%s237 + $0x58] sm:$0xf]
        %v2706 = vld [vmem:[%s237 + $0x5c] sm:$0xf]
        %v2707 = vld [vmem:[%s237 + $0x60] sm:$0xf]
        %v2708 = vld [vmem:[%s237 + $0x64] sm:$0xf]
        %v2709 = vld [vmem:[%s237 + $0x68] sm:$0xf]
        %v2710 = vld [vmem:[%s237 + $0x6c] sm:$0xf]
        %v2711 = vld [vmem:[%s237 + $0x70] sm:$0xf]
        %v2712 = vld [vmem:[%s237 + $0x74] sm:$0xf]
        %v2713 = vld [vmem:[%s237 + $0x78] sm:$0xf]
        %v2714 = vld [vmem:[%s237 + $0x7c] sm:$0xf]
        %v2715 = vld [vmem:[%s237 + $0x80] sm:$0xf]
        %v2716 = vld [vmem:[%s237 + $0x84] sm:$0xf]
        %v2717 = vld [vmem:[%s237 + $0x88] sm:$0xf]
        %v2718 = vld [vmem:[%s237 + $0x8c] sm:$0xf]
        %v2719 = vld [vmem:[%s237 + $0x90] sm:$0xf]
        %v2720 = vld [vmem:[%s237 + $0x94] sm:$0xf]
        %v2721 = vld [vmem:[%s237 + $0x98] sm:$0xf]
        %v2722 = vld [vmem:[%s237 + $0x9c] sm:$0xf]
        %v2723 = vld [vmem:[%s237 + $0xa0] sm:$0x3]
        %s2724 = scalar_lea.vmem [#allocation6], 384
        %v2725 = vld [vmem:[%s2724] sm:$0xf]
        %v2726 = vld [vmem:[%s2724 + $0x4] sm:$0xf]
        %v2727 = vld [vmem:[%s2724 + $0x8] sm:$0xf]
        %v2728 = vld [vmem:[%s2724 + $0xc] sm:$0xf]
        %v2729 = vld [vmem:[%s2724 + $0x10] sm:$0xf]
        %v2730 = vld [vmem:[%s2724 + $0x14] sm:$0xf]
        %v2731 = vld [vmem:[%s2724 + $0x18] sm:$0xf]
        %v2732 = vld [vmem:[%s2724 + $0x1c] sm:$0xf]
        %v2733 = vld [vmem:[%s2724 + $0x20] sm:$0xf]
        %v2734 = vld [vmem:[%s2724 + $0x24] sm:$0xf]
        %v2735 = vld [vmem:[%s2724 + $0x28] sm:$0xf]
        %v2736 = vld [vmem:[%s2724 + $0x2c] sm:$0xf]
        %v2737 = vld [vmem:[%s2724 + $0x30] sm:$0xf]
        %v2738 = vld [vmem:[%s2724 + $0x34] sm:$0xf]
        %v2739 = vld [vmem:[%s2724 + $0x38] sm:$0xf]
        %v2740 = vld [vmem:[%s2724 + $0x3c] sm:$0xf]
        %v2778 = vunpack.c.l.b16 %v2687
        %v2779 = vunpack.c.l.b16 %v2688
        %v2780 = vunpack.c.l.b16 %v2689
        %v2781 = vunpack.c.l.b16 %v2690
        %v2782 = vunpack.c.l.b16 %v2691
        %v2783 = vunpack.c.l.b16 %v2692
        %v2784 = vunpack.c.l.b16 %v2693
        %v2785 = vunpack.c.l.b16 %v2694
        %v2786 = vunpack.c.l.b16 %v2695
        %v2787 = vunpack.c.l.b16 %v2696
        %v2788 = vunpack.c.l.b16 %v2697
        %v2789 = vunpack.c.l.b16 %v2698
        %v2790 = vunpack.c.l.b16 %v2699
        %v2791 = vunpack.c.l.b16 %v2700
        %v2792 = vunpack.c.l.b16 %v2701
        %v2793 = vunpack.c.l.b16 %v2702
        %v2794 = vunpack.c.l.b16 %v2703
        %v2795 = vunpack.c.l.b16 %v2704
        %v2796 = vunpack.c.l.b16 %v2705
        %v2797 = vunpack.c.l.b16 %v2706
        %v2798 = vunpack.c.l.b16 %v2707
        %v2799 = vunpack.c.l.b16 %v2708
        %v2800 = vunpack.c.l.b16 %v2709
        %v2801 = vunpack.c.l.b16 %v2710
        %v2802 = vunpack.c.l.b16 %v2711
        %v2803 = vunpack.c.l.b16 %v2712
        %v2804 = vunpack.c.l.b16 %v2713
        %v2805 = vunpack.c.l.b16 %v2714
        %v2806 = vunpack.c.l.b16 %v2715
        %v2807 = vunpack.c.l.b16 %v2716
        %v2808 = vunpack.c.l.b16 %v2717
        %v2809 = vunpack.c.l.b16 %v2718
        %v2810 = vunpack.c.l.b16 %v2719
        %v2811 = vunpack.c.l.b16 %v2720
        %v2812 = vunpack.c.l.b16 %v2721
        %v2813 = vunpack.c.l.b16 %v2722
        %v2814 = vunpack.c.l.b16 %v2723
        %v2815 = vpack.c.b16 %v2779, %v2778
        %v2816 = vpack.c.b16 %v2781, %v2780
        %v2817 = vpack.c.b16 %v2783, %v2782
        %v2818 = vpack.c.b16 %v2785, %v2784
        %v2819 = vpack.c.b16 %v2787, %v2786
        %v2820 = vpack.c.b16 %v2789, %v2788
        %v2821 = vpack.c.b16 %v2791, %v2790
        %v2822 = vpack.c.b16 %v2793, %v2792
        %v2823 = vpack.c.b16 %v2795, %v2794
        %v2824 = vpack.c.b16 %v2797, %v2796
        %v2825 = vpack.c.b16 %v2799, %v2798
        %v2826 = vpack.c.b16 %v2801, %v2800
        %v2827 = vpack.c.b16 %v2803, %v2802
        %v2828 = vpack.c.b16 %v2805, %v2804
        %v2829 = vpack.c.b16 %v2807, %v2806
        %v2830 = vpack.c.b16 %v2809, %v2808
        %v2831 = vpack.c.b16 %v2811, %v2810
        %v2832 = vpack.c.b16 %v2813, %v2812
        %v2833 = vpack.c.b16 %v2814, %v2814
        %v2834 = vrot.slane %v2815, 2
        %v2835 = vrot.slane %v2816, 2
        %v2836 = vsel %vm2370, %v2834, %v2835
        %v2837 = vrot.slane %v2817, 2
        %v2838 = vsel %vm2370, %v2835, %v2837
        %v2839 = vrot.slane %v2818, 2
        %v2840 = vsel %vm2370, %v2837, %v2839
        %v2841 = vrot.slane %v2819, 2
        %v2842 = vsel %vm2370, %v2839, %v2841
        %v2843 = vrot.slane %v2820, 2
        %v2844 = vsel %vm2370, %v2841, %v2843
        %v2845 = vrot.slane %v2821, 2
        %v2846 = vsel %vm2370, %v2843, %v2845
        %v2847 = vrot.slane %v2822, 2
        %v2848 = vsel %vm2370, %v2845, %v2847
        %v2849 = vrot.slane %v2823, 2
        %v2850 = vsel %vm2370, %v2847, %v2849
        %v2851 = vrot.slane %v2824, 2
        %v2852 = vsel %vm2370, %v2849, %v2851
        %v2853 = vrot.slane %v2825, 2
        %v2854 = vsel %vm2370, %v2851, %v2853
        %v2855 = vrot.slane %v2826, 2
        %v2856 = vsel %vm2370, %v2853, %v2855
        %v2857 = vrot.slane %v2827, 2
        %v2858 = vsel %vm2370, %v2855, %v2857
        %v2859 = vrot.slane %v2828, 2
        %v2860 = vsel %vm2370, %v2857, %v2859
        %v2861 = vrot.slane %v2829, 2
        %v2862 = vsel %vm2370, %v2859, %v2861
        %v2863 = vrot.slane %v2830, 2
        %v2864 = vsel %vm2370, %v2861, %v2863
        %v2865 = vrot.slane %v2831, 2
        %v2866 = vsel %vm2370, %v2863, %v2865
        %v2867 = vrot.slane %v2832, 2
        %v2868 = vsel %vm2370, %v2865, %v2867
        %v2869 = vrot.slane %v2833, 2
        %v2870 = vsel %vm2370, %v2867, %v2869
        %v2905 = vunpack.c.l.b16 %v2725
        %v2906 = vunpack.c.l.b16 %v2726
        %v2907 = vunpack.c.l.b16 %v2727
        %v2908 = vunpack.c.l.b16 %v2728
        %v2909 = vunpack.c.l.b16 %v2729
        %v2910 = vunpack.c.l.b16 %v2730
        %v2911 = vunpack.c.l.b16 %v2731
        %v2912 = vunpack.c.l.b16 %v2732
        %v2913 = vunpack.c.l.b16 %v2733
        %v2914 = vunpack.c.l.b16 %v2734
        %v2915 = vunpack.c.l.b16 %v2735
        %v2916 = vunpack.c.l.b16 %v2736
        %v2917 = vunpack.c.l.b16 %v2737
        %v2918 = vunpack.c.l.b16 %v2738
        %v2919 = vunpack.c.l.b16 %v2739
        %v2920 = vunpack.c.l.b16 %v2740
        %v2921 = vpack.c.b16 %v2906, %v2905
        %v2922 = vpack.c.b16 %v2908, %v2907
        %v2923 = vpack.c.b16 %v2910, %v2909
        %v2924 = vpack.c.b16 %v2912, %v2911
        %v2925 = vpack.c.b16 %v2914, %v2913
        %v2926 = vpack.c.b16 %v2916, %v2915
        %v2927 = vpack.c.b16 %v2918, %v2917
        %v2928 = vpack.c.b16 %v2920, %v2919
        %2937 = vmatprep.subr.bf16.mxu0 0
        %2938 = vmatpush1.bf16.msra.mxu0 %v2928
        %2939 = vmatprep.subr.bf16.mxu0 0
        %2940 = vmatpush1.bf16.msra.mxu0 %v2927
        %2941 = vmatprep.subr.bf16.mxu0 0
        %2942 = vmatpush1.bf16.msra.mxu0 %v2926
        %2943 = vmatprep.subr.bf16.mxu0 0
        %2944 = vmatpush1.bf16.msra.mxu0 %v2925
        %2945 = vmatprep.subr.bf16.mxu0 0
        %2946 = vmatpush1.bf16.msra.mxu0 %v2924
        %2947 = vmatprep.subr.bf16.mxu0 0
        %2948 = vmatpush1.bf16.msra.mxu0 %v2923
        %2949 = vmatprep.subr.bf16.mxu0 0
        %2950 = vmatpush1.bf16.msra.mxu0 %v2922
        %2951 = vmatprep.subr.bf16.mxu0 0
        %2952 = vmatpush1.bf16.msra.mxu0 %v2921
        %2953 = vmatprep.subr.bf16.mxu0 0
        %2954 = vmatpush2.bf16.msra.mxu0 0
        %2955 = vmatprep.subr.bf16.mxu0 0
        %2956 = vmatpush2.bf16.msra.mxu0 0
        %2957 = vmatprep.subr.bf16.mxu0 0
        %2958 = vmatpush2.bf16.msra.mxu0 0
        %2959 = vmatprep.subr.bf16.mxu0 0
        %2960 = vmatpush2.bf16.msra.mxu0 0
        %2961 = vmatprep.subr.bf16.mxu0 0
        %2962 = vmatpush2.bf16.msra.mxu0 0
        %2963 = vmatprep.subr.bf16.mxu0 0
        %2964 = vmatpush2.bf16.msra.mxu0 0
        %2965 = vmatprep.subr.bf16.mxu0 0
        %2966 = vmatpush2.bf16.msra.mxu0 0
        %2967 = vmatprep.subr.bf16.mxu0 0
        %2968 = vmatpush2.bf16.msra.mxu0 0
        %2969 = vmatprep.mubr.bf16.mxu0 0
        %2970 = vmatmul.mubr.bf16.gmra.mxu0 %v2836
        %v2971 = vpop.f32.mrf.mxu0
        %v2972 = vadd.f32 0.0, %v2971
        %v2973 = vpop.f32.mrf.mxu0
        %v2974 = vpop.f32.mrf.mxu0
        %v2975 = vadd.f32 0.0, %v2974
        %v2976 = vpop.f32.mrf.mxu0
        %2977 = vmatprep.mubr.bf16.mxu0 0
        %2978 = vmatmul.mubr.bf16.gmra.mxu0 %v2838
        %v2979 = vpop.f32.mrf.mxu0
        %v2980 = vadd.f32 0.0, %v2979
        %v2981 = vpop.f32.mrf.mxu0
        %v2982 = vpop.f32.mrf.mxu0
        %v2983 = vadd.f32 0.0, %v2982
        %v2984 = vpop.f32.mrf.mxu0
        %2985 = vmatprep.mubr.bf16.mxu0 0
        %2986 = vmatmul.mubr.bf16.gmra.mxu0 %v2840
        %v2987 = vpop.f32.mrf.mxu0
        %v2988 = vadd.f32 0.0, %v2987
        %v2989 = vpop.f32.mrf.mxu0
        %v2990 = vpop.f32.mrf.mxu0
        %v2991 = vadd.f32 0.0, %v2990
        %v2992 = vpop.f32.mrf.mxu0
        %2993 = vmatprep.mubr.bf16.mxu0 0
        %2994 = vmatmul.mubr.bf16.gmra.mxu0 %v2842
        %v2995 = vpop.f32.mrf.mxu0
        %v2996 = vadd.f32 0.0, %v2995
        %v2997 = vpop.f32.mrf.mxu0
        %v2998 = vpop.f32.mrf.mxu0
        %v2999 = vadd.f32 0.0, %v2998
        %v3000 = vpop.f32.mrf.mxu0
        %3001 = vmatprep.mubr.bf16.mxu0 0
        %3002 = vmatmul.mubr.bf16.gmra.mxu0 %v2844
        %v3003 = vpop.f32.mrf.mxu0
        %v3004 = vadd.f32 0.0, %v3003
        %v3005 = vpop.f32.mrf.mxu0
        %v3006 = vpop.f32.mrf.mxu0
        %v3007 = vadd.f32 0.0, %v3006
        %v3008 = vpop.f32.mrf.mxu0
        %3009 = vmatprep.mubr.bf16.mxu0 0
        %3010 = vmatmul.mubr.bf16.gmra.mxu0 %v2846
        %v3011 = vpop.f32.mrf.mxu0
        %v3012 = vadd.f32 0.0, %v3011
        %v3013 = vpop.f32.mrf.mxu0
        %v3014 = vpop.f32.mrf.mxu0
        %v3015 = vadd.f32 0.0, %v3014
        %v3016 = vpop.f32.mrf.mxu0
        %3017 = vmatprep.mubr.bf16.mxu0 0
        %3018 = vmatmul.mubr.bf16.gmra.mxu0 %v2848
        %v3019 = vpop.f32.mrf.mxu0
        %v3020 = vadd.f32 0.0, %v3019
        %v3021 = vpop.f32.mrf.mxu0
        %v3022 = vpop.f32.mrf.mxu0
        %v3023 = vadd.f32 0.0, %v3022
        %v3024 = vpop.f32.mrf.mxu0
        %3025 = vmatprep.mubr.bf16.mxu0 0
        %3026 = vmatmul.mubr.bf16.gmra.mxu0 %v2850
        %v3027 = vpop.f32.mrf.mxu0
        %v3028 = vadd.f32 0.0, %v3027
        %v3029 = vpop.f32.mrf.mxu0
        %v3030 = vpop.f32.mrf.mxu0
        %v3031 = vadd.f32 0.0, %v3030
        %v3032 = vpop.f32.mrf.mxu0
        %3033 = vmatprep.mubr.bf16.mxu0 0
        %3034 = vmatmul.mubr.bf16.gmra.mxu0 %v2852
        %v3035 = vpop.f32.mrf.mxu0
        %v3036 = vadd.f32 0.0, %v3035
        %v3037 = vpop.f32.mrf.mxu0
        %v3038 = vpop.f32.mrf.mxu0
        %v3039 = vadd.f32 0.0, %v3038
        %v3040 = vpop.f32.mrf.mxu0
        %3041 = vmatprep.mubr.bf16.mxu0 0
        %3042 = vmatmul.mubr.bf16.gmra.mxu0 %v2854
        %v3043 = vpop.f32.mrf.mxu0
        %v3044 = vadd.f32 0.0, %v3043
        %v3045 = vpop.f32.mrf.mxu0
        %v3046 = vpop.f32.mrf.mxu0
        %v3047 = vadd.f32 0.0, %v3046
        %v3048 = vpop.f32.mrf.mxu0
        %3049 = vmatprep.mubr.bf16.mxu0 0
        %3050 = vmatmul.mubr.bf16.gmra.mxu0 %v2856
        %v3051 = vpop.f32.mrf.mxu0
        %v3052 = vadd.f32 0.0, %v3051
        %v3053 = vpop.f32.mrf.mxu0
        %v3054 = vpop.f32.mrf.mxu0
        %v3055 = vadd.f32 0.0, %v3054
        %v3056 = vpop.f32.mrf.mxu0
        %3057 = vmatprep.mubr.bf16.mxu0 0
        %3058 = vmatmul.mubr.bf16.gmra.mxu0 %v2858
        %v3059 = vpop.f32.mrf.mxu0
        %v3060 = vadd.f32 0.0, %v3059
        %v3061 = vpop.f32.mrf.mxu0
        %v3062 = vpop.f32.mrf.mxu0
        %v3063 = vadd.f32 0.0, %v3062
        %v3064 = vpop.f32.mrf.mxu0
        %3065 = vmatprep.mubr.bf16.mxu0 0
        %3066 = vmatmul.mubr.bf16.gmra.mxu0 %v2860
        %v3067 = vpop.f32.mrf.mxu0
        %v3068 = vadd.f32 0.0, %v3067
        %v3069 = vpop.f32.mrf.mxu0
        %v3070 = vpop.f32.mrf.mxu0
        %v3071 = vadd.f32 0.0, %v3070
        %v3072 = vpop.f32.mrf.mxu0
        %3073 = vmatprep.mubr.bf16.mxu0 0
        %3074 = vmatmul.mubr.bf16.gmra.mxu0 %v2862
        %v3075 = vpop.f32.mrf.mxu0
        %v3076 = vadd.f32 0.0, %v3075
        %v3077 = vpop.f32.mrf.mxu0
        %v3078 = vpop.f32.mrf.mxu0
        %v3079 = vadd.f32 0.0, %v3078
        %v3080 = vpop.f32.mrf.mxu0
        %3081 = vmatprep.mubr.bf16.mxu0 0
        %3082 = vmatmul.mubr.bf16.gmra.mxu0 %v2864
        %v3083 = vpop.f32.mrf.mxu0
        %v3084 = vadd.f32 0.0, %v3083
        %v3085 = vpop.f32.mrf.mxu0
        %v3086 = vpop.f32.mrf.mxu0
        %v3087 = vadd.f32 0.0, %v3086
        %v3088 = vpop.f32.mrf.mxu0
        %3089 = vmatprep.mubr.bf16.mxu0 0
        %3090 = vmatmul.mubr.bf16.gmra.mxu0 %v2866
        %v3091 = vpop.f32.mrf.mxu0
        %v3092 = vadd.f32 0.0, %v3091
        %v3093 = vpop.f32.mrf.mxu0
        %v3094 = vpop.f32.mrf.mxu0
        %v3095 = vadd.f32 0.0, %v3094
        %v3096 = vpop.f32.mrf.mxu0
        %3097 = vmatprep.mubr.bf16.mxu0 0
        %3098 = vmatmul.mubr.bf16.gmra.mxu0 %v2868
        %v3099 = vpop.f32.mrf.mxu0
        %v3100 = vadd.f32 0.0, %v3099
        %v3101 = vpop.f32.mrf.mxu0
        %v3102 = vpop.f32.mrf.mxu0
        %v3103 = vadd.f32 0.0, %v3102
        %v3104 = vpop.f32.mrf.mxu0
        %3105 = vmatprep.mubr.bf16.mxu0 0
        %3106 = vmatmul.mubr.bf16.gmra.mxu0 %v2870
        %v3107 = vpop.f32.mrf.mxu0
        %v3108 = vadd.f32 0.0, %v3107
        %v3109 = vpop.f32.mrf.mxu0
        %v3110 = vpop.f32.mrf.mxu0
        %v3111 = vadd.f32 0.0, %v3110
        %v3112 = vpop.f32.mrf.mxu0
        %3113 = vdwg.mxu0
        %v3114 = vadd.f32 %v2651, %v2972
        %v3115 = vadd.f32 %v2652, %v2975
        %v3116 = vadd.f32 %v2653, %v2980
        %v3117 = vadd.f32 %v2654, %v2983
        %v3118 = vadd.f32 %v2655, %v2988
        %v3119 = vadd.f32 %v2656, %v2991
        %v3120 = vadd.f32 %v2657, %v2996
        %v3121 = vadd.f32 %v2658, %v2999
        %v3122 = vadd.f32 %v2659, %v3004
        %v3123 = vadd.f32 %v2660, %v3007
        %v3124 = vadd.f32 %v2661, %v3012
        %v3125 = vadd.f32 %v2662, %v3015
        %v3126 = vadd.f32 %v2663, %v3020
        %v3127 = vadd.f32 %v2664, %v3023
        %v3128 = vadd.f32 %v2665, %v3028
        %v3129 = vadd.f32 %v2666, %v3031
        %v3130 = vadd.f32 %v2667, %v3036
        %v3131 = vadd.f32 %v2668, %v3039
        %v3132 = vadd.f32 %v2669, %v3044
        %v3133 = vadd.f32 %v2670, %v3047
        %v3134 = vadd.f32 %v2671, %v3052
        %v3135 = vadd.f32 %v2672, %v3055
        %v3136 = vadd.f32 %v2673, %v3060
        %v3137 = vadd.f32 %v2674, %v3063
        %v3138 = vadd.f32 %v2675, %v3068
        %v3139 = vadd.f32 %v2676, %v3071
        %v3140 = vadd.f32 %v2677, %v3076
        %v3141 = vadd.f32 %v2678, %v3079
        %v3142 = vadd.f32 %v2679, %v3084
        %v3143 = vadd.f32 %v2680, %v3087
        %v3144 = vadd.f32 %v2681, %v3092
        %v3145 = vadd.f32 %v2682, %v3095
        %v3146 = vadd.f32 %v2683, %v3100
        %v3147 = vadd.f32 %v2684, %v3103
        %v3148 = vadd.f32 %v2685, %v3108
        %v3149 = vadd.f32 %v2686, %v3111
        %v3150 = vld [vmem:[%s237 + $0xa0] sm:$0x7]
        %s3151 = scalar_lea.vmem [#allocation6], 448
        %v3152 = vld [vmem:[%s3151] sm:$0xf]
        %v3153 = vld [vmem:[%s3151 + $0x4] sm:$0xf]
        %v3154 = vld [vmem:[%s3151 + $0x8] sm:$0xf]
        %v3155 = vld [vmem:[%s3151 + $0xc] sm:$0xf]
        %v3156 = vld [vmem:[%s3151 + $0x10] sm:$0xf]
        %v3157 = vld [vmem:[%s3151 + $0x14] sm:$0xf]
        %v3158 = vld [vmem:[%s3151 + $0x18] sm:$0xf]
        %v3159 = vld [vmem:[%s3151 + $0x1c] sm:$0xf]
        %v3160 = vld [vmem:[%s3151 + $0x20] sm:$0xf]
        %v3161 = vld [vmem:[%s3151 + $0x24] sm:$0xf]
        %v3162 = vld [vmem:[%s3151 + $0x28] sm:$0xf]
        %v3163 = vld [vmem:[%s3151 + $0x2c] sm:$0xf]
        %v3164 = vld [vmem:[%s3151 + $0x30] sm:$0xf]
        %v3165 = vld [vmem:[%s3151 + $0x34] sm:$0xf]
        %v3166 = vld [vmem:[%s3151 + $0x38] sm:$0xf]
        %v3167 = vld [vmem:[%s3151 + $0x3c] sm:$0xf]
        %v3169 = vunpack.c.l.b16 %v3150
        %v3170 = vpack.c.b16 %v3169, %v3169
        %vm3171 = vsmask.f32 5376
        %v3173 = vshrl.u32 %v2815, 16
        %v3175 = vrot.slane %v3173, 2
        %v3176 = vshll.u32 %v2815, 16
        %v3178 = vrot.slane %v3176, 3
        %v3179 = vor.u32 %v3175, %v3178
        %v3181 = vshrl.u32 %v2816, 16
        %v3183 = vrot.slane %v3181, 2
        %v3184 = vshll.u32 %v2816, 16
        %v3186 = vrot.slane %v3184, 3
        %v3187 = vor.u32 %v3183, %v3186
        %v3188 = vsel %vm3171, %v3179, %v3187
        %v3190 = vshrl.u32 %v2817, 16
        %v3192 = vrot.slane %v3190, 2
        %v3193 = vshll.u32 %v2817, 16
        %v3195 = vrot.slane %v3193, 3
        %v3196 = vor.u32 %v3192, %v3195
        %v3197 = vsel %vm3171, %v3187, %v3196
        %v3199 = vshrl.u32 %v2818, 16
        %v3201 = vrot.slane %v3199, 2
        %v3202 = vshll.u32 %v2818, 16
        %v3204 = vrot.slane %v3202, 3
        %v3205 = vor.u32 %v3201, %v3204
        %v3206 = vsel %vm3171, %v3196, %v3205
        %v3208 = vshrl.u32 %v2819, 16
        %v3210 = vrot.slane %v3208, 2
        %v3211 = vshll.u32 %v2819, 16
        %v3213 = vrot.slane %v3211, 3
        %v3214 = vor.u32 %v3210, %v3213
        %v3215 = vsel %vm3171, %v3205, %v3214
        %v3217 = vshrl.u32 %v2820, 16
        %v3219 = vrot.slane %v3217, 2
        %v3220 = vshll.u32 %v2820, 16
        %v3222 = vrot.slane %v3220, 3
        %v3223 = vor.u32 %v3219, %v3222
        %v3224 = vsel %vm3171, %v3214, %v3223
        %v3226 = vshrl.u32 %v2821, 16
        %v3228 = vrot.slane %v3226, 2
        %v3229 = vshll.u32 %v2821, 16
        %v3231 = vrot.slane %v3229, 3
        %v3232 = vor.u32 %v3228, %v3231
        %v3233 = vsel %vm3171, %v3223, %v3232
        %v3235 = vshrl.u32 %v2822, 16
        %v3237 = vrot.slane %v3235, 2
        %v3238 = vshll.u32 %v2822, 16
        %v3240 = vrot.slane %v3238, 3
        %v3241 = vor.u32 %v3237, %v3240
        %v3242 = vsel %vm3171, %v3232, %v3241
        %v3244 = vshrl.u32 %v2823, 16
        %v3246 = vrot.slane %v3244, 2
        %v3247 = vshll.u32 %v2823, 16
        %v3249 = vrot.slane %v3247, 3
        %v3250 = vor.u32 %v3246, %v3249
        %v3251 = vsel %vm3171, %v3241, %v3250
        %v3253 = vshrl.u32 %v2824, 16
        %v3255 = vrot.slane %v3253, 2
        %v3256 = vshll.u32 %v2824, 16
        %v3258 = vrot.slane %v3256, 3
        %v3259 = vor.u32 %v3255, %v3258
        %v3260 = vsel %vm3171, %v3250, %v3259
        %v3262 = vshrl.u32 %v2825, 16
        %v3264 = vrot.slane %v3262, 2
        %v3265 = vshll.u32 %v2825, 16
        %v3267 = vrot.slane %v3265, 3
        %v3268 = vor.u32 %v3264, %v3267
        %v3269 = vsel %vm3171, %v3259, %v3268
        %v3271 = vshrl.u32 %v2826, 16
        %v3273 = vrot.slane %v3271, 2
        %v3274 = vshll.u32 %v2826, 16
        %v3276 = vrot.slane %v3274, 3
        %v3277 = vor.u32 %v3273, %v3276
        %v3278 = vsel %vm3171, %v3268, %v3277
        %v3280 = vshrl.u32 %v2827, 16
        %v3282 = vrot.slane %v3280, 2
        %v3283 = vshll.u32 %v2827, 16
        %v3285 = vrot.slane %v3283, 3
        %v3286 = vor.u32 %v3282, %v3285
        %v3287 = vsel %vm3171, %v3277, %v3286
        %v3289 = vshrl.u32 %v2828, 16
        %v3291 = vrot.slane %v3289, 2
        %v3292 = vshll.u32 %v2828, 16
        %v3294 = vrot.slane %v3292, 3
        %v3295 = vor.u32 %v3291, %v3294
        %v3296 = vsel %vm3171, %v3286, %v3295
        %v3298 = vshrl.u32 %v2829, 16
        %v3300 = vrot.slane %v3298, 2
        %v3301 = vshll.u32 %v2829, 16
        %v3303 = vrot.slane %v3301, 3
        %v3304 = vor.u32 %v3300, %v3303
        %v3305 = vsel %vm3171, %v3295, %v3304
        %v3307 = vshrl.u32 %v2830, 16
        %v3309 = vrot.slane %v3307, 2
        %v3310 = vshll.u32 %v2830, 16
        %v3312 = vrot.slane %v3310, 3
        %v3313 = vor.u32 %v3309, %v3312
        %v3314 = vsel %vm3171, %v3304, %v3313
        %v3316 = vshrl.u32 %v2831, 16
        %v3318 = vrot.slane %v3316, 2
        %v3319 = vshll.u32 %v2831, 16
        %v3321 = vrot.slane %v3319, 3
        %v3322 = vor.u32 %v3318, %v3321
        %v3323 = vsel %vm3171, %v3313, %v3322
        %v3325 = vshrl.u32 %v2832, 16
        %v3327 = vrot.slane %v3325, 2
        %v3328 = vshll.u32 %v2832, 16
        %v3330 = vrot.slane %v3328, 3
        %v3331 = vor.u32 %v3327, %v3330
        %v3332 = vsel %vm3171, %v3322, %v3331
        %v3334 = vshrl.u32 %v3170, 16
        %v3336 = vrot.slane %v3334, 2
        %v3337 = vshll.u32 %v3170, 16
        %v3339 = vrot.slane %v3337, 3
        %v3340 = vor.u32 %v3336, %v3339
        %v3341 = vsel %vm3171, %v3331, %v3340
        %v3376 = vunpack.c.l.b16 %v3152
        %v3377 = vunpack.c.l.b16 %v3153
        %v3378 = vunpack.c.l.b16 %v3154
        %v3379 = vunpack.c.l.b16 %v3155
        %v3380 = vunpack.c.l.b16 %v3156
        %v3381 = vunpack.c.l.b16 %v3157
        %v3382 = vunpack.c.l.b16 %v3158
        %v3383 = vunpack.c.l.b16 %v3159
        %v3384 = vunpack.c.l.b16 %v3160
        %v3385 = vunpack.c.l.b16 %v3161
        %v3386 = vunpack.c.l.b16 %v3162
        %v3387 = vunpack.c.l.b16 %v3163
        %v3388 = vunpack.c.l.b16 %v3164
        %v3389 = vunpack.c.l.b16 %v3165
        %v3390 = vunpack.c.l.b16 %v3166
        %v3391 = vunpack.c.l.b16 %v3167
        %v3392 = vpack.c.b16 %v3377, %v3376
        %v3393 = vpack.c.b16 %v3379, %v3378
        %v3394 = vpack.c.b16 %v3381, %v3380
        %v3395 = vpack.c.b16 %v3383, %v3382
        %v3396 = vpack.c.b16 %v3385, %v3384
        %v3397 = vpack.c.b16 %v3387, %v3386
        %v3398 = vpack.c.b16 %v3389, %v3388
        %v3399 = vpack.c.b16 %v3391, %v3390
        %3408 = vmatprep.subr.bf16.mxu0 0
        %3409 = vmatpush1.bf16.msra.mxu0 %v3399
        %3410 = vmatprep.subr.bf16.mxu0 0
        %3411 = vmatpush1.bf16.msra.mxu0 %v3398
        %3412 = vmatprep.subr.bf16.mxu0 0
        %3413 = vmatpush1.bf16.msra.mxu0 %v3397
        %3414 = vmatprep.subr.bf16.mxu0 0
        %3415 = vmatpush1.bf16.msra.mxu0 %v3396
        %3416 = vmatprep.subr.bf16.mxu0 0
        %3417 = vmatpush1.bf16.msra.mxu0 %v3395
        %3418 = vmatprep.subr.bf16.mxu0 0
        %3419 = vmatpush1.bf16.msra.mxu0 %v3394
        %3420 = vmatprep.subr.bf16.mxu0 0
        %3421 = vmatpush1.bf16.msra.mxu0 %v3393
        %3422 = vmatprep.subr.bf16.mxu0 0
        %3423 = vmatpush1.bf16.msra.mxu0 %v3392
        %3424 = vmatprep.subr.bf16.mxu0 0
        %3425 = vmatpush2.bf16.msra.mxu0 0
        %3426 = vmatprep.subr.bf16.mxu0 0
        %3427 = vmatpush2.bf16.msra.mxu0 0
        %3428 = vmatprep.subr.bf16.mxu0 0
        %3429 = vmatpush2.bf16.msra.mxu0 0
        %3430 = vmatprep.subr.bf16.mxu0 0
        %3431 = vmatpush2.bf16.msra.mxu0 0
        %3432 = vmatprep.subr.bf16.mxu0 0
        %3433 = vmatpush2.bf16.msra.mxu0 0
        %3434 = vmatprep.subr.bf16.mxu0 0
        %3435 = vmatpush2.bf16.msra.mxu0 0
        %3436 = vmatprep.subr.bf16.mxu0 0
        %3437 = vmatpush2.bf16.msra.mxu0 0
        %3438 = vmatprep.subr.bf16.mxu0 0
        %3439 = vmatpush2.bf16.msra.mxu0 0
        %3440 = vmatprep.mubr.bf16.mxu0 0
        %3441 = vmatmul.mubr.bf16.gmra.mxu0 %v3188
        %v3442 = vpop.f32.mrf.mxu0
        %v3443 = vadd.f32 0.0, %v3442
        %v3444 = vpop.f32.mrf.mxu0
        %v3445 = vpop.f32.mrf.mxu0
        %v3446 = vadd.f32 0.0, %v3445
        %v3447 = vpop.f32.mrf.mxu0
        %3448 = vmatprep.mubr.bf16.mxu0 0
        %3449 = vmatmul.mubr.bf16.gmra.mxu0 %v3197
        %v3450 = vpop.f32.mrf.mxu0
        %v3451 = vadd.f32 0.0, %v3450
        %v3452 = vpop.f32.mrf.mxu0
        %v3453 = vpop.f32.mrf.mxu0
        %v3454 = vadd.f32 0.0, %v3453
        %v3455 = vpop.f32.mrf.mxu0
        %3456 = vmatprep.mubr.bf16.mxu0 0
        %3457 = vmatmul.mubr.bf16.gmra.mxu0 %v3206
        %v3458 = vpop.f32.mrf.mxu0
        %v3459 = vadd.f32 0.0, %v3458
        %v3460 = vpop.f32.mrf.mxu0
        %v3461 = vpop.f32.mrf.mxu0
        %v3462 = vadd.f32 0.0, %v3461
        %v3463 = vpop.f32.mrf.mxu0
        %3464 = vmatprep.mubr.bf16.mxu0 0
        %3465 = vmatmul.mubr.bf16.gmra.mxu0 %v3215
        %v3466 = vpop.f32.mrf.mxu0
        %v3467 = vadd.f32 0.0, %v3466
        %v3468 = vpop.f32.mrf.mxu0
        %v3469 = vpop.f32.mrf.mxu0
        %v3470 = vadd.f32 0.0, %v3469
        %v3471 = vpop.f32.mrf.mxu0
        %3472 = vmatprep.mubr.bf16.mxu0 0
        %3473 = vmatmul.mubr.bf16.gmra.mxu0 %v3224
        %v3474 = vpop.f32.mrf.mxu0
        %v3475 = vadd.f32 0.0, %v3474
        %v3476 = vpop.f32.mrf.mxu0
        %v3477 = vpop.f32.mrf.mxu0
        %v3478 = vadd.f32 0.0, %v3477
        %v3479 = vpop.f32.mrf.mxu0
        %3480 = vmatprep.mubr.bf16.mxu0 0
        %3481 = vmatmul.mubr.bf16.gmra.mxu0 %v3233
        %v3482 = vpop.f32.mrf.mxu0
        %v3483 = vadd.f32 0.0, %v3482
        %v3484 = vpop.f32.mrf.mxu0
        %v3485 = vpop.f32.mrf.mxu0
        %v3486 = vadd.f32 0.0, %v3485
        %v3487 = vpop.f32.mrf.mxu0
        %3488 = vmatprep.mubr.bf16.mxu0 0
        %3489 = vmatmul.mubr.bf16.gmra.mxu0 %v3242
        %v3490 = vpop.f32.mrf.mxu0
        %v3491 = vadd.f32 0.0, %v3490
        %v3492 = vpop.f32.mrf.mxu0
        %v3493 = vpop.f32.mrf.mxu0
        %v3494 = vadd.f32 0.0, %v3493
        %v3495 = vpop.f32.mrf.mxu0
        %3496 = vmatprep.mubr.bf16.mxu0 0
        %3497 = vmatmul.mubr.bf16.gmra.mxu0 %v3251
        %v3498 = vpop.f32.mrf.mxu0
        %v3499 = vadd.f32 0.0, %v3498
        %v3500 = vpop.f32.mrf.mxu0
        %v3501 = vpop.f32.mrf.mxu0
        %v3502 = vadd.f32 0.0, %v3501
        %v3503 = vpop.f32.mrf.mxu0
        %3504 = vmatprep.mubr.bf16.mxu0 0
        %3505 = vmatmul.mubr.bf16.gmra.mxu0 %v3260
        %v3506 = vpop.f32.mrf.mxu0
        %v3507 = vadd.f32 0.0, %v3506
        %v3508 = vpop.f32.mrf.mxu0
        %v3509 = vpop.f32.mrf.mxu0
        %v3510 = vadd.f32 0.0, %v3509
        %v3511 = vpop.f32.mrf.mxu0
        %3512 = vmatprep.mubr.bf16.mxu0 0
        %3513 = vmatmul.mubr.bf16.gmra.mxu0 %v3269
        %v3514 = vpop.f32.mrf.mxu0
        %v3515 = vadd.f32 0.0, %v3514
        %v3516 = vpop.f32.mrf.mxu0
        %v3517 = vpop.f32.mrf.mxu0
        %v3518 = vadd.f32 0.0, %v3517
        %v3519 = vpop.f32.mrf.mxu0
        %3520 = vmatprep.mubr.bf16.mxu0 0
        %3521 = vmatmul.mubr.bf16.gmra.mxu0 %v3278
        %v3522 = vpop.f32.mrf.mxu0
        %v3523 = vadd.f32 0.0, %v3522
        %v3524 = vpop.f32.mrf.mxu0
        %v3525 = vpop.f32.mrf.mxu0
        %v3526 = vadd.f32 0.0, %v3525
        %v3527 = vpop.f32.mrf.mxu0
        %3528 = vmatprep.mubr.bf16.mxu0 0
        %3529 = vmatmul.mubr.bf16.gmra.mxu0 %v3287
        %v3530 = vpop.f32.mrf.mxu0
        %v3531 = vadd.f32 0.0, %v3530
        %v3532 = vpop.f32.mrf.mxu0
        %v3533 = vpop.f32.mrf.mxu0
        %v3534 = vadd.f32 0.0, %v3533
        %v3535 = vpop.f32.mrf.mxu0
        %3536 = vmatprep.mubr.bf16.mxu0 0
        %3537 = vmatmul.mubr.bf16.gmra.mxu0 %v3296
        %v3538 = vpop.f32.mrf.mxu0
        %v3539 = vadd.f32 0.0, %v3538
        %v3540 = vpop.f32.mrf.mxu0
        %v3541 = vpop.f32.mrf.mxu0
        %v3542 = vadd.f32 0.0, %v3541
        %v3543 = vpop.f32.mrf.mxu0
        %3544 = vmatprep.mubr.bf16.mxu0 0
        %3545 = vmatmul.mubr.bf16.gmra.mxu0 %v3305
        %v3546 = vpop.f32.mrf.mxu0
        %v3547 = vadd.f32 0.0, %v3546
        %v3548 = vpop.f32.mrf.mxu0
        %v3549 = vpop.f32.mrf.mxu0
        %v3550 = vadd.f32 0.0, %v3549
        %v3551 = vpop.f32.mrf.mxu0
        %3552 = vmatprep.mubr.bf16.mxu0 0
        %3553 = vmatmul.mubr.bf16.gmra.mxu0 %v3314
        %v3554 = vpop.f32.mrf.mxu0
        %v3555 = vadd.f32 0.0, %v3554
        %v3556 = vpop.f32.mrf.mxu0
        %v3557 = vpop.f32.mrf.mxu0
        %v3558 = vadd.f32 0.0, %v3557
        %v3559 = vpop.f32.mrf.mxu0
        %3560 = vmatprep.mubr.bf16.mxu0 0
        %3561 = vmatmul.mubr.bf16.gmra.mxu0 %v3323
        %v3562 = vpop.f32.mrf.mxu0
        %v3563 = vadd.f32 0.0, %v3562
        %v3564 = vpop.f32.mrf.mxu0
        %v3565 = vpop.f32.mrf.mxu0
        %v3566 = vadd.f32 0.0, %v3565
        %v3567 = vpop.f32.mrf.mxu0
        %3568 = vmatprep.mubr.bf16.mxu0 0
        %3569 = vmatmul.mubr.bf16.gmra.mxu0 %v3332
        %v3570 = vpop.f32.mrf.mxu0
        %v3571 = vadd.f32 0.0, %v3570
        %v3572 = vpop.f32.mrf.mxu0
        %v3573 = vpop.f32.mrf.mxu0
        %v3574 = vadd.f32 0.0, %v3573
        %v3575 = vpop.f32.mrf.mxu0
        %3576 = vmatprep.mubr.bf16.mxu0 0
        %3577 = vmatmul.mubr.bf16.gmra.mxu0 %v3341
        %v3578 = vpop.f32.mrf.mxu0
        %v3579 = vadd.f32 0.0, %v3578
        %v3580 = vpop.f32.mrf.mxu0
        %v3581 = vpop.f32.mrf.mxu0
        %v3582 = vadd.f32 0.0, %v3581
        %v3583 = vpop.f32.mrf.mxu0
        %3584 = vdwg.mxu0
        %v3585 = vadd.f32 %v3114, %v3443
        %v3586 = vadd.f32 %v3115, %v3446
        %v3587 = vadd.f32 %v3116, %v3451
        %v3588 = vadd.f32 %v3117, %v3454
        %v3589 = vadd.f32 %v3118, %v3459
        %v3590 = vadd.f32 %v3119, %v3462
        %v3591 = vadd.f32 %v3120, %v3467
        %v3592 = vadd.f32 %v3121, %v3470
        %v3593 = vadd.f32 %v3122, %v3475
        %v3594 = vadd.f32 %v3123, %v3478
        %v3595 = vadd.f32 %v3124, %v3483
        %v3596 = vadd.f32 %v3125, %v3486
        %v3597 = vadd.f32 %v3126, %v3491
        %v3598 = vadd.f32 %v3127, %v3494
        %v3599 = vadd.f32 %v3128, %v3499
        %v3600 = vadd.f32 %v3129, %v3502
        %v3601 = vadd.f32 %v3130, %v3507
        %v3602 = vadd.f32 %v3131, %v3510
        %v3603 = vadd.f32 %v3132, %v3515
        %v3604 = vadd.f32 %v3133, %v3518
        %v3605 = vadd.f32 %v3134, %v3523
        %v3606 = vadd.f32 %v3135, %v3526
        %v3607 = vadd.f32 %v3136, %v3531
        %v3608 = vadd.f32 %v3137, %v3534
        %v3609 = vadd.f32 %v3138, %v3539
        %v3610 = vadd.f32 %v3139, %v3542
        %v3611 = vadd.f32 %v3140, %v3547
        %v3612 = vadd.f32 %v3141, %v3550
        %v3613 = vadd.f32 %v3142, %v3555
        %v3614 = vadd.f32 %v3143, %v3558
        %v3615 = vadd.f32 %v3144, %v3563
        %v3616 = vadd.f32 %v3145, %v3566
        %v3617 = vadd.f32 %v3146, %v3571
        %v3618 = vadd.f32 %v3147, %v3574
        %v3619 = vadd.f32 %v3148, %v3579
        %v3620 = vadd.f32 %v3149, %v3582
        %v3621 = vld [vmem:[%s237 + $0x10] sm:$0x8]
        %s3622 = scalar_lea.vmem [#allocation6], 512
        %v3623 = vld [vmem:[%s3622] sm:$0xf]
        %v3624 = vld [vmem:[%s3622 + $0x4] sm:$0xf]
        %v3625 = vld [vmem:[%s3622 + $0x8] sm:$0xf]
        %v3626 = vld [vmem:[%s3622 + $0xc] sm:$0xf]
        %v3627 = vld [vmem:[%s3622 + $0x10] sm:$0xf]
        %v3628 = vld [vmem:[%s3622 + $0x14] sm:$0xf]
        %v3629 = vld [vmem:[%s3622 + $0x18] sm:$0xf]
        %v3630 = vld [vmem:[%s3622 + $0x1c] sm:$0xf]
        %v3631 = vld [vmem:[%s3622 + $0x20] sm:$0xf]
        %v3632 = vld [vmem:[%s3622 + $0x24] sm:$0xf]
        %v3633 = vld [vmem:[%s3622 + $0x28] sm:$0xf]
        %v3634 = vld [vmem:[%s3622 + $0x2c] sm:$0xf]
        %v3635 = vld [vmem:[%s3622 + $0x30] sm:$0xf]
        %v3636 = vld [vmem:[%s3622 + $0x34] sm:$0xf]
        %v3637 = vld [vmem:[%s3622 + $0x38] sm:$0xf]
        %v3638 = vld [vmem:[%s3622 + $0x3c] sm:$0xf]
        %v3640 = vunpack.c.l.b16 %v3621
        %v3641 = vpack.c.b16 %v2779, %v3640
        %vm3642 = vcmask 1044480
        %v3643 = vrot.slane %v3641, 3
        %v3644 = vrot.slane %v2816, 3
        %v3645 = vsel %vm3642, %v3643, %v3644
        %v3646 = vrot.slane %v2817, 3
        %v3647 = vsel %vm3642, %v3644, %v3646
        %v3648 = vrot.slane %v2818, 3
        %v3649 = vsel %vm3642, %v3646, %v3648
        %v3650 = vrot.slane %v2819, 3
        %v3651 = vsel %vm3642, %v3648, %v3650
        %v3652 = vrot.slane %v2820, 3
        %v3653 = vsel %vm3642, %v3650, %v3652
        %v3654 = vrot.slane %v2821, 3
        %v3655 = vsel %vm3642, %v3652, %v3654
        %v3656 = vrot.slane %v2822, 3
        %v3657 = vsel %vm3642, %v3654, %v3656
        %v3658 = vrot.slane %v2823, 3
        %v3659 = vsel %vm3642, %v3656, %v3658
        %v3660 = vrot.slane %v2824, 3
        %v3661 = vsel %vm3642, %v3658, %v3660
        %v3662 = vrot.slane %v2825, 3
        %v3663 = vsel %vm3642, %v3660, %v3662
        %v3664 = vrot.slane %v2826, 3
        %v3665 = vsel %vm3642, %v3662, %v3664
        %v3666 = vrot.slane %v2827, 3
        %v3667 = vsel %vm3642, %v3664, %v3666
        %v3668 = vrot.slane %v2828, 3
        %v3669 = vsel %vm3642, %v3666, %v3668
        %v3670 = vrot.slane %v2829, 3
        %v3671 = vsel %vm3642, %v3668, %v3670
        %v3672 = vrot.slane %v2830, 3
        %v3673 = vsel %vm3642, %v3670, %v3672
        %v3674 = vrot.slane %v2831, 3
        %v3675 = vsel %vm3642, %v3672, %v3674
        %v3676 = vrot.slane %v2832, 3
        %v3677 = vsel %vm3642, %v3674, %v3676
        %v3678 = vrot.slane %v3170, 3
        %v3679 = vsel %vm3642, %v3676, %v3678
        %v3714 = vunpack.c.l.b16 %v3623
        %v3715 = vunpack.c.l.b16 %v3624
        %v3716 = vunpack.c.l.b16 %v3625
        %v3717 = vunpack.c.l.b16 %v3626
        %v3718 = vunpack.c.l.b16 %v3627
        %v3719 = vunpack.c.l.b16 %v3628
        %v3720 = vunpack.c.l.b16 %v3629
        %v3721 = vunpack.c.l.b16 %v3630
        %v3722 = vunpack.c.l.b16 %v3631
        %v3723 = vunpack.c.l.b16 %v3632
        %v3724 = vunpack.c.l.b16 %v3633
        %v3725 = vunpack.c.l.b16 %v3634
        %v3726 = vunpack.c.l.b16 %v3635
        %v3727 = vunpack.c.l.b16 %v3636
        %v3728 = vunpack.c.l.b16 %v3637
        %v3729 = vunpack.c.l.b16 %v3638
        %v3730 = vpack.c.b16 %v3715, %v3714
        %v3731 = vpack.c.b16 %v3717, %v3716
        %v3732 = vpack.c.b16 %v3719, %v3718
        %v3733 = vpack.c.b16 %v3721, %v3720
        %v3734 = vpack.c.b16 %v3723, %v3722
        %v3735 = vpack.c.b16 %v3725, %v3724
        %v3736 = vpack.c.b16 %v3727, %v3726
        %v3737 = vpack.c.b16 %v3729, %v3728
        %3746 = vmatprep.subr.bf16.mxu0 0
        %3747 = vmatpush1.bf16.msra.mxu0 %v3737
        %3748 = vmatprep.subr.bf16.mxu0 0
        %3749 = vmatpush1.bf16.msra.mxu0 %v3736
        %3750 = vmatprep.subr.bf16.mxu0 0
        %3751 = vmatpush1.bf16.msra.mxu0 %v3735
        %3752 = vmatprep.subr.bf16.mxu0 0
        %3753 = vmatpush1.bf16.msra.mxu0 %v3734
        %3754 = vmatprep.subr.bf16.mxu0 0
        %3755 = vmatpush1.bf16.msra.mxu0 %v3733
        %3756 = vmatprep.subr.bf16.mxu0 0
        %3757 = vmatpush1.bf16.msra.mxu0 %v3732
        %3758 = vmatprep.subr.bf16.mxu0 0
        %3759 = vmatpush1.bf16.msra.mxu0 %v3731
        %3760 = vmatprep.subr.bf16.mxu0 0
        %3761 = vmatpush1.bf16.msra.mxu0 %v3730
        %3762 = vmatprep.subr.bf16.mxu0 0
        %3763 = vmatpush2.bf16.msra.mxu0 0
        %3764 = vmatprep.subr.bf16.mxu0 0
        %3765 = vmatpush2.bf16.msra.mxu0 0
        %3766 = vmatprep.subr.bf16.mxu0 0
        %3767 = vmatpush2.bf16.msra.mxu0 0
        %3768 = vmatprep.subr.bf16.mxu0 0
        %3769 = vmatpush2.bf16.msra.mxu0 0
        %3770 = vmatprep.subr.bf16.mxu0 0
        %3771 = vmatpush2.bf16.msra.mxu0 0
        %3772 = vmatprep.subr.bf16.mxu0 0
        %3773 = vmatpush2.bf16.msra.mxu0 0
        %3774 = vmatprep.subr.bf16.mxu0 0
        %3775 = vmatpush2.bf16.msra.mxu0 0
        %3776 = vmatprep.subr.bf16.mxu0 0
        %3777 = vmatpush2.bf16.msra.mxu0 0
        %3778 = vmatprep.mubr.bf16.mxu0 0
        %3779 = vmatmul.mubr.bf16.gmra.mxu0 %v3645
        %v3780 = vpop.f32.mrf.mxu0
        %v3781 = vadd.f32 0.0, %v3780
        %v3782 = vpop.f32.mrf.mxu0
        %v3783 = vpop.f32.mrf.mxu0
        %v3784 = vadd.f32 0.0, %v3783
        %v3785 = vpop.f32.mrf.mxu0
        %3786 = vmatprep.mubr.bf16.mxu0 0
        %3787 = vmatmul.mubr.bf16.gmra.mxu0 %v3647
        %v3788 = vpop.f32.mrf.mxu0
        %v3789 = vadd.f32 0.0, %v3788
        %v3790 = vpop.f32.mrf.mxu0
        %v3791 = vpop.f32.mrf.mxu0
        %v3792 = vadd.f32 0.0, %v3791
        %v3793 = vpop.f32.mrf.mxu0
        %3794 = vmatprep.mubr.bf16.mxu0 0
        %3795 = vmatmul.mubr.bf16.gmra.mxu0 %v3649
        %v3796 = vpop.f32.mrf.mxu0
        %v3797 = vadd.f32 0.0, %v3796
        %v3798 = vpop.f32.mrf.mxu0
        %v3799 = vpop.f32.mrf.mxu0
        %v3800 = vadd.f32 0.0, %v3799
        %v3801 = vpop.f32.mrf.mxu0
        %3802 = vmatprep.mubr.bf16.mxu0 0
        %3803 = vmatmul.mubr.bf16.gmra.mxu0 %v3651
        %v3804 = vpop.f32.mrf.mxu0
        %v3805 = vadd.f32 0.0, %v3804
        %v3806 = vpop.f32.mrf.mxu0
        %v3807 = vpop.f32.mrf.mxu0
        %v3808 = vadd.f32 0.0, %v3807
        %v3809 = vpop.f32.mrf.mxu0
        %3810 = vmatprep.mubr.bf16.mxu0 0
        %3811 = vmatmul.mubr.bf16.gmra.mxu0 %v3653
        %v3812 = vpop.f32.mrf.mxu0
        %v3813 = vadd.f32 0.0, %v3812
        %v3814 = vpop.f32.mrf.mxu0
        %v3815 = vpop.f32.mrf.mxu0
        %v3816 = vadd.f32 0.0, %v3815
        %v3817 = vpop.f32.mrf.mxu0
        %3818 = vmatprep.mubr.bf16.mxu0 0
        %3819 = vmatmul.mubr.bf16.gmra.mxu0 %v3655
        %v3820 = vpop.f32.mrf.mxu0
        %v3821 = vadd.f32 0.0, %v3820
        %v3822 = vpop.f32.mrf.mxu0
        %v3823 = vpop.f32.mrf.mxu0
        %v3824 = vadd.f32 0.0, %v3823
        %v3825 = vpop.f32.mrf.mxu0
        %3826 = vmatprep.mubr.bf16.mxu0 0
        %3827 = vmatmul.mubr.bf16.gmra.mxu0 %v3657
        %v3828 = vpop.f32.mrf.mxu0
        %v3829 = vadd.f32 0.0, %v3828
        %v3830 = vpop.f32.mrf.mxu0
        %v3831 = vpop.f32.mrf.mxu0
        %v3832 = vadd.f32 0.0, %v3831
        %v3833 = vpop.f32.mrf.mxu0
        %3834 = vmatprep.mubr.bf16.mxu0 0
        %3835 = vmatmul.mubr.bf16.gmra.mxu0 %v3659
        %v3836 = vpop.f32.mrf.mxu0
        %v3837 = vadd.f32 0.0, %v3836
        %v3838 = vpop.f32.mrf.mxu0
        %v3839 = vpop.f32.mrf.mxu0
        %v3840 = vadd.f32 0.0, %v3839
        %v3841 = vpop.f32.mrf.mxu0
        %3842 = vmatprep.mubr.bf16.mxu0 0
        %3843 = vmatmul.mubr.bf16.gmra.mxu0 %v3661
        %v3844 = vpop.f32.mrf.mxu0
        %v3845 = vadd.f32 0.0, %v3844
        %v3846 = vpop.f32.mrf.mxu0
        %v3847 = vpop.f32.mrf.mxu0
        %v3848 = vadd.f32 0.0, %v3847
        %v3849 = vpop.f32.mrf.mxu0
        %3850 = vmatprep.mubr.bf16.mxu0 0
        %3851 = vmatmul.mubr.bf16.gmra.mxu0 %v3663
        %v3852 = vpop.f32.mrf.mxu0
        %v3853 = vadd.f32 0.0, %v3852
        %v3854 = vpop.f32.mrf.mxu0
        %v3855 = vpop.f32.mrf.mxu0
        %v3856 = vadd.f32 0.0, %v3855
        %v3857 = vpop.f32.mrf.mxu0
        %3858 = vmatprep.mubr.bf16.mxu0 0
        %3859 = vmatmul.mubr.bf16.gmra.mxu0 %v3665
        %v3860 = vpop.f32.mrf.mxu0
        %v3861 = vadd.f32 0.0, %v3860
        %v3862 = vpop.f32.mrf.mxu0
        %v3863 = vpop.f32.mrf.mxu0
        %v3864 = vadd.f32 0.0, %v3863
        %v3865 = vpop.f32.mrf.mxu0
        %3866 = vmatprep.mubr.bf16.mxu0 0
        %3867 = vmatmul.mubr.bf16.gmra.mxu0 %v3667
        %v3868 = vpop.f32.mrf.mxu0
        %v3869 = vadd.f32 0.0, %v3868
        %v3870 = vpop.f32.mrf.mxu0
        %v3871 = vpop.f32.mrf.mxu0
        %v3872 = vadd.f32 0.0, %v3871
        %v3873 = vpop.f32.mrf.mxu0
        %3874 = vmatprep.mubr.bf16.mxu0 0
        %3875 = vmatmul.mubr.bf16.gmra.mxu0 %v3669
        %v3876 = vpop.f32.mrf.mxu0
        %v3877 = vadd.f32 0.0, %v3876
        %v3878 = vpop.f32.mrf.mxu0
        %v3879 = vpop.f32.mrf.mxu0
        %v3880 = vadd.f32 0.0, %v3879
        %v3881 = vpop.f32.mrf.mxu0
        %3882 = vmatprep.mubr.bf16.mxu0 0
        %3883 = vmatmul.mubr.bf16.gmra.mxu0 %v3671
        %v3884 = vpop.f32.mrf.mxu0
        %v3885 = vadd.f32 0.0, %v3884
        %v3886 = vpop.f32.mrf.mxu0
        %v3887 = vpop.f32.mrf.mxu0
        %v3888 = vadd.f32 0.0, %v3887
        %v3889 = vpop.f32.mrf.mxu0
        %3890 = vmatprep.mubr.bf16.mxu0 0
        %3891 = vmatmul.mubr.bf16.gmra.mxu0 %v3673
        %v3892 = vpop.f32.mrf.mxu0
        %v3893 = vadd.f32 0.0, %v3892
        %v3894 = vpop.f32.mrf.mxu0
        %v3895 = vpop.f32.mrf.mxu0
        %v3896 = vadd.f32 0.0, %v3895
        %v3897 = vpop.f32.mrf.mxu0
        %3898 = vmatprep.mubr.bf16.mxu0 0
        %3899 = vmatmul.mubr.bf16.gmra.mxu0 %v3675
        %v3900 = vpop.f32.mrf.mxu0
        %v3901 = vadd.f32 0.0, %v3900
        %v3902 = vpop.f32.mrf.mxu0
        %v3903 = vpop.f32.mrf.mxu0
        %v3904 = vadd.f32 0.0, %v3903
        %v3905 = vpop.f32.mrf.mxu0
        %3906 = vmatprep.mubr.bf16.mxu0 0
        %3907 = vmatmul.mubr.bf16.gmra.mxu0 %v3677
        %v3908 = vpop.f32.mrf.mxu0
        %v3909 = vadd.f32 0.0, %v3908
        %v3910 = vpop.f32.mrf.mxu0
        %v3911 = vpop.f32.mrf.mxu0
        %v3912 = vadd.f32 0.0, %v3911
        %v3913 = vpop.f32.mrf.mxu0
        %3914 = vmatprep.mubr.bf16.mxu0 0
        %3915 = vmatmul.mubr.bf16.gmra.mxu0 %v3679
        %v3916 = vpop.f32.mrf.mxu0
        %v3917 = vadd.f32 0.0, %v3916
        %v3918 = vpop.f32.mrf.mxu0
        %v3919 = vpop.f32.mrf.mxu0
        %v3920 = vadd.f32 0.0, %v3919
        %v3921 = vpop.f32.mrf.mxu0
        %3922 = vdwg.mxu0
        %v3923 = vadd.f32 %v3585, %v3781
        %v3924 = vadd.f32 %v3586, %v3784
        %v3925 = vadd.f32 %v3587, %v3789
        %v3926 = vadd.f32 %v3588, %v3792
        %v3927 = vadd.f32 %v3589, %v3797
        %v3928 = vadd.f32 %v3590, %v3800
        %v3929 = vadd.f32 %v3591, %v3805
        %v3930 = vadd.f32 %v3592, %v3808
        %v3931 = vadd.f32 %v3593, %v3813
        %v3932 = vadd.f32 %v3594, %v3816
        %v3933 = vadd.f32 %v3595, %v3821
        %v3934 = vadd.f32 %v3596, %v3824
        %v3935 = vadd.f32 %v3597, %v3829
        %v3936 = vadd.f32 %v3598, %v3832
        %v3937 = vadd.f32 %v3599, %v3837
        %v3938 = vadd.f32 %v3600, %v3840
        %v3939 = vadd.f32 %v3601, %v3845
        %v3940 = vadd.f32 %v3602, %v3848
        %v3941 = vadd.f32 %v3603, %v3853
        %v3942 = vadd.f32 %v3604, %v3856
        %v3943 = vadd.f32 %v3605, %v3861
        %v3944 = vadd.f32 %v3606, %v3864
        %v3945 = vadd.f32 %v3607, %v3869
        %v3946 = vadd.f32 %v3608, %v3872
        %v3947 = vadd.f32 %v3609, %v3877
        %v3948 = vadd.f32 %v3610, %v3880
        %v3949 = vadd.f32 %v3611, %v3885
        %v3950 = vadd.f32 %v3612, %v3888
        %v3951 = vadd.f32 %v3613, %v3893
        %v3952 = vadd.f32 %v3614, %v3896
        %v3953 = vadd.f32 %v3615, %v3901
        %v3954 = vadd.f32 %v3616, %v3904
        %v3955 = vadd.f32 %v3617, %v3909
        %v3956 = vadd.f32 %v3618, %v3912
        %v3957 = vadd.f32 %v3619, %v3917
        %v3958 = vadd.f32 %v3620, %v3920
        %v3959 = vld [vmem:[%s2] sm:$0x1]
        %v3961 = vlaneseq
        %v3962 = vshrl.u32 %v3961, 7
        %v3963 = vsub.s32 0, %v3962
        %v3964 = vrot.slane %v3959, %v3963
        %v3966 = vadd.f32 %v3923, %v3964
        %v3967 = vadd.f32 %v3924, %v3964
        %v3968 = vadd.f32 %v3925, %v3964
        %v3969 = vadd.f32 %v3926, %v3964
        %v3970 = vadd.f32 %v3927, %v3964
        %v3971 = vadd.f32 %v3928, %v3964
        %v3972 = vadd.f32 %v3929, %v3964
        %v3973 = vadd.f32 %v3930, %v3964
        %v3974 = vadd.f32 %v3931, %v3964
        %v3975 = vadd.f32 %v3932, %v3964
        %v3976 = vadd.f32 %v3933, %v3964
        %v3977 = vadd.f32 %v3934, %v3964
        %v3978 = vadd.f32 %v3935, %v3964
        %v3979 = vadd.f32 %v3936, %v3964
        %v3980 = vadd.f32 %v3937, %v3964
        %v3981 = vadd.f32 %v3938, %v3964
        %v3982 = vadd.f32 %v3939, %v3964
        %v3983 = vadd.f32 %v3940, %v3964
        %v3984 = vadd.f32 %v3941, %v3964
        %v3985 = vadd.f32 %v3942, %v3964
        %v3986 = vadd.f32 %v3943, %v3964
        %v3987 = vadd.f32 %v3944, %v3964
        %v3988 = vadd.f32 %v3945, %v3964
        %v3989 = vadd.f32 %v3946, %v3964
        %v3990 = vadd.f32 %v3947, %v3964
        %v3991 = vadd.f32 %v3948, %v3964
        %v3992 = vadd.f32 %v3949, %v3964
        %v3993 = vadd.f32 %v3950, %v3964
        %v3994 = vadd.f32 %v3951, %v3964
        %v3995 = vadd.f32 %v3952, %v3964
        %v3996 = vadd.f32 %v3953, %v3964
        %v3997 = vadd.f32 %v3954, %v3964
        %v3998 = vadd.f32 %v3955, %v3964
        %v3999 = vadd.f32 %v3956, %v3964
        %v4000 = vadd.f32 %v3957, %v3964
        %v4001 = vadd.f32 %v3958, %v3964
        %v4002 = vmax.f32 %v3966, 0.0
        %v4003 = vmax.f32 %v3967, 0.0
        %v4004 = vmax.f32 %v3968, 0.0
        %v4005 = vmax.f32 %v3969, 0.0
        %v4006 = vmax.f32 %v3970, 0.0
        %v4007 = vmax.f32 %v3971, 0.0
        %v4008 = vmax.f32 %v3972, 0.0
        %v4009 = vmax.f32 %v3973, 0.0
        %v4010 = vmax.f32 %v3974, 0.0
        %v4011 = vmax.f32 %v3975, 0.0
        %v4012 = vmax.f32 %v3976, 0.0
        %v4013 = vmax.f32 %v3977, 0.0
        %v4014 = vmax.f32 %v3978, 0.0
        %v4015 = vmax.f32 %v3979, 0.0
        %v4016 = vmax.f32 %v3980, 0.0
        %v4017 = vmax.f32 %v3981, 0.0
        %v4018 = vmax.f32 %v3982, 0.0
        %v4019 = vmax.f32 %v3983, 0.0
        %v4020 = vmax.f32 %v3984, 0.0
        %v4021 = vmax.f32 %v3985, 0.0
        %v4022 = vmax.f32 %v3986, 0.0
        %v4023 = vmax.f32 %v3987, 0.0
        %v4024 = vmax.f32 %v3988, 0.0
        %v4025 = vmax.f32 %v3989, 0.0
        %v4026 = vmax.f32 %v3990, 0.0
        %v4027 = vmax.f32 %v3991, 0.0
        %v4028 = vmax.f32 %v3992, 0.0
        %v4029 = vmax.f32 %v3993, 0.0
        %v4030 = vmax.f32 %v3994, 0.0
        %v4031 = vmax.f32 %v3995, 0.0
        %v4032 = vmax.f32 %v3996, 0.0
        %v4033 = vmax.f32 %v3997, 0.0
        %v4034 = vmax.f32 %v3998, 0.0
        %v4035 = vmax.f32 %v3999, 0.0
        %v4036 = vmax.f32 %v4000, 0.0
        %v4037 = vmax.f32 %v4001, 0.0
        %v4038 = vlaneseq
        %v4039 = vshrl.u32 %v4038, 7
        %v4040 = vadd.s32 %v4039, 8
        %v4041 = vadd.s32 %v4039, 16
        %v4042 = vadd.s32 %v4039, 24
        %v4043 = vadd.s32 %v4039, 32
        %v4044 = vadd.s32 %v4039, 40
        %v4045 = vadd.s32 %v4039, 48
        %v4046 = vadd.s32 %v4039, 56
        %v4047 = vadd.s32 %v4039, 64
        %v4048 = vadd.s32 %v4039, 72
        %v4049 = vadd.s32 %v4039, 80
        %v4050 = vadd.s32 %v4039, 88
        %v4051 = vadd.s32 %v4039, 96
        %v4052 = vadd.s32 %v4039, 104
        %v4053 = vadd.s32 %v4039, 112
        %v4054 = vadd.s32 %v4039, 120
        %v4055 = vadd.s32 %v4039, 128
        %v4056 = vadd.s32 %v4039, 136
        %v4057 = vadd.s32 %v4039, 144
        %v4058 = vadd.s32 %v4039, 152
        %v4059 = vadd.s32 %v4039, 160
        %v4060 = vadd.s32 %v4039, 168
        %v4061 = vadd.s32 %v4039, 176
        %v4062 = vadd.s32 %v4039, 184
        %v4063 = vadd.s32 %v4039, 192
        %v4064 = vadd.s32 %v4039, 200
        %v4065 = vadd.s32 %v4039, 208
        %v4066 = vadd.s32 %v4039, 216
        %v4067 = vadd.s32 %v4039, 224
        %v4068 = vadd.s32 %v4039, 232
        %v4069 = vadd.s32 %v4039, 240
        %v4070 = vadd.s32 %v4039, 248
        %v4071 = vadd.s32 %v4039, 256
        %v4072 = vadd.s32 %v4039, 264
        %v4073 = vadd.s32 %v4039, 272
        %v4074 = vadd.s32 %v4039, 280
        %vm4075 = vcmp.lt.s32.totalorder %v4039, 0
        %v4076 = vsub.s32 0, %v4039
        %v4077 = vsel %vm4075, %v4076, %v4039
        %v4078 = vmul.u32.u64.compose %v4077, 3817748708
        %v4079 = vextract.low.u32 %v4078
        %v4080 = vextract.high.u32 %v4078
        %v4081 = vshrl.u32 %v4080, 4
        %v4082 = vmul.u32 %v4081, 18
        %v4083 = vsub.s32 %v4077, %v4082
        %v4084 = vsub.s32 0, %v4083
        %v4085 = vsel %vm4075, %v4084, %v4083
        %vm4086 = vcmp.lt.s32.totalorder %v4040, 0
        %v4087 = vsub.s32 0, %v4040
        %v4088 = vsel %vm4086, %v4087, %v4040
        %v4089 = vmul.u32.u64.compose %v4088, 3817748708
        %v4090 = vextract.low.u32 %v4089
        %v4091 = vextract.high.u32 %v4089
        %v4092 = vshrl.u32 %v4091, 4
        %v4093 = vmul.u32 %v4092, 18
        %v4094 = vsub.s32 %v4088, %v4093
        %v4095 = vsub.s32 0, %v4094
        %v4096 = vsel %vm4086, %v4095, %v4094
        %vm4097 = vcmp.lt.s32.totalorder %v4041, 0
        %v4098 = vsub.s32 0, %v4041
        %v4099 = vsel %vm4097, %v4098, %v4041
        %v4100 = vmul.u32.u64.compose %v4099, 3817748708
        %v4101 = vextract.low.u32 %v4100
        %v4102 = vextract.high.u32 %v4100
        %v4103 = vshrl.u32 %v4102, 4
        %v4104 = vmul.u32 %v4103, 18
        %v4105 = vsub.s32 %v4099, %v4104
        %v4106 = vsub.s32 0, %v4105
        %v4107 = vsel %vm4097, %v4106, %v4105
        %vm4108 = vcmp.lt.s32.totalorder %v4042, 0
        %v4109 = vsub.s32 0, %v4042
        %v4110 = vsel %vm4108, %v4109, %v4042
        %v4111 = vmul.u32.u64.compose %v4110, 3817748708
        %v4112 = vextract.low.u32 %v4111
        %v4113 = vextract.high.u32 %v4111
        %v4114 = vshrl.u32 %v4113, 4
        %v4115 = vmul.u32 %v4114, 18
        %v4116 = vsub.s32 %v4110, %v4115
        %v4117 = vsub.s32 0, %v4116
        %v4118 = vsel %vm4108, %v4117, %v4116
        %vm4119 = vcmp.lt.s32.totalorder %v4043, 0
        %v4120 = vsub.s32 0, %v4043
        %v4121 = vsel %vm4119, %v4120, %v4043
        %v4122 = vmul.u32.u64.compose %v4121, 3817748708
        %v4123 = vextract.low.u32 %v4122
        %v4124 = vextract.high.u32 %v4122
        %v4125 = vshrl.u32 %v4124, 4
        %v4126 = vmul.u32 %v4125, 18
        %v4127 = vsub.s32 %v4121, %v4126
        %v4128 = vsub.s32 0, %v4127
        %v4129 = vsel %vm4119, %v4128, %v4127
        %vm4130 = vcmp.lt.s32.totalorder %v4044, 0
        %v4131 = vsub.s32 0, %v4044
        %v4132 = vsel %vm4130, %v4131, %v4044
        %v4133 = vmul.u32.u64.compose %v4132, 3817748708
        %v4134 = vextract.low.u32 %v4133
        %v4135 = vextract.high.u32 %v4133
        %v4136 = vshrl.u32 %v4135, 4
        %v4137 = vmul.u32 %v4136, 18
        %v4138 = vsub.s32 %v4132, %v4137
        %v4139 = vsub.s32 0, %v4138
        %v4140 = vsel %vm4130, %v4139, %v4138
        %vm4141 = vcmp.lt.s32.totalorder %v4045, 0
        %v4142 = vsub.s32 0, %v4045
        %v4143 = vsel %vm4141, %v4142, %v4045
        %v4144 = vmul.u32.u64.compose %v4143, 3817748708
        %v4145 = vextract.low.u32 %v4144
        %v4146 = vextract.high.u32 %v4144
        %v4147 = vshrl.u32 %v4146, 4
        %v4148 = vmul.u32 %v4147, 18
        %v4149 = vsub.s32 %v4143, %v4148
        %v4150 = vsub.s32 0, %v4149
        %v4151 = vsel %vm4141, %v4150, %v4149
        %vm4152 = vcmp.lt.s32.totalorder %v4046, 0
        %v4153 = vsub.s32 0, %v4046
        %v4154 = vsel %vm4152, %v4153, %v4046
        %v4155 = vmul.u32.u64.compose %v4154, 3817748708
        %v4156 = vextract.low.u32 %v4155
        %v4157 = vextract.high.u32 %v4155
        %v4158 = vshrl.u32 %v4157, 4
        %v4159 = vmul.u32 %v4158, 18
        %v4160 = vsub.s32 %v4154, %v4159
        %v4161 = vsub.s32 0, %v4160
        %v4162 = vsel %vm4152, %v4161, %v4160
        %vm4163 = vcmp.lt.s32.totalorder %v4047, 0
        %v4164 = vsub.s32 0, %v4047
        %v4165 = vsel %vm4163, %v4164, %v4047
        %v4166 = vmul.u32.u64.compose %v4165, 3817748708
        %v4167 = vextract.low.u32 %v4166
        %v4168 = vextract.high.u32 %v4166
        %v4169 = vshrl.u32 %v4168, 4
        %v4170 = vmul.u32 %v4169, 18
        %v4171 = vsub.s32 %v4165, %v4170
        %v4172 = vsub.s32 0, %v4171
        %v4173 = vsel %vm4163, %v4172, %v4171
        %vm4174 = vcmp.lt.s32.totalorder %v4048, 0
        %v4175 = vsub.s32 0, %v4048
        %v4176 = vsel %vm4174, %v4175, %v4048
        %v4177 = vmul.u32.u64.compose %v4176, 3817748708
        %v4178 = vextract.low.u32 %v4177
        %v4179 = vextract.high.u32 %v4177
        %v4180 = vshrl.u32 %v4179, 4
        %v4181 = vmul.u32 %v4180, 18
        %v4182 = vsub.s32 %v4176, %v4181
        %v4183 = vsub.s32 0, %v4182
        %v4184 = vsel %vm4174, %v4183, %v4182
        %vm4185 = vcmp.lt.s32.totalorder %v4049, 0
        %v4186 = vsub.s32 0, %v4049
        %v4187 = vsel %vm4185, %v4186, %v4049
        %v4188 = vmul.u32.u64.compose %v4187, 3817748708
        %v4189 = vextract.low.u32 %v4188
        %v4190 = vextract.high.u32 %v4188
        %v4191 = vshrl.u32 %v4190, 4
        %v4192 = vmul.u32 %v4191, 18
        %v4193 = vsub.s32 %v4187, %v4192
        %v4194 = vsub.s32 0, %v4193
        %v4195 = vsel %vm4185, %v4194, %v4193
        %vm4196 = vcmp.lt.s32.totalorder %v4050, 0
        %v4197 = vsub.s32 0, %v4050
        %v4198 = vsel %vm4196, %v4197, %v4050
        %v4199 = vmul.u32.u64.compose %v4198, 3817748708
        %v4200 = vextract.low.u32 %v4199
        %v4201 = vextract.high.u32 %v4199
        %v4202 = vshrl.u32 %v4201, 4
        %v4203 = vmul.u32 %v4202, 18
        %v4204 = vsub.s32 %v4198, %v4203
        %v4205 = vsub.s32 0, %v4204
        %v4206 = vsel %vm4196, %v4205, %v4204
        %vm4207 = vcmp.lt.s32.totalorder %v4051, 0
        %v4208 = vsub.s32 0, %v4051
        %v4209 = vsel %vm4207, %v4208, %v4051
        %v4210 = vmul.u32.u64.compose %v4209, 3817748708
        %v4211 = vextract.low.u32 %v4210
        %v4212 = vextract.high.u32 %v4210
        %v4213 = vshrl.u32 %v4212, 4
        %v4214 = vmul.u32 %v4213, 18
        %v4215 = vsub.s32 %v4209, %v4214
        %v4216 = vsub.s32 0, %v4215
        %v4217 = vsel %vm4207, %v4216, %v4215
        %vm4218 = vcmp.lt.s32.totalorder %v4052, 0
        %v4219 = vsub.s32 0, %v4052
        %v4220 = vsel %vm4218, %v4219, %v4052
        %v4221 = vmul.u32.u64.compose %v4220, 3817748708
        %v4222 = vextract.low.u32 %v4221
        %v4223 = vextract.high.u32 %v4221
        %v4224 = vshrl.u32 %v4223, 4
        %v4225 = vmul.u32 %v4224, 18
        %v4226 = vsub.s32 %v4220, %v4225
        %v4227 = vsub.s32 0, %v4226
        %v4228 = vsel %vm4218, %v4227, %v4226
        %vm4229 = vcmp.lt.s32.totalorder %v4053, 0
        %v4230 = vsub.s32 0, %v4053
        %v4231 = vsel %vm4229, %v4230, %v4053
        %v4232 = vmul.u32.u64.compose %v4231, 3817748708
        %v4233 = vextract.low.u32 %v4232
        %v4234 = vextract.high.u32 %v4232
        %v4235 = vshrl.u32 %v4234, 4
        %v4236 = vmul.u32 %v4235, 18
        %v4237 = vsub.s32 %v4231, %v4236
        %v4238 = vsub.s32 0, %v4237
        %v4239 = vsel %vm4229, %v4238, %v4237
        %vm4240 = vcmp.lt.s32.totalorder %v4054, 0
        %v4241 = vsub.s32 0, %v4054
        %v4242 = vsel %vm4240, %v4241, %v4054
        %v4243 = vmul.u32.u64.compose %v4242, 3817748708
        %v4244 = vextract.low.u32 %v4243
        %v4245 = vextract.high.u32 %v4243
        %v4246 = vshrl.u32 %v4245, 4
        %v4247 = vmul.u32 %v4246, 18
        %v4248 = vsub.s32 %v4242, %v4247
        %v4249 = vsub.s32 0, %v4248
        %v4250 = vsel %vm4240, %v4249, %v4248
        %vm4251 = vcmp.lt.s32.totalorder %v4055, 0
        %v4252 = vsub.s32 0, %v4055
        %v4253 = vsel %vm4251, %v4252, %v4055
        %v4254 = vmul.u32.u64.compose %v4253, 3817748708
        %v4255 = vextract.low.u32 %v4254
        %v4256 = vextract.high.u32 %v4254
        %v4257 = vshrl.u32 %v4256, 4
        %v4258 = vmul.u32 %v4257, 18
        %v4259 = vsub.s32 %v4253, %v4258
        %v4260 = vsub.s32 0, %v4259
        %v4261 = vsel %vm4251, %v4260, %v4259
        %vm4262 = vcmp.lt.s32.totalorder %v4056, 0
        %v4263 = vsub.s32 0, %v4056
        %v4264 = vsel %vm4262, %v4263, %v4056
        %v4265 = vmul.u32.u64.compose %v4264, 3817748708
        %v4266 = vextract.low.u32 %v4265
        %v4267 = vextract.high.u32 %v4265
        %v4268 = vshrl.u32 %v4267, 4
        %v4269 = vmul.u32 %v4268, 18
        %v4270 = vsub.s32 %v4264, %v4269
        %v4271 = vsub.s32 0, %v4270
        %v4272 = vsel %vm4262, %v4271, %v4270
        %vm4273 = vcmp.lt.s32.totalorder %v4057, 0
        %v4274 = vsub.s32 0, %v4057
        %v4275 = vsel %vm4273, %v4274, %v4057
        %v4276 = vmul.u32.u64.compose %v4275, 3817748708
        %v4277 = vextract.low.u32 %v4276
        %v4278 = vextract.high.u32 %v4276
        %v4279 = vshrl.u32 %v4278, 4
        %v4280 = vmul.u32 %v4279, 18
        %v4281 = vsub.s32 %v4275, %v4280
        %v4282 = vsub.s32 0, %v4281
        %v4283 = vsel %vm4273, %v4282, %v4281
        %vm4284 = vcmp.lt.s32.totalorder %v4058, 0
        %v4285 = vsub.s32 0, %v4058
        %v4286 = vsel %vm4284, %v4285, %v4058
        %v4287 = vmul.u32.u64.compose %v4286, 3817748708
        %v4288 = vextract.low.u32 %v4287
        %v4289 = vextract.high.u32 %v4287
        %v4290 = vshrl.u32 %v4289, 4
        %v4291 = vmul.u32 %v4290, 18
        %v4292 = vsub.s32 %v4286, %v4291
        %v4293 = vsub.s32 0, %v4292
        %v4294 = vsel %vm4284, %v4293, %v4292
        %vm4295 = vcmp.lt.s32.totalorder %v4059, 0
        %v4296 = vsub.s32 0, %v4059
        %v4297 = vsel %vm4295, %v4296, %v4059
        %v4298 = vmul.u32.u64.compose %v4297, 3817748708
        %v4299 = vextract.low.u32 %v4298
        %v4300 = vextract.high.u32 %v4298
        %v4301 = vshrl.u32 %v4300, 4
        %v4302 = vmul.u32 %v4301, 18
        %v4303 = vsub.s32 %v4297, %v4302
        %v4304 = vsub.s32 0, %v4303
        %v4305 = vsel %vm4295, %v4304, %v4303
        %vm4306 = vcmp.lt.s32.totalorder %v4060, 0
        %v4307 = vsub.s32 0, %v4060
        %v4308 = vsel %vm4306, %v4307, %v4060
        %v4309 = vmul.u32.u64.compose %v4308, 3817748708
        %v4310 = vextract.low.u32 %v4309
        %v4311 = vextract.high.u32 %v4309
        %v4312 = vshrl.u32 %v4311, 4
        %v4313 = vmul.u32 %v4312, 18
        %v4314 = vsub.s32 %v4308, %v4313
        %v4315 = vsub.s32 0, %v4314
        %v4316 = vsel %vm4306, %v4315, %v4314
        %vm4317 = vcmp.lt.s32.totalorder %v4061, 0
        %v4318 = vsub.s32 0, %v4061
        %v4319 = vsel %vm4317, %v4318, %v4061
        %v4320 = vmul.u32.u64.compose %v4319, 3817748708
        %v4321 = vextract.low.u32 %v4320
        %v4322 = vextract.high.u32 %v4320
        %v4323 = vshrl.u32 %v4322, 4
        %v4324 = vmul.u32 %v4323, 18
        %v4325 = vsub.s32 %v4319, %v4324
        %v4326 = vsub.s32 0, %v4325
        %v4327 = vsel %vm4317, %v4326, %v4325
        %vm4328 = vcmp.lt.s32.totalorder %v4062, 0
        %v4329 = vsub.s32 0, %v4062
        %v4330 = vsel %vm4328, %v4329, %v4062
        %v4331 = vmul.u32.u64.compose %v4330, 3817748708
        %v4332 = vextract.low.u32 %v4331
        %v4333 = vextract.high.u32 %v4331
        %v4334 = vshrl.u32 %v4333, 4
        %v4335 = vmul.u32 %v4334, 18
        %v4336 = vsub.s32 %v4330, %v4335
        %v4337 = vsub.s32 0, %v4336
        %v4338 = vsel %vm4328, %v4337, %v4336
        %vm4339 = vcmp.lt.s32.totalorder %v4063, 0
        %v4340 = vsub.s32 0, %v4063
        %v4341 = vsel %vm4339, %v4340, %v4063
        %v4342 = vmul.u32.u64.compose %v4341, 3817748708
        %v4343 = vextract.low.u32 %v4342
        %v4344 = vextract.high.u32 %v4342
        %v4345 = vshrl.u32 %v4344, 4
        %v4346 = vmul.u32 %v4345, 18
        %v4347 = vsub.s32 %v4341, %v4346
        %v4348 = vsub.s32 0, %v4347
        %v4349 = vsel %vm4339, %v4348, %v4347
        %vm4350 = vcmp.lt.s32.totalorder %v4064, 0
        %v4351 = vsub.s32 0, %v4064
        %v4352 = vsel %vm4350, %v4351, %v4064
        %v4353 = vmul.u32.u64.compose %v4352, 3817748708
        %v4354 = vextract.low.u32 %v4353
        %v4355 = vextract.high.u32 %v4353
        %v4356 = vshrl.u32 %v4355, 4
        %v4357 = vmul.u32 %v4356, 18
        %v4358 = vsub.s32 %v4352, %v4357
        %v4359 = vsub.s32 0, %v4358
        %v4360 = vsel %vm4350, %v4359, %v4358
        %vm4361 = vcmp.lt.s32.totalorder %v4065, 0
        %v4362 = vsub.s32 0, %v4065
        %v4363 = vsel %vm4361, %v4362, %v4065
        %v4364 = vmul.u32.u64.compose %v4363, 3817748708
        %v4365 = vextract.low.u32 %v4364
        %v4366 = vextract.high.u32 %v4364
        %v4367 = vshrl.u32 %v4366, 4
        %v4368 = vmul.u32 %v4367, 18
        %v4369 = vsub.s32 %v4363, %v4368
        %v4370 = vsub.s32 0, %v4369
        %v4371 = vsel %vm4361, %v4370, %v4369
        %vm4372 = vcmp.lt.s32.totalorder %v4066, 0
        %v4373 = vsub.s32 0, %v4066
        %v4374 = vsel %vm4372, %v4373, %v4066
        %v4375 = vmul.u32.u64.compose %v4374, 3817748708
        %v4376 = vextract.low.u32 %v4375
        %v4377 = vextract.high.u32 %v4375
        %v4378 = vshrl.u32 %v4377, 4
        %v4379 = vmul.u32 %v4378, 18
        %v4380 = vsub.s32 %v4374, %v4379
        %v4381 = vsub.s32 0, %v4380
        %v4382 = vsel %vm4372, %v4381, %v4380
        %vm4383 = vcmp.lt.s32.totalorder %v4067, 0
        %v4384 = vsub.s32 0, %v4067
        %v4385 = vsel %vm4383, %v4384, %v4067
        %v4386 = vmul.u32.u64.compose %v4385, 3817748708
        %v4387 = vextract.low.u32 %v4386
        %v4388 = vextract.high.u32 %v4386
        %v4389 = vshrl.u32 %v4388, 4
        %v4390 = vmul.u32 %v4389, 18
        %v4391 = vsub.s32 %v4385, %v4390
        %v4392 = vsub.s32 0, %v4391
        %v4393 = vsel %vm4383, %v4392, %v4391
        %vm4394 = vcmp.lt.s32.totalorder %v4068, 0
        %v4395 = vsub.s32 0, %v4068
        %v4396 = vsel %vm4394, %v4395, %v4068
        %v4397 = vmul.u32.u64.compose %v4396, 3817748708
        %v4398 = vextract.low.u32 %v4397
        %v4399 = vextract.high.u32 %v4397
        %v4400 = vshrl.u32 %v4399, 4
        %v4401 = vmul.u32 %v4400, 18
        %v4402 = vsub.s32 %v4396, %v4401
        %v4403 = vsub.s32 0, %v4402
        %v4404 = vsel %vm4394, %v4403, %v4402
        %vm4405 = vcmp.lt.s32.totalorder %v4069, 0
        %v4406 = vsub.s32 0, %v4069
        %v4407 = vsel %vm4405, %v4406, %v4069
        %v4408 = vmul.u32.u64.compose %v4407, 3817748708
        %v4409 = vextract.low.u32 %v4408
        %v4410 = vextract.high.u32 %v4408
        %v4411 = vshrl.u32 %v4410, 4
        %v4412 = vmul.u32 %v4411, 18
        %v4413 = vsub.s32 %v4407, %v4412
        %v4414 = vsub.s32 0, %v4413
        %v4415 = vsel %vm4405, %v4414, %v4413
        %vm4416 = vcmp.lt.s32.totalorder %v4070, 0
        %v4417 = vsub.s32 0, %v4070
        %v4418 = vsel %vm4416, %v4417, %v4070
        %v4419 = vmul.u32.u64.compose %v4418, 3817748708
        %v4420 = vextract.low.u32 %v4419
        %v4421 = vextract.high.u32 %v4419
        %v4422 = vshrl.u32 %v4421, 4
        %v4423 = vmul.u32 %v4422, 18
        %v4424 = vsub.s32 %v4418, %v4423
        %v4425 = vsub.s32 0, %v4424
        %v4426 = vsel %vm4416, %v4425, %v4424
        %vm4427 = vcmp.lt.s32.totalorder %v4071, 0
        %v4428 = vsub.s32 0, %v4071
        %v4429 = vsel %vm4427, %v4428, %v4071
        %v4430 = vmul.u32.u64.compose %v4429, 3817748708
        %v4431 = vextract.low.u32 %v4430
        %v4432 = vextract.high.u32 %v4430
        %v4433 = vshrl.u32 %v4432, 4
        %v4434 = vmul.u32 %v4433, 18
        %v4435 = vsub.s32 %v4429, %v4434
        %v4436 = vsub.s32 0, %v4435
        %v4437 = vsel %vm4427, %v4436, %v4435
        %vm4438 = vcmp.lt.s32.totalorder %v4072, 0
        %v4439 = vsub.s32 0, %v4072
        %v4440 = vsel %vm4438, %v4439, %v4072
        %v4441 = vmul.u32.u64.compose %v4440, 3817748708
        %v4442 = vextract.low.u32 %v4441
        %v4443 = vextract.high.u32 %v4441
        %v4444 = vshrl.u32 %v4443, 4
        %v4445 = vmul.u32 %v4444, 18
        %v4446 = vsub.s32 %v4440, %v4445
        %v4447 = vsub.s32 0, %v4446
        %v4448 = vsel %vm4438, %v4447, %v4446
        %vm4449 = vcmp.lt.s32.totalorder %v4073, 0
        %v4450 = vsub.s32 0, %v4073
        %v4451 = vsel %vm4449, %v4450, %v4073
        %v4452 = vmul.u32.u64.compose %v4451, 3817748708
        %v4453 = vextract.low.u32 %v4452
        %v4454 = vextract.high.u32 %v4452
        %v4455 = vshrl.u32 %v4454, 4
        %v4456 = vmul.u32 %v4455, 18
        %v4457 = vsub.s32 %v4451, %v4456
        %v4458 = vsub.s32 0, %v4457
        %v4459 = vsel %vm4449, %v4458, %v4457
        %vm4460 = vcmp.lt.s32.totalorder %v4074, 0
        %v4461 = vsub.s32 0, %v4074
        %v4462 = vsel %vm4460, %v4461, %v4074
        %v4463 = vmul.u32.u64.compose %v4462, 3817748708
        %v4464 = vextract.low.u32 %v4463
        %v4465 = vextract.high.u32 %v4463
        %v4466 = vshrl.u32 %v4465, 4
        %v4467 = vmul.u32 %v4466, 18
        %v4468 = vsub.s32 %v4462, %v4467
        %v4469 = vsub.s32 0, %v4468
        %v4470 = vsel %vm4460, %v4469, %v4468
        %vm4471 = vcmp.ne.s32.totalorder %v4085, 0
        %vm4472 = vcmp.ne.s32.totalorder %v4096, 0
        %vm4473 = vcmp.ne.s32.totalorder %v4107, 0
        %vm4474 = vcmp.ne.s32.totalorder %v4118, 0
        %vm4475 = vcmp.ne.s32.totalorder %v4129, 0
        %vm4476 = vcmp.ne.s32.totalorder %v4140, 0
        %vm4477 = vcmp.ne.s32.totalorder %v4151, 0
        %vm4478 = vcmp.ne.s32.totalorder %v4162, 0
        %vm4479 = vcmp.ne.s32.totalorder %v4173, 0
        %vm4480 = vcmp.ne.s32.totalorder %v4184, 0
        %vm4481 = vcmp.ne.s32.totalorder %v4195, 0
        %vm4482 = vcmp.ne.s32.totalorder %v4206, 0
        %vm4483 = vcmp.ne.s32.totalorder %v4217, 0
        %vm4484 = vcmp.ne.s32.totalorder %v4228, 0
        %vm4485 = vcmp.ne.s32.totalorder %v4239, 0
        %vm4486 = vcmp.ne.s32.totalorder %v4250, 0
        %vm4487 = vcmp.ne.s32.totalorder %v4261, 0
        %vm4488 = vcmp.ne.s32.totalorder %v4272, 0
        %vm4489 = vcmp.ne.s32.totalorder %v4283, 0
        %vm4490 = vcmp.ne.s32.totalorder %v4294, 0
        %vm4491 = vcmp.ne.s32.totalorder %v4305, 0
        %vm4492 = vcmp.ne.s32.totalorder %v4316, 0
        %vm4493 = vcmp.ne.s32.totalorder %v4327, 0
        %vm4494 = vcmp.ne.s32.totalorder %v4338, 0
        %vm4495 = vcmp.ne.s32.totalorder %v4349, 0
        %vm4496 = vcmp.ne.s32.totalorder %v4360, 0
        %vm4497 = vcmp.ne.s32.totalorder %v4371, 0
        %vm4498 = vcmp.ne.s32.totalorder %v4382, 0
        %vm4499 = vcmp.ne.s32.totalorder %v4393, 0
        %vm4500 = vcmp.ne.s32.totalorder %v4404, 0
        %vm4501 = vcmp.ne.s32.totalorder %v4415, 0
        %vm4502 = vcmp.ne.s32.totalorder %v4426, 0
        %vm4503 = vcmp.ne.s32.totalorder %v4437, 0
        %vm4504 = vcmp.ne.s32.totalorder %v4448, 0
        %vm4505 = vcmp.ne.s32.totalorder %v4459, 0
        %vm4506 = vcmp.ne.s32.totalorder %v4470, 0
        %vm4507 = vcmp.lt.s32.totalorder %v4085, 0
        %vm4508 = vcmp.lt.s32.totalorder %v4096, 0
        %vm4509 = vcmp.lt.s32.totalorder %v4107, 0
        %vm4510 = vcmp.lt.s32.totalorder %v4118, 0
        %vm4511 = vcmp.lt.s32.totalorder %v4129, 0
        %vm4512 = vcmp.lt.s32.totalorder %v4140, 0
        %vm4513 = vcmp.lt.s32.totalorder %v4151, 0
        %vm4514 = vcmp.lt.s32.totalorder %v4162, 0
        %vm4515 = vcmp.lt.s32.totalorder %v4173, 0
        %vm4516 = vcmp.lt.s32.totalorder %v4184, 0
        %vm4517 = vcmp.lt.s32.totalorder %v4195, 0
        %vm4518 = vcmp.lt.s32.totalorder %v4206, 0
        %vm4519 = vcmp.lt.s32.totalorder %v4217, 0
        %vm4520 = vcmp.lt.s32.totalorder %v4228, 0
        %vm4521 = vcmp.lt.s32.totalorder %v4239, 0
        %vm4522 = vcmp.lt.s32.totalorder %v4250, 0
        %vm4523 = vcmp.lt.s32.totalorder %v4261, 0
        %vm4524 = vcmp.lt.s32.totalorder %v4272, 0
        %vm4525 = vcmp.lt.s32.totalorder %v4283, 0
        %vm4526 = vcmp.lt.s32.totalorder %v4294, 0
        %vm4527 = vcmp.lt.s32.totalorder %v4305, 0
        %vm4528 = vcmp.lt.s32.totalorder %v4316, 0
        %vm4529 = vcmp.lt.s32.totalorder %v4327, 0
        %vm4530 = vcmp.lt.s32.totalorder %v4338, 0
        %vm4531 = vcmp.lt.s32.totalorder %v4349, 0
        %vm4532 = vcmp.lt.s32.totalorder %v4360, 0
        %vm4533 = vcmp.lt.s32.totalorder %v4371, 0
        %vm4534 = vcmp.lt.s32.totalorder %v4382, 0
        %vm4535 = vcmp.lt.s32.totalorder %v4393, 0
        %vm4536 = vcmp.lt.s32.totalorder %v4404, 0
        %vm4537 = vcmp.lt.s32.totalorder %v4415, 0
        %vm4538 = vcmp.lt.s32.totalorder %v4426, 0
        %vm4539 = vcmp.lt.s32.totalorder %v4437, 0
        %vm4540 = vcmp.lt.s32.totalorder %v4448, 0
        %vm4541 = vcmp.lt.s32.totalorder %v4459, 0
        %vm4542 = vcmp.lt.s32.totalorder %v4470, 0
        %vm4543 = vmand %vm4507, %vm4471
        %vm4544 = vmand %vm4508, %vm4472
        %vm4545 = vmand %vm4509, %vm4473
        %vm4546 = vmand %vm4510, %vm4474
        %vm4547 = vmand %vm4511, %vm4475
        %vm4548 = vmand %vm4512, %vm4476
        %vm4549 = vmand %vm4513, %vm4477
        %vm4550 = vmand %vm4514, %vm4478
        %vm4551 = vmand %vm4515, %vm4479
        %vm4552 = vmand %vm4516, %vm4480
        %vm4553 = vmand %vm4517, %vm4481
        %vm4554 = vmand %vm4518, %vm4482
        %vm4555 = vmand %vm4519, %vm4483
        %vm4556 = vmand %vm4520, %vm4484
        %vm4557 = vmand %vm4521, %vm4485
        %vm4558 = vmand %vm4522, %vm4486
        %vm4559 = vmand %vm4523, %vm4487
        %vm4560 = vmand %vm4524, %vm4488
        %vm4561 = vmand %vm4525, %vm4489
        %vm4562 = vmand %vm4526, %vm4490
        %vm4563 = vmand %vm4527, %vm4491
        %vm4564 = vmand %vm4528, %vm4492
        %vm4565 = vmand %vm4529, %vm4493
        %vm4566 = vmand %vm4530, %vm4494
        %vm4567 = vmand %vm4531, %vm4495
        %vm4568 = vmand %vm4532, %vm4496
        %vm4569 = vmand %vm4533, %vm4497
        %vm4570 = vmand %vm4534, %vm4498
        %vm4571 = vmand %vm4535, %vm4499
        %vm4572 = vmand %vm4536, %vm4500
        %vm4573 = vmand %vm4537, %vm4501
        %vm4574 = vmand %vm4538, %vm4502
        %vm4575 = vmand %vm4539, %vm4503
        %vm4576 = vmand %vm4540, %vm4504
        %vm4577 = vmand %vm4541, %vm4505
        %vm4578 = vmand %vm4542, %vm4506
        %v4579 = vadd.s32 %v4085, 18
        %v4580 = vadd.s32 %v4096, 18
        %v4581 = vadd.s32 %v4107, 18
        %v4582 = vadd.s32 %v4118, 18
        %v4583 = vadd.s32 %v4129, 18
        %v4584 = vadd.s32 %v4140, 18
        %v4585 = vadd.s32 %v4151, 18
        %v4586 = vadd.s32 %v4162, 18
        %v4587 = vadd.s32 %v4173, 18
        %v4588 = vadd.s32 %v4184, 18
        %v4589 = vadd.s32 %v4195, 18
        %v4590 = vadd.s32 %v4206, 18
        %v4591 = vadd.s32 %v4217, 18
        %v4592 = vadd.s32 %v4228, 18
        %v4593 = vadd.s32 %v4239, 18
        %v4594 = vadd.s32 %v4250, 18
        %v4595 = vadd.s32 %v4261, 18
        %v4596 = vadd.s32 %v4272, 18
        %v4597 = vadd.s32 %v4283, 18
        %v4598 = vadd.s32 %v4294, 18
        %v4599 = vadd.s32 %v4305, 18
        %v4600 = vadd.s32 %v4316, 18
        %v4601 = vadd.s32 %v4327, 18
        %v4602 = vadd.s32 %v4338, 18
        %v4603 = vadd.s32 %v4349, 18
        %v4604 = vadd.s32 %v4360, 18
        %v4605 = vadd.s32 %v4371, 18
        %v4606 = vadd.s32 %v4382, 18
        %v4607 = vadd.s32 %v4393, 18
        %v4608 = vadd.s32 %v4404, 18
        %v4609 = vadd.s32 %v4415, 18
        %v4610 = vadd.s32 %v4426, 18
        %v4611 = vadd.s32 %v4437, 18
        %v4612 = vadd.s32 %v4448, 18
        %v4613 = vadd.s32 %v4459, 18
        %v4614 = vadd.s32 %v4470, 18
        %v4615 = vsel %vm4543, %v4579, %v4085
        %v4616 = vsel %vm4544, %v4580, %v4096
        %v4617 = vsel %vm4545, %v4581, %v4107
        %v4618 = vsel %vm4546, %v4582, %v4118
        %v4619 = vsel %vm4547, %v4583, %v4129
        %v4620 = vsel %vm4548, %v4584, %v4140
        %v4621 = vsel %vm4549, %v4585, %v4151
        %v4622 = vsel %vm4550, %v4586, %v4162
        %v4623 = vsel %vm4551, %v4587, %v4173
        %v4624 = vsel %vm4552, %v4588, %v4184
        %v4625 = vsel %vm4553, %v4589, %v4195
        %v4626 = vsel %vm4554, %v4590, %v4206
        %v4627 = vsel %vm4555, %v4591, %v4217
        %v4628 = vsel %vm4556, %v4592, %v4228
        %v4629 = vsel %vm4557, %v4593, %v4239
        %v4630 = vsel %vm4558, %v4594, %v4250
        %v4631 = vsel %vm4559, %v4595, %v4261
        %v4632 = vsel %vm4560, %v4596, %v4272
        %v4633 = vsel %vm4561, %v4597, %v4283
        %v4634 = vsel %vm4562, %v4598, %v4294
        %v4635 = vsel %vm4563, %v4599, %v4305
        %v4636 = vsel %vm4564, %v4600, %v4316
        %v4637 = vsel %vm4565, %v4601, %v4327
        %v4638 = vsel %vm4566, %v4602, %v4338
        %v4639 = vsel %vm4567, %v4603, %v4349
        %v4640 = vsel %vm4568, %v4604, %v4360
        %v4641 = vsel %vm4569, %v4605, %v4371
        %v4642 = vsel %vm4570, %v4606, %v4382
        %v4643 = vsel %vm4571, %v4607, %v4393
        %v4644 = vsel %vm4572, %v4608, %v4404
        %v4645 = vsel %vm4573, %v4609, %v4415
        %v4646 = vsel %vm4574, %v4610, %v4426
        %v4647 = vsel %vm4575, %v4611, %v4437
        %v4648 = vsel %vm4576, %v4612, %v4448
        %v4649 = vsel %vm4577, %v4613, %v4459
        %v4650 = vsel %vm4578, %v4614, %v4470
        %vm4651 = vcmp.lt.s32.totalorder %v4615, 16
        %vm4652 = vcmp.lt.s32.totalorder %v4616, 16
        %vm4653 = vcmp.lt.s32.totalorder %v4617, 16
        %vm4654 = vcmp.lt.s32.totalorder %v4618, 16
        %vm4655 = vcmp.lt.s32.totalorder %v4619, 16
        %vm4656 = vcmp.lt.s32.totalorder %v4620, 16
        %vm4657 = vcmp.lt.s32.totalorder %v4621, 16
        %vm4658 = vcmp.lt.s32.totalorder %v4622, 16
        %vm4659 = vcmp.lt.s32.totalorder %v4623, 16
        %vm4660 = vcmp.lt.s32.totalorder %v4624, 16
        %vm4661 = vcmp.lt.s32.totalorder %v4625, 16
        %vm4662 = vcmp.lt.s32.totalorder %v4626, 16
        %vm4663 = vcmp.lt.s32.totalorder %v4627, 16
        %vm4664 = vcmp.lt.s32.totalorder %v4628, 16
        %vm4665 = vcmp.lt.s32.totalorder %v4629, 16
        %vm4666 = vcmp.lt.s32.totalorder %v4630, 16
        %vm4667 = vcmp.lt.s32.totalorder %v4631, 16
        %vm4668 = vcmp.lt.s32.totalorder %v4632, 16
        %vm4669 = vcmp.lt.s32.totalorder %v4633, 16
        %vm4670 = vcmp.lt.s32.totalorder %v4634, 16
        %vm4671 = vcmp.lt.s32.totalorder %v4635, 16
        %vm4672 = vcmp.lt.s32.totalorder %v4636, 16
        %vm4673 = vcmp.lt.s32.totalorder %v4637, 16
        %vm4674 = vcmp.lt.s32.totalorder %v4638, 16
        %vm4675 = vcmp.lt.s32.totalorder %v4639, 16
        %vm4676 = vcmp.lt.s32.totalorder %v4640, 16
        %vm4677 = vcmp.lt.s32.totalorder %v4641, 16
        %vm4678 = vcmp.lt.s32.totalorder %v4642, 16
        %vm4679 = vcmp.lt.s32.totalorder %v4643, 16
        %vm4680 = vcmp.lt.s32.totalorder %v4644, 16
        %vm4681 = vcmp.lt.s32.totalorder %v4645, 16
        %vm4682 = vcmp.lt.s32.totalorder %v4646, 16
        %vm4683 = vcmp.lt.s32.totalorder %v4647, 16
        %vm4684 = vcmp.lt.s32.totalorder %v4648, 16
        %vm4685 = vcmp.lt.s32.totalorder %v4649, 16
        %vm4686 = vcmp.lt.s32.totalorder %v4650, 16
        %v4687 = vsel %vm4651, 1, 0
        %v4688 = vsel %vm4652, 1, 0
        %v4689 = vsel %vm4653, 1, 0
        %v4690 = vsel %vm4654, 1, 0
        %v4691 = vsel %vm4655, 1, 0
        %v4692 = vsel %vm4656, 1, 0
        %v4693 = vsel %vm4657, 1, 0
        %v4694 = vsel %vm4658, 1, 0
        %v4695 = vsel %vm4659, 1, 0
        %v4696 = vsel %vm4660, 1, 0
        %v4697 = vsel %vm4661, 1, 0
        %v4698 = vsel %vm4662, 1, 0
        %v4699 = vsel %vm4663, 1, 0
        %v4700 = vsel %vm4664, 1, 0
        %v4701 = vsel %vm4665, 1, 0
        %v4702 = vsel %vm4666, 1, 0
        %v4703 = vsel %vm4667, 1, 0
        %v4704 = vsel %vm4668, 1, 0
        %v4705 = vsel %vm4669, 1, 0
        %v4706 = vsel %vm4670, 1, 0
        %v4707 = vsel %vm4671, 1, 0
        %v4708 = vsel %vm4672, 1, 0
        %v4709 = vsel %vm4673, 1, 0
        %v4710 = vsel %vm4674, 1, 0
        %v4711 = vsel %vm4675, 1, 0
        %v4712 = vsel %vm4676, 1, 0
        %v4713 = vsel %vm4677, 1, 0
        %v4714 = vsel %vm4678, 1, 0
        %v4715 = vsel %vm4679, 1, 0
        %v4716 = vsel %vm4680, 1, 0
        %v4717 = vsel %vm4681, 1, 0
        %v4718 = vsel %vm4682, 1, 0
        %v4719 = vsel %vm4683, 1, 0
        %v4720 = vsel %vm4684, 1, 0
        %v4721 = vsel %vm4685, 1, 0
        %v4722 = vsel %vm4686, 1, 0
        %vm4723 = vcmp.eq.s32.totalorder %v4687, 1
        %vm4724 = vcmp.eq.s32.totalorder %v4688, 1
        %vm4725 = vcmp.eq.s32.totalorder %v4689, 1
        %vm4726 = vcmp.eq.s32.totalorder %v4690, 1
        %vm4727 = vcmp.eq.s32.totalorder %v4691, 1
        %vm4728 = vcmp.eq.s32.totalorder %v4692, 1
        %vm4729 = vcmp.eq.s32.totalorder %v4693, 1
        %vm4730 = vcmp.eq.s32.totalorder %v4694, 1
        %vm4731 = vcmp.eq.s32.totalorder %v4695, 1
        %vm4732 = vcmp.eq.s32.totalorder %v4696, 1
        %vm4733 = vcmp.eq.s32.totalorder %v4697, 1
        %vm4734 = vcmp.eq.s32.totalorder %v4698, 1
        %vm4735 = vcmp.eq.s32.totalorder %v4699, 1
        %vm4736 = vcmp.eq.s32.totalorder %v4700, 1
        %vm4737 = vcmp.eq.s32.totalorder %v4701, 1
        %vm4738 = vcmp.eq.s32.totalorder %v4702, 1
        %vm4739 = vcmp.eq.s32.totalorder %v4703, 1
        %vm4740 = vcmp.eq.s32.totalorder %v4704, 1
        %vm4741 = vcmp.eq.s32.totalorder %v4705, 1
        %vm4742 = vcmp.eq.s32.totalorder %v4706, 1
        %vm4743 = vcmp.eq.s32.totalorder %v4707, 1
        %vm4744 = vcmp.eq.s32.totalorder %v4708, 1
        %vm4745 = vcmp.eq.s32.totalorder %v4709, 1
        %vm4746 = vcmp.eq.s32.totalorder %v4710, 1
        %vm4747 = vcmp.eq.s32.totalorder %v4711, 1
        %vm4748 = vcmp.eq.s32.totalorder %v4712, 1
        %vm4749 = vcmp.eq.s32.totalorder %v4713, 1
        %vm4750 = vcmp.eq.s32.totalorder %v4714, 1
        %vm4751 = vcmp.eq.s32.totalorder %v4715, 1
        %vm4752 = vcmp.eq.s32.totalorder %v4716, 1
        %vm4753 = vcmp.eq.s32.totalorder %v4717, 1
        %vm4754 = vcmp.eq.s32.totalorder %v4718, 1
        %vm4755 = vcmp.eq.s32.totalorder %v4719, 1
        %vm4756 = vcmp.eq.s32.totalorder %v4720, 1
        %vm4757 = vcmp.eq.s32.totalorder %v4721, 1
        %vm4758 = vcmp.eq.s32.totalorder %v4722, 1
        %v4759 = vsel %vm4723, %v4002, 0.0
        %v4760 = vsel %vm4724, %v4003, 0.0
        %v4761 = vsel %vm4725, %v4004, 0.0
        %v4762 = vsel %vm4726, %v4005, 0.0
        %v4763 = vsel %vm4727, %v4006, 0.0
        %v4764 = vsel %vm4728, %v4007, 0.0
        %v4765 = vsel %vm4729, %v4008, 0.0
        %v4766 = vsel %vm4730, %v4009, 0.0
        %v4767 = vsel %vm4731, %v4010, 0.0
        %v4768 = vsel %vm4732, %v4011, 0.0
        %v4769 = vsel %vm4733, %v4012, 0.0
        %v4770 = vsel %vm4734, %v4013, 0.0
        %v4771 = vsel %vm4735, %v4014, 0.0
        %v4772 = vsel %vm4736, %v4015, 0.0
        %v4773 = vsel %vm4737, %v4016, 0.0
        %v4774 = vsel %vm4738, %v4017, 0.0
        %v4775 = vsel %vm4739, %v4018, 0.0
        %v4776 = vsel %vm4740, %v4019, 0.0
        %v4777 = vsel %vm4741, %v4020, 0.0
        %v4778 = vsel %vm4742, %v4021, 0.0
        %v4779 = vsel %vm4743, %v4022, 0.0
        %v4780 = vsel %vm4744, %v4023, 0.0
        %v4781 = vsel %vm4745, %v4024, 0.0
        %v4782 = vsel %vm4746, %v4025, 0.0
        %v4783 = vsel %vm4747, %v4026, 0.0
        %v4784 = vsel %vm4748, %v4027, 0.0
        %v4785 = vsel %vm4749, %v4028, 0.0
        %v4786 = vsel %vm4750, %v4029, 0.0
        %v4787 = vsel %vm4751, %v4030, 0.0
        %v4788 = vsel %vm4752, %v4031, 0.0
        %v4789 = vsel %vm4753, %v4032, 0.0
        %v4790 = vsel %vm4754, %v4033, 0.0
        %v4791 = vsel %vm4755, %v4034, 0.0
        %v4792 = vsel %vm4756, %v4035, 0.0
        %v4793 = vsel %vm4757, %v4036, 0.0
        %v4794 = vsel %vm4758, %v4037, 0.0
        %v4795 = vpack.c.bf16 %v4760, %v4759
        %v4796 = vpack.c.bf16 %v4762, %v4761
        %v4797 = vpack.c.bf16 %v4764, %v4763
        %v4798 = vpack.c.bf16 %v4766, %v4765
        %v4799 = vpack.c.bf16 %v4768, %v4767
        %v4800 = vpack.c.bf16 %v4770, %v4769
        %v4801 = vpack.c.bf16 %v4772, %v4771
        %v4802 = vpack.c.bf16 %v4774, %v4773
        %v4803 = vpack.c.bf16 %v4776, %v4775
        %v4804 = vpack.c.bf16 %v4778, %v4777
        %v4805 = vpack.c.bf16 %v4780, %v4779
        %v4806 = vpack.c.bf16 %v4782, %v4781
        %v4807 = vpack.c.bf16 %v4784, %v4783
        %v4808 = vpack.c.bf16 %v4786, %v4785
        %v4809 = vpack.c.bf16 %v4788, %v4787
        %v4810 = vpack.c.bf16 %v4790, %v4789
        %v4811 = vpack.c.bf16 %v4792, %v4791
        %v4812 = vpack.c.bf16 %v4794, %v4793
        %v4831 = vunpack.c.l.b16 %v4795
        %v4832 = vunpack.c.h.b16 %v4795
        %v4833 = vunpack.c.l.b16 %v4796
        %v4834 = vunpack.c.h.b16 %v4796
        %v4835 = vunpack.c.l.b16 %v4797
        %v4836 = vunpack.c.h.b16 %v4797
        %v4837 = vunpack.c.l.b16 %v4798
        %v4838 = vunpack.c.h.b16 %v4798
        %v4839 = vunpack.c.l.b16 %v4799
        %v4840 = vunpack.c.h.b16 %v4799
        %v4841 = vunpack.c.l.b16 %v4800
        %v4842 = vunpack.c.h.b16 %v4800
        %v4843 = vunpack.c.l.b16 %v4801
        %v4844 = vunpack.c.h.b16 %v4801
        %v4845 = vunpack.c.l.b16 %v4802
        %v4846 = vunpack.c.h.b16 %v4802
        %v4847 = vunpack.c.l.b16 %v4803
        %v4848 = vunpack.c.h.b16 %v4803
        %v4849 = vunpack.c.l.b16 %v4804
        %v4850 = vunpack.c.h.b16 %v4804
        %v4851 = vunpack.c.l.b16 %v4805
        %v4852 = vunpack.c.h.b16 %v4805
        %v4853 = vunpack.c.l.b16 %v4806
        %v4854 = vunpack.c.h.b16 %v4806
        %v4855 = vunpack.c.l.b16 %v4807
        %v4856 = vunpack.c.h.b16 %v4807
        %v4857 = vunpack.c.l.b16 %v4808
        %v4858 = vunpack.c.h.b16 %v4808
        %v4859 = vunpack.c.l.b16 %v4809
        %v4860 = vunpack.c.h.b16 %v4809
        %v4861 = vunpack.c.l.b16 %v4810
        %v4862 = vunpack.c.h.b16 %v4810
        %v4863 = vunpack.c.l.b16 %v4811
        %v4864 = vunpack.c.h.b16 %v4811
        %v4865 = vunpack.c.l.b16 %v4812
        %v4866 = vunpack.c.h.b16 %v4812
        %v4867 = vpack.c.b16 %v4831, %v4831
        %v4868 = vpack.c.b16 %v4832, %v4832
        %v4869 = vpack.c.b16 %v4833, %v4833
        %v4870 = vpack.c.b16 %v4834, %v4834
        %v4871 = vpack.c.b16 %v4835, %v4835
        %v4872 = vpack.c.b16 %v4836, %v4836
        %v4873 = vpack.c.b16 %v4837, %v4837
        %v4874 = vpack.c.b16 %v4838, %v4838
        %v4875 = vpack.c.b16 %v4839, %v4839
        %v4876 = vpack.c.b16 %v4840, %v4840
        %v4877 = vpack.c.b16 %v4841, %v4841
        %v4878 = vpack.c.b16 %v4842, %v4842
        %v4879 = vpack.c.b16 %v4843, %v4843
        %v4880 = vpack.c.b16 %v4844, %v4844
        %v4881 = vpack.c.b16 %v4845, %v4845
        %v4882 = vpack.c.b16 %v4846, %v4846
        %v4883 = vpack.c.b16 %v4847, %v4847
        %v4884 = vpack.c.b16 %v4848, %v4848
        %v4885 = vpack.c.b16 %v4849, %v4849
        %v4886 = vpack.c.b16 %v4850, %v4850
        %v4887 = vpack.c.b16 %v4851, %v4851
        %v4888 = vpack.c.b16 %v4852, %v4852
        %v4889 = vpack.c.b16 %v4853, %v4853
        %v4890 = vpack.c.b16 %v4854, %v4854
        %v4891 = vpack.c.b16 %v4855, %v4855
        %v4892 = vpack.c.b16 %v4856, %v4856
        %v4893 = vpack.c.b16 %v4857, %v4857
        %v4894 = vpack.c.b16 %v4858, %v4858
        %v4895 = vpack.c.b16 %v4859, %v4859
        %v4896 = vpack.c.b16 %v4860, %v4860
        %v4897 = vpack.c.b16 %v4861, %v4861
        %v4898 = vpack.c.b16 %v4862, %v4862
        %v4899 = vpack.c.b16 %v4863, %v4863
        %v4900 = vpack.c.b16 %v4864, %v4864
        %v4901 = vpack.c.b16 %v4865, %v4865
        %v4902 = vpack.c.b16 %v4866, %v4866
        %4939 = vst [vmem:[#allocation2 + $0xc] sm:$0xf] %v4867
        %4940 = vst [vmem:[#allocation2 + $0x10] sm:$0xf] %v4868
        %4941 = vst [vmem:[#allocation2 + $0x14] sm:$0xf] %v4869
        %4942 = vst [vmem:[#allocation2 + $0x18] sm:$0xf] %v4870
        %4943 = vst [vmem:[#allocation2 + $0x1c] sm:$0xf] %v4871
        %4944 = vst [vmem:[#allocation2 + $0x20] sm:$0xf] %v4872
        %4945 = vst [vmem:[#allocation2 + $0x24] sm:$0xf] %v4873
        %4946 = vst [vmem:[#allocation2 + $0x28] sm:$0xf] %v4874
        %4947 = vst [vmem:[#allocation2 + $0x2c] sm:$0xf] %v4875
        %4948 = vst [vmem:[#allocation2 + $0x30] sm:$0xf] %v4876
        %4949 = vst [vmem:[#allocation2 + $0x34] sm:$0xf] %v4877
        %4950 = vst [vmem:[#allocation2 + $0x38] sm:$0xf] %v4878
        %4951 = vst [vmem:[#allocation2 + $0x3c] sm:$0xf] %v4879
        %4952 = vst [vmem:[#allocation2 + $0x40] sm:$0xf] %v4880
        %4953 = vst [vmem:[#allocation2 + $0x44] sm:$0xf] %v4881
        %4954 = vst [vmem:[#allocation2 + $0x48] sm:$0xf] %v4882
        %4955 = vst [vmem:[#allocation2 + $0x4c] sm:$0xf] %v4883
        %4956 = vst [vmem:[#allocation2 + $0x50] sm:$0xf] %v4884
        %4957 = vst [vmem:[#allocation2 + $0x54] sm:$0xf] %v4885
        %4958 = vst [vmem:[#allocation2 + $0x58] sm:$0xf] %v4886
        %4959 = vst [vmem:[#allocation2 + $0x5c] sm:$0xf] %v4887
        %4960 = vst [vmem:[#allocation2 + $0x60] sm:$0xf] %v4888
        %4961 = vst [vmem:[#allocation2 + $0x64] sm:$0xf] %v4889
        %4962 = vst [vmem:[#allocation2 + $0x68] sm:$0xf] %v4890
        %4963 = vst [vmem:[#allocation2 + $0x6c] sm:$0xf] %v4891
        %4964 = vst [vmem:[#allocation2 + $0x70] sm:$0xf] %v4892
        %4965 = vst [vmem:[#allocation2 + $0x74] sm:$0xf] %v4893
        %4966 = vst [vmem:[#allocation2 + $0x78] sm:$0xf] %v4894
        %4967 = vst [vmem:[#allocation2 + $0x7c] sm:$0xf] %v4895
        %4968 = vst [vmem:[#allocation2 + $0x80] sm:$0xf] %v4896
        %4969 = vst [vmem:[#allocation2 + $0x84] sm:$0xf] %v4897
        %4970 = vst [vmem:[#allocation2 + $0x88] sm:$0xf] %v4898
        %4971 = vst [vmem:[#allocation2 + $0x8c] sm:$0xf] %v4899
        %4972 = vst [vmem:[#allocation2 + $0x90] sm:$0xf] %v4900
        %4973 = vst [vmem:[#allocation2 + $0x94] sm:$0xf] %v4901
        %4974 = vst [vmem:[#allocation2 + $0x98] sm:$0xf] %v4902
        %v4975 = vld [vmem:[#allocation2] sm:$0xc]
        %v4976 = vld [vmem:[#allocation2 + $0x4] sm:$0xf]
        %v4977 = vld [vmem:[#allocation2 + $0x8] sm:$0xf]
        %v4978 = vld [vmem:[#allocation2 + $0xc] sm:$0xf]
        %v4979 = vld [vmem:[#allocation2 + $0x10] sm:$0xf]
        %v4980 = vld [vmem:[#allocation2 + $0x14] sm:$0xf]
        %v4981 = vld [vmem:[#allocation2 + $0x18] sm:$0xf]
        %v4982 = vld [vmem:[#allocation2 + $0x1c] sm:$0xf]
        %v4983 = vld [vmem:[#allocation2 + $0x20] sm:$0xf]
        %v4984 = vld [vmem:[#allocation2 + $0x24] sm:$0xf]
        %v4985 = vld [vmem:[#allocation2 + $0x28] sm:$0xf]
        %v4986 = vld [vmem:[#allocation2 + $0x2c] sm:$0xf]
        %v4987 = vld [vmem:[#allocation2 + $0x30] sm:$0xf]
        %v4988 = vld [vmem:[#allocation2 + $0x34] sm:$0xf]
        %v4989 = vld [vmem:[#allocation2 + $0x38] sm:$0xf]
        %v4990 = vld [vmem:[#allocation2 + $0x3c] sm:$0xf]
        %v4991 = vld [vmem:[#allocation2 + $0x40] sm:$0xf]
        %v4992 = vld [vmem:[#allocation2 + $0x44] sm:$0xf]
        %v4993 = vld [vmem:[#allocation2 + $0x48] sm:$0xf]
        %v4994 = vld [vmem:[#allocation2 + $0x4c] sm:$0xf]
        %v4995 = vld [vmem:[#allocation2 + $0x50] sm:$0xf]
        %v4996 = vld [vmem:[#allocation2 + $0x54] sm:$0xf]
        %v4997 = vld [vmem:[#allocation2 + $0x58] sm:$0xf]
        %v4998 = vld [vmem:[#allocation2 + $0x5c] sm:$0xf]
        %v4999 = vld [vmem:[#allocation2 + $0x60] sm:$0xf]
        %v5000 = vld [vmem:[#allocation2 + $0x64] sm:$0xf]
        %v5001 = vld [vmem:[#allocation2 + $0x68] sm:$0xf]
        %v5002 = vld [vmem:[#allocation2 + $0x6c] sm:$0xf]
        %v5003 = vld [vmem:[#allocation2 + $0x70] sm:$0xf]
        %v5004 = vld [vmem:[#allocation2 + $0x74] sm:$0xf]
        %v5005 = vld [vmem:[#allocation2 + $0x78] sm:$0xf]
        %v5006 = vld [vmem:[#allocation2 + $0x7c] sm:$0xf]
        %v5007 = vld [vmem:[#allocation2 + $0x80] sm:$0xf]
        %v5008 = vld [vmem:[#allocation2 + $0x84] sm:$0xf]
        %v5009 = vld [vmem:[#allocation2 + $0x88] sm:$0xf]
        %v5010 = vld [vmem:[#allocation2 + $0x8c] sm:$0xf]
        %v5011 = vld [vmem:[#allocation2 + $0x90] sm:$0x7]
        %v5012 = vld [vmem:[#allocation8] sm:$0xf]
        %v5013 = vld [vmem:[#allocation8 + $0x4] sm:$0xf]
        %v5014 = vld [vmem:[#allocation8 + $0x8] sm:$0xf]
        %v5015 = vld [vmem:[#allocation8 + $0xc] sm:$0xf]
        %v5016 = vld [vmem:[#allocation8 + $0x10] sm:$0xf]
        %v5017 = vld [vmem:[#allocation8 + $0x14] sm:$0xf]
        %v5018 = vld [vmem:[#allocation8 + $0x18] sm:$0xf]
        %v5019 = vld [vmem:[#allocation8 + $0x1c] sm:$0xf]
        %v5020 = vld [vmem:[#allocation8 + $0x20] sm:$0xf]
        %v5021 = vld [vmem:[#allocation8 + $0x24] sm:$0xf]
        %v5022 = vld [vmem:[#allocation8 + $0x28] sm:$0xf]
        %v5023 = vld [vmem:[#allocation8 + $0x2c] sm:$0xf]
        %v5024 = vld [vmem:[#allocation8 + $0x30] sm:$0xf]
        %v5025 = vld [vmem:[#allocation8 + $0x34] sm:$0xf]
        %v5026 = vld [vmem:[#allocation8 + $0x38] sm:$0xf]
        %v5027 = vld [vmem:[#allocation8 + $0x3c] sm:$0xf]
        %v5028 = vld [vmem:[#allocation2] sm:$0x8]
        %s5029 = scalar_lea.vmem [#allocation8], 64
        %v5030 = vld [vmem:[%s5029] sm:$0xf]
        %v5031 = vld [vmem:[%s5029 + $0x4] sm:$0xf]
        %v5032 = vld [vmem:[%s5029 + $0x8] sm:$0xf]
        %v5033 = vld [vmem:[%s5029 + $0xc] sm:$0xf]
        %v5034 = vld [vmem:[%s5029 + $0x10] sm:$0xf]
        %v5035 = vld [vmem:[%s5029 + $0x14] sm:$0xf]
        %v5036 = vld [vmem:[%s5029 + $0x18] sm:$0xf]
        %v5037 = vld [vmem:[%s5029 + $0x1c] sm:$0xf]
        %v5038 = vld [vmem:[%s5029 + $0x20] sm:$0xf]
        %v5039 = vld [vmem:[%s5029 + $0x24] sm:$0xf]
        %v5040 = vld [vmem:[%s5029 + $0x28] sm:$0xf]
        %v5041 = vld [vmem:[%s5029 + $0x2c] sm:$0xf]
        %v5042 = vld [vmem:[%s5029 + $0x30] sm:$0xf]
        %v5043 = vld [vmem:[%s5029 + $0x34] sm:$0xf]
        %v5044 = vld [vmem:[%s5029 + $0x38] sm:$0xf]
        %v5045 = vld [vmem:[%s5029 + $0x3c] sm:$0xf]
        %v5083 = vunpack.c.l.b16 %v5028
        %v5084 = vunpack.c.l.b16 %v4976
        %v5085 = vunpack.c.l.b16 %v4977
        %v5086 = vunpack.c.l.b16 %v4978
        %v5087 = vunpack.c.l.b16 %v4979
        %v5088 = vunpack.c.l.b16 %v4980
        %v5089 = vunpack.c.l.b16 %v4981
        %v5090 = vunpack.c.l.b16 %v4982
        %v5091 = vunpack.c.l.b16 %v4983
        %v5092 = vunpack.c.l.b16 %v4984
        %v5093 = vunpack.c.l.b16 %v4985
        %v5094 = vunpack.c.l.b16 %v4986
        %v5095 = vunpack.c.l.b16 %v4987
        %v5096 = vunpack.c.l.b16 %v4988
        %v5097 = vunpack.c.l.b16 %v4989
        %v5098 = vunpack.c.l.b16 %v4990
        %v5099 = vunpack.c.l.b16 %v4991
        %v5100 = vunpack.c.l.b16 %v4992
        %v5101 = vunpack.c.l.b16 %v4993
        %v5102 = vunpack.c.l.b16 %v4994
        %v5103 = vunpack.c.l.b16 %v4995
        %v5104 = vunpack.c.l.b16 %v4996
        %v5105 = vunpack.c.l.b16 %v4997
        %v5106 = vunpack.c.l.b16 %v4998
        %v5107 = vunpack.c.l.b16 %v4999
        %v5108 = vunpack.c.l.b16 %v5000
        %v5109 = vunpack.c.l.b16 %v5001
        %v5110 = vunpack.c.l.b16 %v5002
        %v5111 = vunpack.c.l.b16 %v5003
        %v5112 = vunpack.c.l.b16 %v5004
        %v5113 = vunpack.c.l.b16 %v5005
        %v5114 = vunpack.c.l.b16 %v5006
        %v5115 = vunpack.c.l.b16 %v5007
        %v5116 = vunpack.c.l.b16 %v5008
        %v5117 = vunpack.c.l.b16 %v5009
        %v5118 = vunpack.c.l.b16 %v5010
        %v5119 = vunpack.c.l.b16 %v5011
        %v5120 = vpack.c.b16 %v5084, %v5083
        %v5121 = vpack.c.b16 %v5086, %v5085
        %v5122 = vpack.c.b16 %v5088, %v5087
        %v5123 = vpack.c.b16 %v5090, %v5089
        %v5124 = vpack.c.b16 %v5092, %v5091
        %v5125 = vpack.c.b16 %v5094, %v5093
        %v5126 = vpack.c.b16 %v5096, %v5095
        %v5127 = vpack.c.b16 %v5098, %v5097
        %v5128 = vpack.c.b16 %v5100, %v5099
        %v5129 = vpack.c.b16 %v5102, %v5101
        %v5130 = vpack.c.b16 %v5104, %v5103
        %v5131 = vpack.c.b16 %v5106, %v5105
        %v5132 = vpack.c.b16 %v5108, %v5107
        %v5133 = vpack.c.b16 %v5110, %v5109
        %v5134 = vpack.c.b16 %v5112, %v5111
        %v5135 = vpack.c.b16 %v5114, %v5113
        %v5136 = vpack.c.b16 %v5116, %v5115
        %v5137 = vpack.c.b16 %v5118, %v5117
        %v5138 = vpack.c.b16 %v5119, %v5119
        %v5139 = vrot.slane %v5120, 3
        %v5140 = vrot.slane %v5121, 3
        %v5141 = vsel %vm3642, %v5139, %v5140
        %v5142 = vrot.slane %v5122, 3
        %v5143 = vsel %vm3642, %v5140, %v5142
        %v5144 = vrot.slane %v5123, 3
        %v5145 = vsel %vm3642, %v5142, %v5144
        %v5146 = vrot.slane %v5124, 3
        %v5147 = vsel %vm3642, %v5144, %v5146
        %v5148 = vrot.slane %v5125, 3
        %v5149 = vsel %vm3642, %v5146, %v5148
        %v5150 = vrot.slane %v5126, 3
        %v5151 = vsel %vm3642, %v5148, %v5150
        %v5152 = vrot.slane %v5127, 3
        %v5153 = vsel %vm3642, %v5150, %v5152
        %v5154 = vrot.slane %v5128, 3
        %v5155 = vsel %vm3642, %v5152, %v5154
        %v5156 = vrot.slane %v5129, 3
        %v5157 = vsel %vm3642, %v5154, %v5156
        %v5158 = vrot.slane %v5130, 3
        %v5159 = vsel %vm3642, %v5156, %v5158
        %v5160 = vrot.slane %v5131, 3
        %v5161 = vsel %vm3642, %v5158, %v5160
        %v5162 = vrot.slane %v5132, 3
        %v5163 = vsel %vm3642, %v5160, %v5162
        %v5164 = vrot.slane %v5133, 3
        %v5165 = vsel %vm3642, %v5162, %v5164
        %v5166 = vrot.slane %v5134, 3
        %v5167 = vsel %vm3642, %v5164, %v5166
        %v5168 = vrot.slane %v5135, 3
        %v5169 = vsel %vm3642, %v5166, %v5168
        %v5170 = vrot.slane %v5136, 3
        %v5171 = vsel %vm3642, %v5168, %v5170
        %v5172 = vrot.slane %v5137, 3
        %v5173 = vsel %vm3642, %v5170, %v5172
        %v5174 = vrot.slane %v5138, 3
        %v5175 = vsel %vm3642, %v5172, %v5174
        %v5210 = vunpack.c.l.b16 %v5030
        %v5211 = vunpack.c.l.b16 %v5031
        %v5212 = vunpack.c.l.b16 %v5032
        %v5213 = vunpack.c.l.b16 %v5033
        %v5214 = vunpack.c.l.b16 %v5034
        %v5215 = vunpack.c.l.b16 %v5035
        %v5216 = vunpack.c.l.b16 %v5036
        %v5217 = vunpack.c.l.b16 %v5037
        %v5218 = vunpack.c.l.b16 %v5038
        %v5219 = vunpack.c.l.b16 %v5039
        %v5220 = vunpack.c.l.b16 %v5040
        %v5221 = vunpack.c.l.b16 %v5041
        %v5222 = vunpack.c.l.b16 %v5042
        %v5223 = vunpack.c.l.b16 %v5043
        %v5224 = vunpack.c.l.b16 %v5044
        %v5225 = vunpack.c.l.b16 %v5045
        %v5226 = vpack.c.b16 %v5211, %v5210
        %v5227 = vpack.c.b16 %v5213, %v5212
        %v5228 = vpack.c.b16 %v5215, %v5214
        %v5229 = vpack.c.b16 %v5217, %v5216
        %v5230 = vpack.c.b16 %v5219, %v5218
        %v5231 = vpack.c.b16 %v5221, %v5220
        %v5232 = vpack.c.b16 %v5223, %v5222
        %v5233 = vpack.c.b16 %v5225, %v5224
        %5242 = vmatprep.subr.bf16.mxu0 0
        %5243 = vmatpush1.bf16.msra.mxu0 %v5233
        %5244 = vmatprep.subr.bf16.mxu0 0
        %5245 = vmatpush1.bf16.msra.mxu0 %v5232
        %5246 = vmatprep.subr.bf16.mxu0 0
        %5247 = vmatpush1.bf16.msra.mxu0 %v5231
        %5248 = vmatprep.subr.bf16.mxu0 0
        %5249 = vmatpush1.bf16.msra.mxu0 %v5230
        %5250 = vmatprep.subr.bf16.mxu0 0
        %5251 = vmatpush1.bf16.msra.mxu0 %v5229
        %5252 = vmatprep.subr.bf16.mxu0 0
        %5253 = vmatpush1.bf16.msra.mxu0 %v5228
        %5254 = vmatprep.subr.bf16.mxu0 0
        %5255 = vmatpush1.bf16.msra.mxu0 %v5227
        %5256 = vmatprep.subr.bf16.mxu0 0
        %5257 = vmatpush1.bf16.msra.mxu0 %v5226
        %5258 = vmatprep.subr.bf16.mxu0 0
        %5259 = vmatpush2.bf16.msra.mxu0 0
        %5260 = vmatprep.subr.bf16.mxu0 0
        %5261 = vmatpush2.bf16.msra.mxu0 0
        %5262 = vmatprep.subr.bf16.mxu0 0
        %5263 = vmatpush2.bf16.msra.mxu0 0
        %5264 = vmatprep.subr.bf16.mxu0 0
        %5265 = vmatpush2.bf16.msra.mxu0 0
        %5266 = vmatprep.subr.bf16.mxu0 0
        %5267 = vmatpush2.bf16.msra.mxu0 0
        %5268 = vmatprep.subr.bf16.mxu0 0
        %5269 = vmatpush2.bf16.msra.mxu0 0
        %5270 = vmatprep.subr.bf16.mxu0 0
        %5271 = vmatpush2.bf16.msra.mxu0 0
        %5272 = vmatprep.subr.bf16.mxu0 0
        %5273 = vmatpush2.bf16.msra.mxu0 0
        %5274 = vmatprep.mubr.bf16.mxu0 0
        %5275 = vmatmul.mubr.bf16.gmra.mxu0 %v5141
        %v5276 = vpop.f32.mrf.mxu0
        %v5277 = vadd.f32 0.0, %v5276
        %v5278 = vpop.f32.mrf.mxu0
        %v5279 = vpop.f32.mrf.mxu0
        %v5280 = vadd.f32 0.0, %v5279
        %v5281 = vpop.f32.mrf.mxu0
        %5282 = vmatprep.mubr.bf16.mxu0 0
        %5283 = vmatmul.mubr.bf16.gmra.mxu0 %v5143
        %v5284 = vpop.f32.mrf.mxu0
        %v5285 = vadd.f32 0.0, %v5284
        %v5286 = vpop.f32.mrf.mxu0
        %v5287 = vpop.f32.mrf.mxu0
        %v5288 = vadd.f32 0.0, %v5287
        %v5289 = vpop.f32.mrf.mxu0
        %5290 = vmatprep.mubr.bf16.mxu0 0
        %5291 = vmatmul.mubr.bf16.gmra.mxu0 %v5145
        %v5292 = vpop.f32.mrf.mxu0
        %v5293 = vadd.f32 0.0, %v5292
        %v5294 = vpop.f32.mrf.mxu0
        %v5295 = vpop.f32.mrf.mxu0
        %v5296 = vadd.f32 0.0, %v5295
        %v5297 = vpop.f32.mrf.mxu0
        %5298 = vmatprep.mubr.bf16.mxu0 0
        %5299 = vmatmul.mubr.bf16.gmra.mxu0 %v5147
        %v5300 = vpop.f32.mrf.mxu0
        %v5301 = vadd.f32 0.0, %v5300
        %v5302 = vpop.f32.mrf.mxu0
        %v5303 = vpop.f32.mrf.mxu0
        %v5304 = vadd.f32 0.0, %v5303
        %v5305 = vpop.f32.mrf.mxu0
        %5306 = vmatprep.mubr.bf16.mxu0 0
        %5307 = vmatmul.mubr.bf16.gmra.mxu0 %v5149
        %v5308 = vpop.f32.mrf.mxu0
        %v5309 = vadd.f32 0.0, %v5308
        %v5310 = vpop.f32.mrf.mxu0
        %v5311 = vpop.f32.mrf.mxu0
        %v5312 = vadd.f32 0.0, %v5311
        %v5313 = vpop.f32.mrf.mxu0
        %5314 = vmatprep.mubr.bf16.mxu0 0
        %5315 = vmatmul.mubr.bf16.gmra.mxu0 %v5151
        %v5316 = vpop.f32.mrf.mxu0
        %v5317 = vadd.f32 0.0, %v5316
        %v5318 = vpop.f32.mrf.mxu0
        %v5319 = vpop.f32.mrf.mxu0
        %v5320 = vadd.f32 0.0, %v5319
        %v5321 = vpop.f32.mrf.mxu0
        %5322 = vmatprep.mubr.bf16.mxu0 0
        %5323 = vmatmul.mubr.bf16.gmra.mxu0 %v5153
        %v5324 = vpop.f32.mrf.mxu0
        %v5325 = vadd.f32 0.0, %v5324
        %v5326 = vpop.f32.mrf.mxu0
        %v5327 = vpop.f32.mrf.mxu0
        %v5328 = vadd.f32 0.0, %v5327
        %v5329 = vpop.f32.mrf.mxu0
        %5330 = vmatprep.mubr.bf16.mxu0 0
        %5331 = vmatmul.mubr.bf16.gmra.mxu0 %v5155
        %v5332 = vpop.f32.mrf.mxu0
        %v5333 = vadd.f32 0.0, %v5332
        %v5334 = vpop.f32.mrf.mxu0
        %v5335 = vpop.f32.mrf.mxu0
        %v5336 = vadd.f32 0.0, %v5335
        %v5337 = vpop.f32.mrf.mxu0
        %5338 = vmatprep.mubr.bf16.mxu0 0
        %5339 = vmatmul.mubr.bf16.gmra.mxu0 %v5157
        %v5340 = vpop.f32.mrf.mxu0
        %v5341 = vadd.f32 0.0, %v5340
        %v5342 = vpop.f32.mrf.mxu0
        %v5343 = vpop.f32.mrf.mxu0
        %v5344 = vadd.f32 0.0, %v5343
        %v5345 = vpop.f32.mrf.mxu0
        %5346 = vmatprep.mubr.bf16.mxu0 0
        %5347 = vmatmul.mubr.bf16.gmra.mxu0 %v5159
        %v5348 = vpop.f32.mrf.mxu0
        %v5349 = vadd.f32 0.0, %v5348
        %v5350 = vpop.f32.mrf.mxu0
        %v5351 = vpop.f32.mrf.mxu0
        %v5352 = vadd.f32 0.0, %v5351
        %v5353 = vpop.f32.mrf.mxu0
        %5354 = vmatprep.mubr.bf16.mxu0 0
        %5355 = vmatmul.mubr.bf16.gmra.mxu0 %v5161
        %v5356 = vpop.f32.mrf.mxu0
        %v5357 = vadd.f32 0.0, %v5356
        %v5358 = vpop.f32.mrf.mxu0
        %v5359 = vpop.f32.mrf.mxu0
        %v5360 = vadd.f32 0.0, %v5359
        %v5361 = vpop.f32.mrf.mxu0
        %5362 = vmatprep.mubr.bf16.mxu0 0
        %5363 = vmatmul.mubr.bf16.gmra.mxu0 %v5163
        %v5364 = vpop.f32.mrf.mxu0
        %v5365 = vadd.f32 0.0, %v5364
        %v5366 = vpop.f32.mrf.mxu0
        %v5367 = vpop.f32.mrf.mxu0
        %v5368 = vadd.f32 0.0, %v5367
        %v5369 = vpop.f32.mrf.mxu0
        %5370 = vmatprep.mubr.bf16.mxu0 0
        %5371 = vmatmul.mubr.bf16.gmra.mxu0 %v5165
        %v5372 = vpop.f32.mrf.mxu0
        %v5373 = vadd.f32 0.0, %v5372
        %v5374 = vpop.f32.mrf.mxu0
        %v5375 = vpop.f32.mrf.mxu0
        %v5376 = vadd.f32 0.0, %v5375
        %v5377 = vpop.f32.mrf.mxu0
        %5378 = vmatprep.mubr.bf16.mxu0 0
        %5379 = vmatmul.mubr.bf16.gmra.mxu0 %v5167
        %v5380 = vpop.f32.mrf.mxu0
        %v5381 = vadd.f32 0.0, %v5380
        %v5382 = vpop.f32.mrf.mxu0
        %v5383 = vpop.f32.mrf.mxu0
        %v5384 = vadd.f32 0.0, %v5383
        %v5385 = vpop.f32.mrf.mxu0
        %5386 = vmatprep.mubr.bf16.mxu0 0
        %5387 = vmatmul.mubr.bf16.gmra.mxu0 %v5169
        %v5388 = vpop.f32.mrf.mxu0
        %v5389 = vadd.f32 0.0, %v5388
        %v5390 = vpop.f32.mrf.mxu0
        %v5391 = vpop.f32.mrf.mxu0
        %v5392 = vadd.f32 0.0, %v5391
        %v5393 = vpop.f32.mrf.mxu0
        %5394 = vmatprep.mubr.bf16.mxu0 0
        %5395 = vmatmul.mubr.bf16.gmra.mxu0 %v5171
        %v5396 = vpop.f32.mrf.mxu0
        %v5397 = vadd.f32 0.0, %v5396
        %v5398 = vpop.f32.mrf.mxu0
        %v5399 = vpop.f32.mrf.mxu0
        %v5400 = vadd.f32 0.0, %v5399
        %v5401 = vpop.f32.mrf.mxu0
        %5402 = vmatprep.mubr.bf16.mxu0 0
        %5403 = vmatmul.mubr.bf16.gmra.mxu0 %v5173
        %v5404 = vpop.f32.mrf.mxu0
        %v5405 = vadd.f32 0.0, %v5404
        %v5406 = vpop.f32.mrf.mxu0
        %v5407 = vpop.f32.mrf.mxu0
        %v5408 = vadd.f32 0.0, %v5407
        %v5409 = vpop.f32.mrf.mxu0
        %5410 = vmatprep.mubr.bf16.mxu0 0
        %5411 = vmatmul.mubr.bf16.gmra.mxu0 %v5175
        %v5412 = vpop.f32.mrf.mxu0
        %v5413 = vadd.f32 0.0, %v5412
        %v5414 = vpop.f32.mrf.mxu0
        %v5415 = vpop.f32.mrf.mxu0
        %v5416 = vadd.f32 0.0, %v5415
        %v5417 = vpop.f32.mrf.mxu0
        %5418 = vdwg.mxu0
        %v5420 = vunpack.c.l.b16 %v4975
        %v5421 = vpack.c.b16 %v5084, %v5420
        %v5423 = vshrl.u32 %v5421, 16
        %v5425 = vrot.slane %v5423, 2
        %v5426 = vshll.u32 %v5421, 16
        %v5428 = vrot.slane %v5426, 3
        %v5429 = vor.u32 %v5425, %v5428
        %v5431 = vshrl.u32 %v5121, 16
        %v5433 = vrot.slane %v5431, 2
        %v5434 = vshll.u32 %v5121, 16
        %v5436 = vrot.slane %v5434, 3
        %v5437 = vor.u32 %v5433, %v5436
        %v5438 = vsel %vm3171, %v5429, %v5437
        %v5440 = vshrl.u32 %v5122, 16
        %v5442 = vrot.slane %v5440, 2
        %v5443 = vshll.u32 %v5122, 16
        %v5445 = vrot.slane %v5443, 3
        %v5446 = vor.u32 %v5442, %v5445
        %v5447 = vsel %vm3171, %v5437, %v5446
        %v5449 = vshrl.u32 %v5123, 16
        %v5451 = vrot.slane %v5449, 2
        %v5452 = vshll.u32 %v5123, 16
        %v5454 = vrot.slane %v5452, 3
        %v5455 = vor.u32 %v5451, %v5454
        %v5456 = vsel %vm3171, %v5446, %v5455
        %v5458 = vshrl.u32 %v5124, 16
        %v5460 = vrot.slane %v5458, 2
        %v5461 = vshll.u32 %v5124, 16
        %v5463 = vrot.slane %v5461, 3
        %v5464 = vor.u32 %v5460, %v5463
        %v5465 = vsel %vm3171, %v5455, %v5464
        %v5467 = vshrl.u32 %v5125, 16
        %v5469 = vrot.slane %v5467, 2
        %v5470 = vshll.u32 %v5125, 16
        %v5472 = vrot.slane %v5470, 3
        %v5473 = vor.u32 %v5469, %v5472
        %v5474 = vsel %vm3171, %v5464, %v5473
        %v5476 = vshrl.u32 %v5126, 16
        %v5478 = vrot.slane %v5476, 2
        %v5479 = vshll.u32 %v5126, 16
        %v5481 = vrot.slane %v5479, 3
        %v5482 = vor.u32 %v5478, %v5481
        %v5483 = vsel %vm3171, %v5473, %v5482
        %v5485 = vshrl.u32 %v5127, 16
        %v5487 = vrot.slane %v5485, 2
        %v5488 = vshll.u32 %v5127, 16
        %v5490 = vrot.slane %v5488, 3
        %v5491 = vor.u32 %v5487, %v5490
        %v5492 = vsel %vm3171, %v5482, %v5491
        %v5494 = vshrl.u32 %v5128, 16
        %v5496 = vrot.slane %v5494, 2
        %v5497 = vshll.u32 %v5128, 16
        %v5499 = vrot.slane %v5497, 3
        %v5500 = vor.u32 %v5496, %v5499
        %v5501 = vsel %vm3171, %v5491, %v5500
        %v5503 = vshrl.u32 %v5129, 16
        %v5505 = vrot.slane %v5503, 2
        %v5506 = vshll.u32 %v5129, 16
        %v5508 = vrot.slane %v5506, 3
        %v5509 = vor.u32 %v5505, %v5508
        %v5510 = vsel %vm3171, %v5500, %v5509
        %v5512 = vshrl.u32 %v5130, 16
        %v5514 = vrot.slane %v5512, 2
        %v5515 = vshll.u32 %v5130, 16
        %v5517 = vrot.slane %v5515, 3
        %v5518 = vor.u32 %v5514, %v5517
        %v5519 = vsel %vm3171, %v5509, %v5518
        %v5521 = vshrl.u32 %v5131, 16
        %v5523 = vrot.slane %v5521, 2
        %v5524 = vshll.u32 %v5131, 16
        %v5526 = vrot.slane %v5524, 3
        %v5527 = vor.u32 %v5523, %v5526
        %v5528 = vsel %vm3171, %v5518, %v5527
        %v5530 = vshrl.u32 %v5132, 16
        %v5532 = vrot.slane %v5530, 2
        %v5533 = vshll.u32 %v5132, 16
        %v5535 = vrot.slane %v5533, 3
        %v5536 = vor.u32 %v5532, %v5535
        %v5537 = vsel %vm3171, %v5527, %v5536
        %v5539 = vshrl.u32 %v5133, 16
        %v5541 = vrot.slane %v5539, 2
        %v5542 = vshll.u32 %v5133, 16
        %v5544 = vrot.slane %v5542, 3
        %v5545 = vor.u32 %v5541, %v5544
        %v5546 = vsel %vm3171, %v5536, %v5545
        %v5548 = vshrl.u32 %v5134, 16
        %v5550 = vrot.slane %v5548, 2
        %v5551 = vshll.u32 %v5134, 16
        %v5553 = vrot.slane %v5551, 3
        %v5554 = vor.u32 %v5550, %v5553
        %v5555 = vsel %vm3171, %v5545, %v5554
        %v5557 = vshrl.u32 %v5135, 16
        %v5559 = vrot.slane %v5557, 2
        %v5560 = vshll.u32 %v5135, 16
        %v5562 = vrot.slane %v5560, 3
        %v5563 = vor.u32 %v5559, %v5562
        %v5564 = vsel %vm3171, %v5554, %v5563
        %v5566 = vshrl.u32 %v5136, 16
        %v5568 = vrot.slane %v5566, 2
        %v5569 = vshll.u32 %v5136, 16
        %v5571 = vrot.slane %v5569, 3
        %v5572 = vor.u32 %v5568, %v5571
        %v5573 = vsel %vm3171, %v5563, %v5572
        %v5575 = vshrl.u32 %v5137, 16
        %v5577 = vrot.slane %v5575, 2
        %v5578 = vshll.u32 %v5137, 16
        %v5580 = vrot.slane %v5578, 3
        %v5581 = vor.u32 %v5577, %v5580
        %v5582 = vsel %vm3171, %v5572, %v5581
        %v5584 = vshrl.u32 %v5138, 16
        %v5586 = vrot.slane %v5584, 2
        %v5587 = vshll.u32 %v5138, 16
        %v5589 = vrot.slane %v5587, 3
        %v5590 = vor.u32 %v5586, %v5589
        %v5591 = vsel %vm3171, %v5581, %v5590
        %v5626 = vunpack.c.l.b16 %v5012
        %v5627 = vunpack.c.l.b16 %v5013
        %v5628 = vunpack.c.l.b16 %v5014
        %v5629 = vunpack.c.l.b16 %v5015
        %v5630 = vunpack.c.l.b16 %v5016
        %v5631 = vunpack.c.l.b16 %v5017
        %v5632 = vunpack.c.l.b16 %v5018
        %v5633 = vunpack.c.l.b16 %v5019
        %v5634 = vunpack.c.l.b16 %v5020
        %v5635 = vunpack.c.l.b16 %v5021
        %v5636 = vunpack.c.l.b16 %v5022
        %v5637 = vunpack.c.l.b16 %v5023
        %v5638 = vunpack.c.l.b16 %v5024
        %v5639 = vunpack.c.l.b16 %v5025
        %v5640 = vunpack.c.l.b16 %v5026
        %v5641 = vunpack.c.l.b16 %v5027
        %v5642 = vpack.c.b16 %v5627, %v5626
        %v5643 = vpack.c.b16 %v5629, %v5628
        %v5644 = vpack.c.b16 %v5631, %v5630
        %v5645 = vpack.c.b16 %v5633, %v5632
        %v5646 = vpack.c.b16 %v5635, %v5634
        %v5647 = vpack.c.b16 %v5637, %v5636
        %v5648 = vpack.c.b16 %v5639, %v5638
        %v5649 = vpack.c.b16 %v5641, %v5640
        %5658 = vmatprep.subr.bf16.mxu0 0
        %5659 = vmatpush1.bf16.msra.mxu0 %v5649
        %5660 = vmatprep.subr.bf16.mxu0 0
        %5661 = vmatpush1.bf16.msra.mxu0 %v5648
        %5662 = vmatprep.subr.bf16.mxu0 0
        %5663 = vmatpush1.bf16.msra.mxu0 %v5647
        %5664 = vmatprep.subr.bf16.mxu0 0
        %5665 = vmatpush1.bf16.msra.mxu0 %v5646
        %5666 = vmatprep.subr.bf16.mxu0 0
        %5667 = vmatpush1.bf16.msra.mxu0 %v5645
        %5668 = vmatprep.subr.bf16.mxu0 0
        %5669 = vmatpush1.bf16.msra.mxu0 %v5644
        %5670 = vmatprep.subr.bf16.mxu0 0
        %5671 = vmatpush1.bf16.msra.mxu0 %v5643
        %5672 = vmatprep.subr.bf16.mxu0 0
        %5673 = vmatpush1.bf16.msra.mxu0 %v5642
        %5674 = vmatprep.subr.bf16.mxu0 0
        %5675 = vmatpush2.bf16.msra.mxu0 0
        %5676 = vmatprep.subr.bf16.mxu0 0
        %5677 = vmatpush2.bf16.msra.mxu0 0
        %5678 = vmatprep.subr.bf16.mxu0 0
        %5679 = vmatpush2.bf16.msra.mxu0 0
        %5680 = vmatprep.subr.bf16.mxu0 0
        %5681 = vmatpush2.bf16.msra.mxu0 0
        %5682 = vmatprep.subr.bf16.mxu0 0
        %5683 = vmatpush2.bf16.msra.mxu0 0
        %5684 = vmatprep.subr.bf16.mxu0 0
        %5685 = vmatpush2.bf16.msra.mxu0 0
        %5686 = vmatprep.subr.bf16.mxu0 0
        %5687 = vmatpush2.bf16.msra.mxu0 0
        %5688 = vmatprep.subr.bf16.mxu0 0
        %5689 = vmatpush2.bf16.msra.mxu0 0
        %5690 = vmatprep.mubr.bf16.mxu0 0
        %5691 = vmatmul.mubr.bf16.gmra.mxu0 %v5438
        %v5692 = vpop.f32.mrf.mxu0
        %v5693 = vadd.f32 %v5277, %v5692
        %v5694 = vpop.f32.mrf.mxu0
        %v5695 = vpop.f32.mrf.mxu0
        %v5696 = vadd.f32 %v5280, %v5695
        %v5697 = vpop.f32.mrf.mxu0
        %5698 = vmatprep.mubr.bf16.mxu0 0
        %5699 = vmatmul.mubr.bf16.gmra.mxu0 %v5447
        %v5700 = vpop.f32.mrf.mxu0
        %v5701 = vadd.f32 %v5285, %v5700
        %v5702 = vpop.f32.mrf.mxu0
        %v5703 = vpop.f32.mrf.mxu0
        %v5704 = vadd.f32 %v5288, %v5703
        %v5705 = vpop.f32.mrf.mxu0
        %5706 = vmatprep.mubr.bf16.mxu0 0
        %5707 = vmatmul.mubr.bf16.gmra.mxu0 %v5456
        %v5708 = vpop.f32.mrf.mxu0
        %v5709 = vadd.f32 %v5293, %v5708
        %v5710 = vpop.f32.mrf.mxu0
        %v5711 = vpop.f32.mrf.mxu0
        %v5712 = vadd.f32 %v5296, %v5711
        %v5713 = vpop.f32.mrf.mxu0
        %5714 = vmatprep.mubr.bf16.mxu0 0
        %5715 = vmatmul.mubr.bf16.gmra.mxu0 %v5465
        %v5716 = vpop.f32.mrf.mxu0
        %v5717 = vadd.f32 %v5301, %v5716
        %v5718 = vpop.f32.mrf.mxu0
        %v5719 = vpop.f32.mrf.mxu0
        %v5720 = vadd.f32 %v5304, %v5719
        %v5721 = vpop.f32.mrf.mxu0
        %5722 = vmatprep.mubr.bf16.mxu0 0
        %5723 = vmatmul.mubr.bf16.gmra.mxu0 %v5474
        %v5724 = vpop.f32.mrf.mxu0
        %v5725 = vadd.f32 %v5309, %v5724
        %v5726 = vpop.f32.mrf.mxu0
        %v5727 = vpop.f32.mrf.mxu0
        %v5728 = vadd.f32 %v5312, %v5727
        %v5729 = vpop.f32.mrf.mxu0
        %5730 = vmatprep.mubr.bf16.mxu0 0
        %5731 = vmatmul.mubr.bf16.gmra.mxu0 %v5483
        %v5732 = vpop.f32.mrf.mxu0
        %v5733 = vadd.f32 %v5317, %v5732
        %v5734 = vpop.f32.mrf.mxu0
        %v5735 = vpop.f32.mrf.mxu0
        %v5736 = vadd.f32 %v5320, %v5735
        %v5737 = vpop.f32.mrf.mxu0
        %5738 = vmatprep.mubr.bf16.mxu0 0
        %5739 = vmatmul.mubr.bf16.gmra.mxu0 %v5492
        %v5740 = vpop.f32.mrf.mxu0
        %v5741 = vadd.f32 %v5325, %v5740
        %v5742 = vpop.f32.mrf.mxu0
        %v5743 = vpop.f32.mrf.mxu0
        %v5744 = vadd.f32 %v5328, %v5743
        %v5745 = vpop.f32.mrf.mxu0
        %5746 = vmatprep.mubr.bf16.mxu0 0
        %5747 = vmatmul.mubr.bf16.gmra.mxu0 %v5501
        %v5748 = vpop.f32.mrf.mxu0
        %v5749 = vadd.f32 %v5333, %v5748
        %v5750 = vpop.f32.mrf.mxu0
        %v5751 = vpop.f32.mrf.mxu0
        %v5752 = vadd.f32 %v5336, %v5751
        %v5753 = vpop.f32.mrf.mxu0
        %5754 = vmatprep.mubr.bf16.mxu0 0
        %5755 = vmatmul.mubr.bf16.gmra.mxu0 %v5510
        %v5756 = vpop.f32.mrf.mxu0
        %v5757 = vadd.f32 %v5341, %v5756
        %v5758 = vpop.f32.mrf.mxu0
        %v5759 = vpop.f32.mrf.mxu0
        %v5760 = vadd.f32 %v5344, %v5759
        %v5761 = vpop.f32.mrf.mxu0
        %5762 = vmatprep.mubr.bf16.mxu0 0
        %5763 = vmatmul.mubr.bf16.gmra.mxu0 %v5519
        %v5764 = vpop.f32.mrf.mxu0
        %v5765 = vadd.f32 %v5349, %v5764
        %v5766 = vpop.f32.mrf.mxu0
        %v5767 = vpop.f32.mrf.mxu0
        %v5768 = vadd.f32 %v5352, %v5767
        %v5769 = vpop.f32.mrf.mxu0
        %5770 = vmatprep.mubr.bf16.mxu0 0
        %5771 = vmatmul.mubr.bf16.gmra.mxu0 %v5528
        %v5772 = vpop.f32.mrf.mxu0
        %v5773 = vadd.f32 %v5357, %v5772
        %v5774 = vpop.f32.mrf.mxu0
        %v5775 = vpop.f32.mrf.mxu0
        %v5776 = vadd.f32 %v5360, %v5775
        %v5777 = vpop.f32.mrf.mxu0
        %5778 = vmatprep.mubr.bf16.mxu0 0
        %5779 = vmatmul.mubr.bf16.gmra.mxu0 %v5537
        %v5780 = vpop.f32.mrf.mxu0
        %v5781 = vadd.f32 %v5365, %v5780
        %v5782 = vpop.f32.mrf.mxu0
        %v5783 = vpop.f32.mrf.mxu0
        %v5784 = vadd.f32 %v5368, %v5783
        %v5785 = vpop.f32.mrf.mxu0
        %5786 = vmatprep.mubr.bf16.mxu0 0
        %5787 = vmatmul.mubr.bf16.gmra.mxu0 %v5546
        %v5788 = vpop.f32.mrf.mxu0
        %v5789 = vadd.f32 %v5373, %v5788
        %v5790 = vpop.f32.mrf.mxu0
        %v5791 = vpop.f32.mrf.mxu0
        %v5792 = vadd.f32 %v5376, %v5791
        %v5793 = vpop.f32.mrf.mxu0
        %5794 = vmatprep.mubr.bf16.mxu0 0
        %5795 = vmatmul.mubr.bf16.gmra.mxu0 %v5555
        %v5796 = vpop.f32.mrf.mxu0
        %v5797 = vadd.f32 %v5381, %v5796
        %v5798 = vpop.f32.mrf.mxu0
        %v5799 = vpop.f32.mrf.mxu0
        %v5800 = vadd.f32 %v5384, %v5799
        %v5801 = vpop.f32.mrf.mxu0
        %5802 = vmatprep.mubr.bf16.mxu0 0
        %5803 = vmatmul.mubr.bf16.gmra.mxu0 %v5564
        %v5804 = vpop.f32.mrf.mxu0
        %v5805 = vadd.f32 %v5389, %v5804
        %v5806 = vpop.f32.mrf.mxu0
        %v5807 = vpop.f32.mrf.mxu0
        %v5808 = vadd.f32 %v5392, %v5807
        %v5809 = vpop.f32.mrf.mxu0
        %5810 = vmatprep.mubr.bf16.mxu0 0
        %5811 = vmatmul.mubr.bf16.gmra.mxu0 %v5573
        %v5812 = vpop.f32.mrf.mxu0
        %v5813 = vadd.f32 %v5397, %v5812
        %v5814 = vpop.f32.mrf.mxu0
        %v5815 = vpop.f32.mrf.mxu0
        %v5816 = vadd.f32 %v5400, %v5815
        %v5817 = vpop.f32.mrf.mxu0
        %5818 = vmatprep.mubr.bf16.mxu0 0
        %5819 = vmatmul.mubr.bf16.gmra.mxu0 %v5582
        %v5820 = vpop.f32.mrf.mxu0
        %v5821 = vadd.f32 %v5405, %v5820
        %v5822 = vpop.f32.mrf.mxu0
        %v5823 = vpop.f32.mrf.mxu0
        %v5824 = vadd.f32 %v5408, %v5823
        %v5825 = vpop.f32.mrf.mxu0
        %5826 = vmatprep.mubr.bf16.mxu0 0
        %5827 = vmatmul.mubr.bf16.gmra.mxu0 %v5591
        %v5828 = vpop.f32.mrf.mxu0
        %v5829 = vadd.f32 %v5413, %v5828
        %v5830 = vpop.f32.mrf.mxu0
        %v5831 = vpop.f32.mrf.mxu0
        %v5832 = vadd.f32 %v5416, %v5831
        %v5833 = vpop.f32.mrf.mxu0
        %5834 = vdwg.mxu0
        %v5835 = vld [vmem:[#allocation2 + $0x90] sm:$0xf]
        %s5836 = scalar_lea.vmem [#allocation8], 128
        %v5837 = vld [vmem:[%s5836] sm:$0xf]
        %v5838 = vld [vmem:[%s5836 + $0x4] sm:$0xf]
        %v5839 = vld [vmem:[%s5836 + $0x8] sm:$0xf]
        %v5840 = vld [vmem:[%s5836 + $0xc] sm:$0xf]
        %v5841 = vld [vmem:[%s5836 + $0x10] sm:$0xf]
        %v5842 = vld [vmem:[%s5836 + $0x14] sm:$0xf]
        %v5843 = vld [vmem:[%s5836 + $0x18] sm:$0xf]
        %v5844 = vld [vmem:[%s5836 + $0x1c] sm:$0xf]
        %v5845 = vld [vmem:[%s5836 + $0x20] sm:$0xf]
        %v5846 = vld [vmem:[%s5836 + $0x24] sm:$0xf]
        %v5847 = vld [vmem:[%s5836 + $0x28] sm:$0xf]
        %v5848 = vld [vmem:[%s5836 + $0x2c] sm:$0xf]
        %v5849 = vld [vmem:[%s5836 + $0x30] sm:$0xf]
        %v5850 = vld [vmem:[%s5836 + $0x34] sm:$0xf]
        %v5851 = vld [vmem:[%s5836 + $0x38] sm:$0xf]
        %v5852 = vld [vmem:[%s5836 + $0x3c] sm:$0xf]
        %v5854 = vunpack.c.l.b16 %v5835
        %v5855 = vpack.c.b16 %v5854, %v5854
        %vm5856 = vsmask.f32 4352
        %v5858 = vshrl.u32 %v5120, 16
        %v5860 = vrot.slane %v5858, 3
        %v5861 = vshll.u32 %v5120, 16
        %v5863 = vrot.slane %v5861, 4
        %v5864 = vor.u32 %v5860, %v5863
        %v5865 = vrot.slane %v5431, 3
        %v5866 = vrot.slane %v5434, 4
        %v5867 = vor.u32 %v5865, %v5866
        %v5868 = vsel %vm5856, %v5864, %v5867
        %v5869 = vrot.slane %v5440, 3
        %v5870 = vrot.slane %v5443, 4
        %v5871 = vor.u32 %v5869, %v5870
        %v5872 = vsel %vm5856, %v5867, %v5871
        %v5873 = vrot.slane %v5449, 3
        %v5874 = vrot.slane %v5452, 4
        %v5875 = vor.u32 %v5873, %v5874
        %v5876 = vsel %vm5856, %v5871, %v5875
        %v5877 = vrot.slane %v5458, 3
        %v5878 = vrot.slane %v5461, 4
        %v5879 = vor.u32 %v5877, %v5878
        %v5880 = vsel %vm5856, %v5875, %v5879
        %v5881 = vrot.slane %v5467, 3
        %v5882 = vrot.slane %v5470, 4
        %v5883 = vor.u32 %v5881, %v5882
        %v5884 = vsel %vm5856, %v5879, %v5883
        %v5885 = vrot.slane %v5476, 3
        %v5886 = vrot.slane %v5479, 4
        %v5887 = vor.u32 %v5885, %v5886
        %v5888 = vsel %vm5856, %v5883, %v5887
        %v5889 = vrot.slane %v5485, 3
        %v5890 = vrot.slane %v5488, 4
        %v5891 = vor.u32 %v5889, %v5890
        %v5892 = vsel %vm5856, %v5887, %v5891
        %v5893 = vrot.slane %v5494, 3
        %v5894 = vrot.slane %v5497, 4
        %v5895 = vor.u32 %v5893, %v5894
        %v5896 = vsel %vm5856, %v5891, %v5895
        %v5897 = vrot.slane %v5503, 3
        %v5898 = vrot.slane %v5506, 4
        %v5899 = vor.u32 %v5897, %v5898
        %v5900 = vsel %vm5856, %v5895, %v5899
        %v5901 = vrot.slane %v5512, 3
        %v5902 = vrot.slane %v5515, 4
        %v5903 = vor.u32 %v5901, %v5902
        %v5904 = vsel %vm5856, %v5899, %v5903
        %v5905 = vrot.slane %v5521, 3
        %v5906 = vrot.slane %v5524, 4
        %v5907 = vor.u32 %v5905, %v5906
        %v5908 = vsel %vm5856, %v5903, %v5907
        %v5909 = vrot.slane %v5530, 3
        %v5910 = vrot.slane %v5533, 4
        %v5911 = vor.u32 %v5909, %v5910
        %v5912 = vsel %vm5856, %v5907, %v5911
        %v5913 = vrot.slane %v5539, 3
        %v5914 = vrot.slane %v5542, 4
        %v5915 = vor.u32 %v5913, %v5914
        %v5916 = vsel %vm5856, %v5911, %v5915
        %v5917 = vrot.slane %v5548, 3
        %v5918 = vrot.slane %v5551, 4
        %v5919 = vor.u32 %v5917, %v5918
        %v5920 = vsel %vm5856, %v5915, %v5919
        %v5921 = vrot.slane %v5557, 3
        %v5922 = vrot.slane %v5560, 4
        %v5923 = vor.u32 %v5921, %v5922
        %v5924 = vsel %vm5856, %v5919, %v5923
        %v5925 = vrot.slane %v5566, 3
        %v5926 = vrot.slane %v5569, 4
        %v5927 = vor.u32 %v5925, %v5926
        %v5928 = vsel %vm5856, %v5923, %v5927
        %v5929 = vrot.slane %v5575, 3
        %v5930 = vrot.slane %v5578, 4
        %v5931 = vor.u32 %v5929, %v5930
        %v5932 = vsel %vm5856, %v5927, %v5931
        %v5934 = vshrl.u32 %v5855, 16
        %v5936 = vrot.slane %v5934, 3
        %v5937 = vshll.u32 %v5855, 16
        %v5939 = vrot.slane %v5937, 4
        %v5940 = vor.u32 %v5936, %v5939
        %v5941 = vsel %vm5856, %v5931, %v5940
        %v5976 = vunpack.c.l.b16 %v5837
        %v5977 = vunpack.c.l.b16 %v5838
        %v5978 = vunpack.c.l.b16 %v5839
        %v5979 = vunpack.c.l.b16 %v5840
        %v5980 = vunpack.c.l.b16 %v5841
        %v5981 = vunpack.c.l.b16 %v5842
        %v5982 = vunpack.c.l.b16 %v5843
        %v5983 = vunpack.c.l.b16 %v5844
        %v5984 = vunpack.c.l.b16 %v5845
        %v5985 = vunpack.c.l.b16 %v5846
        %v5986 = vunpack.c.l.b16 %v5847
        %v5987 = vunpack.c.l.b16 %v5848
        %v5988 = vunpack.c.l.b16 %v5849
        %v5989 = vunpack.c.l.b16 %v5850
        %v5990 = vunpack.c.l.b16 %v5851
        %v5991 = vunpack.c.l.b16 %v5852
        %v5992 = vpack.c.b16 %v5977, %v5976
        %v5993 = vpack.c.b16 %v5979, %v5978
        %v5994 = vpack.c.b16 %v5981, %v5980
        %v5995 = vpack.c.b16 %v5983, %v5982
        %v5996 = vpack.c.b16 %v5985, %v5984
        %v5997 = vpack.c.b16 %v5987, %v5986
        %v5998 = vpack.c.b16 %v5989, %v5988
        %v5999 = vpack.c.b16 %v5991, %v5990
        %6008 = vmatprep.subr.bf16.mxu0 0
        %6009 = vmatpush1.bf16.msra.mxu0 %v5999
        %6010 = vmatprep.subr.bf16.mxu0 0
        %6011 = vmatpush1.bf16.msra.mxu0 %v5998
        %6012 = vmatprep.subr.bf16.mxu0 0
        %6013 = vmatpush1.bf16.msra.mxu0 %v5997
        %6014 = vmatprep.subr.bf16.mxu0 0
        %6015 = vmatpush1.bf16.msra.mxu0 %v5996
        %6016 = vmatprep.subr.bf16.mxu0 0
        %6017 = vmatpush1.bf16.msra.mxu0 %v5995
        %6018 = vmatprep.subr.bf16.mxu0 0
        %6019 = vmatpush1.bf16.msra.mxu0 %v5994
        %6020 = vmatprep.subr.bf16.mxu0 0
        %6021 = vmatpush1.bf16.msra.mxu0 %v5993
        %6022 = vmatprep.subr.bf16.mxu0 0
        %6023 = vmatpush1.bf16.msra.mxu0 %v5992
        %6024 = vmatprep.subr.bf16.mxu0 0
        %6025 = vmatpush2.bf16.msra.mxu0 0
        %6026 = vmatprep.subr.bf16.mxu0 0
        %6027 = vmatpush2.bf16.msra.mxu0 0
        %6028 = vmatprep.subr.bf16.mxu0 0
        %6029 = vmatpush2.bf16.msra.mxu0 0
        %6030 = vmatprep.subr.bf16.mxu0 0
        %6031 = vmatpush2.bf16.msra.mxu0 0
        %6032 = vmatprep.subr.bf16.mxu0 0
        %6033 = vmatpush2.bf16.msra.mxu0 0
        %6034 = vmatprep.subr.bf16.mxu0 0
        %6035 = vmatpush2.bf16.msra.mxu0 0
        %6036 = vmatprep.subr.bf16.mxu0 0
        %6037 = vmatpush2.bf16.msra.mxu0 0
        %6038 = vmatprep.subr.bf16.mxu0 0
        %6039 = vmatpush2.bf16.msra.mxu0 0
        %6040 = vmatprep.mubr.bf16.mxu0 0
        %6041 = vmatmul.mubr.bf16.gmra.mxu0 %v5868
        %v6042 = vpop.f32.mrf.mxu0
        %v6043 = vadd.f32 0.0, %v6042
        %v6044 = vpop.f32.mrf.mxu0
        %v6045 = vpop.f32.mrf.mxu0
        %v6046 = vadd.f32 0.0, %v6045
        %v6047 = vpop.f32.mrf.mxu0
        %6048 = vmatprep.mubr.bf16.mxu0 0
        %6049 = vmatmul.mubr.bf16.gmra.mxu0 %v5872
        %v6050 = vpop.f32.mrf.mxu0
        %v6051 = vadd.f32 0.0, %v6050
        %v6052 = vpop.f32.mrf.mxu0
        %v6053 = vpop.f32.mrf.mxu0
        %v6054 = vadd.f32 0.0, %v6053
        %v6055 = vpop.f32.mrf.mxu0
        %6056 = vmatprep.mubr.bf16.mxu0 0
        %6057 = vmatmul.mubr.bf16.gmra.mxu0 %v5876
        %v6058 = vpop.f32.mrf.mxu0
        %v6059 = vadd.f32 0.0, %v6058
        %v6060 = vpop.f32.mrf.mxu0
        %v6061 = vpop.f32.mrf.mxu0
        %v6062 = vadd.f32 0.0, %v6061
        %v6063 = vpop.f32.mrf.mxu0
        %6064 = vmatprep.mubr.bf16.mxu0 0
        %6065 = vmatmul.mubr.bf16.gmra.mxu0 %v5880
        %v6066 = vpop.f32.mrf.mxu0
        %v6067 = vadd.f32 0.0, %v6066
        %v6068 = vpop.f32.mrf.mxu0
        %v6069 = vpop.f32.mrf.mxu0
        %v6070 = vadd.f32 0.0, %v6069
        %v6071 = vpop.f32.mrf.mxu0
        %6072 = vmatprep.mubr.bf16.mxu0 0
        %6073 = vmatmul.mubr.bf16.gmra.mxu0 %v5884
        %v6074 = vpop.f32.mrf.mxu0
        %v6075 = vadd.f32 0.0, %v6074
        %v6076 = vpop.f32.mrf.mxu0
        %v6077 = vpop.f32.mrf.mxu0
        %v6078 = vadd.f32 0.0, %v6077
        %v6079 = vpop.f32.mrf.mxu0
        %6080 = vmatprep.mubr.bf16.mxu0 0
        %6081 = vmatmul.mubr.bf16.gmra.mxu0 %v5888
        %v6082 = vpop.f32.mrf.mxu0
        %v6083 = vadd.f32 0.0, %v6082
        %v6084 = vpop.f32.mrf.mxu0
        %v6085 = vpop.f32.mrf.mxu0
        %v6086 = vadd.f32 0.0, %v6085
        %v6087 = vpop.f32.mrf.mxu0
        %6088 = vmatprep.mubr.bf16.mxu0 0
        %6089 = vmatmul.mubr.bf16.gmra.mxu0 %v5892
        %v6090 = vpop.f32.mrf.mxu0
        %v6091 = vadd.f32 0.0, %v6090
        %v6092 = vpop.f32.mrf.mxu0
        %v6093 = vpop.f32.mrf.mxu0
        %v6094 = vadd.f32 0.0, %v6093
        %v6095 = vpop.f32.mrf.mxu0
        %6096 = vmatprep.mubr.bf16.mxu0 0
        %6097 = vmatmul.mubr.bf16.gmra.mxu0 %v5896
        %v6098 = vpop.f32.mrf.mxu0
        %v6099 = vadd.f32 0.0, %v6098
        %v6100 = vpop.f32.mrf.mxu0
        %v6101 = vpop.f32.mrf.mxu0
        %v6102 = vadd.f32 0.0, %v6101
        %v6103 = vpop.f32.mrf.mxu0
        %6104 = vmatprep.mubr.bf16.mxu0 0
        %6105 = vmatmul.mubr.bf16.gmra.mxu0 %v5900
        %v6106 = vpop.f32.mrf.mxu0
        %v6107 = vadd.f32 0.0, %v6106
        %v6108 = vpop.f32.mrf.mxu0
        %v6109 = vpop.f32.mrf.mxu0
        %v6110 = vadd.f32 0.0, %v6109
        %v6111 = vpop.f32.mrf.mxu0
        %6112 = vmatprep.mubr.bf16.mxu0 0
        %6113 = vmatmul.mubr.bf16.gmra.mxu0 %v5904
        %v6114 = vpop.f32.mrf.mxu0
        %v6115 = vadd.f32 0.0, %v6114
        %v6116 = vpop.f32.mrf.mxu0
        %v6117 = vpop.f32.mrf.mxu0
        %v6118 = vadd.f32 0.0, %v6117
        %v6119 = vpop.f32.mrf.mxu0
        %6120 = vmatprep.mubr.bf16.mxu0 0
        %6121 = vmatmul.mubr.bf16.gmra.mxu0 %v5908
        %v6122 = vpop.f32.mrf.mxu0
        %v6123 = vadd.f32 0.0, %v6122
        %v6124 = vpop.f32.mrf.mxu0
        %v6125 = vpop.f32.mrf.mxu0
        %v6126 = vadd.f32 0.0, %v6125
        %v6127 = vpop.f32.mrf.mxu0
        %6128 = vmatprep.mubr.bf16.mxu0 0
        %6129 = vmatmul.mubr.bf16.gmra.mxu0 %v5912
        %v6130 = vpop.f32.mrf.mxu0
        %v6131 = vadd.f32 0.0, %v6130
        %v6132 = vpop.f32.mrf.mxu0
        %v6133 = vpop.f32.mrf.mxu0
        %v6134 = vadd.f32 0.0, %v6133
        %v6135 = vpop.f32.mrf.mxu0
        %6136 = vmatprep.mubr.bf16.mxu0 0
        %6137 = vmatmul.mubr.bf16.gmra.mxu0 %v5916
        %v6138 = vpop.f32.mrf.mxu0
        %v6139 = vadd.f32 0.0, %v6138
        %v6140 = vpop.f32.mrf.mxu0
        %v6141 = vpop.f32.mrf.mxu0
        %v6142 = vadd.f32 0.0, %v6141
        %v6143 = vpop.f32.mrf.mxu0
        %6144 = vmatprep.mubr.bf16.mxu0 0
        %6145 = vmatmul.mubr.bf16.gmra.mxu0 %v5920
        %v6146 = vpop.f32.mrf.mxu0
        %v6147 = vadd.f32 0.0, %v6146
        %v6148 = vpop.f32.mrf.mxu0
        %v6149 = vpop.f32.mrf.mxu0
        %v6150 = vadd.f32 0.0, %v6149
        %v6151 = vpop.f32.mrf.mxu0
        %6152 = vmatprep.mubr.bf16.mxu0 0
        %6153 = vmatmul.mubr.bf16.gmra.mxu0 %v5924
        %v6154 = vpop.f32.mrf.mxu0
        %v6155 = vadd.f32 0.0, %v6154
        %v6156 = vpop.f32.mrf.mxu0
        %v6157 = vpop.f32.mrf.mxu0
        %v6158 = vadd.f32 0.0, %v6157
        %v6159 = vpop.f32.mrf.mxu0
        %6160 = vmatprep.mubr.bf16.mxu0 0
        %6161 = vmatmul.mubr.bf16.gmra.mxu0 %v5928
        %v6162 = vpop.f32.mrf.mxu0
        %v6163 = vadd.f32 0.0, %v6162
        %v6164 = vpop.f32.mrf.mxu0
        %v6165 = vpop.f32.mrf.mxu0
        %v6166 = vadd.f32 0.0, %v6165
        %v6167 = vpop.f32.mrf.mxu0
        %6168 = vmatprep.mubr.bf16.mxu0 0
        %6169 = vmatmul.mubr.bf16.gmra.mxu0 %v5932
        %v6170 = vpop.f32.mrf.mxu0
        %v6171 = vadd.f32 0.0, %v6170
        %v6172 = vpop.f32.mrf.mxu0
        %v6173 = vpop.f32.mrf.mxu0
        %v6174 = vadd.f32 0.0, %v6173
        %v6175 = vpop.f32.mrf.mxu0
        %6176 = vmatprep.mubr.bf16.mxu0 0
        %6177 = vmatmul.mubr.bf16.gmra.mxu0 %v5941
        %v6178 = vpop.f32.mrf.mxu0
        %v6179 = vadd.f32 0.0, %v6178
        %v6180 = vpop.f32.mrf.mxu0
        %v6181 = vpop.f32.mrf.mxu0
        %v6182 = vadd.f32 0.0, %v6181
        %v6183 = vpop.f32.mrf.mxu0
        %6184 = vdwg.mxu0
        %v6185 = vadd.f32 %v5693, %v6043
        %v6186 = vadd.f32 %v5696, %v6046
        %v6187 = vadd.f32 %v5701, %v6051
        %v6188 = vadd.f32 %v5704, %v6054
        %v6189 = vadd.f32 %v5709, %v6059
        %v6190 = vadd.f32 %v5712, %v6062
        %v6191 = vadd.f32 %v5717, %v6067
        %v6192 = vadd.f32 %v5720, %v6070
        %v6193 = vadd.f32 %v5725, %v6075
        %v6194 = vadd.f32 %v5728, %v6078
        %v6195 = vadd.f32 %v5733, %v6083
        %v6196 = vadd.f32 %v5736, %v6086
        %v6197 = vadd.f32 %v5741, %v6091
        %v6198 = vadd.f32 %v5744, %v6094
        %v6199 = vadd.f32 %v5749, %v6099
        %v6200 = vadd.f32 %v5752, %v6102
        %v6201 = vadd.f32 %v5757, %v6107
        %v6202 = vadd.f32 %v5760, %v6110
        %v6203 = vadd.f32 %v5765, %v6115
        %v6204 = vadd.f32 %v5768, %v6118
        %v6205 = vadd.f32 %v5773, %v6123
        %v6206 = vadd.f32 %v5776, %v6126
        %v6207 = vadd.f32 %v5781, %v6131
        %v6208 = vadd.f32 %v5784, %v6134
        %v6209 = vadd.f32 %v5789, %v6139
        %v6210 = vadd.f32 %v5792, %v6142
        %v6211 = vadd.f32 %v5797, %v6147
        %v6212 = vadd.f32 %v5800, %v6150
        %v6213 = vadd.f32 %v5805, %v6155
        %v6214 = vadd.f32 %v5808, %v6158
        %v6215 = vadd.f32 %v5813, %v6163
        %v6216 = vadd.f32 %v5816, %v6166
        %v6217 = vadd.f32 %v5821, %v6171
        %v6218 = vadd.f32 %v5824, %v6174
        %v6219 = vadd.f32 %v5829, %v6179
        %v6220 = vadd.f32 %v5832, %v6182
        %v6221 = vld [vmem:[#allocation2 + $0x8] sm:$0x8]
        %v6222 = vld [vmem:[#allocation2 + $0xc] sm:$0xf]
        %v6223 = vld [vmem:[#allocation2 + $0x10] sm:$0xf]
        %v6224 = vld [vmem:[#allocation2 + $0x14] sm:$0xf]
        %v6225 = vld [vmem:[#allocation2 + $0x18] sm:$0xf]
        %v6226 = vld [vmem:[#allocation2 + $0x1c] sm:$0xf]
        %v6227 = vld [vmem:[#allocation2 + $0x20] sm:$0xf]
        %v6228 = vld [vmem:[#allocation2 + $0x24] sm:$0xf]
        %v6229 = vld [vmem:[#allocation2 + $0x28] sm:$0xf]
        %v6230 = vld [vmem:[#allocation2 + $0x2c] sm:$0xf]
        %v6231 = vld [vmem:[#allocation2 + $0x30] sm:$0xf]
        %v6232 = vld [vmem:[#allocation2 + $0x34] sm:$0xf]
        %v6233 = vld [vmem:[#allocation2 + $0x38] sm:$0xf]
        %v6234 = vld [vmem:[#allocation2 + $0x3c] sm:$0xf]
        %v6235 = vld [vmem:[#allocation2 + $0x40] sm:$0xf]
        %v6236 = vld [vmem:[#allocation2 + $0x44] sm:$0xf]
        %v6237 = vld [vmem:[#allocation2 + $0x48] sm:$0xf]
        %v6238 = vld [vmem:[#allocation2 + $0x4c] sm:$0xf]
        %v6239 = vld [vmem:[#allocation2 + $0x50] sm:$0xf]
        %v6240 = vld [vmem:[#allocation2 + $0x54] sm:$0xf]
        %v6241 = vld [vmem:[#allocation2 + $0x58] sm:$0xf]
        %v6242 = vld [vmem:[#allocation2 + $0x5c] sm:$0xf]
        %v6243 = vld [vmem:[#allocation2 + $0x60] sm:$0xf]
        %v6244 = vld [vmem:[#allocation2 + $0x64] sm:$0xf]
        %v6245 = vld [vmem:[#allocation2 + $0x68] sm:$0xf]
        %v6246 = vld [vmem:[#allocation2 + $0x6c] sm:$0xf]
        %v6247 = vld [vmem:[#allocation2 + $0x70] sm:$0xf]
        %v6248 = vld [vmem:[#allocation2 + $0x74] sm:$0xf]
        %v6249 = vld [vmem:[#allocation2 + $0x78] sm:$0xf]
        %v6250 = vld [vmem:[#allocation2 + $0x7c] sm:$0xf]
        %v6251 = vld [vmem:[#allocation2 + $0x80] sm:$0xf]
        %v6252 = vld [vmem:[#allocation2 + $0x84] sm:$0xf]
        %v6253 = vld [vmem:[#allocation2 + $0x88] sm:$0xf]
        %v6254 = vld [vmem:[#allocation2 + $0x8c] sm:$0xf]
        %v6255 = vld [vmem:[#allocation2 + $0x90] sm:$0xf]
        %v6256 = vld [vmem:[#allocation2 + $0x94] sm:$0xf]
        %v6257 = vld [vmem:[#allocation2 + $0x98] sm:$0xf]
        %s6258 = scalar_lea.vmem [#allocation8], 192
        %v6259 = vld [vmem:[%s6258] sm:$0xf]
        %v6260 = vld [vmem:[%s6258 + $0x4] sm:$0xf]
        %v6261 = vld [vmem:[%s6258 + $0x8] sm:$0xf]
        %v6262 = vld [vmem:[%s6258 + $0xc] sm:$0xf]
        %v6263 = vld [vmem:[%s6258 + $0x10] sm:$0xf]
        %v6264 = vld [vmem:[%s6258 + $0x14] sm:$0xf]
        %v6265 = vld [vmem:[%s6258 + $0x18] sm:$0xf]
        %v6266 = vld [vmem:[%s6258 + $0x1c] sm:$0xf]
        %v6267 = vld [vmem:[%s6258 + $0x20] sm:$0xf]
        %v6268 = vld [vmem:[%s6258 + $0x24] sm:$0xf]
        %v6269 = vld [vmem:[%s6258 + $0x28] sm:$0xf]
        %v6270 = vld [vmem:[%s6258 + $0x2c] sm:$0xf]
        %v6271 = vld [vmem:[%s6258 + $0x30] sm:$0xf]
        %v6272 = vld [vmem:[%s6258 + $0x34] sm:$0xf]
        %v6273 = vld [vmem:[%s6258 + $0x38] sm:$0xf]
        %v6274 = vld [vmem:[%s6258 + $0x3c] sm:$0xf]
        %v6312 = vunpack.c.l.b16 %v6221
        %v6313 = vunpack.c.l.b16 %v6222
        %v6314 = vunpack.c.l.b16 %v6223
        %v6315 = vunpack.c.l.b16 %v6224
        %v6316 = vunpack.c.l.b16 %v6225
        %v6317 = vunpack.c.l.b16 %v6226
        %v6318 = vunpack.c.l.b16 %v6227
        %v6319 = vunpack.c.l.b16 %v6228
        %v6320 = vunpack.c.l.b16 %v6229
        %v6321 = vunpack.c.l.b16 %v6230
        %v6322 = vunpack.c.l.b16 %v6231
        %v6323 = vunpack.c.l.b16 %v6232
        %v6324 = vunpack.c.l.b16 %v6233
        %v6325 = vunpack.c.l.b16 %v6234
        %v6326 = vunpack.c.l.b16 %v6235
        %v6327 = vunpack.c.l.b16 %v6236
        %v6328 = vunpack.c.l.b16 %v6237
        %v6329 = vunpack.c.l.b16 %v6238
        %v6330 = vunpack.c.l.b16 %v6239
        %v6331 = vunpack.c.l.b16 %v6240
        %v6332 = vunpack.c.l.b16 %v6241
        %v6333 = vunpack.c.l.b16 %v6242
        %v6334 = vunpack.c.l.b16 %v6243
        %v6335 = vunpack.c.l.b16 %v6244
        %v6336 = vunpack.c.l.b16 %v6245
        %v6337 = vunpack.c.l.b16 %v6246
        %v6338 = vunpack.c.l.b16 %v6247
        %v6339 = vunpack.c.l.b16 %v6248
        %v6340 = vunpack.c.l.b16 %v6249
        %v6341 = vunpack.c.l.b16 %v6250
        %v6342 = vunpack.c.l.b16 %v6251
        %v6343 = vunpack.c.l.b16 %v6252
        %v6344 = vunpack.c.l.b16 %v6253
        %v6345 = vunpack.c.l.b16 %v6254
        %v6346 = vunpack.c.l.b16 %v6255
        %v6347 = vunpack.c.l.b16 %v6256
        %v6348 = vunpack.c.l.b16 %v6257
        %v6349 = vpack.c.b16 %v6313, %v6312
        %v6350 = vpack.c.b16 %v6315, %v6314
        %v6351 = vpack.c.b16 %v6317, %v6316
        %v6352 = vpack.c.b16 %v6319, %v6318
        %v6353 = vpack.c.b16 %v6321, %v6320
        %v6354 = vpack.c.b16 %v6323, %v6322
        %v6355 = vpack.c.b16 %v6325, %v6324
        %v6356 = vpack.c.b16 %v6327, %v6326
        %v6357 = vpack.c.b16 %v6329, %v6328
        %v6358 = vpack.c.b16 %v6331, %v6330
        %v6359 = vpack.c.b16 %v6333, %v6332
        %v6360 = vpack.c.b16 %v6335, %v6334
        %v6361 = vpack.c.b16 %v6337, %v6336
        %v6362 = vpack.c.b16 %v6339, %v6338
        %v6363 = vpack.c.b16 %v6341, %v6340
        %v6364 = vpack.c.b16 %v6343, %v6342
        %v6365 = vpack.c.b16 %v6345, %v6344
        %v6366 = vpack.c.b16 %v6347, %v6346
        %v6367 = vpack.c.b16 %v6348, %v6348
        %v6369 = vshrl.u32 %v6349, 16
        %v6371 = vrot.slane %v6369, 3
        %v6372 = vshll.u32 %v6349, 16
        %v6374 = vrot.slane %v6372, 4
        %v6375 = vor.u32 %v6371, %v6374
        %v6377 = vshrl.u32 %v6350, 16
        %v6379 = vrot.slane %v6377, 3
        %v6380 = vshll.u32 %v6350, 16
        %v6382 = vrot.slane %v6380, 4
        %v6383 = vor.u32 %v6379, %v6382
        %v6384 = vsel %vm5856, %v6375, %v6383
        %v6386 = vshrl.u32 %v6351, 16
        %v6388 = vrot.slane %v6386, 3
        %v6389 = vshll.u32 %v6351, 16
        %v6391 = vrot.slane %v6389, 4
        %v6392 = vor.u32 %v6388, %v6391
        %v6393 = vsel %vm5856, %v6383, %v6392
        %v6395 = vshrl.u32 %v6352, 16
        %v6397 = vrot.slane %v6395, 3
        %v6398 = vshll.u32 %v6352, 16
        %v6400 = vrot.slane %v6398, 4
        %v6401 = vor.u32 %v6397, %v6400
        %v6402 = vsel %vm5856, %v6392, %v6401
        %v6404 = vshrl.u32 %v6353, 16
        %v6406 = vrot.slane %v6404, 3
        %v6407 = vshll.u32 %v6353, 16
        %v6409 = vrot.slane %v6407, 4
        %v6410 = vor.u32 %v6406, %v6409
        %v6411 = vsel %vm5856, %v6401, %v6410
        %v6413 = vshrl.u32 %v6354, 16
        %v6415 = vrot.slane %v6413, 3
        %v6416 = vshll.u32 %v6354, 16
        %v6418 = vrot.slane %v6416, 4
        %v6419 = vor.u32 %v6415, %v6418
        %v6420 = vsel %vm5856, %v6410, %v6419
        %v6422 = vshrl.u32 %v6355, 16
        %v6424 = vrot.slane %v6422, 3
        %v6425 = vshll.u32 %v6355, 16
        %v6427 = vrot.slane %v6425, 4
        %v6428 = vor.u32 %v6424, %v6427
        %v6429 = vsel %vm5856, %v6419, %v6428
        %v6431 = vshrl.u32 %v6356, 16
        %v6433 = vrot.slane %v6431, 3
        %v6434 = vshll.u32 %v6356, 16
        %v6436 = vrot.slane %v6434, 4
        %v6437 = vor.u32 %v6433, %v6436
        %v6438 = vsel %vm5856, %v6428, %v6437
        %v6440 = vshrl.u32 %v6357, 16
        %v6442 = vrot.slane %v6440, 3
        %v6443 = vshll.u32 %v6357, 16
        %v6445 = vrot.slane %v6443, 4
        %v6446 = vor.u32 %v6442, %v6445
        %v6447 = vsel %vm5856, %v6437, %v6446
        %v6449 = vshrl.u32 %v6358, 16
        %v6451 = vrot.slane %v6449, 3
        %v6452 = vshll.u32 %v6358, 16
        %v6454 = vrot.slane %v6452, 4
        %v6455 = vor.u32 %v6451, %v6454
        %v6456 = vsel %vm5856, %v6446, %v6455
        %v6458 = vshrl.u32 %v6359, 16
        %v6460 = vrot.slane %v6458, 3
        %v6461 = vshll.u32 %v6359, 16
        %v6463 = vrot.slane %v6461, 4
        %v6464 = vor.u32 %v6460, %v6463
        %v6465 = vsel %vm5856, %v6455, %v6464
        %v6467 = vshrl.u32 %v6360, 16
        %v6469 = vrot.slane %v6467, 3
        %v6470 = vshll.u32 %v6360, 16
        %v6472 = vrot.slane %v6470, 4
        %v6473 = vor.u32 %v6469, %v6472
        %v6474 = vsel %vm5856, %v6464, %v6473
        %v6476 = vshrl.u32 %v6361, 16
        %v6478 = vrot.slane %v6476, 3
        %v6479 = vshll.u32 %v6361, 16
        %v6481 = vrot.slane %v6479, 4
        %v6482 = vor.u32 %v6478, %v6481
        %v6483 = vsel %vm5856, %v6473, %v6482
        %v6485 = vshrl.u32 %v6362, 16
        %v6487 = vrot.slane %v6485, 3
        %v6488 = vshll.u32 %v6362, 16
        %v6490 = vrot.slane %v6488, 4
        %v6491 = vor.u32 %v6487, %v6490
        %v6492 = vsel %vm5856, %v6482, %v6491
        %v6494 = vshrl.u32 %v6363, 16
        %v6496 = vrot.slane %v6494, 3
        %v6497 = vshll.u32 %v6363, 16
        %v6499 = vrot.slane %v6497, 4
        %v6500 = vor.u32 %v6496, %v6499
        %v6501 = vsel %vm5856, %v6491, %v6500
        %v6503 = vshrl.u32 %v6364, 16
        %v6505 = vrot.slane %v6503, 3
        %v6506 = vshll.u32 %v6364, 16
        %v6508 = vrot.slane %v6506, 4
        %v6509 = vor.u32 %v6505, %v6508
        %v6510 = vsel %vm5856, %v6500, %v6509
        %v6512 = vshrl.u32 %v6365, 16
        %v6514 = vrot.slane %v6512, 3
        %v6515 = vshll.u32 %v6365, 16
        %v6517 = vrot.slane %v6515, 4
        %v6518 = vor.u32 %v6514, %v6517
        %v6519 = vsel %vm5856, %v6509, %v6518
        %v6521 = vshrl.u32 %v6366, 16
        %v6523 = vrot.slane %v6521, 3
        %v6524 = vshll.u32 %v6366, 16
        %v6526 = vrot.slane %v6524, 4
        %v6527 = vor.u32 %v6523, %v6526
        %v6528 = vsel %vm5856, %v6518, %v6527
        %v6530 = vshrl.u32 %v6367, 16
        %v6532 = vrot.slane %v6530, 3
        %v6533 = vshll.u32 %v6367, 16
        %v6535 = vrot.slane %v6533, 4
        %v6536 = vor.u32 %v6532, %v6535
        %v6537 = vsel %vm5856, %v6527, %v6536
        %v6572 = vunpack.c.l.b16 %v6259
        %v6573 = vunpack.c.l.b16 %v6260
        %v6574 = vunpack.c.l.b16 %v6261
        %v6575 = vunpack.c.l.b16 %v6262
        %v6576 = vunpack.c.l.b16 %v6263
        %v6577 = vunpack.c.l.b16 %v6264
        %v6578 = vunpack.c.l.b16 %v6265
        %v6579 = vunpack.c.l.b16 %v6266
        %v6580 = vunpack.c.l.b16 %v6267
        %v6581 = vunpack.c.l.b16 %v6268
        %v6582 = vunpack.c.l.b16 %v6269
        %v6583 = vunpack.c.l.b16 %v6270
        %v6584 = vunpack.c.l.b16 %v6271
        %v6585 = vunpack.c.l.b16 %v6272
        %v6586 = vunpack.c.l.b16 %v6273
        %v6587 = vunpack.c.l.b16 %v6274
        %v6588 = vpack.c.b16 %v6573, %v6572
        %v6589 = vpack.c.b16 %v6575, %v6574
        %v6590 = vpack.c.b16 %v6577, %v6576
        %v6591 = vpack.c.b16 %v6579, %v6578
        %v6592 = vpack.c.b16 %v6581, %v6580
        %v6593 = vpack.c.b16 %v6583, %v6582
        %v6594 = vpack.c.b16 %v6585, %v6584
        %v6595 = vpack.c.b16 %v6587, %v6586
        %6604 = vmatprep.subr.bf16.mxu0 0
        %6605 = vmatpush1.bf16.msra.mxu0 %v6595
        %6606 = vmatprep.subr.bf16.mxu0 0
        %6607 = vmatpush1.bf16.msra.mxu0 %v6594
        %6608 = vmatprep.subr.bf16.mxu0 0
        %6609 = vmatpush1.bf16.msra.mxu0 %v6593
        %6610 = vmatprep.subr.bf16.mxu0 0
        %6611 = vmatpush1.bf16.msra.mxu0 %v6592
        %6612 = vmatprep.subr.bf16.mxu0 0
        %6613 = vmatpush1.bf16.msra.mxu0 %v6591
        %6614 = vmatprep.subr.bf16.mxu0 0
        %6615 = vmatpush1.bf16.msra.mxu0 %v6590
        %6616 = vmatprep.subr.bf16.mxu0 0
        %6617 = vmatpush1.bf16.msra.mxu0 %v6589
        %6618 = vmatprep.subr.bf16.mxu0 0
        %6619 = vmatpush1.bf16.msra.mxu0 %v6588
        %6620 = vmatprep.subr.bf16.mxu0 0
        %6621 = vmatpush2.bf16.msra.mxu0 0
        %6622 = vmatprep.subr.bf16.mxu0 0
        %6623 = vmatpush2.bf16.msra.mxu0 0
        %6624 = vmatprep.subr.bf16.mxu0 0
        %6625 = vmatpush2.bf16.msra.mxu0 0
        %6626 = vmatprep.subr.bf16.mxu0 0
        %6627 = vmatpush2.bf16.msra.mxu0 0
        %6628 = vmatprep.subr.bf16.mxu0 0
        %6629 = vmatpush2.bf16.msra.mxu0 0
        %6630 = vmatprep.subr.bf16.mxu0 0
        %6631 = vmatpush2.bf16.msra.mxu0 0
        %6632 = vmatprep.subr.bf16.mxu0 0
        %6633 = vmatpush2.bf16.msra.mxu0 0
        %6634 = vmatprep.subr.bf16.mxu0 0
        %6635 = vmatpush2.bf16.msra.mxu0 0
        %6636 = vmatprep.mubr.bf16.mxu0 0
        %6637 = vmatmul.mubr.bf16.gmra.mxu0 %v6384
        %v6638 = vpop.f32.mrf.mxu0
        %v6639 = vadd.f32 0.0, %v6638
        %v6640 = vpop.f32.mrf.mxu0
        %v6641 = vpop.f32.mrf.mxu0
        %v6642 = vadd.f32 0.0, %v6641
        %v6643 = vpop.f32.mrf.mxu0
        %6644 = vmatprep.mubr.bf16.mxu0 0
        %6645 = vmatmul.mubr.bf16.gmra.mxu0 %v6393
        %v6646 = vpop.f32.mrf.mxu0
        %v6647 = vadd.f32 0.0, %v6646
        %v6648 = vpop.f32.mrf.mxu0
        %v6649 = vpop.f32.mrf.mxu0
        %v6650 = vadd.f32 0.0, %v6649
        %v6651 = vpop.f32.mrf.mxu0
        %6652 = vmatprep.mubr.bf16.mxu0 0
        %6653 = vmatmul.mubr.bf16.gmra.mxu0 %v6402
        %v6654 = vpop.f32.mrf.mxu0
        %v6655 = vadd.f32 0.0, %v6654
        %v6656 = vpop.f32.mrf.mxu0
        %v6657 = vpop.f32.mrf.mxu0
        %v6658 = vadd.f32 0.0, %v6657
        %v6659 = vpop.f32.mrf.mxu0
        %6660 = vmatprep.mubr.bf16.mxu0 0
        %6661 = vmatmul.mubr.bf16.gmra.mxu0 %v6411
        %v6662 = vpop.f32.mrf.mxu0
        %v6663 = vadd.f32 0.0, %v6662
        %v6664 = vpop.f32.mrf.mxu0
        %v6665 = vpop.f32.mrf.mxu0
        %v6666 = vadd.f32 0.0, %v6665
        %v6667 = vpop.f32.mrf.mxu0
        %6668 = vmatprep.mubr.bf16.mxu0 0
        %6669 = vmatmul.mubr.bf16.gmra.mxu0 %v6420
        %v6670 = vpop.f32.mrf.mxu0
        %v6671 = vadd.f32 0.0, %v6670
        %v6672 = vpop.f32.mrf.mxu0
        %v6673 = vpop.f32.mrf.mxu0
        %v6674 = vadd.f32 0.0, %v6673
        %v6675 = vpop.f32.mrf.mxu0
        %6676 = vmatprep.mubr.bf16.mxu0 0
        %6677 = vmatmul.mubr.bf16.gmra.mxu0 %v6429
        %v6678 = vpop.f32.mrf.mxu0
        %v6679 = vadd.f32 0.0, %v6678
        %v6680 = vpop.f32.mrf.mxu0
        %v6681 = vpop.f32.mrf.mxu0
        %v6682 = vadd.f32 0.0, %v6681
        %v6683 = vpop.f32.mrf.mxu0
        %6684 = vmatprep.mubr.bf16.mxu0 0
        %6685 = vmatmul.mubr.bf16.gmra.mxu0 %v6438
        %v6686 = vpop.f32.mrf.mxu0
        %v6687 = vadd.f32 0.0, %v6686
        %v6688 = vpop.f32.mrf.mxu0
        %v6689 = vpop.f32.mrf.mxu0
        %v6690 = vadd.f32 0.0, %v6689
        %v6691 = vpop.f32.mrf.mxu0
        %6692 = vmatprep.mubr.bf16.mxu0 0
        %6693 = vmatmul.mubr.bf16.gmra.mxu0 %v6447
        %v6694 = vpop.f32.mrf.mxu0
        %v6695 = vadd.f32 0.0, %v6694
        %v6696 = vpop.f32.mrf.mxu0
        %v6697 = vpop.f32.mrf.mxu0
        %v6698 = vadd.f32 0.0, %v6697
        %v6699 = vpop.f32.mrf.mxu0
        %6700 = vmatprep.mubr.bf16.mxu0 0
        %6701 = vmatmul.mubr.bf16.gmra.mxu0 %v6456
        %v6702 = vpop.f32.mrf.mxu0
        %v6703 = vadd.f32 0.0, %v6702
        %v6704 = vpop.f32.mrf.mxu0
        %v6705 = vpop.f32.mrf.mxu0
        %v6706 = vadd.f32 0.0, %v6705
        %v6707 = vpop.f32.mrf.mxu0
        %6708 = vmatprep.mubr.bf16.mxu0 0
        %6709 = vmatmul.mubr.bf16.gmra.mxu0 %v6465
        %v6710 = vpop.f32.mrf.mxu0
        %v6711 = vadd.f32 0.0, %v6710
        %v6712 = vpop.f32.mrf.mxu0
        %v6713 = vpop.f32.mrf.mxu0
        %v6714 = vadd.f32 0.0, %v6713
        %v6715 = vpop.f32.mrf.mxu0
        %6716 = vmatprep.mubr.bf16.mxu0 0
        %6717 = vmatmul.mubr.bf16.gmra.mxu0 %v6474
        %v6718 = vpop.f32.mrf.mxu0
        %v6719 = vadd.f32 0.0, %v6718
        %v6720 = vpop.f32.mrf.mxu0
        %v6721 = vpop.f32.mrf.mxu0
        %v6722 = vadd.f32 0.0, %v6721
        %v6723 = vpop.f32.mrf.mxu0
        %6724 = vmatprep.mubr.bf16.mxu0 0
        %6725 = vmatmul.mubr.bf16.gmra.mxu0 %v6483
        %v6726 = vpop.f32.mrf.mxu0
        %v6727 = vadd.f32 0.0, %v6726
        %v6728 = vpop.f32.mrf.mxu0
        %v6729 = vpop.f32.mrf.mxu0
        %v6730 = vadd.f32 0.0, %v6729
        %v6731 = vpop.f32.mrf.mxu0
        %6732 = vmatprep.mubr.bf16.mxu0 0
        %6733 = vmatmul.mubr.bf16.gmra.mxu0 %v6492
        %v6734 = vpop.f32.mrf.mxu0
        %v6735 = vadd.f32 0.0, %v6734
        %v6736 = vpop.f32.mrf.mxu0
        %v6737 = vpop.f32.mrf.mxu0
        %v6738 = vadd.f32 0.0, %v6737
        %v6739 = vpop.f32.mrf.mxu0
        %6740 = vmatprep.mubr.bf16.mxu0 0
        %6741 = vmatmul.mubr.bf16.gmra.mxu0 %v6501
        %v6742 = vpop.f32.mrf.mxu0
        %v6743 = vadd.f32 0.0, %v6742
        %v6744 = vpop.f32.mrf.mxu0
        %v6745 = vpop.f32.mrf.mxu0
        %v6746 = vadd.f32 0.0, %v6745
        %v6747 = vpop.f32.mrf.mxu0
        %6748 = vmatprep.mubr.bf16.mxu0 0
        %6749 = vmatmul.mubr.bf16.gmra.mxu0 %v6510
        %v6750 = vpop.f32.mrf.mxu0
        %v6751 = vadd.f32 0.0, %v6750
        %v6752 = vpop.f32.mrf.mxu0
        %v6753 = vpop.f32.mrf.mxu0
        %v6754 = vadd.f32 0.0, %v6753
        %v6755 = vpop.f32.mrf.mxu0
        %6756 = vmatprep.mubr.bf16.mxu0 0
        %6757 = vmatmul.mubr.bf16.gmra.mxu0 %v6519
        %v6758 = vpop.f32.mrf.mxu0
        %v6759 = vadd.f32 0.0, %v6758
        %v6760 = vpop.f32.mrf.mxu0
        %v6761 = vpop.f32.mrf.mxu0
        %v6762 = vadd.f32 0.0, %v6761
        %v6763 = vpop.f32.mrf.mxu0
        %6764 = vmatprep.mubr.bf16.mxu0 0
        %6765 = vmatmul.mubr.bf16.gmra.mxu0 %v6528
        %v6766 = vpop.f32.mrf.mxu0
        %v6767 = vadd.f32 0.0, %v6766
        %v6768 = vpop.f32.mrf.mxu0
        %v6769 = vpop.f32.mrf.mxu0
        %v6770 = vadd.f32 0.0, %v6769
        %v6771 = vpop.f32.mrf.mxu0
        %6772 = vmatprep.mubr.bf16.mxu0 0
        %6773 = vmatmul.mubr.bf16.gmra.mxu0 %v6537
        %v6774 = vpop.f32.mrf.mxu0
        %v6775 = vadd.f32 0.0, %v6774
        %v6776 = vpop.f32.mrf.mxu0
        %v6777 = vpop.f32.mrf.mxu0
        %v6778 = vadd.f32 0.0, %v6777
        %v6779 = vpop.f32.mrf.mxu0
        %6780 = vdwg.mxu0
        %v6781 = vadd.f32 %v6185, %v6639
        %v6782 = vadd.f32 %v6186, %v6642
        %v6783 = vadd.f32 %v6187, %v6647
        %v6784 = vadd.f32 %v6188, %v6650
        %v6785 = vadd.f32 %v6189, %v6655
        %v6786 = vadd.f32 %v6190, %v6658
        %v6787 = vadd.f32 %v6191, %v6663
        %v6788 = vadd.f32 %v6192, %v6666
        %v6789 = vadd.f32 %v6193, %v6671
        %v6790 = vadd.f32 %v6194, %v6674
        %v6791 = vadd.f32 %v6195, %v6679
        %v6792 = vadd.f32 %v6196, %v6682
        %v6793 = vadd.f32 %v6197, %v6687
        %v6794 = vadd.f32 %v6198, %v6690
        %v6795 = vadd.f32 %v6199, %v6695
        %v6796 = vadd.f32 %v6200, %v6698
        %v6797 = vadd.f32 %v6201, %v6703
        %v6798 = vadd.f32 %v6202, %v6706
        %v6799 = vadd.f32 %v6203, %v6711
        %v6800 = vadd.f32 %v6204, %v6714
        %v6801 = vadd.f32 %v6205, %v6719
        %v6802 = vadd.f32 %v6206, %v6722
        %v6803 = vadd.f32 %v6207, %v6727
        %v6804 = vadd.f32 %v6208, %v6730
        %v6805 = vadd.f32 %v6209, %v6735
        %v6806 = vadd.f32 %v6210, %v6738
        %v6807 = vadd.f32 %v6211, %v6743
        %v6808 = vadd.f32 %v6212, %v6746
        %v6809 = vadd.f32 %v6213, %v6751
        %v6810 = vadd.f32 %v6214, %v6754
        %v6811 = vadd.f32 %v6215, %v6759
        %v6812 = vadd.f32 %v6216, %v6762
        %v6813 = vadd.f32 %v6217, %v6767
        %v6814 = vadd.f32 %v6218, %v6770
        %v6815 = vadd.f32 %v6219, %v6775
        %v6816 = vadd.f32 %v6220, %v6778
        %s6817 = scalar_lea.vmem [#allocation8], 256
        %v6818 = vld [vmem:[%s6817] sm:$0xf]
        %v6819 = vld [vmem:[%s6817 + $0x4] sm:$0xf]
        %v6820 = vld [vmem:[%s6817 + $0x8] sm:$0xf]
        %v6821 = vld [vmem:[%s6817 + $0xc] sm:$0xf]
        %v6822 = vld [vmem:[%s6817 + $0x10] sm:$0xf]
        %v6823 = vld [vmem:[%s6817 + $0x14] sm:$0xf]
        %v6824 = vld [vmem:[%s6817 + $0x18] sm:$0xf]
        %v6825 = vld [vmem:[%s6817 + $0x1c] sm:$0xf]
        %v6826 = vld [vmem:[%s6817 + $0x20] sm:$0xf]
        %v6827 = vld [vmem:[%s6817 + $0x24] sm:$0xf]
        %v6828 = vld [vmem:[%s6817 + $0x28] sm:$0xf]
        %v6829 = vld [vmem:[%s6817 + $0x2c] sm:$0xf]
        %v6830 = vld [vmem:[%s6817 + $0x30] sm:$0xf]
        %v6831 = vld [vmem:[%s6817 + $0x34] sm:$0xf]
        %v6832 = vld [vmem:[%s6817 + $0x38] sm:$0xf]
        %v6833 = vld [vmem:[%s6817 + $0x3c] sm:$0xf]
        %v6834 = vpack.c.b16 %v6314, %v6313
        %v6835 = vpack.c.b16 %v6316, %v6315
        %v6836 = vpack.c.b16 %v6318, %v6317
        %v6837 = vpack.c.b16 %v6320, %v6319
        %v6838 = vpack.c.b16 %v6322, %v6321
        %v6839 = vpack.c.b16 %v6324, %v6323
        %v6840 = vpack.c.b16 %v6326, %v6325
        %v6841 = vpack.c.b16 %v6328, %v6327
        %v6842 = vpack.c.b16 %v6330, %v6329
        %v6843 = vpack.c.b16 %v6332, %v6331
        %v6844 = vpack.c.b16 %v6334, %v6333
        %v6845 = vpack.c.b16 %v6336, %v6335
        %v6846 = vpack.c.b16 %v6338, %v6337
        %v6847 = vpack.c.b16 %v6340, %v6339
        %v6848 = vpack.c.b16 %v6342, %v6341
        %v6849 = vpack.c.b16 %v6344, %v6343
        %v6850 = vpack.c.b16 %v6346, %v6345
        %v6851 = vpack.c.b16 %v6348, %v6347
        %v6886 = vunpack.c.l.b16 %v6818
        %v6887 = vunpack.c.l.b16 %v6819
        %v6888 = vunpack.c.l.b16 %v6820
        %v6889 = vunpack.c.l.b16 %v6821
        %v6890 = vunpack.c.l.b16 %v6822
        %v6891 = vunpack.c.l.b16 %v6823
        %v6892 = vunpack.c.l.b16 %v6824
        %v6893 = vunpack.c.l.b16 %v6825
        %v6894 = vunpack.c.l.b16 %v6826
        %v6895 = vunpack.c.l.b16 %v6827
        %v6896 = vunpack.c.l.b16 %v6828
        %v6897 = vunpack.c.l.b16 %v6829
        %v6898 = vunpack.c.l.b16 %v6830
        %v6899 = vunpack.c.l.b16 %v6831
        %v6900 = vunpack.c.l.b16 %v6832
        %v6901 = vunpack.c.l.b16 %v6833
        %v6902 = vpack.c.b16 %v6887, %v6886
        %v6903 = vpack.c.b16 %v6889, %v6888
        %v6904 = vpack.c.b16 %v6891, %v6890
        %v6905 = vpack.c.b16 %v6893, %v6892
        %v6906 = vpack.c.b16 %v6895, %v6894
        %v6907 = vpack.c.b16 %v6897, %v6896
        %v6908 = vpack.c.b16 %v6899, %v6898
        %v6909 = vpack.c.b16 %v6901, %v6900
        %6918 = vmatprep.subr.bf16.mxu0 0
        %6919 = vmatpush1.bf16.msra.mxu0 %v6909
        %6920 = vmatprep.subr.bf16.mxu0 0
        %6921 = vmatpush1.bf16.msra.mxu0 %v6908
        %6922 = vmatprep.subr.bf16.mxu0 0
        %6923 = vmatpush1.bf16.msra.mxu0 %v6907
        %6924 = vmatprep.subr.bf16.mxu0 0
        %6925 = vmatpush1.bf16.msra.mxu0 %v6906
        %6926 = vmatprep.subr.bf16.mxu0 0
        %6927 = vmatpush1.bf16.msra.mxu0 %v6905
        %6928 = vmatprep.subr.bf16.mxu0 0
        %6929 = vmatpush1.bf16.msra.mxu0 %v6904
        %6930 = vmatprep.subr.bf16.mxu0 0
        %6931 = vmatpush1.bf16.msra.mxu0 %v6903
        %6932 = vmatprep.subr.bf16.mxu0 0
        %6933 = vmatpush1.bf16.msra.mxu0 %v6902
        %6934 = vmatprep.subr.bf16.mxu0 0
        %6935 = vmatpush2.bf16.msra.mxu0 0
        %6936 = vmatprep.subr.bf16.mxu0 0
        %6937 = vmatpush2.bf16.msra.mxu0 0
        %6938 = vmatprep.subr.bf16.mxu0 0
        %6939 = vmatpush2.bf16.msra.mxu0 0
        %6940 = vmatprep.subr.bf16.mxu0 0
        %6941 = vmatpush2.bf16.msra.mxu0 0
        %6942 = vmatprep.subr.bf16.mxu0 0
        %6943 = vmatpush2.bf16.msra.mxu0 0
        %6944 = vmatprep.subr.bf16.mxu0 0
        %6945 = vmatpush2.bf16.msra.mxu0 0
        %6946 = vmatprep.subr.bf16.mxu0 0
        %6947 = vmatpush2.bf16.msra.mxu0 0
        %6948 = vmatprep.subr.bf16.mxu0 0
        %6949 = vmatpush2.bf16.msra.mxu0 0
        %6950 = vmatprep.mubr.bf16.mxu0 0
        %6951 = vmatmul.mubr.bf16.gmra.mxu0 %v6834
        %v6952 = vpop.f32.mrf.mxu0
        %v6953 = vadd.f32 0.0, %v6952
        %v6954 = vpop.f32.mrf.mxu0
        %v6955 = vpop.f32.mrf.mxu0
        %v6956 = vadd.f32 0.0, %v6955
        %v6957 = vpop.f32.mrf.mxu0
        %6958 = vmatprep.mubr.bf16.mxu0 0
        %6959 = vmatmul.mubr.bf16.gmra.mxu0 %v6835
        %v6960 = vpop.f32.mrf.mxu0
        %v6961 = vadd.f32 0.0, %v6960
        %v6962 = vpop.f32.mrf.mxu0
        %v6963 = vpop.f32.mrf.mxu0
        %v6964 = vadd.f32 0.0, %v6963
        %v6965 = vpop.f32.mrf.mxu0
        %6966 = vmatprep.mubr.bf16.mxu0 0
        %6967 = vmatmul.mubr.bf16.gmra.mxu0 %v6836
        %v6968 = vpop.f32.mrf.mxu0
        %v6969 = vadd.f32 0.0, %v6968
        %v6970 = vpop.f32.mrf.mxu0
        %v6971 = vpop.f32.mrf.mxu0
        %v6972 = vadd.f32 0.0, %v6971
        %v6973 = vpop.f32.mrf.mxu0
        %6974 = vmatprep.mubr.bf16.mxu0 0
        %6975 = vmatmul.mubr.bf16.gmra.mxu0 %v6837
        %v6976 = vpop.f32.mrf.mxu0
        %v6977 = vadd.f32 0.0, %v6976
        %v6978 = vpop.f32.mrf.mxu0
        %v6979 = vpop.f32.mrf.mxu0
        %v6980 = vadd.f32 0.0, %v6979
        %v6981 = vpop.f32.mrf.mxu0
        %6982 = vmatprep.mubr.bf16.mxu0 0
        %6983 = vmatmul.mubr.bf16.gmra.mxu0 %v6838
        %v6984 = vpop.f32.mrf.mxu0
        %v6985 = vadd.f32 0.0, %v6984
        %v6986 = vpop.f32.mrf.mxu0
        %v6987 = vpop.f32.mrf.mxu0
        %v6988 = vadd.f32 0.0, %v6987
        %v6989 = vpop.f32.mrf.mxu0
        %6990 = vmatprep.mubr.bf16.mxu0 0
        %6991 = vmatmul.mubr.bf16.gmra.mxu0 %v6839
        %v6992 = vpop.f32.mrf.mxu0
        %v6993 = vadd.f32 0.0, %v6992
        %v6994 = vpop.f32.mrf.mxu0
        %v6995 = vpop.f32.mrf.mxu0
        %v6996 = vadd.f32 0.0, %v6995
        %v6997 = vpop.f32.mrf.mxu0
        %6998 = vmatprep.mubr.bf16.mxu0 0
        %6999 = vmatmul.mubr.bf16.gmra.mxu0 %v6840
        %v7000 = vpop.f32.mrf.mxu0
        %v7001 = vadd.f32 0.0, %v7000
        %v7002 = vpop.f32.mrf.mxu0
        %v7003 = vpop.f32.mrf.mxu0
        %v7004 = vadd.f32 0.0, %v7003
        %v7005 = vpop.f32.mrf.mxu0
        %7006 = vmatprep.mubr.bf16.mxu0 0
        %7007 = vmatmul.mubr.bf16.gmra.mxu0 %v6841
        %v7008 = vpop.f32.mrf.mxu0
        %v7009 = vadd.f32 0.0, %v7008
        %v7010 = vpop.f32.mrf.mxu0
        %v7011 = vpop.f32.mrf.mxu0
        %v7012 = vadd.f32 0.0, %v7011
        %v7013 = vpop.f32.mrf.mxu0
        %7014 = vmatprep.mubr.bf16.mxu0 0
        %7015 = vmatmul.mubr.bf16.gmra.mxu0 %v6842
        %v7016 = vpop.f32.mrf.mxu0
        %v7017 = vadd.f32 0.0, %v7016
        %v7018 = vpop.f32.mrf.mxu0
        %v7019 = vpop.f32.mrf.mxu0
        %v7020 = vadd.f32 0.0, %v7019
        %v7021 = vpop.f32.mrf.mxu0
        %7022 = vmatprep.mubr.bf16.mxu0 0
        %7023 = vmatmul.mubr.bf16.gmra.mxu0 %v6843
        %v7024 = vpop.f32.mrf.mxu0
        %v7025 = vadd.f32 0.0, %v7024
        %v7026 = vpop.f32.mrf.mxu0
        %v7027 = vpop.f32.mrf.mxu0
        %v7028 = vadd.f32 0.0, %v7027
        %v7029 = vpop.f32.mrf.mxu0
        %7030 = vmatprep.mubr.bf16.mxu0 0
        %7031 = vmatmul.mubr.bf16.gmra.mxu0 %v6844
        %v7032 = vpop.f32.mrf.mxu0
        %v7033 = vadd.f32 0.0, %v7032
        %v7034 = vpop.f32.mrf.mxu0
        %v7035 = vpop.f32.mrf.mxu0
        %v7036 = vadd.f32 0.0, %v7035
        %v7037 = vpop.f32.mrf.mxu0
        %7038 = vmatprep.mubr.bf16.mxu0 0
        %7039 = vmatmul.mubr.bf16.gmra.mxu0 %v6845
        %v7040 = vpop.f32.mrf.mxu0
        %v7041 = vadd.f32 0.0, %v7040
        %v7042 = vpop.f32.mrf.mxu0
        %v7043 = vpop.f32.mrf.mxu0
        %v7044 = vadd.f32 0.0, %v7043
        %v7045 = vpop.f32.mrf.mxu0
        %7046 = vmatprep.mubr.bf16.mxu0 0
        %7047 = vmatmul.mubr.bf16.gmra.mxu0 %v6846
        %v7048 = vpop.f32.mrf.mxu0
        %v7049 = vadd.f32 0.0, %v7048
        %v7050 = vpop.f32.mrf.mxu0
        %v7051 = vpop.f32.mrf.mxu0
        %v7052 = vadd.f32 0.0, %v7051
        %v7053 = vpop.f32.mrf.mxu0
        %7054 = vmatprep.mubr.bf16.mxu0 0
        %7055 = vmatmul.mubr.bf16.gmra.mxu0 %v6847
        %v7056 = vpop.f32.mrf.mxu0
        %v7057 = vadd.f32 0.0, %v7056
        %v7058 = vpop.f32.mrf.mxu0
        %v7059 = vpop.f32.mrf.mxu0
        %v7060 = vadd.f32 0.0, %v7059
        %v7061 = vpop.f32.mrf.mxu0
        %7062 = vmatprep.mubr.bf16.mxu0 0
        %7063 = vmatmul.mubr.bf16.gmra.mxu0 %v6848
        %v7064 = vpop.f32.mrf.mxu0
        %v7065 = vadd.f32 0.0, %v7064
        %v7066 = vpop.f32.mrf.mxu0
        %v7067 = vpop.f32.mrf.mxu0
        %v7068 = vadd.f32 0.0, %v7067
        %v7069 = vpop.f32.mrf.mxu0
        %7070 = vmatprep.mubr.bf16.mxu0 0
        %7071 = vmatmul.mubr.bf16.gmra.mxu0 %v6849
        %v7072 = vpop.f32.mrf.mxu0
        %v7073 = vadd.f32 0.0, %v7072
        %v7074 = vpop.f32.mrf.mxu0
        %v7075 = vpop.f32.mrf.mxu0
        %v7076 = vadd.f32 0.0, %v7075
        %v7077 = vpop.f32.mrf.mxu0
        %7078 = vmatprep.mubr.bf16.mxu0 0
        %7079 = vmatmul.mubr.bf16.gmra.mxu0 %v6850
        %v7080 = vpop.f32.mrf.mxu0
        %v7081 = vadd.f32 0.0, %v7080
        %v7082 = vpop.f32.mrf.mxu0
        %v7083 = vpop.f32.mrf.mxu0
        %v7084 = vadd.f32 0.0, %v7083
        %v7085 = vpop.f32.mrf.mxu0
        %7086 = vmatprep.mubr.bf16.mxu0 0
        %7087 = vmatmul.mubr.bf16.gmra.mxu0 %v6851
        %v7088 = vpop.f32.mrf.mxu0
        %v7089 = vadd.f32 0.0, %v7088
        %v7090 = vpop.f32.mrf.mxu0
        %v7091 = vpop.f32.mrf.mxu0
        %v7092 = vadd.f32 0.0, %v7091
        %v7093 = vpop.f32.mrf.mxu0
        %7094 = vdwg.mxu0
        %v7095 = vadd.f32 %v6781, %v6953
        %v7096 = vadd.f32 %v6782, %v6956
        %v7097 = vadd.f32 %v6783, %v6961
        %v7098 = vadd.f32 %v6784, %v6964
        %v7099 = vadd.f32 %v6785, %v6969
        %v7100 = vadd.f32 %v6786, %v6972
        %v7101 = vadd.f32 %v6787, %v6977
        %v7102 = vadd.f32 %v6788, %v6980
        %v7103 = vadd.f32 %v6789, %v6985
        %v7104 = vadd.f32 %v6790, %v6988
        %v7105 = vadd.f32 %v6791, %v6993
        %v7106 = vadd.f32 %v6792, %v6996
        %v7107 = vadd.f32 %v6793, %v7001
        %v7108 = vadd.f32 %v6794, %v7004
        %v7109 = vadd.f32 %v6795, %v7009
        %v7110 = vadd.f32 %v6796, %v7012
        %v7111 = vadd.f32 %v6797, %v7017
        %v7112 = vadd.f32 %v6798, %v7020
        %v7113 = vadd.f32 %v6799, %v7025
        %v7114 = vadd.f32 %v6800, %v7028
        %v7115 = vadd.f32 %v6801, %v7033
        %v7116 = vadd.f32 %v6802, %v7036
        %v7117 = vadd.f32 %v6803, %v7041
        %v7118 = vadd.f32 %v6804, %v7044
        %v7119 = vadd.f32 %v6805, %v7049
        %v7120 = vadd.f32 %v6806, %v7052
        %v7121 = vadd.f32 %v6807, %v7057
        %v7122 = vadd.f32 %v6808, %v7060
        %v7123 = vadd.f32 %v6809, %v7065
        %v7124 = vadd.f32 %v6810, %v7068
        %v7125 = vadd.f32 %v6811, %v7073
        %v7126 = vadd.f32 %v6812, %v7076
        %v7127 = vadd.f32 %v6813, %v7081
        %v7128 = vadd.f32 %v6814, %v7084
        %v7129 = vadd.f32 %v6815, %v7089
        %v7130 = vadd.f32 %v6816, %v7092
        %v7131 = vld [vmem:[#allocation2 + $0xc] sm:$0xf]
        %v7132 = vld [vmem:[#allocation2 + $0x10] sm:$0xf]
        %v7133 = vld [vmem:[#allocation2 + $0x14] sm:$0xf]
        %v7134 = vld [vmem:[#allocation2 + $0x18] sm:$0xf]
        %v7135 = vld [vmem:[#allocation2 + $0x1c] sm:$0xf]
        %v7136 = vld [vmem:[#allocation2 + $0x20] sm:$0xf]
        %v7137 = vld [vmem:[#allocation2 + $0x24] sm:$0xf]
        %v7138 = vld [vmem:[#allocation2 + $0x28] sm:$0xf]
        %v7139 = vld [vmem:[#allocation2 + $0x2c] sm:$0xf]
        %v7140 = vld [vmem:[#allocation2 + $0x30] sm:$0xf]
        %v7141 = vld [vmem:[#allocation2 + $0x34] sm:$0xf]
        %v7142 = vld [vmem:[#allocation2 + $0x38] sm:$0xf]
        %v7143 = vld [vmem:[#allocation2 + $0x3c] sm:$0xf]
        %v7144 = vld [vmem:[#allocation2 + $0x40] sm:$0xf]
        %v7145 = vld [vmem:[#allocation2 + $0x44] sm:$0xf]
        %v7146 = vld [vmem:[#allocation2 + $0x48] sm:$0xf]
        %v7147 = vld [vmem:[#allocation2 + $0x4c] sm:$0xf]
        %v7148 = vld [vmem:[#allocation2 + $0x50] sm:$0xf]
        %v7149 = vld [vmem:[#allocation2 + $0x54] sm:$0xf]
        %v7150 = vld [vmem:[#allocation2 + $0x58] sm:$0xf]
        %v7151 = vld [vmem:[#allocation2 + $0x5c] sm:$0xf]
        %v7152 = vld [vmem:[#allocation2 + $0x60] sm:$0xf]
        %v7153 = vld [vmem:[#allocation2 + $0x64] sm:$0xf]
        %v7154 = vld [vmem:[#allocation2 + $0x68] sm:$0xf]
        %v7155 = vld [vmem:[#allocation2 + $0x6c] sm:$0xf]
        %v7156 = vld [vmem:[#allocation2 + $0x70] sm:$0xf]
        %v7157 = vld [vmem:[#allocation2 + $0x74] sm:$0xf]
        %v7158 = vld [vmem:[#allocation2 + $0x78] sm:$0xf]
        %v7159 = vld [vmem:[#allocation2 + $0x7c] sm:$0xf]
        %v7160 = vld [vmem:[#allocation2 + $0x80] sm:$0xf]
        %v7161 = vld [vmem:[#allocation2 + $0x84] sm:$0xf]
        %v7162 = vld [vmem:[#allocation2 + $0x88] sm:$0xf]
        %v7163 = vld [vmem:[#allocation2 + $0x8c] sm:$0xf]
        %v7164 = vld [vmem:[#allocation2 + $0x90] sm:$0xf]
        %v7165 = vld [vmem:[#allocation2 + $0x94] sm:$0xf]
        %v7166 = vld [vmem:[#allocation2 + $0x98] sm:$0xf]
        %v7167 = vld [vmem:[#allocation2 + $0x9c] sm:$0x1]
        %s7168 = scalar_lea.vmem [#allocation8], 320
        %v7169 = vld [vmem:[%s7168] sm:$0xf]
        %v7170 = vld [vmem:[%s7168 + $0x4] sm:$0xf]
        %v7171 = vld [vmem:[%s7168 + $0x8] sm:$0xf]
        %v7172 = vld [vmem:[%s7168 + $0xc] sm:$0xf]
        %v7173 = vld [vmem:[%s7168 + $0x10] sm:$0xf]
        %v7174 = vld [vmem:[%s7168 + $0x14] sm:$0xf]
        %v7175 = vld [vmem:[%s7168 + $0x18] sm:$0xf]
        %v7176 = vld [vmem:[%s7168 + $0x1c] sm:$0xf]
        %v7177 = vld [vmem:[%s7168 + $0x20] sm:$0xf]
        %v7178 = vld [vmem:[%s7168 + $0x24] sm:$0xf]
        %v7179 = vld [vmem:[%s7168 + $0x28] sm:$0xf]
        %v7180 = vld [vmem:[%s7168 + $0x2c] sm:$0xf]
        %v7181 = vld [vmem:[%s7168 + $0x30] sm:$0xf]
        %v7182 = vld [vmem:[%s7168 + $0x34] sm:$0xf]
        %v7183 = vld [vmem:[%s7168 + $0x38] sm:$0xf]
        %v7184 = vld [vmem:[%s7168 + $0x3c] sm:$0xf]
        %v7222 = vunpack.c.l.b16 %v7131
        %v7223 = vunpack.c.l.b16 %v7132
        %v7224 = vunpack.c.l.b16 %v7133
        %v7225 = vunpack.c.l.b16 %v7134
        %v7226 = vunpack.c.l.b16 %v7135
        %v7227 = vunpack.c.l.b16 %v7136
        %v7228 = vunpack.c.l.b16 %v7137
        %v7229 = vunpack.c.l.b16 %v7138
        %v7230 = vunpack.c.l.b16 %v7139
        %v7231 = vunpack.c.l.b16 %v7140
        %v7232 = vunpack.c.l.b16 %v7141
        %v7233 = vunpack.c.l.b16 %v7142
        %v7234 = vunpack.c.l.b16 %v7143
        %v7235 = vunpack.c.l.b16 %v7144
        %v7236 = vunpack.c.l.b16 %v7145
        %v7237 = vunpack.c.l.b16 %v7146
        %v7238 = vunpack.c.l.b16 %v7147
        %v7239 = vunpack.c.l.b16 %v7148
        %v7240 = vunpack.c.l.b16 %v7149
        %v7241 = vunpack.c.l.b16 %v7150
        %v7242 = vunpack.c.l.b16 %v7151
        %v7243 = vunpack.c.l.b16 %v7152
        %v7244 = vunpack.c.l.b16 %v7153
        %v7245 = vunpack.c.l.b16 %v7154
        %v7246 = vunpack.c.l.b16 %v7155
        %v7247 = vunpack.c.l.b16 %v7156
        %v7248 = vunpack.c.l.b16 %v7157
        %v7249 = vunpack.c.l.b16 %v7158
        %v7250 = vunpack.c.l.b16 %v7159
        %v7251 = vunpack.c.l.b16 %v7160
        %v7252 = vunpack.c.l.b16 %v7161
        %v7253 = vunpack.c.l.b16 %v7162
        %v7254 = vunpack.c.l.b16 %v7163
        %v7255 = vunpack.c.l.b16 %v7164
        %v7256 = vunpack.c.l.b16 %v7165
        %v7257 = vunpack.c.l.b16 %v7166
        %v7258 = vunpack.c.l.b16 %v7167
        %v7259 = vpack.c.b16 %v7223, %v7222
        %v7260 = vpack.c.b16 %v7225, %v7224
        %v7261 = vpack.c.b16 %v7227, %v7226
        %v7262 = vpack.c.b16 %v7229, %v7228
        %v7263 = vpack.c.b16 %v7231, %v7230
        %v7264 = vpack.c.b16 %v7233, %v7232
        %v7265 = vpack.c.b16 %v7235, %v7234
        %v7266 = vpack.c.b16 %v7237, %v7236
        %v7267 = vpack.c.b16 %v7239, %v7238
        %v7268 = vpack.c.b16 %v7241, %v7240
        %v7269 = vpack.c.b16 %v7243, %v7242
        %v7270 = vpack.c.b16 %v7245, %v7244
        %v7271 = vpack.c.b16 %v7247, %v7246
        %v7272 = vpack.c.b16 %v7249, %v7248
        %v7273 = vpack.c.b16 %v7251, %v7250
        %v7274 = vpack.c.b16 %v7253, %v7252
        %v7275 = vpack.c.b16 %v7255, %v7254
        %v7276 = vpack.c.b16 %v7257, %v7256
        %v7277 = vpack.c.b16 %v7258, %v7258
        %v7279 = vshrl.u32 %v7259, 16
        %v7281 = vshll.u32 %v7259, 16
        %v7283 = vrot.slane %v7281, 1
        %v7284 = vor.u32 %v7279, %v7283
        %v7286 = vshll.u32 %v7260, 16
        %v7288 = vrot.slane %v7286, 1
        %v7289 = vsel %vm442, %v7284, %v7288
        %v7290 = vshrl.u32 %v7260, 16
        %v7292 = vor.u32 %v7290, %v7288
        %v7294 = vshll.u32 %v7261, 16
        %v7296 = vrot.slane %v7294, 1
        %v7297 = vsel %vm442, %v7292, %v7296
        %v7298 = vshrl.u32 %v7261, 16
        %v7300 = vor.u32 %v7298, %v7296
        %v7302 = vshll.u32 %v7262, 16
        %v7304 = vrot.slane %v7302, 1
        %v7305 = vsel %vm442, %v7300, %v7304
        %v7306 = vshrl.u32 %v7262, 16
        %v7308 = vor.u32 %v7306, %v7304
        %v7310 = vshll.u32 %v7263, 16
        %v7312 = vrot.slane %v7310, 1
        %v7313 = vsel %vm442, %v7308, %v7312
        %v7314 = vshrl.u32 %v7263, 16
        %v7316 = vor.u32 %v7314, %v7312
        %v7318 = vshll.u32 %v7264, 16
        %v7320 = vrot.slane %v7318, 1
        %v7321 = vsel %vm442, %v7316, %v7320
        %v7322 = vshrl.u32 %v7264, 16
        %v7324 = vor.u32 %v7322, %v7320
        %v7326 = vshll.u32 %v7265, 16
        %v7328 = vrot.slane %v7326, 1
        %v7329 = vsel %vm442, %v7324, %v7328
        %v7330 = vshrl.u32 %v7265, 16
        %v7332 = vor.u32 %v7330, %v7328
        %v7334 = vshll.u32 %v7266, 16
        %v7336 = vrot.slane %v7334, 1
        %v7337 = vsel %vm442, %v7332, %v7336
        %v7338 = vshrl.u32 %v7266, 16
        %v7340 = vor.u32 %v7338, %v7336
        %v7342 = vshll.u32 %v7267, 16
        %v7344 = vrot.slane %v7342, 1
        %v7345 = vsel %vm442, %v7340, %v7344
        %v7346 = vshrl.u32 %v7267, 16
        %v7348 = vor.u32 %v7346, %v7344
        %v7350 = vshll.u32 %v7268, 16
        %v7352 = vrot.slane %v7350, 1
        %v7353 = vsel %vm442, %v7348, %v7352
        %v7354 = vshrl.u32 %v7268, 16
        %v7356 = vor.u32 %v7354, %v7352
        %v7358 = vshll.u32 %v7269, 16
        %v7360 = vrot.slane %v7358, 1
        %v7361 = vsel %vm442, %v7356, %v7360
        %v7362 = vshrl.u32 %v7269, 16
        %v7364 = vor.u32 %v7362, %v7360
        %v7366 = vshll.u32 %v7270, 16
        %v7368 = vrot.slane %v7366, 1
        %v7369 = vsel %vm442, %v7364, %v7368
        %v7370 = vshrl.u32 %v7270, 16
        %v7372 = vor.u32 %v7370, %v7368
        %v7374 = vshll.u32 %v7271, 16
        %v7376 = vrot.slane %v7374, 1
        %v7377 = vsel %vm442, %v7372, %v7376
        %v7378 = vshrl.u32 %v7271, 16
        %v7380 = vor.u32 %v7378, %v7376
        %v7382 = vshll.u32 %v7272, 16
        %v7384 = vrot.slane %v7382, 1
        %v7385 = vsel %vm442, %v7380, %v7384
        %v7386 = vshrl.u32 %v7272, 16
        %v7388 = vor.u32 %v7386, %v7384
        %v7390 = vshll.u32 %v7273, 16
        %v7392 = vrot.slane %v7390, 1
        %v7393 = vsel %vm442, %v7388, %v7392
        %v7394 = vshrl.u32 %v7273, 16
        %v7396 = vor.u32 %v7394, %v7392
        %v7398 = vshll.u32 %v7274, 16
        %v7400 = vrot.slane %v7398, 1
        %v7401 = vsel %vm442, %v7396, %v7400
        %v7402 = vshrl.u32 %v7274, 16
        %v7404 = vor.u32 %v7402, %v7400
        %v7406 = vshll.u32 %v7275, 16
        %v7408 = vrot.slane %v7406, 1
        %v7409 = vsel %vm442, %v7404, %v7408
        %v7410 = vshrl.u32 %v7275, 16
        %v7412 = vor.u32 %v7410, %v7408
        %v7414 = vshll.u32 %v7276, 16
        %v7416 = vrot.slane %v7414, 1
        %v7417 = vsel %vm442, %v7412, %v7416
        %v7418 = vshrl.u32 %v7276, 16
        %v7420 = vor.u32 %v7418, %v7416
        %v7422 = vshll.u32 %v7277, 16
        %v7424 = vrot.slane %v7422, 1
        %v7425 = vsel %vm442, %v7420, %v7424
        %v7460 = vunpack.c.l.b16 %v7169
        %v7461 = vunpack.c.l.b16 %v7170
        %v7462 = vunpack.c.l.b16 %v7171
        %v7463 = vunpack.c.l.b16 %v7172
        %v7464 = vunpack.c.l.b16 %v7173
        %v7465 = vunpack.c.l.b16 %v7174
        %v7466 = vunpack.c.l.b16 %v7175
        %v7467 = vunpack.c.l.b16 %v7176
        %v7468 = vunpack.c.l.b16 %v7177
        %v7469 = vunpack.c.l.b16 %v7178
        %v7470 = vunpack.c.l.b16 %v7179
        %v7471 = vunpack.c.l.b16 %v7180
        %v7472 = vunpack.c.l.b16 %v7181
        %v7473 = vunpack.c.l.b16 %v7182
        %v7474 = vunpack.c.l.b16 %v7183
        %v7475 = vunpack.c.l.b16 %v7184
        %v7476 = vpack.c.b16 %v7461, %v7460
        %v7477 = vpack.c.b16 %v7463, %v7462
        %v7478 = vpack.c.b16 %v7465, %v7464
        %v7479 = vpack.c.b16 %v7467, %v7466
        %v7480 = vpack.c.b16 %v7469, %v7468
        %v7481 = vpack.c.b16 %v7471, %v7470
        %v7482 = vpack.c.b16 %v7473, %v7472
        %v7483 = vpack.c.b16 %v7475, %v7474
        %7492 = vmatprep.subr.bf16.mxu0 0
        %7493 = vmatpush1.bf16.msra.mxu0 %v7483
        %7494 = vmatprep.subr.bf16.mxu0 0
        %7495 = vmatpush1.bf16.msra.mxu0 %v7482
        %7496 = vmatprep.subr.bf16.mxu0 0
        %7497 = vmatpush1.bf16.msra.mxu0 %v7481
        %7498 = vmatprep.subr.bf16.mxu0 0
        %7499 = vmatpush1.bf16.msra.mxu0 %v7480
        %7500 = vmatprep.subr.bf16.mxu0 0
        %7501 = vmatpush1.bf16.msra.mxu0 %v7479
        %7502 = vmatprep.subr.bf16.mxu0 0
        %7503 = vmatpush1.bf16.msra.mxu0 %v7478
        %7504 = vmatprep.subr.bf16.mxu0 0
        %7505 = vmatpush1.bf16.msra.mxu0 %v7477
        %7506 = vmatprep.subr.bf16.mxu0 0
        %7507 = vmatpush1.bf16.msra.mxu0 %v7476
        %7508 = vmatprep.subr.bf16.mxu0 0
        %7509 = vmatpush2.bf16.msra.mxu0 0
        %7510 = vmatprep.subr.bf16.mxu0 0
        %7511 = vmatpush2.bf16.msra.mxu0 0
        %7512 = vmatprep.subr.bf16.mxu0 0
        %7513 = vmatpush2.bf16.msra.mxu0 0
        %7514 = vmatprep.subr.bf16.mxu0 0
        %7515 = vmatpush2.bf16.msra.mxu0 0
        %7516 = vmatprep.subr.bf16.mxu0 0
        %7517 = vmatpush2.bf16.msra.mxu0 0
        %7518 = vmatprep.subr.bf16.mxu0 0
        %7519 = vmatpush2.bf16.msra.mxu0 0
        %7520 = vmatprep.subr.bf16.mxu0 0
        %7521 = vmatpush2.bf16.msra.mxu0 0
        %7522 = vmatprep.subr.bf16.mxu0 0
        %7523 = vmatpush2.bf16.msra.mxu0 0
        %7524 = vmatprep.mubr.bf16.mxu0 0
        %7525 = vmatmul.mubr.bf16.gmra.mxu0 %v7289
        %v7526 = vpop.f32.mrf.mxu0
        %v7527 = vadd.f32 0.0, %v7526
        %v7528 = vpop.f32.mrf.mxu0
        %v7529 = vpop.f32.mrf.mxu0
        %v7530 = vadd.f32 0.0, %v7529
        %v7531 = vpop.f32.mrf.mxu0
        %7532 = vmatprep.mubr.bf16.mxu0 0
        %7533 = vmatmul.mubr.bf16.gmra.mxu0 %v7297
        %v7534 = vpop.f32.mrf.mxu0
        %v7535 = vadd.f32 0.0, %v7534
        %v7536 = vpop.f32.mrf.mxu0
        %v7537 = vpop.f32.mrf.mxu0
        %v7538 = vadd.f32 0.0, %v7537
        %v7539 = vpop.f32.mrf.mxu0
        %7540 = vmatprep.mubr.bf16.mxu0 0
        %7541 = vmatmul.mubr.bf16.gmra.mxu0 %v7305
        %v7542 = vpop.f32.mrf.mxu0
        %v7543 = vadd.f32 0.0, %v7542
        %v7544 = vpop.f32.mrf.mxu0
        %v7545 = vpop.f32.mrf.mxu0
        %v7546 = vadd.f32 0.0, %v7545
        %v7547 = vpop.f32.mrf.mxu0
        %7548 = vmatprep.mubr.bf16.mxu0 0
        %7549 = vmatmul.mubr.bf16.gmra.mxu0 %v7313
        %v7550 = vpop.f32.mrf.mxu0
        %v7551 = vadd.f32 0.0, %v7550
        %v7552 = vpop.f32.mrf.mxu0
        %v7553 = vpop.f32.mrf.mxu0
        %v7554 = vadd.f32 0.0, %v7553
        %v7555 = vpop.f32.mrf.mxu0
        %7556 = vmatprep.mubr.bf16.mxu0 0
        %7557 = vmatmul.mubr.bf16.gmra.mxu0 %v7321
        %v7558 = vpop.f32.mrf.mxu0
        %v7559 = vadd.f32 0.0, %v7558
        %v7560 = vpop.f32.mrf.mxu0
        %v7561 = vpop.f32.mrf.mxu0
        %v7562 = vadd.f32 0.0, %v7561
        %v7563 = vpop.f32.mrf.mxu0
        %7564 = vmatprep.mubr.bf16.mxu0 0
        %7565 = vmatmul.mubr.bf16.gmra.mxu0 %v7329
        %v7566 = vpop.f32.mrf.mxu0
        %v7567 = vadd.f32 0.0, %v7566
        %v7568 = vpop.f32.mrf.mxu0
        %v7569 = vpop.f32.mrf.mxu0
        %v7570 = vadd.f32 0.0, %v7569
        %v7571 = vpop.f32.mrf.mxu0
        %7572 = vmatprep.mubr.bf16.mxu0 0
        %7573 = vmatmul.mubr.bf16.gmra.mxu0 %v7337
        %v7574 = vpop.f32.mrf.mxu0
        %v7575 = vadd.f32 0.0, %v7574
        %v7576 = vpop.f32.mrf.mxu0
        %v7577 = vpop.f32.mrf.mxu0
        %v7578 = vadd.f32 0.0, %v7577
        %v7579 = vpop.f32.mrf.mxu0
        %7580 = vmatprep.mubr.bf16.mxu0 0
        %7581 = vmatmul.mubr.bf16.gmra.mxu0 %v7345
        %v7582 = vpop.f32.mrf.mxu0
        %v7583 = vadd.f32 0.0, %v7582
        %v7584 = vpop.f32.mrf.mxu0
        %v7585 = vpop.f32.mrf.mxu0
        %v7586 = vadd.f32 0.0, %v7585
        %v7587 = vpop.f32.mrf.mxu0
        %7588 = vmatprep.mubr.bf16.mxu0 0
        %7589 = vmatmul.mubr.bf16.gmra.mxu0 %v7353
        %v7590 = vpop.f32.mrf.mxu0
        %v7591 = vadd.f32 0.0, %v7590
        %v7592 = vpop.f32.mrf.mxu0
        %v7593 = vpop.f32.mrf.mxu0
        %v7594 = vadd.f32 0.0, %v7593
        %v7595 = vpop.f32.mrf.mxu0
        %7596 = vmatprep.mubr.bf16.mxu0 0
        %7597 = vmatmul.mubr.bf16.gmra.mxu0 %v7361
        %v7598 = vpop.f32.mrf.mxu0
        %v7599 = vadd.f32 0.0, %v7598
        %v7600 = vpop.f32.mrf.mxu0
        %v7601 = vpop.f32.mrf.mxu0
        %v7602 = vadd.f32 0.0, %v7601
        %v7603 = vpop.f32.mrf.mxu0
        %7604 = vmatprep.mubr.bf16.mxu0 0
        %7605 = vmatmul.mubr.bf16.gmra.mxu0 %v7369
        %v7606 = vpop.f32.mrf.mxu0
        %v7607 = vadd.f32 0.0, %v7606
        %v7608 = vpop.f32.mrf.mxu0
        %v7609 = vpop.f32.mrf.mxu0
        %v7610 = vadd.f32 0.0, %v7609
        %v7611 = vpop.f32.mrf.mxu0
        %7612 = vmatprep.mubr.bf16.mxu0 0
        %7613 = vmatmul.mubr.bf16.gmra.mxu0 %v7377
        %v7614 = vpop.f32.mrf.mxu0
        %v7615 = vadd.f32 0.0, %v7614
        %v7616 = vpop.f32.mrf.mxu0
        %v7617 = vpop.f32.mrf.mxu0
        %v7618 = vadd.f32 0.0, %v7617
        %v7619 = vpop.f32.mrf.mxu0
        %7620 = vmatprep.mubr.bf16.mxu0 0
        %7621 = vmatmul.mubr.bf16.gmra.mxu0 %v7385
        %v7622 = vpop.f32.mrf.mxu0
        %v7623 = vadd.f32 0.0, %v7622
        %v7624 = vpop.f32.mrf.mxu0
        %v7625 = vpop.f32.mrf.mxu0
        %v7626 = vadd.f32 0.0, %v7625
        %v7627 = vpop.f32.mrf.mxu0
        %7628 = vmatprep.mubr.bf16.mxu0 0
        %7629 = vmatmul.mubr.bf16.gmra.mxu0 %v7393
        %v7630 = vpop.f32.mrf.mxu0
        %v7631 = vadd.f32 0.0, %v7630
        %v7632 = vpop.f32.mrf.mxu0
        %v7633 = vpop.f32.mrf.mxu0
        %v7634 = vadd.f32 0.0, %v7633
        %v7635 = vpop.f32.mrf.mxu0
        %7636 = vmatprep.mubr.bf16.mxu0 0
        %7637 = vmatmul.mubr.bf16.gmra.mxu0 %v7401
        %v7638 = vpop.f32.mrf.mxu0
        %v7639 = vadd.f32 0.0, %v7638
        %v7640 = vpop.f32.mrf.mxu0
        %v7641 = vpop.f32.mrf.mxu0
        %v7642 = vadd.f32 0.0, %v7641
        %v7643 = vpop.f32.mrf.mxu0
        %7644 = vmatprep.mubr.bf16.mxu0 0
        %7645 = vmatmul.mubr.bf16.gmra.mxu0 %v7409
        %v7646 = vpop.f32.mrf.mxu0
        %v7647 = vadd.f32 0.0, %v7646
        %v7648 = vpop.f32.mrf.mxu0
        %v7649 = vpop.f32.mrf.mxu0
        %v7650 = vadd.f32 0.0, %v7649
        %v7651 = vpop.f32.mrf.mxu0
        %7652 = vmatprep.mubr.bf16.mxu0 0
        %7653 = vmatmul.mubr.bf16.gmra.mxu0 %v7417
        %v7654 = vpop.f32.mrf.mxu0
        %v7655 = vadd.f32 0.0, %v7654
        %v7656 = vpop.f32.mrf.mxu0
        %v7657 = vpop.f32.mrf.mxu0
        %v7658 = vadd.f32 0.0, %v7657
        %v7659 = vpop.f32.mrf.mxu0
        %7660 = vmatprep.mubr.bf16.mxu0 0
        %7661 = vmatmul.mubr.bf16.gmra.mxu0 %v7425
        %v7662 = vpop.f32.mrf.mxu0
        %v7663 = vadd.f32 0.0, %v7662
        %v7664 = vpop.f32.mrf.mxu0
        %v7665 = vpop.f32.mrf.mxu0
        %v7666 = vadd.f32 0.0, %v7665
        %v7667 = vpop.f32.mrf.mxu0
        %7668 = vdwg.mxu0
        %v7669 = vadd.f32 %v7095, %v7527
        %v7670 = vadd.f32 %v7096, %v7530
        %v7671 = vadd.f32 %v7097, %v7535
        %v7672 = vadd.f32 %v7098, %v7538
        %v7673 = vadd.f32 %v7099, %v7543
        %v7674 = vadd.f32 %v7100, %v7546
        %v7675 = vadd.f32 %v7101, %v7551
        %v7676 = vadd.f32 %v7102, %v7554
        %v7677 = vadd.f32 %v7103, %v7559
        %v7678 = vadd.f32 %v7104, %v7562
        %v7679 = vadd.f32 %v7105, %v7567
        %v7680 = vadd.f32 %v7106, %v7570
        %v7681 = vadd.f32 %v7107, %v7575
        %v7682 = vadd.f32 %v7108, %v7578
        %v7683 = vadd.f32 %v7109, %v7583
        %v7684 = vadd.f32 %v7110, %v7586
        %v7685 = vadd.f32 %v7111, %v7591
        %v7686 = vadd.f32 %v7112, %v7594
        %v7687 = vadd.f32 %v7113, %v7599
        %v7688 = vadd.f32 %v7114, %v7602
        %v7689 = vadd.f32 %v7115, %v7607
        %v7690 = vadd.f32 %v7116, %v7610
        %v7691 = vadd.f32 %v7117, %v7615
        %v7692 = vadd.f32 %v7118, %v7618
        %v7693 = vadd.f32 %v7119, %v7623
        %v7694 = vadd.f32 %v7120, %v7626
        %v7695 = vadd.f32 %v7121, %v7631
        %v7696 = vadd.f32 %v7122, %v7634
        %v7697 = vadd.f32 %v7123, %v7639
        %v7698 = vadd.f32 %v7124, %v7642
        %v7699 = vadd.f32 %v7125, %v7647
        %v7700 = vadd.f32 %v7126, %v7650
        %v7701 = vadd.f32 %v7127, %v7655
        %v7702 = vadd.f32 %v7128, %v7658
        %v7703 = vadd.f32 %v7129, %v7663
        %v7704 = vadd.f32 %v7130, %v7666
        %v7705 = vld [vmem:[#allocation2 + $0x14] sm:$0xf]
        %v7706 = vld [vmem:[#allocation2 + $0x18] sm:$0xf]
        %v7707 = vld [vmem:[#allocation2 + $0x1c] sm:$0xf]
        %v7708 = vld [vmem:[#allocation2 + $0x20] sm:$0xf]
        %v7709 = vld [vmem:[#allocation2 + $0x24] sm:$0xf]
        %v7710 = vld [vmem:[#allocation2 + $0x28] sm:$0xf]
        %v7711 = vld [vmem:[#allocation2 + $0x2c] sm:$0xf]
        %v7712 = vld [vmem:[#allocation2 + $0x30] sm:$0xf]
        %v7713 = vld [vmem:[#allocation2 + $0x34] sm:$0xf]
        %v7714 = vld [vmem:[#allocation2 + $0x38] sm:$0xf]
        %v7715 = vld [vmem:[#allocation2 + $0x3c] sm:$0xf]
        %v7716 = vld [vmem:[#allocation2 + $0x40] sm:$0xf]
        %v7717 = vld [vmem:[#allocation2 + $0x44] sm:$0xf]
        %v7718 = vld [vmem:[#allocation2 + $0x48] sm:$0xf]
        %v7719 = vld [vmem:[#allocation2 + $0x4c] sm:$0xf]
        %v7720 = vld [vmem:[#allocation2 + $0x50] sm:$0xf]
        %v7721 = vld [vmem:[#allocation2 + $0x54] sm:$0xf]
        %v7722 = vld [vmem:[#allocation2 + $0x58] sm:$0xf]
        %v7723 = vld [vmem:[#allocation2 + $0x5c] sm:$0xf]
        %v7724 = vld [vmem:[#allocation2 + $0x60] sm:$0xf]
        %v7725 = vld [vmem:[#allocation2 + $0x64] sm:$0xf]
        %v7726 = vld [vmem:[#allocation2 + $0x68] sm:$0xf]
        %v7727 = vld [vmem:[#allocation2 + $0x6c] sm:$0xf]
        %v7728 = vld [vmem:[#allocation2 + $0x70] sm:$0xf]
        %v7729 = vld [vmem:[#allocation2 + $0x74] sm:$0xf]
        %v7730 = vld [vmem:[#allocation2 + $0x78] sm:$0xf]
        %v7731 = vld [vmem:[#allocation2 + $0x7c] sm:$0xf]
        %v7732 = vld [vmem:[#allocation2 + $0x80] sm:$0xf]
        %v7733 = vld [vmem:[#allocation2 + $0x84] sm:$0xf]
        %v7734 = vld [vmem:[#allocation2 + $0x88] sm:$0xf]
        %v7735 = vld [vmem:[#allocation2 + $0x8c] sm:$0xf]
        %v7736 = vld [vmem:[#allocation2 + $0x90] sm:$0xf]
        %v7737 = vld [vmem:[#allocation2 + $0x94] sm:$0xf]
        %v7738 = vld [vmem:[#allocation2 + $0x98] sm:$0xf]
        %v7739 = vld [vmem:[#allocation2 + $0x9c] sm:$0xf]
        %v7740 = vld [vmem:[#allocation2 + $0xa0] sm:$0xf]
        %v7741 = vld [vmem:[#allocation2 + $0xa4] sm:$0x1]
        %s7742 = scalar_lea.vmem [#allocation8], 384
        %v7743 = vld [vmem:[%s7742] sm:$0xf]
        %v7744 = vld [vmem:[%s7742 + $0x4] sm:$0xf]
        %v7745 = vld [vmem:[%s7742 + $0x8] sm:$0xf]
        %v7746 = vld [vmem:[%s7742 + $0xc] sm:$0xf]
        %v7747 = vld [vmem:[%s7742 + $0x10] sm:$0xf]
        %v7748 = vld [vmem:[%s7742 + $0x14] sm:$0xf]
        %v7749 = vld [vmem:[%s7742 + $0x18] sm:$0xf]
        %v7750 = vld [vmem:[%s7742 + $0x1c] sm:$0xf]
        %v7751 = vld [vmem:[%s7742 + $0x20] sm:$0xf]
        %v7752 = vld [vmem:[%s7742 + $0x24] sm:$0xf]
        %v7753 = vld [vmem:[%s7742 + $0x28] sm:$0xf]
        %v7754 = vld [vmem:[%s7742 + $0x2c] sm:$0xf]
        %v7755 = vld [vmem:[%s7742 + $0x30] sm:$0xf]
        %v7756 = vld [vmem:[%s7742 + $0x34] sm:$0xf]
        %v7757 = vld [vmem:[%s7742 + $0x38] sm:$0xf]
        %v7758 = vld [vmem:[%s7742 + $0x3c] sm:$0xf]
        %v7796 = vunpack.c.l.b16 %v7705
        %v7797 = vunpack.c.l.b16 %v7706
        %v7798 = vunpack.c.l.b16 %v7707
        %v7799 = vunpack.c.l.b16 %v7708
        %v7800 = vunpack.c.l.b16 %v7709
        %v7801 = vunpack.c.l.b16 %v7710
        %v7802 = vunpack.c.l.b16 %v7711
        %v7803 = vunpack.c.l.b16 %v7712
        %v7804 = vunpack.c.l.b16 %v7713
        %v7805 = vunpack.c.l.b16 %v7714
        %v7806 = vunpack.c.l.b16 %v7715
        %v7807 = vunpack.c.l.b16 %v7716
        %v7808 = vunpack.c.l.b16 %v7717
        %v7809 = vunpack.c.l.b16 %v7718
        %v7810 = vunpack.c.l.b16 %v7719
        %v7811 = vunpack.c.l.b16 %v7720
        %v7812 = vunpack.c.l.b16 %v7721
        %v7813 = vunpack.c.l.b16 %v7722
        %v7814 = vunpack.c.l.b16 %v7723
        %v7815 = vunpack.c.l.b16 %v7724
        %v7816 = vunpack.c.l.b16 %v7725
        %v7817 = vunpack.c.l.b16 %v7726
        %v7818 = vunpack.c.l.b16 %v7727
        %v7819 = vunpack.c.l.b16 %v7728
        %v7820 = vunpack.c.l.b16 %v7729
        %v7821 = vunpack.c.l.b16 %v7730
        %v7822 = vunpack.c.l.b16 %v7731
        %v7823 = vunpack.c.l.b16 %v7732
        %v7824 = vunpack.c.l.b16 %v7733
        %v7825 = vunpack.c.l.b16 %v7734
        %v7826 = vunpack.c.l.b16 %v7735
        %v7827 = vunpack.c.l.b16 %v7736
        %v7828 = vunpack.c.l.b16 %v7737
        %v7829 = vunpack.c.l.b16 %v7738
        %v7830 = vunpack.c.l.b16 %v7739
        %v7831 = vunpack.c.l.b16 %v7740
        %v7832 = vunpack.c.l.b16 %v7741
        %v7833 = vpack.c.b16 %v7797, %v7796
        %v7834 = vpack.c.b16 %v7799, %v7798
        %v7835 = vpack.c.b16 %v7801, %v7800
        %v7836 = vpack.c.b16 %v7803, %v7802
        %v7837 = vpack.c.b16 %v7805, %v7804
        %v7838 = vpack.c.b16 %v7807, %v7806
        %v7839 = vpack.c.b16 %v7809, %v7808
        %v7840 = vpack.c.b16 %v7811, %v7810
        %v7841 = vpack.c.b16 %v7813, %v7812
        %v7842 = vpack.c.b16 %v7815, %v7814
        %v7843 = vpack.c.b16 %v7817, %v7816
        %v7844 = vpack.c.b16 %v7819, %v7818
        %v7845 = vpack.c.b16 %v7821, %v7820
        %v7846 = vpack.c.b16 %v7823, %v7822
        %v7847 = vpack.c.b16 %v7825, %v7824
        %v7848 = vpack.c.b16 %v7827, %v7826
        %v7849 = vpack.c.b16 %v7829, %v7828
        %v7850 = vpack.c.b16 %v7831, %v7830
        %v7851 = vpack.c.b16 %v7832, %v7832
        %v7853 = vshrl.u32 %v7833, 16
        %v7855 = vshll.u32 %v7833, 16
        %v7857 = vrot.slane %v7855, 1
        %v7858 = vor.u32 %v7853, %v7857
        %v7860 = vshll.u32 %v7834, 16
        %v7862 = vrot.slane %v7860, 1
        %v7863 = vsel %vm442, %v7858, %v7862
        %v7864 = vshrl.u32 %v7834, 16
        %v7866 = vor.u32 %v7864, %v7862
        %v7868 = vshll.u32 %v7835, 16
        %v7870 = vrot.slane %v7868, 1
        %v7871 = vsel %vm442, %v7866, %v7870
        %v7872 = vshrl.u32 %v7835, 16
        %v7874 = vor.u32 %v7872, %v7870
        %v7876 = vshll.u32 %v7836, 16
        %v7878 = vrot.slane %v7876, 1
        %v7879 = vsel %vm442, %v7874, %v7878
        %v7880 = vshrl.u32 %v7836, 16
        %v7882 = vor.u32 %v7880, %v7878
        %v7884 = vshll.u32 %v7837, 16
        %v7886 = vrot.slane %v7884, 1
        %v7887 = vsel %vm442, %v7882, %v7886
        %v7888 = vshrl.u32 %v7837, 16
        %v7890 = vor.u32 %v7888, %v7886
        %v7892 = vshll.u32 %v7838, 16
        %v7894 = vrot.slane %v7892, 1
        %v7895 = vsel %vm442, %v7890, %v7894
        %v7896 = vshrl.u32 %v7838, 16
        %v7898 = vor.u32 %v7896, %v7894
        %v7900 = vshll.u32 %v7839, 16
        %v7902 = vrot.slane %v7900, 1
        %v7903 = vsel %vm442, %v7898, %v7902
        %v7904 = vshrl.u32 %v7839, 16
        %v7906 = vor.u32 %v7904, %v7902
        %v7908 = vshll.u32 %v7840, 16
        %v7910 = vrot.slane %v7908, 1
        %v7911 = vsel %vm442, %v7906, %v7910
        %v7912 = vshrl.u32 %v7840, 16
        %v7914 = vor.u32 %v7912, %v7910
        %v7916 = vshll.u32 %v7841, 16
        %v7918 = vrot.slane %v7916, 1
        %v7919 = vsel %vm442, %v7914, %v7918
        %v7920 = vshrl.u32 %v7841, 16
        %v7922 = vor.u32 %v7920, %v7918
        %v7924 = vshll.u32 %v7842, 16
        %v7926 = vrot.slane %v7924, 1
        %v7927 = vsel %vm442, %v7922, %v7926
        %v7928 = vshrl.u32 %v7842, 16
        %v7930 = vor.u32 %v7928, %v7926
        %v7932 = vshll.u32 %v7843, 16
        %v7934 = vrot.slane %v7932, 1
        %v7935 = vsel %vm442, %v7930, %v7934
        %v7936 = vshrl.u32 %v7843, 16
        %v7938 = vor.u32 %v7936, %v7934
        %v7940 = vshll.u32 %v7844, 16
        %v7942 = vrot.slane %v7940, 1
        %v7943 = vsel %vm442, %v7938, %v7942
        %v7944 = vshrl.u32 %v7844, 16
        %v7946 = vor.u32 %v7944, %v7942
        %v7948 = vshll.u32 %v7845, 16
        %v7950 = vrot.slane %v7948, 1
        %v7951 = vsel %vm442, %v7946, %v7950
        %v7952 = vshrl.u32 %v7845, 16
        %v7954 = vor.u32 %v7952, %v7950
        %v7956 = vshll.u32 %v7846, 16
        %v7958 = vrot.slane %v7956, 1
        %v7959 = vsel %vm442, %v7954, %v7958
        %v7960 = vshrl.u32 %v7846, 16
        %v7962 = vor.u32 %v7960, %v7958
        %v7964 = vshll.u32 %v7847, 16
        %v7966 = vrot.slane %v7964, 1
        %v7967 = vsel %vm442, %v7962, %v7966
        %v7968 = vshrl.u32 %v7847, 16
        %v7970 = vor.u32 %v7968, %v7966
        %v7972 = vshll.u32 %v7848, 16
        %v7974 = vrot.slane %v7972, 1
        %v7975 = vsel %vm442, %v7970, %v7974
        %v7976 = vshrl.u32 %v7848, 16
        %v7978 = vor.u32 %v7976, %v7974
        %v7980 = vshll.u32 %v7849, 16
        %v7982 = vrot.slane %v7980, 1
        %v7983 = vsel %vm442, %v7978, %v7982
        %v7984 = vshrl.u32 %v7849, 16
        %v7986 = vor.u32 %v7984, %v7982
        %v7988 = vshll.u32 %v7850, 16
        %v7990 = vrot.slane %v7988, 1
        %v7991 = vsel %vm442, %v7986, %v7990
        %v7992 = vshrl.u32 %v7850, 16
        %v7994 = vor.u32 %v7992, %v7990
        %v7996 = vshll.u32 %v7851, 16
        %v7998 = vrot.slane %v7996, 1
        %v7999 = vsel %vm442, %v7994, %v7998
        %v8034 = vunpack.c.l.b16 %v7743
        %v8035 = vunpack.c.l.b16 %v7744
        %v8036 = vunpack.c.l.b16 %v7745
        %v8037 = vunpack.c.l.b16 %v7746
        %v8038 = vunpack.c.l.b16 %v7747
        %v8039 = vunpack.c.l.b16 %v7748
        %v8040 = vunpack.c.l.b16 %v7749
        %v8041 = vunpack.c.l.b16 %v7750
        %v8042 = vunpack.c.l.b16 %v7751
        %v8043 = vunpack.c.l.b16 %v7752
        %v8044 = vunpack.c.l.b16 %v7753
        %v8045 = vunpack.c.l.b16 %v7754
        %v8046 = vunpack.c.l.b16 %v7755
        %v8047 = vunpack.c.l.b16 %v7756
        %v8048 = vunpack.c.l.b16 %v7757
        %v8049 = vunpack.c.l.b16 %v7758
        %v8050 = vpack.c.b16 %v8035, %v8034
        %v8051 = vpack.c.b16 %v8037, %v8036
        %v8052 = vpack.c.b16 %v8039, %v8038
        %v8053 = vpack.c.b16 %v8041, %v8040
        %v8054 = vpack.c.b16 %v8043, %v8042
        %v8055 = vpack.c.b16 %v8045, %v8044
        %v8056 = vpack.c.b16 %v8047, %v8046
        %v8057 = vpack.c.b16 %v8049, %v8048
        %8066 = vmatprep.subr.bf16.mxu0 0
        %8067 = vmatpush1.bf16.msra.mxu0 %v8057
        %8068 = vmatprep.subr.bf16.mxu0 0
        %8069 = vmatpush1.bf16.msra.mxu0 %v8056
        %8070 = vmatprep.subr.bf16.mxu0 0
        %8071 = vmatpush1.bf16.msra.mxu0 %v8055
        %8072 = vmatprep.subr.bf16.mxu0 0
        %8073 = vmatpush1.bf16.msra.mxu0 %v8054
        %8074 = vmatprep.subr.bf16.mxu0 0
        %8075 = vmatpush1.bf16.msra.mxu0 %v8053
        %8076 = vmatprep.subr.bf16.mxu0 0
        %8077 = vmatpush1.bf16.msra.mxu0 %v8052
        %8078 = vmatprep.subr.bf16.mxu0 0
        %8079 = vmatpush1.bf16.msra.mxu0 %v8051
        %8080 = vmatprep.subr.bf16.mxu0 0
        %8081 = vmatpush1.bf16.msra.mxu0 %v8050
        %8082 = vmatprep.subr.bf16.mxu0 0
        %8083 = vmatpush2.bf16.msra.mxu0 0
        %8084 = vmatprep.subr.bf16.mxu0 0
        %8085 = vmatpush2.bf16.msra.mxu0 0
        %8086 = vmatprep.subr.bf16.mxu0 0
        %8087 = vmatpush2.bf16.msra.mxu0 0
        %8088 = vmatprep.subr.bf16.mxu0 0
        %8089 = vmatpush2.bf16.msra.mxu0 0
        %8090 = vmatprep.subr.bf16.mxu0 0
        %8091 = vmatpush2.bf16.msra.mxu0 0
        %8092 = vmatprep.subr.bf16.mxu0 0
        %8093 = vmatpush2.bf16.msra.mxu0 0
        %8094 = vmatprep.subr.bf16.mxu0 0
        %8095 = vmatpush2.bf16.msra.mxu0 0
        %8096 = vmatprep.subr.bf16.mxu0 0
        %8097 = vmatpush2.bf16.msra.mxu0 0
        %8098 = vmatprep.mubr.bf16.mxu0 0
        %8099 = vmatmul.mubr.bf16.gmra.mxu0 %v7863
        %v8100 = vpop.f32.mrf.mxu0
        %v8101 = vadd.f32 0.0, %v8100
        %v8102 = vpop.f32.mrf.mxu0
        %v8103 = vpop.f32.mrf.mxu0
        %v8104 = vadd.f32 0.0, %v8103
        %v8105 = vpop.f32.mrf.mxu0
        %8106 = vmatprep.mubr.bf16.mxu0 0
        %8107 = vmatmul.mubr.bf16.gmra.mxu0 %v7871
        %v8108 = vpop.f32.mrf.mxu0
        %v8109 = vadd.f32 0.0, %v8108
        %v8110 = vpop.f32.mrf.mxu0
        %v8111 = vpop.f32.mrf.mxu0
        %v8112 = vadd.f32 0.0, %v8111
        %v8113 = vpop.f32.mrf.mxu0
        %8114 = vmatprep.mubr.bf16.mxu0 0
        %8115 = vmatmul.mubr.bf16.gmra.mxu0 %v7879
        %v8116 = vpop.f32.mrf.mxu0
        %v8117 = vadd.f32 0.0, %v8116
        %v8118 = vpop.f32.mrf.mxu0
        %v8119 = vpop.f32.mrf.mxu0
        %v8120 = vadd.f32 0.0, %v8119
        %v8121 = vpop.f32.mrf.mxu0
        %8122 = vmatprep.mubr.bf16.mxu0 0
        %8123 = vmatmul.mubr.bf16.gmra.mxu0 %v7887
        %v8124 = vpop.f32.mrf.mxu0
        %v8125 = vadd.f32 0.0, %v8124
        %v8126 = vpop.f32.mrf.mxu0
        %v8127 = vpop.f32.mrf.mxu0
        %v8128 = vadd.f32 0.0, %v8127
        %v8129 = vpop.f32.mrf.mxu0
        %8130 = vmatprep.mubr.bf16.mxu0 0
        %8131 = vmatmul.mubr.bf16.gmra.mxu0 %v7895
        %v8132 = vpop.f32.mrf.mxu0
        %v8133 = vadd.f32 0.0, %v8132
        %v8134 = vpop.f32.mrf.mxu0
        %v8135 = vpop.f32.mrf.mxu0
        %v8136 = vadd.f32 0.0, %v8135
        %v8137 = vpop.f32.mrf.mxu0
        %8138 = vmatprep.mubr.bf16.mxu0 0
        %8139 = vmatmul.mubr.bf16.gmra.mxu0 %v7903
        %v8140 = vpop.f32.mrf.mxu0
        %v8141 = vadd.f32 0.0, %v8140
        %v8142 = vpop.f32.mrf.mxu0
        %v8143 = vpop.f32.mrf.mxu0
        %v8144 = vadd.f32 0.0, %v8143
        %v8145 = vpop.f32.mrf.mxu0
        %8146 = vmatprep.mubr.bf16.mxu0 0
        %8147 = vmatmul.mubr.bf16.gmra.mxu0 %v7911
        %v8148 = vpop.f32.mrf.mxu0
        %v8149 = vadd.f32 0.0, %v8148
        %v8150 = vpop.f32.mrf.mxu0
        %v8151 = vpop.f32.mrf.mxu0
        %v8152 = vadd.f32 0.0, %v8151
        %v8153 = vpop.f32.mrf.mxu0
        %8154 = vmatprep.mubr.bf16.mxu0 0
        %8155 = vmatmul.mubr.bf16.gmra.mxu0 %v7919
        %v8156 = vpop.f32.mrf.mxu0
        %v8157 = vadd.f32 0.0, %v8156
        %v8158 = vpop.f32.mrf.mxu0
        %v8159 = vpop.f32.mrf.mxu0
        %v8160 = vadd.f32 0.0, %v8159
        %v8161 = vpop.f32.mrf.mxu0
        %8162 = vmatprep.mubr.bf16.mxu0 0
        %8163 = vmatmul.mubr.bf16.gmra.mxu0 %v7927
        %v8164 = vpop.f32.mrf.mxu0
        %v8165 = vadd.f32 0.0, %v8164
        %v8166 = vpop.f32.mrf.mxu0
        %v8167 = vpop.f32.mrf.mxu0
        %v8168 = vadd.f32 0.0, %v8167
        %v8169 = vpop.f32.mrf.mxu0
        %8170 = vmatprep.mubr.bf16.mxu0 0
        %8171 = vmatmul.mubr.bf16.gmra.mxu0 %v7935
        %v8172 = vpop.f32.mrf.mxu0
        %v8173 = vadd.f32 0.0, %v8172
        %v8174 = vpop.f32.mrf.mxu0
        %v8175 = vpop.f32.mrf.mxu0
        %v8176 = vadd.f32 0.0, %v8175
        %v8177 = vpop.f32.mrf.mxu0
        %8178 = vmatprep.mubr.bf16.mxu0 0
        %8179 = vmatmul.mubr.bf16.gmra.mxu0 %v7943
        %v8180 = vpop.f32.mrf.mxu0
        %v8181 = vadd.f32 0.0, %v8180
        %v8182 = vpop.f32.mrf.mxu0
        %v8183 = vpop.f32.mrf.mxu0
        %v8184 = vadd.f32 0.0, %v8183
        %v8185 = vpop.f32.mrf.mxu0
        %8186 = vmatprep.mubr.bf16.mxu0 0
        %8187 = vmatmul.mubr.bf16.gmra.mxu0 %v7951
        %v8188 = vpop.f32.mrf.mxu0
        %v8189 = vadd.f32 0.0, %v8188
        %v8190 = vpop.f32.mrf.mxu0
        %v8191 = vpop.f32.mrf.mxu0
        %v8192 = vadd.f32 0.0, %v8191
        %v8193 = vpop.f32.mrf.mxu0
        %8194 = vmatprep.mubr.bf16.mxu0 0
        %8195 = vmatmul.mubr.bf16.gmra.mxu0 %v7959
        %v8196 = vpop.f32.mrf.mxu0
        %v8197 = vadd.f32 0.0, %v8196
        %v8198 = vpop.f32.mrf.mxu0
        %v8199 = vpop.f32.mrf.mxu0
        %v8200 = vadd.f32 0.0, %v8199
        %v8201 = vpop.f32.mrf.mxu0
        %8202 = vmatprep.mubr.bf16.mxu0 0
        %8203 = vmatmul.mubr.bf16.gmra.mxu0 %v7967
        %v8204 = vpop.f32.mrf.mxu0
        %v8205 = vadd.f32 0.0, %v8204
        %v8206 = vpop.f32.mrf.mxu0
        %v8207 = vpop.f32.mrf.mxu0
        %v8208 = vadd.f32 0.0, %v8207
        %v8209 = vpop.f32.mrf.mxu0
        %8210 = vmatprep.mubr.bf16.mxu0 0
        %8211 = vmatmul.mubr.bf16.gmra.mxu0 %v7975
        %v8212 = vpop.f32.mrf.mxu0
        %v8213 = vadd.f32 0.0, %v8212
        %v8214 = vpop.f32.mrf.mxu0
        %v8215 = vpop.f32.mrf.mxu0
        %v8216 = vadd.f32 0.0, %v8215
        %v8217 = vpop.f32.mrf.mxu0
        %8218 = vmatprep.mubr.bf16.mxu0 0
        %8219 = vmatmul.mubr.bf16.gmra.mxu0 %v7983
        %v8220 = vpop.f32.mrf.mxu0
        %v8221 = vadd.f32 0.0, %v8220
        %v8222 = vpop.f32.mrf.mxu0
        %v8223 = vpop.f32.mrf.mxu0
        %v8224 = vadd.f32 0.0, %v8223
        %v8225 = vpop.f32.mrf.mxu0
        %8226 = vmatprep.mubr.bf16.mxu0 0
        %8227 = vmatmul.mubr.bf16.gmra.mxu0 %v7991
        %v8228 = vpop.f32.mrf.mxu0
        %v8229 = vadd.f32 0.0, %v8228
        %v8230 = vpop.f32.mrf.mxu0
        %v8231 = vpop.f32.mrf.mxu0
        %v8232 = vadd.f32 0.0, %v8231
        %v8233 = vpop.f32.mrf.mxu0
        %8234 = vmatprep.mubr.bf16.mxu0 0
        %8235 = vmatmul.mubr.bf16.gmra.mxu0 %v7999
        %v8236 = vpop.f32.mrf.mxu0
        %v8237 = vadd.f32 0.0, %v8236
        %v8238 = vpop.f32.mrf.mxu0
        %v8239 = vpop.f32.mrf.mxu0
        %v8240 = vadd.f32 0.0, %v8239
        %v8241 = vpop.f32.mrf.mxu0
        %8242 = vdwg.mxu0
        %v8243 = vadd.f32 %v7669, %v8101
        %v8244 = vadd.f32 %v7670, %v8104
        %v8245 = vadd.f32 %v7671, %v8109
        %v8246 = vadd.f32 %v7672, %v8112
        %v8247 = vadd.f32 %v7673, %v8117
        %v8248 = vadd.f32 %v7674, %v8120
        %v8249 = vadd.f32 %v7675, %v8125
        %v8250 = vadd.f32 %v7676, %v8128
        %v8251 = vadd.f32 %v7677, %v8133
        %v8252 = vadd.f32 %v7678, %v8136
        %v8253 = vadd.f32 %v7679, %v8141
        %v8254 = vadd.f32 %v7680, %v8144
        %v8255 = vadd.f32 %v7681, %v8149
        %v8256 = vadd.f32 %v7682, %v8152
        %v8257 = vadd.f32 %v7683, %v8157
        %v8258 = vadd.f32 %v7684, %v8160
        %v8259 = vadd.f32 %v7685, %v8165
        %v8260 = vadd.f32 %v7686, %v8168
        %v8261 = vadd.f32 %v7687, %v8173
        %v8262 = vadd.f32 %v7688, %v8176
        %v8263 = vadd.f32 %v7689, %v8181
        %v8264 = vadd.f32 %v7690, %v8184
        %v8265 = vadd.f32 %v7691, %v8189
        %v8266 = vadd.f32 %v7692, %v8192
        %v8267 = vadd.f32 %v7693, %v8197
        %v8268 = vadd.f32 %v7694, %v8200
        %v8269 = vadd.f32 %v7695, %v8205
        %v8270 = vadd.f32 %v7696, %v8208
        %v8271 = vadd.f32 %v7697, %v8213
        %v8272 = vadd.f32 %v7698, %v8216
        %v8273 = vadd.f32 %v7699, %v8221
        %v8274 = vadd.f32 %v7700, %v8224
        %v8275 = vadd.f32 %v7701, %v8229
        %v8276 = vadd.f32 %v7702, %v8232
        %v8277 = vadd.f32 %v7703, %v8237
        %v8278 = vadd.f32 %v7704, %v8240
        %v8279 = vld [vmem:[#allocation2 + $0x14] sm:$0xe]
        %s8280 = scalar_lea.vmem [#allocation8], 448
        %v8281 = vld [vmem:[%s8280] sm:$0xf]
        %v8282 = vld [vmem:[%s8280 + $0x4] sm:$0xf]
        %v8283 = vld [vmem:[%s8280 + $0x8] sm:$0xf]
        %v8284 = vld [vmem:[%s8280 + $0xc] sm:$0xf]
        %v8285 = vld [vmem:[%s8280 + $0x10] sm:$0xf]
        %v8286 = vld [vmem:[%s8280 + $0x14] sm:$0xf]
        %v8287 = vld [vmem:[%s8280 + $0x18] sm:$0xf]
        %v8288 = vld [vmem:[%s8280 + $0x1c] sm:$0xf]
        %v8289 = vld [vmem:[%s8280 + $0x20] sm:$0xf]
        %v8290 = vld [vmem:[%s8280 + $0x24] sm:$0xf]
        %v8291 = vld [vmem:[%s8280 + $0x28] sm:$0xf]
        %v8292 = vld [vmem:[%s8280 + $0x2c] sm:$0xf]
        %v8293 = vld [vmem:[%s8280 + $0x30] sm:$0xf]
        %v8294 = vld [vmem:[%s8280 + $0x34] sm:$0xf]
        %v8295 = vld [vmem:[%s8280 + $0x38] sm:$0xf]
        %v8296 = vld [vmem:[%s8280 + $0x3c] sm:$0xf]
        %v8298 = vunpack.c.l.b16 %v8279
        %v8299 = vpack.c.b16 %v7797, %v8298
        %v8300 = vrot.slane %v8299, 1
        %v8301 = vrot.slane %v7834, 1
        %v8302 = vsel %vm1098, %v8300, %v8301
        %v8303 = vrot.slane %v7835, 1
        %v8304 = vsel %vm1098, %v8301, %v8303
        %v8305 = vrot.slane %v7836, 1
        %v8306 = vsel %vm1098, %v8303, %v8305
        %v8307 = vrot.slane %v7837, 1
        %v8308 = vsel %vm1098, %v8305, %v8307
        %v8309 = vrot.slane %v7838, 1
        %v8310 = vsel %vm1098, %v8307, %v8309
        %v8311 = vrot.slane %v7839, 1
        %v8312 = vsel %vm1098, %v8309, %v8311
        %v8313 = vrot.slane %v7840, 1
        %v8314 = vsel %vm1098, %v8311, %v8313
        %v8315 = vrot.slane %v7841, 1
        %v8316 = vsel %vm1098, %v8313, %v8315
        %v8317 = vrot.slane %v7842, 1
        %v8318 = vsel %vm1098, %v8315, %v8317
        %v8319 = vrot.slane %v7843, 1
        %v8320 = vsel %vm1098, %v8317, %v8319
        %v8321 = vrot.slane %v7844, 1
        %v8322 = vsel %vm1098, %v8319, %v8321
        %v8323 = vrot.slane %v7845, 1
        %v8324 = vsel %vm1098, %v8321, %v8323
        %v8325 = vrot.slane %v7846, 1
        %v8326 = vsel %vm1098, %v8323, %v8325
        %v8327 = vrot.slane %v7847, 1
        %v8328 = vsel %vm1098, %v8325, %v8327
        %v8329 = vrot.slane %v7848, 1
        %v8330 = vsel %vm1098, %v8327, %v8329
        %v8331 = vrot.slane %v7849, 1
        %v8332 = vsel %vm1098, %v8329, %v8331
        %v8333 = vrot.slane %v7850, 1
        %v8334 = vsel %vm1098, %v8331, %v8333
        %v8335 = vrot.slane %v7851, 1
        %v8336 = vsel %vm1098, %v8333, %v8335
        %v8371 = vunpack.c.l.b16 %v8281
        %v8372 = vunpack.c.l.b16 %v8282
        %v8373 = vunpack.c.l.b16 %v8283
        %v8374 = vunpack.c.l.b16 %v8284
        %v8375 = vunpack.c.l.b16 %v8285
        %v8376 = vunpack.c.l.b16 %v8286
        %v8377 = vunpack.c.l.b16 %v8287
        %v8378 = vunpack.c.l.b16 %v8288
        %v8379 = vunpack.c.l.b16 %v8289
        %v8380 = vunpack.c.l.b16 %v8290
        %v8381 = vunpack.c.l.b16 %v8291
        %v8382 = vunpack.c.l.b16 %v8292
        %v8383 = vunpack.c.l.b16 %v8293
        %v8384 = vunpack.c.l.b16 %v8294
        %v8385 = vunpack.c.l.b16 %v8295
        %v8386 = vunpack.c.l.b16 %v8296
        %v8387 = vpack.c.b16 %v8372, %v8371
        %v8388 = vpack.c.b16 %v8374, %v8373
        %v8389 = vpack.c.b16 %v8376, %v8375
        %v8390 = vpack.c.b16 %v8378, %v8377
        %v8391 = vpack.c.b16 %v8380, %v8379
        %v8392 = vpack.c.b16 %v8382, %v8381
        %v8393 = vpack.c.b16 %v8384, %v8383
        %v8394 = vpack.c.b16 %v8386, %v8385
        %8403 = vmatprep.subr.bf16.mxu0 0
        %8404 = vmatpush1.bf16.msra.mxu0 %v8394
        %8405 = vmatprep.subr.bf16.mxu0 0
        %8406 = vmatpush1.bf16.msra.mxu0 %v8393
        %8407 = vmatprep.subr.bf16.mxu0 0
        %8408 = vmatpush1.bf16.msra.mxu0 %v8392
        %8409 = vmatprep.subr.bf16.mxu0 0
        %8410 = vmatpush1.bf16.msra.mxu0 %v8391
        %8411 = vmatprep.subr.bf16.mxu0 0
        %8412 = vmatpush1.bf16.msra.mxu0 %v8390
        %8413 = vmatprep.subr.bf16.mxu0 0
        %8414 = vmatpush1.bf16.msra.mxu0 %v8389
        %8415 = vmatprep.subr.bf16.mxu0 0
        %8416 = vmatpush1.bf16.msra.mxu0 %v8388
        %8417 = vmatprep.subr.bf16.mxu0 0
        %8418 = vmatpush1.bf16.msra.mxu0 %v8387
        %8419 = vmatprep.subr.bf16.mxu0 0
        %8420 = vmatpush2.bf16.msra.mxu0 0
        %8421 = vmatprep.subr.bf16.mxu0 0
        %8422 = vmatpush2.bf16.msra.mxu0 0
        %8423 = vmatprep.subr.bf16.mxu0 0
        %8424 = vmatpush2.bf16.msra.mxu0 0
        %8425 = vmatprep.subr.bf16.mxu0 0
        %8426 = vmatpush2.bf16.msra.mxu0 0
        %8427 = vmatprep.subr.bf16.mxu0 0
        %8428 = vmatpush2.bf16.msra.mxu0 0
        %8429 = vmatprep.subr.bf16.mxu0 0
        %8430 = vmatpush2.bf16.msra.mxu0 0
        %8431 = vmatprep.subr.bf16.mxu0 0
        %8432 = vmatpush2.bf16.msra.mxu0 0
        %8433 = vmatprep.subr.bf16.mxu0 0
        %8434 = vmatpush2.bf16.msra.mxu0 0
        %8435 = vmatprep.mubr.bf16.mxu0 0
        %8436 = vmatmul.mubr.bf16.gmra.mxu0 %v8302
        %v8437 = vpop.f32.mrf.mxu0
        %v8438 = vadd.f32 0.0, %v8437
        %v8439 = vpop.f32.mrf.mxu0
        %v8440 = vpop.f32.mrf.mxu0
        %v8441 = vadd.f32 0.0, %v8440
        %v8442 = vpop.f32.mrf.mxu0
        %8443 = vmatprep.mubr.bf16.mxu0 0
        %8444 = vmatmul.mubr.bf16.gmra.mxu0 %v8304
        %v8445 = vpop.f32.mrf.mxu0
        %v8446 = vadd.f32 0.0, %v8445
        %v8447 = vpop.f32.mrf.mxu0
        %v8448 = vpop.f32.mrf.mxu0
        %v8449 = vadd.f32 0.0, %v8448
        %v8450 = vpop.f32.mrf.mxu0
        %8451 = vmatprep.mubr.bf16.mxu0 0
        %8452 = vmatmul.mubr.bf16.gmra.mxu0 %v8306
        %v8453 = vpop.f32.mrf.mxu0
        %v8454 = vadd.f32 0.0, %v8453
        %v8455 = vpop.f32.mrf.mxu0
        %v8456 = vpop.f32.mrf.mxu0
        %v8457 = vadd.f32 0.0, %v8456
        %v8458 = vpop.f32.mrf.mxu0
        %8459 = vmatprep.mubr.bf16.mxu0 0
        %8460 = vmatmul.mubr.bf16.gmra.mxu0 %v8308
        %v8461 = vpop.f32.mrf.mxu0
        %v8462 = vadd.f32 0.0, %v8461
        %v8463 = vpop.f32.mrf.mxu0
        %v8464 = vpop.f32.mrf.mxu0
        %v8465 = vadd.f32 0.0, %v8464
        %v8466 = vpop.f32.mrf.mxu0
        %8467 = vmatprep.mubr.bf16.mxu0 0
        %8468 = vmatmul.mubr.bf16.gmra.mxu0 %v8310
        %v8469 = vpop.f32.mrf.mxu0
        %v8470 = vadd.f32 0.0, %v8469
        %v8471 = vpop.f32.mrf.mxu0
        %v8472 = vpop.f32.mrf.mxu0
        %v8473 = vadd.f32 0.0, %v8472
        %v8474 = vpop.f32.mrf.mxu0
        %8475 = vmatprep.mubr.bf16.mxu0 0
        %8476 = vmatmul.mubr.bf16.gmra.mxu0 %v8312
        %v8477 = vpop.f32.mrf.mxu0
        %v8478 = vadd.f32 0.0, %v8477
        %v8479 = vpop.f32.mrf.mxu0
        %v8480 = vpop.f32.mrf.mxu0
        %v8481 = vadd.f32 0.0, %v8480
        %v8482 = vpop.f32.mrf.mxu0
        %8483 = vmatprep.mubr.bf16.mxu0 0
        %8484 = vmatmul.mubr.bf16.gmra.mxu0 %v8314
        %v8485 = vpop.f32.mrf.mxu0
        %v8486 = vadd.f32 0.0, %v8485
        %v8487 = vpop.f32.mrf.mxu0
        %v8488 = vpop.f32.mrf.mxu0
        %v8489 = vadd.f32 0.0, %v8488
        %v8490 = vpop.f32.mrf.mxu0
        %8491 = vmatprep.mubr.bf16.mxu0 0
        %8492 = vmatmul.mubr.bf16.gmra.mxu0 %v8316
        %v8493 = vpop.f32.mrf.mxu0
        %v8494 = vadd.f32 0.0, %v8493
        %v8495 = vpop.f32.mrf.mxu0
        %v8496 = vpop.f32.mrf.mxu0
        %v8497 = vadd.f32 0.0, %v8496
        %v8498 = vpop.f32.mrf.mxu0
        %8499 = vmatprep.mubr.bf16.mxu0 0
        %8500 = vmatmul.mubr.bf16.gmra.mxu0 %v8318
        %v8501 = vpop.f32.mrf.mxu0
        %v8502 = vadd.f32 0.0, %v8501
        %v8503 = vpop.f32.mrf.mxu0
        %v8504 = vpop.f32.mrf.mxu0
        %v8505 = vadd.f32 0.0, %v8504
        %v8506 = vpop.f32.mrf.mxu0
        %8507 = vmatprep.mubr.bf16.mxu0 0
        %8508 = vmatmul.mubr.bf16.gmra.mxu0 %v8320
        %v8509 = vpop.f32.mrf.mxu0
        %v8510 = vadd.f32 0.0, %v8509
        %v8511 = vpop.f32.mrf.mxu0
        %v8512 = vpop.f32.mrf.mxu0
        %v8513 = vadd.f32 0.0, %v8512
        %v8514 = vpop.f32.mrf.mxu0
        %8515 = vmatprep.mubr.bf16.mxu0 0
        %8516 = vmatmul.mubr.bf16.gmra.mxu0 %v8322
        %v8517 = vpop.f32.mrf.mxu0
        %v8518 = vadd.f32 0.0, %v8517
        %v8519 = vpop.f32.mrf.mxu0
        %v8520 = vpop.f32.mrf.mxu0
        %v8521 = vadd.f32 0.0, %v8520
        %v8522 = vpop.f32.mrf.mxu0
        %8523 = vmatprep.mubr.bf16.mxu0 0
        %8524 = vmatmul.mubr.bf16.gmra.mxu0 %v8324
        %v8525 = vpop.f32.mrf.mxu0
        %v8526 = vadd.f32 0.0, %v8525
        %v8527 = vpop.f32.mrf.mxu0
        %v8528 = vpop.f32.mrf.mxu0
        %v8529 = vadd.f32 0.0, %v8528
        %v8530 = vpop.f32.mrf.mxu0
        %8531 = vmatprep.mubr.bf16.mxu0 0
        %8532 = vmatmul.mubr.bf16.gmra.mxu0 %v8326
        %v8533 = vpop.f32.mrf.mxu0
        %v8534 = vadd.f32 0.0, %v8533
        %v8535 = vpop.f32.mrf.mxu0
        %v8536 = vpop.f32.mrf.mxu0
        %v8537 = vadd.f32 0.0, %v8536
        %v8538 = vpop.f32.mrf.mxu0
        %8539 = vmatprep.mubr.bf16.mxu0 0
        %8540 = vmatmul.mubr.bf16.gmra.mxu0 %v8328
        %v8541 = vpop.f32.mrf.mxu0
        %v8542 = vadd.f32 0.0, %v8541
        %v8543 = vpop.f32.mrf.mxu0
        %v8544 = vpop.f32.mrf.mxu0
        %v8545 = vadd.f32 0.0, %v8544
        %v8546 = vpop.f32.mrf.mxu0
        %8547 = vmatprep.mubr.bf16.mxu0 0
        %8548 = vmatmul.mubr.bf16.gmra.mxu0 %v8330
        %v8549 = vpop.f32.mrf.mxu0
        %v8550 = vadd.f32 0.0, %v8549
        %v8551 = vpop.f32.mrf.mxu0
        %v8552 = vpop.f32.mrf.mxu0
        %v8553 = vadd.f32 0.0, %v8552
        %v8554 = vpop.f32.mrf.mxu0
        %8555 = vmatprep.mubr.bf16.mxu0 0
        %8556 = vmatmul.mubr.bf16.gmra.mxu0 %v8332
        %v8557 = vpop.f32.mrf.mxu0
        %v8558 = vadd.f32 0.0, %v8557
        %v8559 = vpop.f32.mrf.mxu0
        %v8560 = vpop.f32.mrf.mxu0
        %v8561 = vadd.f32 0.0, %v8560
        %v8562 = vpop.f32.mrf.mxu0
        %8563 = vmatprep.mubr.bf16.mxu0 0
        %8564 = vmatmul.mubr.bf16.gmra.mxu0 %v8334
        %v8565 = vpop.f32.mrf.mxu0
        %v8566 = vadd.f32 0.0, %v8565
        %v8567 = vpop.f32.mrf.mxu0
        %v8568 = vpop.f32.mrf.mxu0
        %v8569 = vadd.f32 0.0, %v8568
        %v8570 = vpop.f32.mrf.mxu0
        %8571 = vmatprep.mubr.bf16.mxu0 0
        %8572 = vmatmul.mubr.bf16.gmra.mxu0 %v8336
        %v8573 = vpop.f32.mrf.mxu0
        %v8574 = vadd.f32 0.0, %v8573
        %v8575 = vpop.f32.mrf.mxu0
        %v8576 = vpop.f32.mrf.mxu0
        %v8577 = vadd.f32 0.0, %v8576
        %v8578 = vpop.f32.mrf.mxu0
        %8579 = vdwg.mxu0
        %v8580 = vadd.f32 %v8243, %v8438
        %v8581 = vadd.f32 %v8244, %v8441
        %v8582 = vadd.f32 %v8245, %v8446
        %v8583 = vadd.f32 %v8246, %v8449
        %v8584 = vadd.f32 %v8247, %v8454
        %v8585 = vadd.f32 %v8248, %v8457
        %v8586 = vadd.f32 %v8249, %v8462
        %v8587 = vadd.f32 %v8250, %v8465
        %v8588 = vadd.f32 %v8251, %v8470
        %v8589 = vadd.f32 %v8252, %v8473
        %v8590 = vadd.f32 %v8253, %v8478
        %v8591 = vadd.f32 %v8254, %v8481
        %v8592 = vadd.f32 %v8255, %v8486
        %v8593 = vadd.f32 %v8256, %v8489
        %v8594 = vadd.f32 %v8257, %v8494
        %v8595 = vadd.f32 %v8258, %v8497
        %v8596 = vadd.f32 %v8259, %v8502
        %v8597 = vadd.f32 %v8260, %v8505
        %v8598 = vadd.f32 %v8261, %v8510
        %v8599 = vadd.f32 %v8262, %v8513
        %v8600 = vadd.f32 %v8263, %v8518
        %v8601 = vadd.f32 %v8264, %v8521
        %v8602 = vadd.f32 %v8265, %v8526
        %v8603 = vadd.f32 %v8266, %v8529
        %v8604 = vadd.f32 %v8267, %v8534
        %v8605 = vadd.f32 %v8268, %v8537
        %v8606 = vadd.f32 %v8269, %v8542
        %v8607 = vadd.f32 %v8270, %v8545
        %v8608 = vadd.f32 %v8271, %v8550
        %v8609 = vadd.f32 %v8272, %v8553
        %v8610 = vadd.f32 %v8273, %v8558
        %v8611 = vadd.f32 %v8274, %v8561
        %v8612 = vadd.f32 %v8275, %v8566
        %v8613 = vadd.f32 %v8276, %v8569
        %v8614 = vadd.f32 %v8277, %v8574
        %v8615 = vadd.f32 %v8278, %v8577
        %v8616 = vld [vmem:[#allocation2 + $0xa4] sm:$0x3]
        %s8617 = scalar_lea.vmem [#allocation8], 512
        %v8618 = vld [vmem:[%s8617] sm:$0xf]
        %v8619 = vld [vmem:[%s8617 + $0x4] sm:$0xf]
        %v8620 = vld [vmem:[%s8617 + $0x8] sm:$0xf]
        %v8621 = vld [vmem:[%s8617 + $0xc] sm:$0xf]
        %v8622 = vld [vmem:[%s8617 + $0x10] sm:$0xf]
        %v8623 = vld [vmem:[%s8617 + $0x14] sm:$0xf]
        %v8624 = vld [vmem:[%s8617 + $0x18] sm:$0xf]
        %v8625 = vld [vmem:[%s8617 + $0x1c] sm:$0xf]
        %v8626 = vld [vmem:[%s8617 + $0x20] sm:$0xf]
        %v8627 = vld [vmem:[%s8617 + $0x24] sm:$0xf]
        %v8628 = vld [vmem:[%s8617 + $0x28] sm:$0xf]
        %v8629 = vld [vmem:[%s8617 + $0x2c] sm:$0xf]
        %v8630 = vld [vmem:[%s8617 + $0x30] sm:$0xf]
        %v8631 = vld [vmem:[%s8617 + $0x34] sm:$0xf]
        %v8632 = vld [vmem:[%s8617 + $0x38] sm:$0xf]
        %v8633 = vld [vmem:[%s8617 + $0x3c] sm:$0xf]
        %v8635 = vunpack.c.l.b16 %v8616
        %v8636 = vpack.c.b16 %v8635, %v8635
        %v8638 = vshrl.u32 %v8299, 16
        %v8640 = vrot.slane %v8638, 1
        %v8641 = vshll.u32 %v8299, 16
        %v8643 = vrot.slane %v8641, 2
        %v8644 = vor.u32 %v8640, %v8643
        %v8645 = vrot.slane %v7864, 1
        %v8646 = vrot.slane %v7860, 2
        %v8647 = vor.u32 %v8645, %v8646
        %v8648 = vsel %vm1899, %v8644, %v8647
        %v8649 = vrot.slane %v7872, 1
        %v8650 = vrot.slane %v7868, 2
        %v8651 = vor.u32 %v8649, %v8650
        %v8652 = vsel %vm1899, %v8647, %v8651
        %v8653 = vrot.slane %v7880, 1
        %v8654 = vrot.slane %v7876, 2
        %v8655 = vor.u32 %v8653, %v8654
        %v8656 = vsel %vm1899, %v8651, %v8655
        %v8657 = vrot.slane %v7888, 1
        %v8658 = vrot.slane %v7884, 2
        %v8659 = vor.u32 %v8657, %v8658
        %v8660 = vsel %vm1899, %v8655, %v8659
        %v8661 = vrot.slane %v7896, 1
        %v8662 = vrot.slane %v7892, 2
        %v8663 = vor.u32 %v8661, %v8662
        %v8664 = vsel %vm1899, %v8659, %v8663
        %v8665 = vrot.slane %v7904, 1
        %v8666 = vrot.slane %v7900, 2
        %v8667 = vor.u32 %v8665, %v8666
        %v8668 = vsel %vm1899, %v8663, %v8667
        %v8669 = vrot.slane %v7912, 1
        %v8670 = vrot.slane %v7908, 2
        %v8671 = vor.u32 %v8669, %v8670
        %v8672 = vsel %vm1899, %v8667, %v8671
        %v8673 = vrot.slane %v7920, 1
        %v8674 = vrot.slane %v7916, 2
        %v8675 = vor.u32 %v8673, %v8674
        %v8676 = vsel %vm1899, %v8671, %v8675
        %v8677 = vrot.slane %v7928, 1
        %v8678 = vrot.slane %v7924, 2
        %v8679 = vor.u32 %v8677, %v8678
        %v8680 = vsel %vm1899, %v8675, %v8679
        %v8681 = vrot.slane %v7936, 1
        %v8682 = vrot.slane %v7932, 2
        %v8683 = vor.u32 %v8681, %v8682
        %v8684 = vsel %vm1899, %v8679, %v8683
        %v8685 = vrot.slane %v7944, 1
        %v8686 = vrot.slane %v7940, 2
        %v8687 = vor.u32 %v8685, %v8686
        %v8688 = vsel %vm1899, %v8683, %v8687
        %v8689 = vrot.slane %v7952, 1
        %v8690 = vrot.slane %v7948, 2
        %v8691 = vor.u32 %v8689, %v8690
        %v8692 = vsel %vm1899, %v8687, %v8691
        %v8693 = vrot.slane %v7960, 1
        %v8694 = vrot.slane %v7956, 2
        %v8695 = vor.u32 %v8693, %v8694
        %v8696 = vsel %vm1899, %v8691, %v8695
        %v8697 = vrot.slane %v7968, 1
        %v8698 = vrot.slane %v7964, 2
        %v8699 = vor.u32 %v8697, %v8698
        %v8700 = vsel %vm1899, %v8695, %v8699
        %v8701 = vrot.slane %v7976, 1
        %v8702 = vrot.slane %v7972, 2
        %v8703 = vor.u32 %v8701, %v8702
        %v8704 = vsel %vm1899, %v8699, %v8703
        %v8705 = vrot.slane %v7984, 1
        %v8706 = vrot.slane %v7980, 2
        %v8707 = vor.u32 %v8705, %v8706
        %v8708 = vsel %vm1899, %v8703, %v8707
        %v8709 = vrot.slane %v7992, 1
        %v8710 = vrot.slane %v7988, 2
        %v8711 = vor.u32 %v8709, %v8710
        %v8712 = vsel %vm1899, %v8707, %v8711
        %v8714 = vshrl.u32 %v8636, 16
        %v8716 = vrot.slane %v8714, 1
        %v8717 = vshll.u32 %v8636, 16
        %v8719 = vrot.slane %v8717, 2
        %v8720 = vor.u32 %v8716, %v8719
        %v8721 = vsel %vm1899, %v8711, %v8720
        %v8756 = vunpack.c.l.b16 %v8618
        %v8757 = vunpack.c.l.b16 %v8619
        %v8758 = vunpack.c.l.b16 %v8620
        %v8759 = vunpack.c.l.b16 %v8621
        %v8760 = vunpack.c.l.b16 %v8622
        %v8761 = vunpack.c.l.b16 %v8623
        %v8762 = vunpack.c.l.b16 %v8624
        %v8763 = vunpack.c.l.b16 %v8625
        %v8764 = vunpack.c.l.b16 %v8626
        %v8765 = vunpack.c.l.b16 %v8627
        %v8766 = vunpack.c.l.b16 %v8628
        %v8767 = vunpack.c.l.b16 %v8629
        %v8768 = vunpack.c.l.b16 %v8630
        %v8769 = vunpack.c.l.b16 %v8631
        %v8770 = vunpack.c.l.b16 %v8632
        %v8771 = vunpack.c.l.b16 %v8633
        %v8772 = vpack.c.b16 %v8757, %v8756
        %v8773 = vpack.c.b16 %v8759, %v8758
        %v8774 = vpack.c.b16 %v8761, %v8760
        %v8775 = vpack.c.b16 %v8763, %v8762
        %v8776 = vpack.c.b16 %v8765, %v8764
        %v8777 = vpack.c.b16 %v8767, %v8766
        %v8778 = vpack.c.b16 %v8769, %v8768
        %v8779 = vpack.c.b16 %v8771, %v8770
        %8788 = vmatprep.subr.bf16.mxu0 0
        %8789 = vmatpush1.bf16.msra.mxu0 %v8779
        %8790 = vmatprep.subr.bf16.mxu0 0
        %8791 = vmatpush1.bf16.msra.mxu0 %v8778
        %8792 = vmatprep.subr.bf16.mxu0 0
        %8793 = vmatpush1.bf16.msra.mxu0 %v8777
        %8794 = vmatprep.subr.bf16.mxu0 0
        %8795 = vmatpush1.bf16.msra.mxu0 %v8776
        %8796 = vmatprep.subr.bf16.mxu0 0
        %8797 = vmatpush1.bf16.msra.mxu0 %v8775
        %8798 = vmatprep.subr.bf16.mxu0 0
        %8799 = vmatpush1.bf16.msra.mxu0 %v8774
        %8800 = vmatprep.subr.bf16.mxu0 0
        %8801 = vmatpush1.bf16.msra.mxu0 %v8773
        %8802 = vmatprep.subr.bf16.mxu0 0
        %8803 = vmatpush1.bf16.msra.mxu0 %v8772
        %8804 = vmatprep.subr.bf16.mxu0 0
        %8805 = vmatpush2.bf16.msra.mxu0 0
        %8806 = vmatprep.subr.bf16.mxu0 0
        %8807 = vmatpush2.bf16.msra.mxu0 0
        %8808 = vmatprep.subr.bf16.mxu0 0
        %8809 = vmatpush2.bf16.msra.mxu0 0
        %8810 = vmatprep.subr.bf16.mxu0 0
        %8811 = vmatpush2.bf16.msra.mxu0 0
        %8812 = vmatprep.subr.bf16.mxu0 0
        %8813 = vmatpush2.bf16.msra.mxu0 0
        %8814 = vmatprep.subr.bf16.mxu0 0
        %8815 = vmatpush2.bf16.msra.mxu0 0
        %8816 = vmatprep.subr.bf16.mxu0 0
        %8817 = vmatpush2.bf16.msra.mxu0 0
        %8818 = vmatprep.subr.bf16.mxu0 0
        %8819 = vmatpush2.bf16.msra.mxu0 0
        %8820 = vmatprep.mubr.bf16.mxu0 0
        %8821 = vmatmul.mubr.bf16.gmra.mxu0 %v8648
        %v8822 = vpop.f32.mrf.mxu0
        %v8823 = vadd.f32 0.0, %v8822
        %v8824 = vpop.f32.mrf.mxu0
        %v8825 = vpop.f32.mrf.mxu0
        %v8826 = vadd.f32 0.0, %v8825
        %v8827 = vpop.f32.mrf.mxu0
        %8828 = vmatprep.mubr.bf16.mxu0 0
        %8829 = vmatmul.mubr.bf16.gmra.mxu0 %v8652
        %v8830 = vpop.f32.mrf.mxu0
        %v8831 = vadd.f32 0.0, %v8830
        %v8832 = vpop.f32.mrf.mxu0
        %v8833 = vpop.f32.mrf.mxu0
        %v8834 = vadd.f32 0.0, %v8833
        %v8835 = vpop.f32.mrf.mxu0
        %8836 = vmatprep.mubr.bf16.mxu0 0
        %8837 = vmatmul.mubr.bf16.gmra.mxu0 %v8656
        %v8838 = vpop.f32.mrf.mxu0
        %v8839 = vadd.f32 0.0, %v8838
        %v8840 = vpop.f32.mrf.mxu0
        %v8841 = vpop.f32.mrf.mxu0
        %v8842 = vadd.f32 0.0, %v8841
        %v8843 = vpop.f32.mrf.mxu0
        %8844 = vmatprep.mubr.bf16.mxu0 0
        %8845 = vmatmul.mubr.bf16.gmra.mxu0 %v8660
        %v8846 = vpop.f32.mrf.mxu0
        %v8847 = vadd.f32 0.0, %v8846
        %v8848 = vpop.f32.mrf.mxu0
        %v8849 = vpop.f32.mrf.mxu0
        %v8850 = vadd.f32 0.0, %v8849
        %v8851 = vpop.f32.mrf.mxu0
        %8852 = vmatprep.mubr.bf16.mxu0 0
        %8853 = vmatmul.mubr.bf16.gmra.mxu0 %v8664
        %v8854 = vpop.f32.mrf.mxu0
        %v8855 = vadd.f32 0.0, %v8854
        %v8856 = vpop.f32.mrf.mxu0
        %v8857 = vpop.f32.mrf.mxu0
        %v8858 = vadd.f32 0.0, %v8857
        %v8859 = vpop.f32.mrf.mxu0
        %8860 = vmatprep.mubr.bf16.mxu0 0
        %8861 = vmatmul.mubr.bf16.gmra.mxu0 %v8668
        %v8862 = vpop.f32.mrf.mxu0
        %v8863 = vadd.f32 0.0, %v8862
        %v8864 = vpop.f32.mrf.mxu0
        %v8865 = vpop.f32.mrf.mxu0
        %v8866 = vadd.f32 0.0, %v8865
        %v8867 = vpop.f32.mrf.mxu0
        %8868 = vmatprep.mubr.bf16.mxu0 0
        %8869 = vmatmul.mubr.bf16.gmra.mxu0 %v8672
        %v8870 = vpop.f32.mrf.mxu0
        %v8871 = vadd.f32 0.0, %v8870
        %v8872 = vpop.f32.mrf.mxu0
        %v8873 = vpop.f32.mrf.mxu0
        %v8874 = vadd.f32 0.0, %v8873
        %v8875 = vpop.f32.mrf.mxu0
        %8876 = vmatprep.mubr.bf16.mxu0 0
        %8877 = vmatmul.mubr.bf16.gmra.mxu0 %v8676
        %v8878 = vpop.f32.mrf.mxu0
        %v8879 = vadd.f32 0.0, %v8878
        %v8880 = vpop.f32.mrf.mxu0
        %v8881 = vpop.f32.mrf.mxu0
        %v8882 = vadd.f32 0.0, %v8881
        %v8883 = vpop.f32.mrf.mxu0
        %8884 = vmatprep.mubr.bf16.mxu0 0
        %8885 = vmatmul.mubr.bf16.gmra.mxu0 %v8680
        %v8886 = vpop.f32.mrf.mxu0
        %v8887 = vadd.f32 0.0, %v8886
        %v8888 = vpop.f32.mrf.mxu0
        %v8889 = vpop.f32.mrf.mxu0
        %v8890 = vadd.f32 0.0, %v8889
        %v8891 = vpop.f32.mrf.mxu0
        %8892 = vmatprep.mubr.bf16.mxu0 0
        %8893 = vmatmul.mubr.bf16.gmra.mxu0 %v8684
        %v8894 = vpop.f32.mrf.mxu0
        %v8895 = vadd.f32 0.0, %v8894
        %v8896 = vpop.f32.mrf.mxu0
        %v8897 = vpop.f32.mrf.mxu0
        %v8898 = vadd.f32 0.0, %v8897
        %v8899 = vpop.f32.mrf.mxu0
        %8900 = vmatprep.mubr.bf16.mxu0 0
        %8901 = vmatmul.mubr.bf16.gmra.mxu0 %v8688
        %v8902 = vpop.f32.mrf.mxu0
        %v8903 = vadd.f32 0.0, %v8902
        %v8904 = vpop.f32.mrf.mxu0
        %v8905 = vpop.f32.mrf.mxu0
        %v8906 = vadd.f32 0.0, %v8905
        %v8907 = vpop.f32.mrf.mxu0
        %8908 = vmatprep.mubr.bf16.mxu0 0
        %8909 = vmatmul.mubr.bf16.gmra.mxu0 %v8692
        %v8910 = vpop.f32.mrf.mxu0
        %v8911 = vadd.f32 0.0, %v8910
        %v8912 = vpop.f32.mrf.mxu0
        %v8913 = vpop.f32.mrf.mxu0
        %v8914 = vadd.f32 0.0, %v8913
        %v8915 = vpop.f32.mrf.mxu0
        %8916 = vmatprep.mubr.bf16.mxu0 0
        %8917 = vmatmul.mubr.bf16.gmra.mxu0 %v8696
        %v8918 = vpop.f32.mrf.mxu0
        %v8919 = vadd.f32 0.0, %v8918
        %v8920 = vpop.f32.mrf.mxu0
        %v8921 = vpop.f32.mrf.mxu0
        %v8922 = vadd.f32 0.0, %v8921
        %v8923 = vpop.f32.mrf.mxu0
        %8924 = vmatprep.mubr.bf16.mxu0 0
        %8925 = vmatmul.mubr.bf16.gmra.mxu0 %v8700
        %v8926 = vpop.f32.mrf.mxu0
        %v8927 = vadd.f32 0.0, %v8926
        %v8928 = vpop.f32.mrf.mxu0
        %v8929 = vpop.f32.mrf.mxu0
        %v8930 = vadd.f32 0.0, %v8929
        %v8931 = vpop.f32.mrf.mxu0
        %8932 = vmatprep.mubr.bf16.mxu0 0
        %8933 = vmatmul.mubr.bf16.gmra.mxu0 %v8704
        %v8934 = vpop.f32.mrf.mxu0
        %v8935 = vadd.f32 0.0, %v8934
        %v8936 = vpop.f32.mrf.mxu0
        %v8937 = vpop.f32.mrf.mxu0
        %v8938 = vadd.f32 0.0, %v8937
        %v8939 = vpop.f32.mrf.mxu0
        %8940 = vmatprep.mubr.bf16.mxu0 0
        %8941 = vmatmul.mubr.bf16.gmra.mxu0 %v8708
        %v8942 = vpop.f32.mrf.mxu0
        %v8943 = vadd.f32 0.0, %v8942
        %v8944 = vpop.f32.mrf.mxu0
        %v8945 = vpop.f32.mrf.mxu0
        %v8946 = vadd.f32 0.0, %v8945
        %v8947 = vpop.f32.mrf.mxu0
        %8948 = vmatprep.mubr.bf16.mxu0 0
        %8949 = vmatmul.mubr.bf16.gmra.mxu0 %v8712
        %v8950 = vpop.f32.mrf.mxu0
        %v8951 = vadd.f32 0.0, %v8950
        %v8952 = vpop.f32.mrf.mxu0
        %v8953 = vpop.f32.mrf.mxu0
        %v8954 = vadd.f32 0.0, %v8953
        %v8955 = vpop.f32.mrf.mxu0
        %8956 = vmatprep.mubr.bf16.mxu0 0
        %8957 = vmatmul.mubr.bf16.gmra.mxu0 %v8721
        %v8958 = vpop.f32.mrf.mxu0
        %v8959 = vadd.f32 0.0, %v8958
        %v8960 = vpop.f32.mrf.mxu0
        %v8961 = vpop.f32.mrf.mxu0
        %v8962 = vadd.f32 0.0, %v8961
        %v8963 = vpop.f32.mrf.mxu0
        %8964 = vdwg.mxu0
        %v8965 = vadd.f32 %v8580, %v8823
        %v8966 = vadd.f32 %v8581, %v8826
        %v8967 = vadd.f32 %v8582, %v8831
        %v8968 = vadd.f32 %v8583, %v8834
        %v8969 = vadd.f32 %v8584, %v8839
        %v8970 = vadd.f32 %v8585, %v8842
        %v8971 = vadd.f32 %v8586, %v8847
        %v8972 = vadd.f32 %v8587, %v8850
        %v8973 = vadd.f32 %v8588, %v8855
        %v8974 = vadd.f32 %v8589, %v8858
        %v8975 = vadd.f32 %v8590, %v8863
        %v8976 = vadd.f32 %v8591, %v8866
        %v8977 = vadd.f32 %v8592, %v8871
        %v8978 = vadd.f32 %v8593, %v8874
        %v8979 = vadd.f32 %v8594, %v8879
        %v8980 = vadd.f32 %v8595, %v8882
        %v8981 = vadd.f32 %v8596, %v8887
        %v8982 = vadd.f32 %v8597, %v8890
        %v8983 = vadd.f32 %v8598, %v8895
        %v8984 = vadd.f32 %v8599, %v8898
        %v8985 = vadd.f32 %v8600, %v8903
        %v8986 = vadd.f32 %v8601, %v8906
        %v8987 = vadd.f32 %v8602, %v8911
        %v8988 = vadd.f32 %v8603, %v8914
        %v8989 = vadd.f32 %v8604, %v8919
        %v8990 = vadd.f32 %v8605, %v8922
        %v8991 = vadd.f32 %v8606, %v8927
        %v8992 = vadd.f32 %v8607, %v8930
        %v8993 = vadd.f32 %v8608, %v8935
        %v8994 = vadd.f32 %v8609, %v8938
        %v8995 = vadd.f32 %v8610, %v8943
        %v8996 = vadd.f32 %v8611, %v8946
        %v8997 = vadd.f32 %v8612, %v8951
        %v8998 = vadd.f32 %v8613, %v8954
        %v8999 = vadd.f32 %v8614, %v8959
        %v9000 = vadd.f32 %v8615, %v8962
        %v9001 = vld [vmem:[%s237 + $0x8] sm:$0xe]
        %v9002 = vld [vmem:[%s237 + $0xc] sm:$0xf]
        %v9003 = vld [vmem:[%s237 + $0x10] sm:$0xf]
        %v9004 = vld [vmem:[%s237 + $0x14] sm:$0xf]
        %v9005 = vld [vmem:[%s237 + $0x18] sm:$0xf]
        %v9006 = vld [vmem:[%s237 + $0x1c] sm:$0xf]
        %v9007 = vld [vmem:[%s237 + $0x20] sm:$0xf]
        %v9008 = vld [vmem:[%s237 + $0x24] sm:$0xf]
        %v9009 = vld [vmem:[%s237 + $0x28] sm:$0xf]
        %v9010 = vld [vmem:[%s237 + $0x2c] sm:$0xf]
        %v9011 = vld [vmem:[%s237 + $0x30] sm:$0xf]
        %v9012 = vld [vmem:[%s237 + $0x34] sm:$0xf]
        %v9013 = vld [vmem:[%s237 + $0x38] sm:$0xf]
        %v9014 = vld [vmem:[%s237 + $0x3c] sm:$0xf]
        %v9015 = vld [vmem:[%s237 + $0x40] sm:$0xf]
        %v9016 = vld [vmem:[%s237 + $0x44] sm:$0xf]
        %v9017 = vld [vmem:[%s237 + $0x48] sm:$0xf]
        %v9018 = vld [vmem:[%s237 + $0x4c] sm:$0xf]
        %v9019 = vld [vmem:[%s237 + $0x50] sm:$0xf]
        %v9020 = vld [vmem:[%s237 + $0x54] sm:$0xf]
        %v9021 = vld [vmem:[%s237 + $0x58] sm:$0xf]
        %v9022 = vld [vmem:[%s237 + $0x5c] sm:$0xf]
        %v9023 = vld [vmem:[%s237 + $0x60] sm:$0xf]
        %v9024 = vld [vmem:[%s237 + $0x64] sm:$0xf]
        %v9025 = vld [vmem:[%s237 + $0x68] sm:$0xf]
        %v9026 = vld [vmem:[%s237 + $0x6c] sm:$0xf]
        %v9027 = vld [vmem:[%s237 + $0x70] sm:$0xf]
        %v9028 = vld [vmem:[%s237 + $0x74] sm:$0xf]
        %v9029 = vld [vmem:[%s237 + $0x78] sm:$0xf]
        %v9030 = vld [vmem:[%s237 + $0x7c] sm:$0xf]
        %v9031 = vld [vmem:[%s237 + $0x80] sm:$0xf]
        %v9032 = vld [vmem:[%s237 + $0x84] sm:$0xf]
        %v9033 = vld [vmem:[%s237 + $0x88] sm:$0xf]
        %v9034 = vld [vmem:[%s237 + $0x8c] sm:$0xf]
        %v9035 = vld [vmem:[%s237 + $0x90] sm:$0xf]
        %v9036 = vld [vmem:[%s237 + $0x94] sm:$0xf]
        %v9037 = vld [vmem:[%s237 + $0x98] sm:$0x3]
        %v9038 = vunpack.c.l.bf16 %v9001
        %v9039 = vunpack.c.l.bf16 %v9002
        %v9040 = vunpack.c.l.bf16 %v9003
        %v9041 = vunpack.c.l.bf16 %v9004
        %v9042 = vunpack.c.l.bf16 %v9005
        %v9043 = vunpack.c.l.bf16 %v9006
        %v9044 = vunpack.c.l.bf16 %v9007
        %v9045 = vunpack.c.l.bf16 %v9008
        %v9046 = vunpack.c.l.bf16 %v9009
        %v9047 = vunpack.c.l.bf16 %v9010
        %v9048 = vunpack.c.l.bf16 %v9011
        %v9049 = vunpack.c.l.bf16 %v9012
        %v9050 = vunpack.c.l.bf16 %v9013
        %v9051 = vunpack.c.l.bf16 %v9014
        %v9052 = vunpack.c.l.bf16 %v9015
        %v9053 = vunpack.c.l.bf16 %v9016
        %v9054 = vunpack.c.l.bf16 %v9017
        %v9055 = vunpack.c.l.bf16 %v9018
        %v9056 = vunpack.c.l.bf16 %v9019
        %v9057 = vunpack.c.l.bf16 %v9020
        %v9058 = vunpack.c.l.bf16 %v9021
        %v9059 = vunpack.c.l.bf16 %v9022
        %v9060 = vunpack.c.l.bf16 %v9023
        %v9061 = vunpack.c.l.bf16 %v9024
        %v9062 = vunpack.c.l.bf16 %v9025
        %v9063 = vunpack.c.l.bf16 %v9026
        %v9064 = vunpack.c.l.bf16 %v9027
        %v9065 = vunpack.c.l.bf16 %v9028
        %v9066 = vunpack.c.l.bf16 %v9029
        %v9067 = vunpack.c.l.bf16 %v9030
        %v9068 = vunpack.c.l.bf16 %v9031
        %v9069 = vunpack.c.l.bf16 %v9032
        %v9070 = vunpack.c.l.bf16 %v9033
        %v9071 = vunpack.c.l.bf16 %v9034
        %v9072 = vunpack.c.l.bf16 %v9035
        %v9073 = vunpack.c.l.bf16 %v9036
        %v9074 = vunpack.c.l.bf16 %v9037
        %v9075 = vld [vmem:[%s4] sm:$0x1]
        %v9077 = vlaneseq
        %v9078 = vshrl.u32 %v9077, 7
        %v9079 = vsub.s32 0, %v9078
        %v9080 = vrot.slane %v9075, %v9079
        %v9082 = vadd.f32 %v8965, %v9080
        %v9083 = vadd.f32 %v8966, %v9080
        %v9084 = vadd.f32 %v8967, %v9080
        %v9085 = vadd.f32 %v8968, %v9080
        %v9086 = vadd.f32 %v8969, %v9080
        %v9087 = vadd.f32 %v8970, %v9080
        %v9088 = vadd.f32 %v8971, %v9080
        %v9089 = vadd.f32 %v8972, %v9080
        %v9090 = vadd.f32 %v8973, %v9080
        %v9091 = vadd.f32 %v8974, %v9080
        %v9092 = vadd.f32 %v8975, %v9080
        %v9093 = vadd.f32 %v8976, %v9080
        %v9094 = vadd.f32 %v8977, %v9080
        %v9095 = vadd.f32 %v8978, %v9080
        %v9096 = vadd.f32 %v8979, %v9080
        %v9097 = vadd.f32 %v8980, %v9080
        %v9098 = vadd.f32 %v8981, %v9080
        %v9099 = vadd.f32 %v8982, %v9080
        %v9100 = vadd.f32 %v8983, %v9080
        %v9101 = vadd.f32 %v8984, %v9080
        %v9102 = vadd.f32 %v8985, %v9080
        %v9103 = vadd.f32 %v8986, %v9080
        %v9104 = vadd.f32 %v8987, %v9080
        %v9105 = vadd.f32 %v8988, %v9080
        %v9106 = vadd.f32 %v8989, %v9080
        %v9107 = vadd.f32 %v8990, %v9080
        %v9108 = vadd.f32 %v8991, %v9080
        %v9109 = vadd.f32 %v8992, %v9080
        %v9110 = vadd.f32 %v8993, %v9080
        %v9111 = vadd.f32 %v8994, %v9080
        %v9112 = vadd.f32 %v8995, %v9080
        %v9113 = vadd.f32 %v8996, %v9080
        %v9114 = vadd.f32 %v8997, %v9080
        %v9115 = vadd.f32 %v8998, %v9080
        %v9116 = vadd.f32 %v8999, %v9080
        %v9117 = vadd.f32 %v9000, %v9080
        %vm9155 = vcmask 1044480
        %v9156 = vrot.slane %v9038, 3
        %v9157 = vrot.slane %v9039, 3
        %v9158 = vsel %vm9155, %v9156, %v9157
        %v9159 = vrot.slane %v9040, 3
        %v9160 = vsel %vm9155, %v9157, %v9159
        %v9161 = vrot.slane %v9041, 3
        %v9162 = vsel %vm9155, %v9159, %v9161
        %v9163 = vrot.slane %v9042, 3
        %v9164 = vsel %vm9155, %v9161, %v9163
        %v9165 = vrot.slane %v9043, 3
        %v9166 = vsel %vm9155, %v9163, %v9165
        %v9167 = vrot.slane %v9044, 3
        %v9168 = vsel %vm9155, %v9165, %v9167
        %v9169 = vrot.slane %v9045, 3
        %v9170 = vsel %vm9155, %v9167, %v9169
        %v9171 = vrot.slane %v9046, 3
        %v9172 = vsel %vm9155, %v9169, %v9171
        %v9173 = vrot.slane %v9047, 3
        %v9174 = vsel %vm9155, %v9171, %v9173
        %v9175 = vrot.slane %v9048, 3
        %v9176 = vsel %vm9155, %v9173, %v9175
        %v9177 = vrot.slane %v9049, 3
        %v9178 = vsel %vm9155, %v9175, %v9177
        %v9179 = vrot.slane %v9050, 3
        %v9180 = vsel %vm9155, %v9177, %v9179
        %v9181 = vrot.slane %v9051, 3
        %v9182 = vsel %vm9155, %v9179, %v9181
        %v9183 = vrot.slane %v9052, 3
        %v9184 = vsel %vm9155, %v9181, %v9183
        %v9185 = vrot.slane %v9053, 3
        %v9186 = vsel %vm9155, %v9183, %v9185
        %v9187 = vrot.slane %v9054, 3
        %v9188 = vsel %vm9155, %v9185, %v9187
        %v9189 = vrot.slane %v9055, 3
        %v9190 = vsel %vm9155, %v9187, %v9189
        %v9191 = vrot.slane %v9056, 3
        %v9192 = vsel %vm9155, %v9189, %v9191
        %v9193 = vrot.slane %v9057, 3
        %v9194 = vsel %vm9155, %v9191, %v9193
        %v9195 = vrot.slane %v9058, 3
        %v9196 = vsel %vm9155, %v9193, %v9195
        %v9197 = vrot.slane %v9059, 3
        %v9198 = vsel %vm9155, %v9195, %v9197
        %v9199 = vrot.slane %v9060, 3
        %v9200 = vsel %vm9155, %v9197, %v9199
        %v9201 = vrot.slane %v9061, 3
        %v9202 = vsel %vm9155, %v9199, %v9201
        %v9203 = vrot.slane %v9062, 3
        %v9204 = vsel %vm9155, %v9201, %v9203
        %v9205 = vrot.slane %v9063, 3
        %v9206 = vsel %vm9155, %v9203, %v9205
        %v9207 = vrot.slane %v9064, 3
        %v9208 = vsel %vm9155, %v9205, %v9207
        %v9209 = vrot.slane %v9065, 3
        %v9210 = vsel %vm9155, %v9207, %v9209
        %v9211 = vrot.slane %v9066, 3
        %v9212 = vsel %vm9155, %v9209, %v9211
        %v9213 = vrot.slane %v9067, 3
        %v9214 = vsel %vm9155, %v9211, %v9213
        %v9215 = vrot.slane %v9068, 3
        %v9216 = vsel %vm9155, %v9213, %v9215
        %v9217 = vrot.slane %v9069, 3
        %v9218 = vsel %vm9155, %v9215, %v9217
        %v9219 = vrot.slane %v9070, 3
        %v9220 = vsel %vm9155, %v9217, %v9219
        %v9221 = vrot.slane %v9071, 3
        %v9222 = vsel %vm9155, %v9219, %v9221
        %v9223 = vrot.slane %v9072, 3
        %v9224 = vsel %vm9155, %v9221, %v9223
        %v9225 = vrot.slane %v9073, 3
        %v9226 = vsel %vm9155, %v9223, %v9225
        %v9227 = vrot.slane %v9074, 3
        %v9228 = vsel %vm9155, %v9225, %v9227
        %v9265 = vadd.f32 %v9082, %v9158
        %v9266 = vadd.f32 %v9083, %v9160
        %v9267 = vadd.f32 %v9084, %v9162
        %v9268 = vadd.f32 %v9085, %v9164
        %v9269 = vadd.f32 %v9086, %v9166
        %v9270 = vadd.f32 %v9087, %v9168
        %v9271 = vadd.f32 %v9088, %v9170
        %v9272 = vadd.f32 %v9089, %v9172
        %v9273 = vadd.f32 %v9090, %v9174
        %v9274 = vadd.f32 %v9091, %v9176
        %v9275 = vadd.f32 %v9092, %v9178
        %v9276 = vadd.f32 %v9093, %v9180
        %v9277 = vadd.f32 %v9094, %v9182
        %v9278 = vadd.f32 %v9095, %v9184
        %v9279 = vadd.f32 %v9096, %v9186
        %v9280 = vadd.f32 %v9097, %v9188
        %v9281 = vadd.f32 %v9098, %v9190
        %v9282 = vadd.f32 %v9099, %v9192
        %v9283 = vadd.f32 %v9100, %v9194
        %v9284 = vadd.f32 %v9101, %v9196
        %v9285 = vadd.f32 %v9102, %v9198
        %v9286 = vadd.f32 %v9103, %v9200
        %v9287 = vadd.f32 %v9104, %v9202
        %v9288 = vadd.f32 %v9105, %v9204
        %v9289 = vadd.f32 %v9106, %v9206
        %v9290 = vadd.f32 %v9107, %v9208
        %v9291 = vadd.f32 %v9108, %v9210
        %v9292 = vadd.f32 %v9109, %v9212
        %v9293 = vadd.f32 %v9110, %v9214
        %v9294 = vadd.f32 %v9111, %v9216
        %v9295 = vadd.f32 %v9112, %v9218
        %v9296 = vadd.f32 %v9113, %v9220
        %v9297 = vadd.f32 %v9114, %v9222
        %v9298 = vadd.f32 %v9115, %v9224
        %v9299 = vadd.f32 %v9116, %v9226
        %v9300 = vadd.f32 %v9117, %v9228
        %v9301 = vmax.f32 %v9265, 0.0
        %v9302 = vmax.f32 %v9266, 0.0
        %v9303 = vmax.f32 %v9267, 0.0
        %v9304 = vmax.f32 %v9268, 0.0
        %v9305 = vmax.f32 %v9269, 0.0
        %v9306 = vmax.f32 %v9270, 0.0
        %v9307 = vmax.f32 %v9271, 0.0
        %v9308 = vmax.f32 %v9272, 0.0
        %v9309 = vmax.f32 %v9273, 0.0
        %v9310 = vmax.f32 %v9274, 0.0
        %v9311 = vmax.f32 %v9275, 0.0
        %v9312 = vmax.f32 %v9276, 0.0
        %v9313 = vmax.f32 %v9277, 0.0
        %v9314 = vmax.f32 %v9278, 0.0
        %v9315 = vmax.f32 %v9279, 0.0
        %v9316 = vmax.f32 %v9280, 0.0
        %v9317 = vmax.f32 %v9281, 0.0
        %v9318 = vmax.f32 %v9282, 0.0
        %v9319 = vmax.f32 %v9283, 0.0
        %v9320 = vmax.f32 %v9284, 0.0
        %v9321 = vmax.f32 %v9285, 0.0
        %v9322 = vmax.f32 %v9286, 0.0
        %v9323 = vmax.f32 %v9287, 0.0
        %v9324 = vmax.f32 %v9288, 0.0
        %v9325 = vmax.f32 %v9289, 0.0
        %v9326 = vmax.f32 %v9290, 0.0
        %v9327 = vmax.f32 %v9291, 0.0
        %v9328 = vmax.f32 %v9292, 0.0
        %v9329 = vmax.f32 %v9293, 0.0
        %v9330 = vmax.f32 %v9294, 0.0
        %v9331 = vmax.f32 %v9295, 0.0
        %v9332 = vmax.f32 %v9296, 0.0
        %v9333 = vmax.f32 %v9297, 0.0
        %v9334 = vmax.f32 %v9298, 0.0
        %v9335 = vmax.f32 %v9299, 0.0
        %v9336 = vmax.f32 %v9300, 0.0
        %9337 = vst [vmem:[%s271] sm:$0xff] %v9301
        %9338 = vst [vmem:[%s271 + $0x8] sm:$0xff] %v9302
        %9339 = vst [vmem:[%s271 + $0x10] sm:$0xff] %v9303
        %9340 = vst [vmem:[%s271 + $0x18] sm:$0xff] %v9304
        %9341 = vst [vmem:[%s271 + $0x20] sm:$0xff] %v9305
        %9342 = vst [vmem:[%s271 + $0x28] sm:$0xff] %v9306
        %9343 = vst [vmem:[%s271 + $0x30] sm:$0xff] %v9307
        %9344 = vst [vmem:[%s271 + $0x38] sm:$0xff] %v9308
        %9345 = vst [vmem:[%s271 + $0x40] sm:$0xff] %v9309
        %9346 = vst [vmem:[%s271 + $0x48] sm:$0xff] %v9310
        %9347 = vst [vmem:[%s271 + $0x50] sm:$0xff] %v9311
        %9348 = vst [vmem:[%s271 + $0x58] sm:$0xff] %v9312
        %9349 = vst [vmem:[%s271 + $0x60] sm:$0xff] %v9313
        %9350 = vst [vmem:[%s271 + $0x68] sm:$0xff] %v9314
        %9351 = vst [vmem:[%s271 + $0x70] sm:$0xff] %v9315
        %9352 = vst [vmem:[%s271 + $0x78] sm:$0xff] %v9316
        %9353 = vst [vmem:[%s271 + $0x80] sm:$0xff] %v9317
        %9354 = vst [vmem:[%s271 + $0x88] sm:$0xff] %v9318
        %9355 = vst [vmem:[%s271 + $0x90] sm:$0xff] %v9319
        %9356 = vst [vmem:[%s271 + $0x98] sm:$0xff] %v9320
        %9357 = vst [vmem:[%s271 + $0xa0] sm:$0xff] %v9321
        %9358 = vst [vmem:[%s271 + $0xa8] sm:$0xff] %v9322
        %9359 = vst [vmem:[%s271 + $0xb0] sm:$0xff] %v9323
        %9360 = vst [vmem:[%s271 + $0xb8] sm:$0xff] %v9324
        %9361 = vst [vmem:[%s271 + $0xc0] sm:$0xff] %v9325
        %9362 = vst [vmem:[%s271 + $0xc8] sm:$0xff] %v9326
        %9363 = vst [vmem:[%s271 + $0xd0] sm:$0xff] %v9327
        %9364 = vst [vmem:[%s271 + $0xd8] sm:$0xff] %v9328
        %9365 = vst [vmem:[%s271 + $0xe0] sm:$0xff] %v9329
        %9366 = vst [vmem:[%s271 + $0xe8] sm:$0xff] %v9330
        %9367 = vst [vmem:[%s271 + $0xf0] sm:$0xff] %v9331
        %9368 = vst [vmem:[%s271 + $0xf8] sm:$0xff] %v9332
        %9369 = vst [vmem:[%s271 + $0x100] sm:$0xff] %v9333
        %9370 = vst [vmem:[%s271 + $0x108] sm:$0xff] %v9334
        %9371 = vst [vmem:[%s271 + $0x110] sm:$0xff] %v9335
        %9372 = vst [vmem:[%s271 + $0x118] sm:$0xff] %v9336
        %s9373 = sand.u32 %s141, 1
        %s9374 = scalar_lea.sflag [#allocation5], %s9373
        %s9375 = sand.u32 %s141, 1
        %s9376 = smul.addr %s9375, 288
        %s9377 = scalar_lea.vmem [#allocation9], %s9376
        // Predicated region
        $region53: #{tpu_custom_call.1} parent=39 // pred_check
          %p9378 = pneg %p151
        $region54: #{tpu_custom_call.1} parent=39 // pred_check_branch
          %9380 = sbr.rel (%p9378) target = $region56
        $region55: #{tpu_custom_call.1} parent=39 // pred_region
          %s9382 = ssub.s32 4608, 4608
          %9383 = vsyncadd %s9374, %s9382
          %s9384 = smul.addr %s23, 36
          %s9385 = smul.addr %s9384, 128
          %s9386 = scalar_lea.hbm %s5, %s9385
          %s9387 = sshll.u32 %s9377, 4
          %s9388 = int_to_ptr.vmem [resolvable:$true] %s9387
          %9393 = dma.vmem_to_hbm [thread:$0]  %s9388, 4608, %s9386, %s9374, 128, 128, 8
        $region56: #{tpu_custom_call.1} parent=39 // pred_fallthru
          _
      $region40: #{tpu_custom_call.1} parent=5 // pred_fallthru
        _
      %p9394 = scmp.le.s32.totalorder 2, %s18
      // Predicated region
      $region57: #{tpu_custom_call.1} parent=5 // pred_check
        %p9395 = pneg %p9394
      $region58: #{tpu_custom_call.1} parent=5 // pred_check_branch
        %9397 = sbr.rel (%p9395) target = $region60
      $region59: #{tpu_custom_call.1} parent=5 // pred_region
        %s9398 = ssub.s32 %s18, 2
        // Predicated region
        $region61: #{tpu_custom_call.1} parent=59 // pred_check
          %p9399 = pneg %p157
        $region62: #{tpu_custom_call.1} parent=59 // pred_check_branch
          %9401 = sbr.rel (%p9399) target = $region64
        $region63: #{tpu_custom_call.1} parent=59 // pred_region
          %s9402 = sand.u32 %s142, 1
          %s9403 = scalar_lea.sflag [#allocation5], %s9402
          %s9404 = sand.u32 %s142, 1
          %s9405 = smul.addr %s9404, 288
          %s9406 = scalar_lea.vmem [#allocation9], %s9405
          %9407 = dma.done %s9403, 4608
        $region64: #{tpu_custom_call.1} parent=59 // pred_fallthru
          _
      $region60: #{tpu_custom_call.1} parent=5 // pred_fallthru
        _
    $region6: #{tpu_custom_call.1} parent=1 // loop_footer
      %s22 = sadd.s32 1, %s18
    $region7: #{tpu_custom_call.1} parent=1 // loop_footer_branch
      %17 = sbr.rel target = $region3
    $region8: #{tpu_custom_call.1} parent=1 // loop_exit
      _
    %9408 = vsyncpa [#allocation4], 1
    %s9409 = scalar_lea.sflag [#allocation4], 1
    %9410 = vsyncpa %s9409, 1
    %9411 = vsyncpa [#allocation7], 1
    %9412 = vsyncpa [#allocation5], 1
    %s9413 = scalar_lea.sflag [#allocation5], 1
    %9414 = vsyncpa %s9413, 1

</llo_original>
